<compile_context>
chip_gen: v5e
topology: v5e:2x2
jax: 0.10.0
libtpu: 0.0.40
codegen_flags: <defaults>
</compile_context>

<pallas_src>
import functools

import jax
import jax.numpy as jnp
from jax.experimental import pallas as pl
from jax.experimental.pallas import tpu as pltpu

BN_EPS = 1e-5
LANE = 128
SUBLANE_BF16 = 16             # bf16 packs 16 rows per vreg sublane group
TM = 512                      # M tile for the conv GEMM (v7x-safe with 32 MiB limit)
VMEM_LIMIT = 32 * 1024 * 1024


def _round_up(x, m):
    return (x + m - 1) // m * m


def _pad_k(k):
    # Contraction dim: lane-dense (multiple of 128) when large, else just 32-align.
    return _round_up(k, LANE) if k >= LANE else _round_up(k, 32)


# --------------------------------------------------------------------------- kernels
def _conv_bn_relu_kernel(p_ref, w_ref, g_ref, b_ref, o_ref, stats_ref, *,
                         inv_count, tm):
    """Fused im2col-GEMM + training-mode BatchNorm + ReLU.

    p_ref: (tm, K_pad) bf16 patches tile (M grid axis, sequential).
    w_ref: (K_pad, C_pad) bf16 weights (constant block).
    g_ref/b_ref: (1, C_pad) f32 BN gamma/beta.
    o_ref: (M_pad, C_pad) bf16 full output, VMEM-resident across the grid.
    stats_ref: (2, C_pad) f32 scratch holding [sum; sumsq] over all rows.
    """
    i = pl.program_id(0)
    n_m = pl.num_programs(0)

    y = jnp.dot(p_ref[...], w_ref[...], preferred_element_type=jnp.float32)

    # Per-channel partial sums straight from the f32 accumulator.
    s = jnp.sum(y, axis=0, keepdims=True)
    ss = jnp.sum(y * y, axis=0, keepdims=True)
    part = jnp.concatenate([s, ss], axis=0)               # (2, C_pad)

    @pl.when(i == 0)
    def _init():
        stats_ref[...] = part

    @pl.when(i > 0)
    def _acc():
        stats_ref[...] += part

    # Stash the raw GEMM result for this tile into the resident output block.
    row0 = pl.multiple_of(i * tm, tm)
    o_ref[pl.ds(row0, tm), :] = y.astype(o_ref.dtype)

    # Final grid step: batch stats are complete -> normalize + ReLU in place.
    @pl.when(i == n_m - 1)
    def _finalize():
        mean = stats_ref[0:1, :] * inv_count
        var = stats_ref[1:2, :] * inv_count - mean * mean
        scale = jax.lax.rsqrt(var + BN_EPS) * g_ref[...]
        shift = b_ref[...] - mean * scale
        yo = o_ref[...].astype(jnp.float32)
        o_ref[...] = jnp.maximum(yo * scale + shift, 0.0).astype(o_ref.dtype)


def _mlp_kernel(x_ref, w1_ref, b1_ref, w2_ref, b2_ref, o_ref):
    h = jnp.dot(x_ref[...], w1_ref[...], preferred_element_type=jnp.float32) + b1_ref[...]
    o_ref[...] = (
        jnp.dot(h.astype(jnp.bfloat16), w2_ref[...], preferred_element_type=jnp.float32)
        + b2_ref[...]
    )


# --------------------------------------------------------------------------- wrappers
def conv_bn_relu(patches, w_mat, gamma, beta, *, m_valid, tm):
    """patches: (M_pad, K_pad) bf16 (zero rows beyond m_valid), w_mat: (K_pad, C_pad)
    bf16, gamma/beta: (1, C_pad) f32.  Returns (M_pad, C_pad) bf16 activations.

    Note: the fused design keeps the full (M_pad, C_pad) output resident in VMEM,
    so M_pad*C_pad*2B (+ double-buffered patch tiles + weights) must fit under
    VMEM_LIMIT; fine for these sizes and for moderate batches."""
    M_pad, K_pad = patches.shape
    C_pad = w_mat.shape[1]
    grid_m = M_pad // tm

    cost = pl.CostEstimate(
        flops=int(2 * M_pad * K_pad * C_pad),
        transcendentals=0,
        bytes_accessed=int((M_pad * K_pad + K_pad * C_pad + M_pad * C_pad) * 2
                           + 2 * C_pad * 4),
    )
    kernel = functools.partial(_conv_bn_relu_kernel,
                               inv_count=1.0 / float(m_valid), tm=tm)

    return pl.pallas_call(
        kernel,
        out_shape=jax.ShapeDtypeStruct((M_pad, C_pad), jnp.bfloat16),
        grid=(grid_m,),
        in_specs=[
            pl.BlockSpec((tm, K_pad), lambda i: (i, 0)),
            pl.BlockSpec((K_pad, C_pad), lambda i: (0, 0)),
            pl.BlockSpec((1, C_pad), lambda i: (0, 0)),
            pl.BlockSpec((1, C_pad), lambda i: (0, 0)),
        ],
        # Constant block index -> output stays in VMEM across the whole M grid.
        out_specs=pl.BlockSpec((M_pad, C_pad), lambda i: (0, 0)),
        scratch_shapes=[pltpu.VMEM((2, C_pad), jnp.float32)],
        compiler_params=pltpu.CompilerParams(
            dimension_semantics=("arbitrary",),   # stats + resident output are sequential
            vmem_limit_bytes=VMEM_LIMIT,
        ),
        cost_estimate=cost,
    )(patches, w_mat, gamma, beta)


def mlp_head(feat, w1, b1, w2, b2):
    N, D = feat.shape
    Hp = w1.shape[1]
    Cp = w2.shape[1]
    return pl.pallas_call(
        _mlp_kernel,
        out_shape=jax.ShapeDtypeStruct((N, Cp), jnp.float32),
        grid=(1,),
        in_specs=[
            pl.BlockSpec((N, D), lambda i: (0, 0)),
            pl.BlockSpec((D, Hp), lambda i: (0, 0)),
            pl.BlockSpec((1, Hp), lambda i: (0, 0)),
            pl.BlockSpec((Hp, Cp), lambda i: (0, 0)),
            pl.BlockSpec((1, Cp), lambda i: (0, 0)),
        ],
        out_specs=pl.BlockSpec((N, Cp), lambda i: (0, 0)),
        compiler_params=pltpu.CompilerParams(
            dimension_semantics=("arbitrary",),
            vmem_limit_bytes=VMEM_LIMIT,
        ),
    )(feat.astype(jnp.bfloat16), w1, b1, w2, b2)


# --------------------------------------------------------------------------- glue
def im2col_nhwc(x, k=3, stride=2, pad=1):
    """NHWC patch extraction. Returns ((N*Ho*Wo, k*k*C), Ho, Wo).
    Patch feature order is (kh, kw, ci), matching weights flattened from
    torch layout via transpose(2, 3, 1, 0)."""
    N, H, W, C = x.shape
    xp = jnp.pad(x, ((0, 0), (pad, pad), (pad, pad), (0, 0)))
    Ho = (H + 2 * pad - k) // stride + 1
    Wo = (W + 2 * pad - k) // stride + 1
    cols = []
    for kh in range(k):
        for kw in range(k):
            cols.append(xp[:, kh:kh + stride * Ho:stride, kw:kw + stride * Wo:stride, :])
    col = jnp.concatenate(cols, axis=-1)                    # (N, Ho, Wo, k*k*C)
    return col.reshape(N * Ho * Wo, k * k * C), Ho, Wo


def init_params(key, input_shape=(3, 32, 32), classes=100):
    conv_defs = ((input_shape[0], 64), (64, 128), (128, 256), (256, 512))
    params = {"convs": []}
    for (cin, cout) in conv_defs:
        cout_pad = _round_up(cout, LANE)
        key, kw_ = jax.random.split(key)
        # Kaiming normal, mode='fan_out', nonlinearity='relu': std = sqrt(2 / (cout*9))
        std = (2.0 / (cout * 9)) ** 0.5
        w = jax.random.normal(kw_, (cout, cin, 3, 3), jnp.float32) * std   # torch layout
        w_khwc = jnp.transpose(w, (2, 3, 1, 0))                 # (kh, kw, cin, cout)
        w_khwc = jnp.pad(w_khwc, ((0, 0), (0, 0), (0, 0), (0, cout_pad - cout)))
        K = 9 * cin                                             # real contraction (no carried pad)
        K_pad = _pad_k(K)
        w_mat = w_khwc.reshape(K, cout_pad)
        w_mat = jnp.pad(w_mat, ((0, K_pad - K), (0, 0))).astype(jnp.bfloat16)
        gamma = jnp.ones((1, cout_pad), jnp.float32)            # BN weight = 1
        beta = jnp.zeros((1, cout_pad), jnp.float32)            # BN bias = 0
        params["convs"].append((w_mat, gamma, beta))

    # spatial after 4 stride-2 pad-1 3x3 convs
    hsp, wsp = input_shape[1], input_shape[2]
    for _ in range(4):
        hsp = (hsp + 2 - 3) // 2 + 1
        wsp = (wsp + 2 - 3) // 2 + 1
    c_last = 512                                                # no feature padding (512 % 128 == 0)
    d = c_last * hsp * wsp

    hid, hid_pad = 64, _round_up(64, LANE)
    cls_pad = _round_up(classes, LANE)
    key, k1, k2, k3, k4 = jax.random.split(key, 5)
    lim1 = 1.0 / (d ** 0.5)
    lim2 = 1.0 / (hid ** 0.5)
    fc1_w = jax.random.uniform(k1, (d, hid), jnp.float32, -lim1, lim1)   # rows = torch NCHW flatten
    fc1_b = jax.random.uniform(k2, (hid,), jnp.float32, -lim1, lim1)
    fc2_w = jax.random.uniform(k3, (hid, classes), jnp.float32, -lim2, lim2)
    fc2_b = jax.random.uniform(k4, (classes,), jnp.float32, -lim2, lim2)

    # Permute fc1 rows from torch NCHW-flatten order to our NHWC-flatten order.
    hw = jnp.arange(hsp * wsp)
    perm = (jnp.arange(c_last)[None, :] * (hsp * wsp) + hw[:, None]).reshape(-1)
    fc1_w = fc1_w[perm, :]

    params["fc1_w"] = jnp.pad(fc1_w, ((0, 0), (0, hid_pad - hid))).astype(jnp.bfloat16)
    params["fc1_b"] = jnp.pad(fc1_b, (0, hid_pad - hid)).reshape(1, hid_pad)
    params["fc2_w"] = jnp.pad(fc2_w, ((0, hid_pad - hid), (0, cls_pad - classes))).astype(jnp.bfloat16)
    params["fc2_b"] = jnp.pad(fc2_b, (0, cls_pad - classes)).reshape(1, cls_pad)
    return params


@functools.partial(jax.jit, static_argnames=("classes",))
def deep_cnn_forward(x_nchw, params, classes=100):
    x = jnp.transpose(x_nchw, (0, 2, 3, 1)).astype(jnp.bfloat16)   # NHWC, bf16 activations
    N = x.shape[0]
    # Real input-channel count per conv layer (static); layer-1's 64->128 lane
    # padding is sliced off before layer 2 so no zero-FLOPs are carried forward.
    cin_real = (x.shape[-1], 64, 128, 256)
    for (w_mat, gamma, beta), cin in zip(params["convs"], cin_real):
        K_pad, C_pad = w_mat.shape
        xin = x[..., :cin]
        patches, Ho, Wo = im2col_nhwc(xin)
        M, K = patches.shape
        tm = min(TM, _round_up(M, SUBLANE_BF16))
        M_pad = _round_up(M, tm)
        # Zero row padding keeps BN stats exact (zeros add nothing to sum/sumsq;
        # we divide by the real M); padded rows are sliced off below.
        patches = jnp.pad(patches, ((0, M_pad - M), (0, K_pad - K))).astype(jnp.bfloat16)
        y = conv_bn_relu(patches, w_mat, gamma, beta, m_valid=M, tm=tm)
        x = y[:M].reshape(N, Ho, Wo, C_pad)
    feat = x.reshape(N, -1)          # NHWC flatten; fc1_w rows permuted to match torch order
    logits = mlp_head(feat, params["fc1_w"], params["fc1_b"],
                      params["fc2_w"], params["fc2_b"])
    return logits[:, :classes]


if __name__ == "__main__":
    key = jax.random.PRNGKey(0)
    pkey, xkey = jax.random.split(key)
    params = init_params(pkey, input_shape=(3, 32, 32), classes=100)
    x = jax.random.normal(xkey, (2, 3, 32, 32), jnp.float32)     # NCHW, batch=2

    logits = deep_cnn_forward(x, params, classes=100)
    jax.block_until_ready(logits)
    assert logits.shape == (2, 100), logits.shape
    assert bool(jnp.all(jnp.isfinite(logits)))
    print("KERNEL_OK")
</pallas_src>

<mosaic_0001>
module attributes {stable_mosaic.version = 11 : i64} {
  func.func @_conv_bn_relu_kernel(%arg0: i32, %arg1: memref<512x32xbf16, #tpu.memory_space<vmem>>, %arg2: memref<32x128xbf16, #tpu.memory_space<vmem>>, %arg3: memref<1x128xf32, #tpu.memory_space<vmem>>, %arg4: memref<1x128xf32, #tpu.memory_space<vmem>>, %arg5: memref<512x128xbf16, #tpu.memory_space<vmem>>, %arg6: memref<2x128xf32, #tpu.memory_space<vmem>>) attributes {dimension_semantics = [#tpu.dimension_semantics<arbitrary>], iteration_bounds = array<i64: 1>, scalar_prefetch = 0 : i64, scratch_operands = 1 : i64, tpu.core_type = #tpu.core_type<tc>, window_params = [{transform_indices = @transform_0, window_bounds = array<i64: 512, 32>}, {pipeline_mode = #tpu.pipeline_mode<synchronous>, transform_indices = @transform_1, window_bounds = array<i64: 32, 128>}, {pipeline_mode = #tpu.pipeline_mode<synchronous>, transform_indices = @transform_2, window_bounds = array<i64: 1, 128>}, {pipeline_mode = #tpu.pipeline_mode<synchronous>, transform_indices = @transform_3, window_bounds = array<i64: 1, 128>}, {pipeline_mode = #tpu.pipeline_mode<synchronous>, transform_indices = @transform_4, window_bounds = array<i64: 512, 128>}]} {
    %c0 = arith.constant 0 : index
    %c0_0 = arith.constant 0 : index
    %0 = vector.load %arg1[%c0, %c0_0] : memref<512x32xbf16, #tpu.memory_space<vmem>>, vector<512x32xbf16>
    %c0_1 = arith.constant 0 : index
    %c0_2 = arith.constant 0 : index
    %1 = vector.load %arg2[%c0_1, %c0_2] : memref<32x128xbf16, #tpu.memory_space<vmem>>, vector<32x128xbf16>
    %cst = arith.constant dense<0.000000e+00> : vector<512x128xf32>
    %2 = tpu.matmul %0, %1, %cst {dimension_numbers = #tpu.dot_dimension_numbers<[1], [0], [0], [1], [0, 0, 1, 1], [], []>} : vector<512x32xbf16>, vector<32x128xbf16>, vector<512x128xf32> -> vector<512x128xf32>
    %cst_3 = arith.constant dense<0.000000e+00> : vector<128xf32>
    %3 = vector.multi_reduction <add>, %2, %cst_3 [0] : vector<512x128xf32> to vector<128xf32>
    %4 = vector.shape_cast %3 : vector<128xf32> to vector<1x128xf32>
    %5 = arith.mulf %2, %2 : vector<512x128xf32>
    %cst_4 = arith.constant dense<0.000000e+00> : vector<128xf32>
    %6 = vector.multi_reduction <add>, %5, %cst_4 [0] : vector<512x128xf32> to vector<128xf32>
    %7 = vector.shape_cast %6 : vector<128xf32> to vector<1x128xf32>
    %8 = tpu.concatenate %4, %7 in 0 : vector<1x128xf32>, vector<1x128xf32> -> vector<2x128xf32>
    %c0_i32 = arith.constant 0 : i32
    %9 = arith.cmpi eq, %arg0, %c0_i32 : i32
    %10 = arith.extui %9 : i1 to i32
    %c0_i32_5 = arith.constant 0 : i32
    %11 = arith.cmpi ne, %10, %c0_i32_5 : i32
    scf.if %11 {
      %c0_11 = arith.constant 0 : index
      %c0_12 = arith.constant 0 : index
      %23 = vector.load %arg6[%c0_11, %c0_12] : memref<2x128xf32, #tpu.memory_space<vmem>>, vector<2x128xf32>
      tpu.vector_store %arg6[%c0_11, %c0_12], %8 {strides = array<i32>} : memref<2x128xf32, #tpu.memory_space<vmem>>, vector<2x128xf32>,
    } else {
    }
    %c0_i32_6 = arith.constant 0 : i32
    %12 = arith.cmpi sgt, %arg0, %c0_i32_6 : i32
    %13 = arith.extui %12 : i1 to i32
    %c0_i32_7 = arith.constant 0 : i32
    %14 = arith.cmpi ne, %13, %c0_i32_7 : i32
    scf.if %14 {
      %c0_11 = arith.constant 0 : index
      %c0_12 = arith.constant 0 : index
      %23 = vector.load %arg6[%c0_11, %c0_12] : memref<2x128xf32, #tpu.memory_space<vmem>>, vector<2x128xf32>
      %24 = arith.addf %23, %8 : vector<2x128xf32>
      %c0_13 = arith.constant 0 : index
      %c0_14 = arith.constant 0 : index
      %25 = vector.load %arg6[%c0_13, %c0_14] : memref<2x128xf32, #tpu.memory_space<vmem>>, vector<2x128xf32>
      tpu.vector_store %arg6[%c0_13, %c0_14], %24 {strides = array<i32>} : memref<2x128xf32, #tpu.memory_space<vmem>>, vector<2x128xf32>,
    } else {
    }
    %c512_i32 = arith.constant 512 : i32
    %15 = arith.muli %arg0, %c512_i32 : i32
    %16 = tpu.assume_multiple %15, 512 : i32
    %17 = arith.truncf %2 : vector<512x128xf32> to vector<512x128xbf16>
    %18 = arith.index_cast %16 : i32 to index
    %c0_8 = arith.constant 0 : index
    %19 = vector.load %arg5[%18, %c0_8] : memref<512x128xbf16, #tpu.memory_space<vmem>>, vector<512x128xbf16>
    tpu.vector_store %arg5[%18, %c0_8], %17 {strides = array<i32>} : memref<512x128xbf16, #tpu.memory_space<vmem>>, vector<512x128xbf16>,
    %c0_i32_9 = arith.constant 0 : i32
    %20 = arith.cmpi eq, %arg0, %c0_i32_9 : i32
    %21 = arith.extui %20 : i1 to i32
    %c0_i32_10 = arith.constant 0 : i32
    %22 = arith.cmpi ne, %21, %c0_i32_10 : i32
    scf.if %22 {
      %c0_11 = arith.constant 0 : index
      %c0_12 = arith.constant 0 : index
      %23 = vector.load %arg6[%c0_11, %c0_12] : memref<2x128xf32, #tpu.memory_space<vmem>>, vector<1x128xf32>
      %cst_13 = arith.constant 0.001953125 : f32
      %24 = vector.broadcast %cst_13 : f32 to vector<1x128xf32>
      %25 = arith.mulf %23, %24 : vector<1x128xf32>
      %c1 = arith.constant 1 : index
      %c0_14 = arith.constant 0 : index
      %26 = vector.load %arg6[%c1, %c0_14] : memref<2x128xf32, #tpu.memory_space<vmem>>, vector<1x128xf32>
      %cst_15 = arith.constant 0.001953125 : f32
      %27 = vector.broadcast %cst_15 : f32 to vector<1x128xf32>
      %28 = arith.mulf %26, %27 : vector<1x128xf32>
      %29 = arith.mulf %25, %25 : vector<1x128xf32>
      %30 = arith.subf %28, %29 : vector<1x128xf32>
      %cst_16 = arith.constant 9.99999974E-6 : f32
      %31 = vector.broadcast %cst_16 : f32 to vector<1x128xf32>
      %32 = arith.addf %30, %31 : vector<1x128xf32>
      %33 = math.rsqrt %32 : vector<1x128xf32>
      %c0_17 = arith.constant 0 : index
      %c0_18 = arith.constant 0 : index
      %34 = vector.load %arg3[%c0_17, %c0_18] : memref<1x128xf32, #tpu.memory_space<vmem>>, vector<1x128xf32>
      %35 = arith.mulf %33, %34 : vector<1x128xf32>
      %c0_19 = arith.constant 0 : index
      %c0_20 = arith.constant 0 : index
      %36 = vector.load %arg4[%c0_19, %c0_20] : memref<1x128xf32, #tpu.memory_space<vmem>>, vector<1x128xf32>
      %37 = arith.mulf %25, %35 : vector<1x128xf32>
      %38 = arith.subf %36, %37 : vector<1x128xf32>
      %c0_21 = arith.constant 0 : index
      %c0_22 = arith.constant 0 : index
      %39 = vector.load %arg5[%c0_21, %c0_22] : memref<512x128xbf16, #tpu.memory_space<vmem>>, vector<512x128xbf16>
      %40 = arith.extf %39 : vector<512x128xbf16> to vector<512x128xf32>
      %41 = vector.broadcast %35 : vector<1x128xf32> to vector<512x128xf32>
      %42 = arith.mulf %40, %41 : vector<512x128xf32>
      %43 = vector.broadcast %38 : vector<1x128xf32> to vector<512x128xf32>
      %44 = arith.addf %42, %43 : vector<512x128xf32>
      %cst_23 = arith.constant 0.000000e+00 : f32
      %45 = vector.broadcast %cst_23 : f32 to vector<512x128xf32>
      %46 = arith.maximumf %44, %45 : vector<512x128xf32>
      %47 = arith.truncf %46 : vector<512x128xf32> to vector<512x128xbf16>
      %c0_24 = arith.constant 0 : index
      %c0_25 = arith.constant 0 : index
      %48 = vector.load %arg5[%c0_24, %c0_25] : memref<512x128xbf16, #tpu.memory_space<vmem>>, vector<512x128xbf16>
      tpu.vector_store %arg5[%c0_24, %c0_25], %47 {strides = array<i32>} : memref<512x128xbf16, #tpu.memory_space<vmem>>, vector<512x128xbf16>,
    } else {
    }
    return
  }
  func.func @transform_0(%arg0: i32) -> (i32, i32) {
    %c0_i32 = arith.constant 0 : i32
    %c0_i32_0 = arith.constant 0 : i32
    return %arg0, %c0_i32 : i32, i32
  }
  func.func @transform_1(%arg0: i32) -> (i32, i32) {
    %c0_i32 = arith.constant 0 : i32
    %c0_i32_0 = arith.constant 0 : i32
    %c0_i32_1 = arith.constant 0 : i32
    return %c0_i32, %c0_i32_0 : i32, i32
  }
  func.func @transform_2(%arg0: i32) -> (i32, i32) {
    %c0_i32 = arith.constant 0 : i32
    %c0_i32_0 = arith.constant 0 : i32
    %c0_i32_1 = arith.constant 0 : i32
    return %c0_i32, %c0_i32_0 : i32, i32
  }
  func.func @transform_3(%arg0: i32) -> (i32, i32) {
    %c0_i32 = arith.constant 0 : i32
    %c0_i32_0 = arith.constant 0 : i32
    %c0_i32_1 = arith.constant 0 : i32
    return %c0_i32, %c0_i32_0 : i32, i32
  }
  func.func @transform_4(%arg0: i32) -> (i32, i32) {
    %c0_i32 = arith.constant 0 : i32
    %c0_i32_0 = arith.constant 0 : i32
    %c0_i32_1 = arith.constant 0 : i32
    return %c0_i32, %c0_i32_0 : i32, i32
  }
}

module attributes {stable_mosaic.version = 11 : i64} {
  func.func @_conv_bn_relu_kernel(%arg0: i32, %arg1: memref<128x640xbf16, #tpu.memory_space<vmem>>, %arg2: memref<640x128xbf16, #tpu.memory_space<vmem>>, %arg3: memref<1x128xf32, #tpu.memory_space<vmem>>, %arg4: memref<1x128xf32, #tpu.memory_space<vmem>>, %arg5: memref<128x128xbf16, #tpu.memory_space<vmem>>, %arg6: memref<2x128xf32, #tpu.memory_space<vmem>>) attributes {dimension_semantics = [#tpu.dimension_semantics<arbitrary>], iteration_bounds = array<i64: 1>, scalar_prefetch = 0 : i64, scratch_operands = 1 : i64, tpu.core_type = #tpu.core_type<tc>, window_params = [{transform_indices = @transform_0, window_bounds = array<i64: 128, 640>}, {pipeline_mode = #tpu.pipeline_mode<synchronous>, transform_indices = @transform_1, window_bounds = array<i64: 640, 128>}, {pipeline_mode = #tpu.pipeline_mode<synchronous>, transform_indices = @transform_2, window_bounds = array<i64: 1, 128>}, {pipeline_mode = #tpu.pipeline_mode<synchronous>, transform_indices = @transform_3, window_bounds = array<i64: 1, 128>}, {pipeline_mode = #tpu.pipeline_mode<synchronous>, transform_indices = @transform_4, window_bounds = array<i64: 128, 128>}]} {
    %c0 = arith.constant 0 : index
    %c0_0 = arith.constant 0 : index
    %0 = vector.load %arg1[%c0, %c0_0] : memref<128x640xbf16, #tpu.memory_space<vmem>>, vector<128x640xbf16>
    %c0_1 = arith.constant 0 : index
    %c0_2 = arith.constant 0 : index
    %1 = vector.load %arg2[%c0_1, %c0_2] : memref<640x128xbf16, #tpu.memory_space<vmem>>, vector<640x128xbf16>
    %cst = arith.constant dense<0.000000e+00> : vector<128x128xf32>
    %2 = tpu.matmul %0, %1, %cst {dimension_numbers = #tpu.dot_dimension_numbers<[1], [0], [0], [1], [0, 0, 1, 1], [], []>} : vector<128x640xbf16>, vector<640x128xbf16>, vector<128x128xf32> -> vector<128x128xf32>
    %cst_3 = arith.constant dense<0.000000e+00> : vector<128xf32>
    %3 = vector.multi_reduction <add>, %2, %cst_3 [0] : vector<128x128xf32> to vector<128xf32>
    %4 = vector.shape_cast %3 : vector<128xf32> to vector<1x128xf32>
    %5 = arith.mulf %2, %2 : vector<128x128xf32>
    %cst_4 = arith.constant dense<0.000000e+00> : vector<128xf32>
    %6 = vector.multi_reduction <add>, %5, %cst_4 [0] : vector<128x128xf32> to vector<128xf32>
    %7 = vector.shape_cast %6 : vector<128xf32> to vector<1x128xf32>
    %8 = tpu.concatenate %4, %7 in 0 : vector<1x128xf32>, vector<1x128xf32> -> vector<2x128xf32>
    %c0_i32 = arith.constant 0 : i32
    %9 = arith.cmpi eq, %arg0, %c0_i32 : i32
    %10 = arith.extui %9 : i1 to i32
    %c0_i32_5 = arith.constant 0 : i32
    %11 = arith.cmpi ne, %10, %c0_i32_5 : i32
    scf.if %11 {
      %c0_11 = arith.constant 0 : index
      %c0_12 = arith.constant 0 : index
      %23 = vector.load %arg6[%c0_11, %c0_12] : memref<2x128xf32, #tpu.memory_space<vmem>>, vector<2x128xf32>
      tpu.vector_store %arg6[%c0_11, %c0_12], %8 {strides = array<i32>} : memref<2x128xf32, #tpu.memory_space<vmem>>, vector<2x128xf32>,
    } else {
    }
    %c0_i32_6 = arith.constant 0 : i32
    %12 = arith.cmpi sgt, %arg0, %c0_i32_6 : i32
    %13 = arith.extui %12 : i1 to i32
    %c0_i32_7 = arith.constant 0 : i32
    %14 = arith.cmpi ne, %13, %c0_i32_7 : i32
    scf.if %14 {
      %c0_11 = arith.constant 0 : index
      %c0_12 = arith.constant 0 : index
      %23 = vector.load %arg6[%c0_11, %c0_12] : memref<2x128xf32, #tpu.memory_space<vmem>>, vector<2x128xf32>
      %24 = arith.addf %23, %8 : vector<2x128xf32>
      %c0_13 = arith.constant 0 : index
      %c0_14 = arith.constant 0 : index
      %25 = vector.load %arg6[%c0_13, %c0_14] : memref<2x128xf32, #tpu.memory_space<vmem>>, vector<2x128xf32>
      tpu.vector_store %arg6[%c0_13, %c0_14], %24 {strides = array<i32>} : memref<2x128xf32, #tpu.memory_space<vmem>>, vector<2x128xf32>,
    } else {
    }
    %c128_i32 = arith.constant 128 : i32
    %15 = arith.muli %arg0, %c128_i32 : i32
    %16 = tpu.assume_multiple %15, 128 : i32
    %17 = arith.truncf %2 : vector<128x128xf32> to vector<128x128xbf16>
    %18 = arith.index_cast %16 : i32 to index
    %c0_8 = arith.constant 0 : index
    %19 = vector.load %arg5[%18, %c0_8] : memref<128x128xbf16, #tpu.memory_space<vmem>>, vector<128x128xbf16>
    tpu.vector_store %arg5[%18, %c0_8], %17 {strides = array<i32>} : memref<128x128xbf16, #tpu.memory_space<vmem>>, vector<128x128xbf16>,
    %c0_i32_9 = arith.constant 0 : i32
    %20 = arith.cmpi eq, %arg0, %c0_i32_9 : i32
    %21 = arith.extui %20 : i1 to i32
    %c0_i32_10 = arith.constant 0 : i32
    %22 = arith.cmpi ne, %21, %c0_i32_10 : i32
    scf.if %22 {
      %c0_11 = arith.constant 0 : index
      %c0_12 = arith.constant 0 : index
      %23 = vector.load %arg6[%c0_11, %c0_12] : memref<2x128xf32, #tpu.memory_space<vmem>>, vector<1x128xf32>
      %cst_13 = arith.constant 7.812500e-03 : f32
      %24 = vector.broadcast %cst_13 : f32 to vector<1x128xf32>
      %25 = arith.mulf %23, %24 : vector<1x128xf32>
      %c1 = arith.constant 1 : index
      %c0_14 = arith.constant 0 : index
      %26 = vector.load %arg6[%c1, %c0_14] : memref<2x128xf32, #tpu.memory_space<vmem>>, vector<1x128xf32>
      %cst_15 = arith.constant 7.812500e-03 : f32
      %27 = vector.broadcast %cst_15 : f32 to vector<1x128xf32>
      %28 = arith.mulf %26, %27 : vector<1x128xf32>
      %29 = arith.mulf %25, %25 : vector<1x128xf32>
      %30 = arith.subf %28, %29 : vector<1x128xf32>
      %cst_16 = arith.constant 9.99999974E-6 : f32
      %31 = vector.broadcast %cst_16 : f32 to vector<1x128xf32>
      %32 = arith.addf %30, %31 : vector<1x128xf32>
      %33 = math.rsqrt %32 : vector<1x128xf32>
      %c0_17 = arith.constant 0 : index
      %c0_18 = arith.constant 0 : index
      %34 = vector.load %arg3[%c0_17, %c0_18] : memref<1x128xf32, #tpu.memory_space<vmem>>, vector<1x128xf32>
      %35 = arith.mulf %33, %34 : vector<1x128xf32>
      %c0_19 = arith.constant 0 : index
      %c0_20 = arith.constant 0 : index
      %36 = vector.load %arg4[%c0_19, %c0_20] : memref<1x128xf32, #tpu.memory_space<vmem>>, vector<1x128xf32>
      %37 = arith.mulf %25, %35 : vector<1x128xf32>
      %38 = arith.subf %36, %37 : vector<1x128xf32>
      %c0_21 = arith.constant 0 : index
      %c0_22 = arith.constant 0 : index
      %39 = vector.load %arg5[%c0_21, %c0_22] : memref<128x128xbf16, #tpu.memory_space<vmem>>, vector<128x128xbf16>
      %40 = arith.extf %39 : vector<128x128xbf16> to vector<128x128xf32>
      %41 = vector.broadcast %35 : vector<1x128xf32> to vector<128x128xf32>
      %42 = arith.mulf %40, %41 : vector<128x128xf32>
      %43 = vector.broadcast %38 : vector<1x128xf32> to vector<128x128xf32>
      %44 = arith.addf %42, %43 : vector<128x128xf32>
      %cst_23 = arith.constant 0.000000e+00 : f32
      %45 = vector.broadcast %cst_23 : f32 to vector<128x128xf32>
      %46 = arith.maximumf %44, %45 : vector<128x128xf32>
      %47 = arith.truncf %46 : vector<128x128xf32> to vector<128x128xbf16>
      %c0_24 = arith.constant 0 : index
      %c0_25 = arith.constant 0 : index
      %48 = vector.load %arg5[%c0_24, %c0_25] : memref<128x128xbf16, #tpu.memory_space<vmem>>, vector<128x128xbf16>
      tpu.vector_store %arg5[%c0_24, %c0_25], %47 {strides = array<i32>} : memref<128x128xbf16, #tpu.memory_space<vmem>>, vector<128x128xbf16>,
    } else {
    }
    return
  }
  func.func @transform_0(%arg0: i32) -> (i32, i32) {
    %c0_i32 = arith.constant 0 : i32
    %c0_i32_0 = arith.constant 0 : i32
    return %arg0, %c0_i32 : i32, i32
  }
  func.func @transform_1(%arg0: i32) -> (i32, i32) {
    %c0_i32 = arith.constant 0 : i32
    %c0_i32_0 = arith.constant 0 : i32
    %c0_i32_1 = arith.constant 0 : i32
    return %c0_i32, %c0_i32_0 : i32, i32
  }
  func.func @transform_2(%arg0: i32) -> (i32, i32) {
    %c0_i32 = arith.constant 0 : i32
    %c0_i32_0 = arith.constant 0 : i32
    %c0_i32_1 = arith.constant 0 : i32
    return %c0_i32, %c0_i32_0 : i32, i32
  }
  func.func @transform_3(%arg0: i32) -> (i32, i32) {
    %c0_i32 = arith.constant 0 : i32
    %c0_i32_0 = arith.constant 0 : i32
    %c0_i32_1 = arith.constant 0 : i32
    return %c0_i32, %c0_i32_0 : i32, i32
  }
  func.func @transform_4(%arg0: i32) -> (i32, i32) {
    %c0_i32 = arith.constant 0 : i32
    %c0_i32_0 = arith.constant 0 : i32
    %c0_i32_1 = arith.constant 0 : i32
    return %c0_i32, %c0_i32_0 : i32, i32
  }
}

module attributes {stable_mosaic.version = 11 : i64} {
  func.func @_conv_bn_relu_kernel(%arg0: i32, %arg1: memref<32x1152xbf16, #tpu.memory_space<vmem>>, %arg2: memref<1152x256xbf16, #tpu.memory_space<vmem>>, %arg3: memref<1x256xf32, #tpu.memory_space<vmem>>, %arg4: memref<1x256xf32, #tpu.memory_space<vmem>>, %arg5: memref<32x256xbf16, #tpu.memory_space<vmem>>, %arg6: memref<2x256xf32, #tpu.memory_space<vmem>>) attributes {dimension_semantics = [#tpu.dimension_semantics<arbitrary>], iteration_bounds = array<i64: 1>, scalar_prefetch = 0 : i64, scratch_operands = 1 : i64, tpu.core_type = #tpu.core_type<tc>, window_params = [{transform_indices = @transform_0, window_bounds = array<i64: 32, 1152>}, {pipeline_mode = #tpu.pipeline_mode<synchronous>, transform_indices = @transform_1, window_bounds = array<i64: 1152, 256>}, {pipeline_mode = #tpu.pipeline_mode<synchronous>, transform_indices = @transform_2, window_bounds = array<i64: 1, 256>}, {pipeline_mode = #tpu.pipeline_mode<synchronous>, transform_indices = @transform_3, window_bounds = array<i64: 1, 256>}, {pipeline_mode = #tpu.pipeline_mode<synchronous>, transform_indices = @transform_4, window_bounds = array<i64: 32, 256>}]} {
    %c0 = arith.constant 0 : index
    %c0_0 = arith.constant 0 : index
    %0 = vector.load %arg1[%c0, %c0_0] : memref<32x1152xbf16, #tpu.memory_space<vmem>>, vector<32x1152xbf16>
    %c0_1 = arith.constant 0 : index
    %c0_2 = arith.constant 0 : index
    %1 = vector.load %arg2[%c0_1, %c0_2] : memref<1152x256xbf16, #tpu.memory_space<vmem>>, vector<1152x256xbf16>
    %cst = arith.constant dense<0.000000e+00> : vector<32x256xf32>
    %2 = tpu.matmul %0, %1, %cst {dimension_numbers = #tpu.dot_dimension_numbers<[1], [0], [0], [1], [0, 0, 1, 1], [], []>} : vector<32x1152xbf16>, vector<1152x256xbf16>, vector<32x256xf32> -> vector<32x256xf32>
    %cst_3 = arith.constant dense<0.000000e+00> : vector<256xf32>
    %3 = vector.multi_reduction <add>, %2, %cst_3 [0] : vector<32x256xf32> to vector<256xf32>
    %4 = vector.shape_cast %3 : vector<256xf32> to vector<1x256xf32>
    %5 = arith.mulf %2, %2 : vector<32x256xf32>
    %cst_4 = arith.constant dense<0.000000e+00> : vector<256xf32>
    %6 = vector.multi_reduction <add>, %5, %cst_4 [0] : vector<32x256xf32> to vector<256xf32>
    %7 = vector.shape_cast %6 : vector<256xf32> to vector<1x256xf32>
    %8 = tpu.concatenate %4, %7 in 0 : vector<1x256xf32>, vector<1x256xf32> -> vector<2x256xf32>
    %c0_i32 = arith.constant 0 : i32
    %9 = arith.cmpi eq, %arg0, %c0_i32 : i32
    %10 = arith.extui %9 : i1 to i32
    %c0_i32_5 = arith.constant 0 : i32
    %11 = arith.cmpi ne, %10, %c0_i32_5 : i32
    scf.if %11 {
      %c0_11 = arith.constant 0 : index
      %c0_12 = arith.constant 0 : index
      %23 = vector.load %arg6[%c0_11, %c0_12] : memref<2x256xf32, #tpu.memory_space<vmem>>, vector<2x256xf32>
      tpu.vector_store %arg6[%c0_11, %c0_12], %8 {strides = array<i32>} : memref<2x256xf32, #tpu.memory_space<vmem>>, vector<2x256xf32>,
    } else {
    }
    %c0_i32_6 = arith.constant 0 : i32
    %12 = arith.cmpi sgt, %arg0, %c0_i32_6 : i32
    %13 = arith.extui %12 : i1 to i32
    %c0_i32_7 = arith.constant 0 : i32
    %14 = arith.cmpi ne, %13, %c0_i32_7 : i32
    scf.if %14 {
      %c0_11 = arith.constant 0 : index
      %c0_12 = arith.constant 0 : index
      %23 = vector.load %arg6[%c0_11, %c0_12] : memref<2x256xf32, #tpu.memory_space<vmem>>, vector<2x256xf32>
      %24 = arith.addf %23, %8 : vector<2x256xf32>
      %c0_13 = arith.constant 0 : index
      %c0_14 = arith.constant 0 : index
      %25 = vector.load %arg6[%c0_13, %c0_14] : memref<2x256xf32, #tpu.memory_space<vmem>>, vector<2x256xf32>
      tpu.vector_store %arg6[%c0_13, %c0_14], %24 {strides = array<i32>} : memref<2x256xf32, #tpu.memory_space<vmem>>, vector<2x256xf32>,
    } else {
    }
    %c32_i32 = arith.constant 32 : i32
    %15 = arith.muli %arg0, %c32_i32 : i32
    %16 = tpu.assume_multiple %15, 32 : i32
    %17 = arith.truncf %2 : vector<32x256xf32> to vector<32x256xbf16>
    %18 = arith.index_cast %16 : i32 to index
    %c0_8 = arith.constant 0 : index
    %19 = vector.load %arg5[%18, %c0_8] : memref<32x256xbf16, #tpu.memory_space<vmem>>, vector<32x256xbf16>
    tpu.vector_store %arg5[%18, %c0_8], %17 {strides = array<i32>} : memref<32x256xbf16, #tpu.memory_space<vmem>>, vector<32x256xbf16>,
    %c0_i32_9 = arith.constant 0 : i32
    %20 = arith.cmpi eq, %arg0, %c0_i32_9 : i32
    %21 = arith.extui %20 : i1 to i32
    %c0_i32_10 = arith.constant 0 : i32
    %22 = arith.cmpi ne, %21, %c0_i32_10 : i32
    scf.if %22 {
      %c0_11 = arith.constant 0 : index
      %c0_12 = arith.constant 0 : index
      %23 = vector.load %arg6[%c0_11, %c0_12] : memref<2x256xf32, #tpu.memory_space<vmem>>, vector<1x256xf32>
      %cst_13 = arith.constant 3.125000e-02 : f32
      %24 = vector.broadcast %cst_13 : f32 to vector<1x256xf32>
      %25 = arith.mulf %23, %24 : vector<1x256xf32>
      %c1 = arith.constant 1 : index
      %c0_14 = arith.constant 0 : index
      %26 = vector.load %arg6[%c1, %c0_14] : memref<2x256xf32, #tpu.memory_space<vmem>>, vector<1x256xf32>
      %cst_15 = arith.constant 3.125000e-02 : f32
      %27 = vector.broadcast %cst_15 : f32 to vector<1x256xf32>
      %28 = arith.mulf %26, %27 : vector<1x256xf32>
      %29 = arith.mulf %25, %25 : vector<1x256xf32>
      %30 = arith.subf %28, %29 : vector<1x256xf32>
      %cst_16 = arith.constant 9.99999974E-6 : f32
      %31 = vector.broadcast %cst_16 : f32 to vector<1x256xf32>
      %32 = arith.addf %30, %31 : vector<1x256xf32>
      %33 = math.rsqrt %32 : vector<1x256xf32>
      %c0_17 = arith.constant 0 : index
      %c0_18 = arith.constant 0 : index
      %34 = vector.load %arg3[%c0_17, %c0_18] : memref<1x256xf32, #tpu.memory_space<vmem>>, vector<1x256xf32>
      %35 = arith.mulf %33, %34 : vector<1x256xf32>
      %c0_19 = arith.constant 0 : index
      %c0_20 = arith.constant 0 : index
      %36 = vector.load %arg4[%c0_19, %c0_20] : memref<1x256xf32, #tpu.memory_space<vmem>>, vector<1x256xf32>
      %37 = arith.mulf %25, %35 : vector<1x256xf32>
      %38 = arith.subf %36, %37 : vector<1x256xf32>
      %c0_21 = arith.constant 0 : index
      %c0_22 = arith.constant 0 : index
      %39 = vector.load %arg5[%c0_21, %c0_22] : memref<32x256xbf16, #tpu.memory_space<vmem>>, vector<32x256xbf16>
      %40 = arith.extf %39 : vector<32x256xbf16> to vector<32x256xf32>
      %41 = vector.broadcast %35 : vector<1x256xf32> to vector<32x256xf32>
      %42 = arith.mulf %40, %41 : vector<32x256xf32>
      %43 = vector.broadcast %38 : vector<1x256xf32> to vector<32x256xf32>
      %44 = arith.addf %42, %43 : vector<32x256xf32>
      %cst_23 = arith.constant 0.000000e+00 : f32
      %45 = vector.broadcast %cst_23 : f32 to vector<32x256xf32>
      %46 = arith.maximumf %44, %45 : vector<32x256xf32>
      %47 = arith.truncf %46 : vector<32x256xf32> to vector<32x256xbf16>
      %c0_24 = arith.constant 0 : index
      %c0_25 = arith.constant 0 : index
      %48 = vector.load %arg5[%c0_24, %c0_25] : memref<32x256xbf16, #tpu.memory_space<vmem>>, vector<32x256xbf16>
      tpu.vector_store %arg5[%c0_24, %c0_25], %47 {strides = array<i32>} : memref<32x256xbf16, #tpu.memory_space<vmem>>, vector<32x256xbf16>,
    } else {
    }
    return
  }
  func.func @transform_0(%arg0: i32) -> (i32, i32) {
    %c0_i32 = arith.constant 0 : i32
    %c0_i32_0 = arith.constant 0 : i32
    return %arg0, %c0_i32 : i32, i32
  }
  func.func @transform_1(%arg0: i32) -> (i32, i32) {
    %c0_i32 = arith.constant 0 : i32
    %c0_i32_0 = arith.constant 0 : i32
    %c0_i32_1 = arith.constant 0 : i32
    return %c0_i32, %c0_i32_0 : i32, i32
  }
  func.func @transform_2(%arg0: i32) -> (i32, i32) {
    %c0_i32 = arith.constant 0 : i32
    %c0_i32_0 = arith.constant 0 : i32
    %c0_i32_1 = arith.constant 0 : i32
    return %c0_i32, %c0_i32_0 : i32, i32
  }
  func.func @transform_3(%arg0: i32) -> (i32, i32) {
    %c0_i32 = arith.constant 0 : i32
    %c0_i32_0 = arith.constant 0 : i32
    %c0_i32_1 = arith.constant 0 : i32
    return %c0_i32, %c0_i32_0 : i32, i32
  }
  func.func @transform_4(%arg0: i32) -> (i32, i32) {
    %c0_i32 = arith.constant 0 : i32
    %c0_i32_0 = arith.constant 0 : i32
    %c0_i32_1 = arith.constant 0 : i32
    return %c0_i32, %c0_i32_0 : i32, i32
  }
}

module attributes {stable_mosaic.version = 11 : i64} {
  func.func @_conv_bn_relu_kernel(%arg0: i32, %arg1: memref<16x2304xbf16, #tpu.memory_space<vmem>>, %arg2: memref<2304x512xbf16, #tpu.memory_space<vmem>>, %arg3: memref<1x512xf32, #tpu.memory_space<vmem>>, %arg4: memref<1x512xf32, #tpu.memory_space<vmem>>, %arg5: memref<16x512xbf16, #tpu.memory_space<vmem>>, %arg6: memref<2x512xf32, #tpu.memory_space<vmem>>) attributes {dimension_semantics = [#tpu.dimension_semantics<arbitrary>], iteration_bounds = array<i64: 1>, scalar_prefetch = 0 : i64, scratch_operands = 1 : i64, tpu.core_type = #tpu.core_type<tc>, window_params = [{transform_indices = @transform_0, window_bounds = array<i64: 16, 2304>}, {pipeline_mode = #tpu.pipeline_mode<synchronous>, transform_indices = @transform_1, window_bounds = array<i64: 2304, 512>}, {pipeline_mode = #tpu.pipeline_mode<synchronous>, transform_indices = @transform_2, window_bounds = array<i64: 1, 512>}, {pipeline_mode = #tpu.pipeline_mode<synchronous>, transform_indices = @transform_3, window_bounds = array<i64: 1, 512>}, {pipeline_mode = #tpu.pipeline_mode<synchronous>, transform_indices = @transform_4, window_bounds = array<i64: 16, 512>}]} {
    %c0 = arith.constant 0 : index
    %c0_0 = arith.constant 0 : index
    %0 = vector.load %arg1[%c0, %c0_0] : memref<16x2304xbf16, #tpu.memory_space<vmem>>, vector<16x2304xbf16>
    %c0_1 = arith.constant 0 : index
    %c0_2 = arith.constant 0 : index
    %1 = vector.load %arg2[%c0_1, %c0_2] : memref<2304x512xbf16, #tpu.memory_space<vmem>>, vector<2304x512xbf16>
    %cst = arith.constant dense<0.000000e+00> : vector<16x512xf32>
    %2 = tpu.matmul %0, %1, %cst {dimension_numbers = #tpu.dot_dimension_numbers<[1], [0], [0], [1], [0, 0, 1, 1], [], []>} : vector<16x2304xbf16>, vector<2304x512xbf16>, vector<16x512xf32> -> vector<16x512xf32>
    %cst_3 = arith.constant dense<0.000000e+00> : vector<512xf32>
    %3 = vector.multi_reduction <add>, %2, %cst_3 [0] : vector<16x512xf32> to vector<512xf32>
    %4 = vector.shape_cast %3 : vector<512xf32> to vector<1x512xf32>
    %5 = arith.mulf %2, %2 : vector<16x512xf32>
    %cst_4 = arith.constant dense<0.000000e+00> : vector<512xf32>
    %6 = vector.multi_reduction <add>, %5, %cst_4 [0] : vector<16x512xf32> to vector<512xf32>
    %7 = vector.shape_cast %6 : vector<512xf32> to vector<1x512xf32>
    %8 = tpu.concatenate %4, %7 in 0 : vector<1x512xf32>, vector<1x512xf32> -> vector<2x512xf32>
    %c0_i32 = arith.constant 0 : i32
    %9 = arith.cmpi eq, %arg0, %c0_i32 : i32
    %10 = arith.extui %9 : i1 to i32
    %c0_i32_5 = arith.constant 0 : i32
    %11 = arith.cmpi ne, %10, %c0_i32_5 : i32
    scf.if %11 {
      %c0_11 = arith.constant 0 : index
      %c0_12 = arith.constant 0 : index
      %23 = vector.load %arg6[%c0_11, %c0_12] : memref<2x512xf32, #tpu.memory_space<vmem>>, vector<2x512xf32>
      tpu.vector_store %arg6[%c0_11, %c0_12], %8 {strides = array<i32>} : memref<2x512xf32, #tpu.memory_space<vmem>>, vector<2x512xf32>,
    } else {
    }
    %c0_i32_6 = arith.constant 0 : i32
    %12 = arith.cmpi sgt, %arg0, %c0_i32_6 : i32
    %13 = arith.extui %12 : i1 to i32
    %c0_i32_7 = arith.constant 0 : i32
    %14 = arith.cmpi ne, %13, %c0_i32_7 : i32
    scf.if %14 {
      %c0_11 = arith.constant 0 : index
      %c0_12 = arith.constant 0 : index
      %23 = vector.load %arg6[%c0_11, %c0_12] : memref<2x512xf32, #tpu.memory_space<vmem>>, vector<2x512xf32>
      %24 = arith.addf %23, %8 : vector<2x512xf32>
      %c0_13 = arith.constant 0 : index
      %c0_14 = arith.constant 0 : index
      %25 = vector.load %arg6[%c0_13, %c0_14] : memref<2x512xf32, #tpu.memory_space<vmem>>, vector<2x512xf32>
      tpu.vector_store %arg6[%c0_13, %c0_14], %24 {strides = array<i32>} : memref<2x512xf32, #tpu.memory_space<vmem>>, vector<2x512xf32>,
    } else {
    }
    %c16_i32 = arith.constant 16 : i32
    %15 = arith.muli %arg0, %c16_i32 : i32
    %16 = tpu.assume_multiple %15, 16 : i32
    %17 = arith.truncf %2 : vector<16x512xf32> to vector<16x512xbf16>
    %18 = arith.index_cast %16 : i32 to index
    %c0_8 = arith.constant 0 : index
    %19 = vector.load %arg5[%18, %c0_8] : memref<16x512xbf16, #tpu.memory_space<vmem>>, vector<16x512xbf16>
    tpu.vector_store %arg5[%18, %c0_8], %17 {strides = array<i32>} : memref<16x512xbf16, #tpu.memory_space<vmem>>, vector<16x512xbf16>,
    %c0_i32_9 = arith.constant 0 : i32
    %20 = arith.cmpi eq, %arg0, %c0_i32_9 : i32
    %21 = arith.extui %20 : i1 to i32
    %c0_i32_10 = arith.constant 0 : i32
    %22 = arith.cmpi ne, %21, %c0_i32_10 : i32
    scf.if %22 {
      %c0_11 = arith.constant 0 : index
      %c0_12 = arith.constant 0 : index
      %23 = vector.load %arg6[%c0_11, %c0_12] : memref<2x512xf32, #tpu.memory_space<vmem>>, vector<1x512xf32>
      %cst_13 = arith.constant 1.250000e-01 : f32
      %24 = vector.broadcast %cst_13 : f32 to vector<1x512xf32>
      %25 = arith.mulf %23, %24 : vector<1x512xf32>
      %c1 = arith.constant 1 : index
      %c0_14 = arith.constant 0 : index
      %26 = vector.load %arg6[%c1, %c0_14] : memref<2x512xf32, #tpu.memory_space<vmem>>, vector<1x512xf32>
      %cst_15 = arith.constant 1.250000e-01 : f32
      %27 = vector.broadcast %cst_15 : f32 to vector<1x512xf32>
      %28 = arith.mulf %26, %27 : vector<1x512xf32>
      %29 = arith.mulf %25, %25 : vector<1x512xf32>
      %30 = arith.subf %28, %29 : vector<1x512xf32>
      %cst_16 = arith.constant 9.99999974E-6 : f32
      %31 = vector.broadcast %cst_16 : f32 to vector<1x512xf32>
      %32 = arith.addf %30, %31 : vector<1x512xf32>
      %33 = math.rsqrt %32 : vector<1x512xf32>
      %c0_17 = arith.constant 0 : index
      %c0_18 = arith.constant 0 : index
      %34 = vector.load %arg3[%c0_17, %c0_18] : memref<1x512xf32, #tpu.memory_space<vmem>>, vector<1x512xf32>
      %35 = arith.mulf %33, %34 : vector<1x512xf32>
      %c0_19 = arith.constant 0 : index
      %c0_20 = arith.constant 0 : index
      %36 = vector.load %arg4[%c0_19, %c0_20] : memref<1x512xf32, #tpu.memory_space<vmem>>, vector<1x512xf32>
      %37 = arith.mulf %25, %35 : vector<1x512xf32>
      %38 = arith.subf %36, %37 : vector<1x512xf32>
      %c0_21 = arith.constant 0 : index
      %c0_22 = arith.constant 0 : index
      %39 = vector.load %arg5[%c0_21, %c0_22] : memref<16x512xbf16, #tpu.memory_space<vmem>>, vector<16x512xbf16>
      %40 = arith.extf %39 : vector<16x512xbf16> to vector<16x512xf32>
      %41 = vector.broadcast %35 : vector<1x512xf32> to vector<16x512xf32>
      %42 = arith.mulf %40, %41 : vector<16x512xf32>
      %43 = vector.broadcast %38 : vector<1x512xf32> to vector<16x512xf32>
      %44 = arith.addf %42, %43 : vector<16x512xf32>
      %cst_23 = arith.constant 0.000000e+00 : f32
      %45 = vector.broadcast %cst_23 : f32 to vector<16x512xf32>
      %46 = arith.maximumf %44, %45 : vector<16x512xf32>
      %47 = arith.truncf %46 : vector<16x512xf32> to vector<16x512xbf16>
      %c0_24 = arith.constant 0 : index
      %c0_25 = arith.constant 0 : index
      %48 = vector.load %arg5[%c0_24, %c0_25] : memref<16x512xbf16, #tpu.memory_space<vmem>>, vector<16x512xbf16>
      tpu.vector_store %arg5[%c0_24, %c0_25], %47 {strides = array<i32>} : memref<16x512xbf16, #tpu.memory_space<vmem>>, vector<16x512xbf16>,
    } else {
    }
    return
  }
  func.func @transform_0(%arg0: i32) -> (i32, i32) {
    %c0_i32 = arith.constant 0 : i32
    %c0_i32_0 = arith.constant 0 : i32
    return %arg0, %c0_i32 : i32, i32
  }
  func.func @transform_1(%arg0: i32) -> (i32, i32) {
    %c0_i32 = arith.constant 0 : i32
    %c0_i32_0 = arith.constant 0 : i32
    %c0_i32_1 = arith.constant 0 : i32
    return %c0_i32, %c0_i32_0 : i32, i32
  }
  func.func @transform_2(%arg0: i32) -> (i32, i32) {
    %c0_i32 = arith.constant 0 : i32
    %c0_i32_0 = arith.constant 0 : i32
    %c0_i32_1 = arith.constant 0 : i32
    return %c0_i32, %c0_i32_0 : i32, i32
  }
  func.func @transform_3(%arg0: i32) -> (i32, i32) {
    %c0_i32 = arith.constant 0 : i32
    %c0_i32_0 = arith.constant 0 : i32
    %c0_i32_1 = arith.constant 0 : i32
    return %c0_i32, %c0_i32_0 : i32, i32
  }
  func.func @transform_4(%arg0: i32) -> (i32, i32) {
    %c0_i32 = arith.constant 0 : i32
    %c0_i32_0 = arith.constant 0 : i32
    %c0_i32_1 = arith.constant 0 : i32
    return %c0_i32, %c0_i32_0 : i32, i32
  }
}

module attributes {stable_mosaic.version = 11 : i64} {
  func.func @_mlp_kernel(%arg0: i32, %arg1: memref<2x2048xbf16, #tpu.memory_space<vmem>>, %arg2: memref<2048x128xbf16, #tpu.memory_space<vmem>>, %arg3: memref<1x128xf32, #tpu.memory_space<vmem>>, %arg4: memref<128x128xbf16, #tpu.memory_space<vmem>>, %arg5: memref<1x128xf32, #tpu.memory_space<vmem>>, %arg6: memref<2x128xf32, #tpu.memory_space<vmem>>) attributes {dimension_semantics = [#tpu.dimension_semantics<arbitrary>], iteration_bounds = array<i64: 1>, scalar_prefetch = 0 : i64, scratch_operands = 0 : i64, tpu.core_type = #tpu.core_type<tc>, window_params = [{pipeline_mode = #tpu.pipeline_mode<synchronous>, transform_indices = @transform_0, window_bounds = array<i64: 2, 2048>}, {pipeline_mode = #tpu.pipeline_mode<synchronous>, transform_indices = @transform_1, window_bounds = array<i64: 2048, 128>}, {pipeline_mode = #tpu.pipeline_mode<synchronous>, transform_indices = @transform_2, window_bounds = array<i64: 1, 128>}, {pipeline_mode = #tpu.pipeline_mode<synchronous>, transform_indices = @transform_3, window_bounds = array<i64: 128, 128>}, {pipeline_mode = #tpu.pipeline_mode<synchronous>, transform_indices = @transform_4, window_bounds = array<i64: 1, 128>}, {pipeline_mode = #tpu.pipeline_mode<synchronous>, transform_indices = @transform_5, window_bounds = array<i64: 2, 128>}]} {
    %c0 = arith.constant 0 : index
    %c0_0 = arith.constant 0 : index
    %0 = vector.load %arg1[%c0, %c0_0] : memref<2x2048xbf16, #tpu.memory_space<vmem>>, vector<2x2048xbf16>
    %c0_1 = arith.constant 0 : index
    %c0_2 = arith.constant 0 : index
    %1 = vector.load %arg2[%c0_1, %c0_2] : memref<2048x128xbf16, #tpu.memory_space<vmem>>, vector<2048x128xbf16>
    %cst = arith.constant dense<0.000000e+00> : vector<2x128xf32>
    %2 = tpu.matmul %0, %1, %cst {dimension_numbers = #tpu.dot_dimension_numbers<[1], [0], [0], [1], [0, 0, 1, 1], [], []>} : vector<2x2048xbf16>, vector<2048x128xbf16>, vector<2x128xf32> -> vector<2x128xf32>
    %c0_3 = arith.constant 0 : index
    %c0_4 = arith.constant 0 : index
    %3 = vector.load %arg3[%c0_3, %c0_4] : memref<1x128xf32, #tpu.memory_space<vmem>>, vector<1x128xf32>
    %4 = vector.broadcast %3 : vector<1x128xf32> to vector<2x128xf32>
    %5 = arith.addf %2, %4 : vector<2x128xf32>
    %6 = arith.truncf %5 : vector<2x128xf32> to vector<2x128xbf16>
    %c0_5 = arith.constant 0 : index
    %c0_6 = arith.constant 0 : index
    %7 = vector.load %arg4[%c0_5, %c0_6] : memref<128x128xbf16, #tpu.memory_space<vmem>>, vector<128x128xbf16>
    %cst_7 = arith.constant dense<0.000000e+00> : vector<2x128xf32>
    %8 = tpu.matmul %6, %7, %cst_7 {dimension_numbers = #tpu.dot_dimension_numbers<[1], [0], [0], [1], [0, 0, 1, 1], [], []>} : vector<2x128xbf16>, vector<128x128xbf16>, vector<2x128xf32> -> vector<2x128xf32>
    %c0_8 = arith.constant 0 : index
    %c0_9 = arith.constant 0 : index
    %9 = vector.load %arg5[%c0_8, %c0_9] : memref<1x128xf32, #tpu.memory_space<vmem>>, vector<1x128xf32>
    %10 = vector.broadcast %9 : vector<1x128xf32> to vector<2x128xf32>
    %11 = arith.addf %8, %10 : vector<2x128xf32>
    %c0_10 = arith.constant 0 : index
    %c0_11 = arith.constant 0 : index
    %12 = vector.load %arg6[%c0_10, %c0_11] : memref<2x128xf32, #tpu.memory_space<vmem>>, vector<2x128xf32>
    tpu.vector_store %arg6[%c0_10, %c0_11], %11 {strides = array<i32>} : memref<2x128xf32, #tpu.memory_space<vmem>>, vector<2x128xf32>,
    return
  }
  func.func @transform_0(%arg0: i32) -> (i32, i32) {
    %c0_i32 = arith.constant 0 : i32
    %c0_i32_0 = arith.constant 0 : i32
    %c0_i32_1 = arith.constant 0 : i32
    return %c0_i32, %c0_i32_0 : i32, i32
  }
  func.func @transform_1(%arg0: i32) -> (i32, i32) {
    %c0_i32 = arith.constant 0 : i32
    %c0_i32_0 = arith.constant 0 : i32
    %c0_i32_1 = arith.constant 0 : i32
    return %c0_i32, %c0_i32_0 : i32, i32
  }
  func.func @transform_2(%arg0: i32) -> (i32, i32) {
    %c0_i32 = arith.constant 0 : i32
    %c0_i32_0 = arith.constant 0 : i32
    %c0_i32_1 = arith.constant 0 : i32
    return %c0_i32, %c0_i32_0 : i32, i32
  }
  func.func @transform_3(%arg0: i32) -> (i32, i32) {
    %c0_i32 = arith.constant 0 : i32
    %c0_i32_0 = arith.constant 0 : i32
    %c0_i32_1 = arith.constant 0 : i32
    return %c0_i32, %c0_i32_0 : i32, i32
  }
  func.func @transform_4(%arg0: i32) -> (i32, i32) {
    %c0_i32 = arith.constant 0 : i32
    %c0_i32_0 = arith.constant 0 : i32
    %c0_i32_1 = arith.constant 0 : i32
    return %c0_i32, %c0_i32_0 : i32, i32
  }
  func.func @transform_5(%arg0: i32) -> (i32, i32) {
    %c0_i32 = arith.constant 0 : i32
    %c0_i32_0 = arith.constant 0 : i32
    %c0_i32_1 = arith.constant 0 : i32
    return %c0_i32, %c0_i32_0 : i32, i32
  }
}

</mosaic_0001>

<llo_original>
// kernel: deep_cnn_forward.5
$region0: #{deep_cnn_forward.5}
  #allocation0 [shape = 'u32[]', space=smem, size = 0x4, offset = 0x4, fixed_abs, tag = 'smem constant byte address 0x4 - core index']
  #allocation1 [shape = 'u32[72,128]{1,0:T(1,128)}', space=vmem, size = 0x9000, scoped, tag = 'internal scratch']
  #allocation2 [shape = 'f32[2,128]{1,0:T(2,128)}', space=vmem, size = 0x400, scoped, tag = 'scratch operand']
  %s0 = inlined_call_operand.vmem [shape: bf16[512,32], index: 0, kind: input, shape index: {}]
  %s1 = inlined_call_operand.hbm [shape: bf16[32,128], index: 1, kind: input, shape index: {}]
  %s2 = inlined_call_operand.hbm [shape: f32[1,128], index: 2, kind: input, shape index: {}]
  %s3 = inlined_call_operand.hbm [shape: f32[1,128], index: 3, kind: input, shape index: {}]
  %s4 = inlined_call_operand.vmem [shape: bf16[512,128], index: 4, kind: output, shape index: {}]
  %s5 = sld [smem:[#allocation0]]
  $region50: #{deep_cnn_forward.5} parent=0
    _
  %s7 = ssub.s32 1, %s5
  %s8 = scalar_select 0, %s7, %s5
  $region1: #{deep_cnn_forward.5} parent=0
    #allocation3 [shape = 'u8[8192]{0}', space=vmem, size = 0x2000, scoped, tag = 'input window, operand 1, single buffered']
    #allocation4 [shape = 's32[1]{0}', space=sflag, size = 0x4, scoped, tag = 'scoped memory for deep_cnn_forward.5']
    #allocation5 [shape = 'u8[512]{0}', space=vmem, size = 0x400, scoped, tag = 'input window, operand 2, single buffered']
    #allocation6 [shape = 's32[1]{0}', space=sflag, size = 0x4, scoped, tag = 'scoped memory for deep_cnn_forward.5']
    #allocation7 [shape = 'u8[512]{0}', space=vmem, size = 0x400, scoped, tag = 'input window, operand 3, single buffered']
    %9 = vsyncpa [#allocation4], 0
    %10 = vsyncpa [#allocation6], 0
    // Predicated region
    $region2: #{deep_cnn_forward.5} parent=1 // pred_check
      _
    $region3: #{deep_cnn_forward.5} parent=1 // pred_check_branch
      %12 = sbr.rel (0) target = $region5
    $region4: #{deep_cnn_forward.5} parent=1 // pred_region
      _
    $region5: #{deep_cnn_forward.5} parent=1 // pred_fallthru
      _
    // Predicated region
    $region6: #{deep_cnn_forward.5} parent=1 // pred_check
      _
    $region7: #{deep_cnn_forward.5} parent=1 // pred_check_branch
      %14 = sbr.rel (0) target = $region9
    $region8: #{deep_cnn_forward.5} parent=1 // pred_region
      %16 = vsyncadd [#allocation4], 0
      %s17 = sshll.u32 %s1, 4
      %s18 = int_to_ptr.hbm [resolvable:$true] %s17
      %s19 = sshll.u32 [#allocation3], 4
      %s20 = int_to_ptr.vmem [resolvable:$true] %s19
      %25 = dma.hbm_to_vmem [thread:$0]  %s18, 256, %s20, [#allocation4], 64, 64, 4
    $region9: #{deep_cnn_forward.5} parent=1 // pred_fallthru
      _
    // Predicated region
    $region10: #{deep_cnn_forward.5} parent=1 // pred_check
      _
    $region11: #{deep_cnn_forward.5} parent=1 // pred_check_branch
      %27 = sbr.rel (0) target = $region13
    $region12: #{deep_cnn_forward.5} parent=1 // pred_region
      %29 = vsyncadd [#allocation6], 0
      %s31 = sshll.u32 %s2, 4
      %s32 = int_to_ptr.hbm [resolvable:$true] %s31
      %s33 = sshll.u32 [#allocation5], 4
      %s34 = int_to_ptr.vmem [resolvable:$true] %s33
      %36 = dma.hbm_to_vmem [thread:$0]  %s32, 16, %s34, [#allocation6]
    $region13: #{deep_cnn_forward.5} parent=1 // pred_fallthru
      _
    // Predicated region
    $region14: #{deep_cnn_forward.5} parent=1 // pred_check
      _
    $region15: #{deep_cnn_forward.5} parent=1 // pred_check_branch
      %38 = sbr.rel (0) target = $region17
    $region16: #{deep_cnn_forward.5} parent=1 // pred_region
      %40 = vsyncadd [#allocation6], 0
      %s42 = sshll.u32 %s3, 4
      %s43 = int_to_ptr.hbm [resolvable:$true] %s42
      %s44 = sshll.u32 [#allocation7], 4
      %s45 = int_to_ptr.vmem [resolvable:$true] %s44
      %47 = dma.hbm_to_vmem [thread:$0]  %s43, 16, %s45, [#allocation6]
    $region17: #{deep_cnn_forward.5} parent=1 // pred_fallthru
      _
    // Predicated region
    $region18: #{deep_cnn_forward.5} parent=1 // pred_check
      _
    $region19: #{deep_cnn_forward.5} parent=1 // pred_check_branch
      %49 = sbr.rel (0) target = $region21
    $region20: #{deep_cnn_forward.5} parent=1 // pred_region
      %51 = dma.done [#allocation4], 256
    $region21: #{deep_cnn_forward.5} parent=1 // pred_fallthru
      _
    // Predicated region
    $region22: #{deep_cnn_forward.5} parent=1 // pred_check
      _
    $region23: #{deep_cnn_forward.5} parent=1 // pred_check_branch
      %53 = sbr.rel (0) target = $region25
    $region24: #{deep_cnn_forward.5} parent=1 // pred_region
      %55 = dma.done [#allocation6], 16
    $region25: #{deep_cnn_forward.5} parent=1 // pred_fallthru
      _
    // Predicated region
    $region26: #{deep_cnn_forward.5} parent=1 // pred_check
      _
    $region27: #{deep_cnn_forward.5} parent=1 // pred_check_branch
      %57 = sbr.rel (0) target = $region29
    $region28: #{deep_cnn_forward.5} parent=1 // pred_region
      %59 = dma.done [#allocation6], 16
    $region29: #{deep_cnn_forward.5} parent=1 // pred_fallthru
      _
    %v61 = vld [vmem:[%s0] sm:$0xf]
    %v62 = vld [vmem:[%s0 + $0x4] sm:$0xf]
    %v63 = vld [vmem:[%s0 + $0x8] sm:$0xf]
    %v64 = vld [vmem:[%s0 + $0xc] sm:$0xf]
    %v65 = vld [vmem:[%s0 + $0x10] sm:$0xf]
    %v66 = vld [vmem:[%s0 + $0x14] sm:$0xf]
    %v67 = vld [vmem:[%s0 + $0x18] sm:$0xf]
    %v68 = vld [vmem:[%s0 + $0x1c] sm:$0xf]
    %v69 = vld [vmem:[%s0 + $0x20] sm:$0xf]
    %v70 = vld [vmem:[%s0 + $0x24] sm:$0xf]
    %v71 = vld [vmem:[%s0 + $0x28] sm:$0xf]
    %v72 = vld [vmem:[%s0 + $0x2c] sm:$0xf]
    %v73 = vld [vmem:[%s0 + $0x30] sm:$0xf]
    %v74 = vld [vmem:[%s0 + $0x34] sm:$0xf]
    %v75 = vld [vmem:[%s0 + $0x38] sm:$0xf]
    %v76 = vld [vmem:[%s0 + $0x3c] sm:$0xf]
    %v77 = vld [vmem:[%s0 + $0x40] sm:$0xf]
    %v78 = vld [vmem:[%s0 + $0x44] sm:$0xf]
    %v79 = vld [vmem:[%s0 + $0x48] sm:$0xf]
    %v80 = vld [vmem:[%s0 + $0x4c] sm:$0xf]
    %v81 = vld [vmem:[%s0 + $0x50] sm:$0xf]
    %v82 = vld [vmem:[%s0 + $0x54] sm:$0xf]
    %v83 = vld [vmem:[%s0 + $0x58] sm:$0xf]
    %v84 = vld [vmem:[%s0 + $0x5c] sm:$0xf]
    %v85 = vld [vmem:[%s0 + $0x60] sm:$0xf]
    %v86 = vld [vmem:[%s0 + $0x64] sm:$0xf]
    %v87 = vld [vmem:[%s0 + $0x68] sm:$0xf]
    %v88 = vld [vmem:[%s0 + $0x6c] sm:$0xf]
    %v89 = vld [vmem:[%s0 + $0x70] sm:$0xf]
    %v90 = vld [vmem:[%s0 + $0x74] sm:$0xf]
    %v91 = vld [vmem:[%s0 + $0x78] sm:$0xf]
    %v92 = vld [vmem:[%s0 + $0x7c] sm:$0xf]
    %v93 = vld [vmem:[%s0 + $0x80] sm:$0xf]
    %v94 = vld [vmem:[%s0 + $0x84] sm:$0xf]
    %v95 = vld [vmem:[%s0 + $0x88] sm:$0xf]
    %v96 = vld [vmem:[%s0 + $0x8c] sm:$0xf]
    %v97 = vld [vmem:[%s0 + $0x90] sm:$0xf]
    %v98 = vld [vmem:[%s0 + $0x94] sm:$0xf]
    %v99 = vld [vmem:[%s0 + $0x98] sm:$0xf]
    %v100 = vld [vmem:[%s0 + $0x9c] sm:$0xf]
    %v101 = vld [vmem:[%s0 + $0xa0] sm:$0xf]
    %v102 = vld [vmem:[%s0 + $0xa4] sm:$0xf]
    %v103 = vld [vmem:[%s0 + $0xa8] sm:$0xf]
    %v104 = vld [vmem:[%s0 + $0xac] sm:$0xf]
    %v105 = vld [vmem:[%s0 + $0xb0] sm:$0xf]
    %v106 = vld [vmem:[%s0 + $0xb4] sm:$0xf]
    %v107 = vld [vmem:[%s0 + $0xb8] sm:$0xf]
    %v108 = vld [vmem:[%s0 + $0xbc] sm:$0xf]
    %v109 = vld [vmem:[%s0 + $0xc0] sm:$0xf]
    %v110 = vld [vmem:[%s0 + $0xc4] sm:$0xf]
    %v111 = vld [vmem:[%s0 + $0xc8] sm:$0xf]
    %v112 = vld [vmem:[%s0 + $0xcc] sm:$0xf]
    %v113 = vld [vmem:[%s0 + $0xd0] sm:$0xf]
    %v114 = vld [vmem:[%s0 + $0xd4] sm:$0xf]
    %v115 = vld [vmem:[%s0 + $0xd8] sm:$0xf]
    %v116 = vld [vmem:[%s0 + $0xdc] sm:$0xf]
    %v117 = vld [vmem:[%s0 + $0xe0] sm:$0xf]
    %v118 = vld [vmem:[%s0 + $0xe4] sm:$0xf]
    %v119 = vld [vmem:[%s0 + $0xe8] sm:$0xf]
    %v120 = vld [vmem:[%s0 + $0xec] sm:$0xf]
    %v121 = vld [vmem:[%s0 + $0xf0] sm:$0xf]
    %v122 = vld [vmem:[%s0 + $0xf4] sm:$0xf]
    %v123 = vld [vmem:[%s0 + $0xf8] sm:$0xf]
    %v124 = vld [vmem:[%s0 + $0xfc] sm:$0xf]
    %v125 = vld [vmem:[#allocation3] sm:$0xf]
    %v126 = vld [vmem:[#allocation3 + $0x4] sm:$0xf]
    %v127 = vld [vmem:[#allocation3 + $0x8] sm:$0xf]
    %v128 = vld [vmem:[#allocation3 + $0xc] sm:$0xf]
    %v193 = vunpack.c.l.b16 %v61
    %v194 = vunpack.c.l.b16 %v62
    %v195 = vunpack.c.l.b16 %v63
    %v196 = vunpack.c.l.b16 %v64
    %v197 = vunpack.c.l.b16 %v65
    %v198 = vunpack.c.l.b16 %v66
    %v199 = vunpack.c.l.b16 %v67
    %v200 = vunpack.c.l.b16 %v68
    %v201 = vunpack.c.l.b16 %v69
    %v202 = vunpack.c.l.b16 %v70
    %v203 = vunpack.c.l.b16 %v71
    %v204 = vunpack.c.l.b16 %v72
    %v205 = vunpack.c.l.b16 %v73
    %v206 = vunpack.c.l.b16 %v74
    %v207 = vunpack.c.l.b16 %v75
    %v208 = vunpack.c.l.b16 %v76
    %v209 = vunpack.c.l.b16 %v77
    %v210 = vunpack.c.l.b16 %v78
    %v211 = vunpack.c.l.b16 %v79
    %v212 = vunpack.c.l.b16 %v80
    %v213 = vunpack.c.l.b16 %v81
    %v214 = vunpack.c.l.b16 %v82
    %v215 = vunpack.c.l.b16 %v83
    %v216 = vunpack.c.l.b16 %v84
    %v217 = vunpack.c.l.b16 %v85
    %v218 = vunpack.c.l.b16 %v86
    %v219 = vunpack.c.l.b16 %v87
    %v220 = vunpack.c.l.b16 %v88
    %v221 = vunpack.c.l.b16 %v89
    %v222 = vunpack.c.l.b16 %v90
    %v223 = vunpack.c.l.b16 %v91
    %v224 = vunpack.c.l.b16 %v92
    %v225 = vunpack.c.l.b16 %v93
    %v226 = vunpack.c.l.b16 %v94
    %v227 = vunpack.c.l.b16 %v95
    %v228 = vunpack.c.l.b16 %v96
    %v229 = vunpack.c.l.b16 %v97
    %v230 = vunpack.c.l.b16 %v98
    %v231 = vunpack.c.l.b16 %v99
    %v232 = vunpack.c.l.b16 %v100
    %v233 = vunpack.c.l.b16 %v101
    %v234 = vunpack.c.l.b16 %v102
    %v235 = vunpack.c.l.b16 %v103
    %v236 = vunpack.c.l.b16 %v104
    %v237 = vunpack.c.l.b16 %v105
    %v238 = vunpack.c.l.b16 %v106
    %v239 = vunpack.c.l.b16 %v107
    %v240 = vunpack.c.l.b16 %v108
    %v241 = vunpack.c.l.b16 %v109
    %v242 = vunpack.c.l.b16 %v110
    %v243 = vunpack.c.l.b16 %v111
    %v244 = vunpack.c.l.b16 %v112
    %v245 = vunpack.c.l.b16 %v113
    %v246 = vunpack.c.l.b16 %v114
    %v247 = vunpack.c.l.b16 %v115
    %v248 = vunpack.c.l.b16 %v116
    %v249 = vunpack.c.l.b16 %v117
    %v250 = vunpack.c.l.b16 %v118
    %v251 = vunpack.c.l.b16 %v119
    %v252 = vunpack.c.l.b16 %v120
    %v253 = vunpack.c.l.b16 %v121
    %v254 = vunpack.c.l.b16 %v122
    %v255 = vunpack.c.l.b16 %v123
    %v256 = vunpack.c.l.b16 %v124
    %v257 = vpack.c.b16 %v194, %v193
    %v258 = vpack.c.b16 %v196, %v195
    %v259 = vpack.c.b16 %v198, %v197
    %v260 = vpack.c.b16 %v200, %v199
    %v261 = vpack.c.b16 %v202, %v201
    %v262 = vpack.c.b16 %v204, %v203
    %v263 = vpack.c.b16 %v206, %v205
    %v264 = vpack.c.b16 %v208, %v207
    %v265 = vpack.c.b16 %v210, %v209
    %v266 = vpack.c.b16 %v212, %v211
    %v267 = vpack.c.b16 %v214, %v213
    %v268 = vpack.c.b16 %v216, %v215
    %v269 = vpack.c.b16 %v218, %v217
    %v270 = vpack.c.b16 %v220, %v219
    %v271 = vpack.c.b16 %v222, %v221
    %v272 = vpack.c.b16 %v224, %v223
    %v273 = vpack.c.b16 %v226, %v225
    %v274 = vpack.c.b16 %v228, %v227
    %v275 = vpack.c.b16 %v230, %v229
    %v276 = vpack.c.b16 %v232, %v231
    %v277 = vpack.c.b16 %v234, %v233
    %v278 = vpack.c.b16 %v236, %v235
    %v279 = vpack.c.b16 %v238, %v237
    %v280 = vpack.c.b16 %v240, %v239
    %v281 = vpack.c.b16 %v242, %v241
    %v282 = vpack.c.b16 %v244, %v243
    %v283 = vpack.c.b16 %v246, %v245
    %v284 = vpack.c.b16 %v248, %v247
    %v285 = vpack.c.b16 %v250, %v249
    %v286 = vpack.c.b16 %v252, %v251
    %v287 = vpack.c.b16 %v254, %v253
    %v288 = vpack.c.b16 %v256, %v255
    %v293 = vunpack.c.l.b16 %v125
    %v294 = vunpack.c.l.b16 %v126
    %v295 = vunpack.c.l.b16 %v127
    %v296 = vunpack.c.l.b16 %v128
    %v297 = vpack.c.b16 %v294, %v293
    %v298 = vpack.c.b16 %v296, %v295
    %vm301 = vcmask 261120
    %v303 = vsel %vm301, %v257, 0
    %v306 = vsel %vm301, %v258, 0
    %v309 = vsel %vm301, %v259, 0
    %v312 = vsel %vm301, %v260, 0
    %v315 = vsel %vm301, %v261, 0
    %v318 = vsel %vm301, %v262, 0
    %v321 = vsel %vm301, %v263, 0
    %v324 = vsel %vm301, %v264, 0
    %v327 = vsel %vm301, %v265, 0
    %v330 = vsel %vm301, %v266, 0
    %v333 = vsel %vm301, %v267, 0
    %v336 = vsel %vm301, %v268, 0
    %v339 = vsel %vm301, %v269, 0
    %v342 = vsel %vm301, %v270, 0
    %v345 = vsel %vm301, %v271, 0
    %v348 = vsel %vm301, %v272, 0
    %v351 = vsel %vm301, %v273, 0
    %v354 = vsel %vm301, %v274, 0
    %v357 = vsel %vm301, %v275, 0
    %v360 = vsel %vm301, %v276, 0
    %v363 = vsel %vm301, %v277, 0
    %v366 = vsel %vm301, %v278, 0
    %v369 = vsel %vm301, %v279, 0
    %v372 = vsel %vm301, %v280, 0
    %v375 = vsel %vm301, %v281, 0
    %v378 = vsel %vm301, %v282, 0
    %v381 = vsel %vm301, %v283, 0
    %v384 = vsel %vm301, %v284, 0
    %v387 = vsel %vm301, %v285, 0
    %v390 = vsel %vm301, %v286, 0
    %v393 = vsel %vm301, %v287, 0
    %v396 = vsel %vm301, %v288, 0
    %398 = vmatpush.bf16.msra.mxu0 0
    %399 = vmatpush.bf16.msra.mxu0 0
    %400 = vmatpush.bf16.msra.mxu0 0
    %401 = vmatpush.bf16.msra.mxu0 0
    %402 = vmatpush.bf16.msra.mxu0 0
    %403 = vmatpush.bf16.msra.mxu0 0
    %404 = vmatpush.bf16.msra.mxu0 %v298
    %405 = vmatpush.bf16.msra.mxu0 %v297
    %406 = vmatmul.bf16.gmra.mxu0 %v303
    %v407 = vpop.f32.mrf.mxu0
    %v408 = vadd.f32 0.0, %v407
    %v409 = vpop.f32.mrf.mxu0
    %v410 = vadd.f32 0.0, %v409
    %411 = vmatmul.bf16.gmra.mxu0 %v306
    %v412 = vpop.f32.mrf.mxu0
    %v413 = vadd.f32 0.0, %v412
    %v414 = vpop.f32.mrf.mxu0
    %v415 = vadd.f32 0.0, %v414
    %416 = vmatmul.bf16.gmra.mxu0 %v309
    %v417 = vpop.f32.mrf.mxu0
    %v418 = vadd.f32 0.0, %v417
    %v419 = vpop.f32.mrf.mxu0
    %v420 = vadd.f32 0.0, %v419
    %421 = vmatmul.bf16.gmra.mxu0 %v312
    %v422 = vpop.f32.mrf.mxu0
    %v423 = vadd.f32 0.0, %v422
    %v424 = vpop.f32.mrf.mxu0
    %v425 = vadd.f32 0.0, %v424
    %426 = vmatmul.bf16.gmra.mxu0 %v315
    %v427 = vpop.f32.mrf.mxu0
    %v428 = vadd.f32 0.0, %v427
    %v429 = vpop.f32.mrf.mxu0
    %v430 = vadd.f32 0.0, %v429
    %431 = vmatmul.bf16.gmra.mxu0 %v318
    %v432 = vpop.f32.mrf.mxu0
    %v433 = vadd.f32 0.0, %v432
    %v434 = vpop.f32.mrf.mxu0
    %v435 = vadd.f32 0.0, %v434
    %436 = vmatmul.bf16.gmra.mxu0 %v321
    %v437 = vpop.f32.mrf.mxu0
    %v438 = vadd.f32 0.0, %v437
    %v439 = vpop.f32.mrf.mxu0
    %v440 = vadd.f32 0.0, %v439
    %441 = vmatmul.bf16.gmra.mxu0 %v324
    %v442 = vpop.f32.mrf.mxu0
    %v443 = vadd.f32 0.0, %v442
    %v444 = vpop.f32.mrf.mxu0
    %v445 = vadd.f32 0.0, %v444
    %446 = vmatmul.bf16.gmra.mxu0 %v327
    %v447 = vpop.f32.mrf.mxu0
    %v448 = vadd.f32 0.0, %v447
    %v449 = vpop.f32.mrf.mxu0
    %v450 = vadd.f32 0.0, %v449
    %451 = vmatmul.bf16.gmra.mxu0 %v330
    %v452 = vpop.f32.mrf.mxu0
    %v453 = vadd.f32 0.0, %v452
    %v454 = vpop.f32.mrf.mxu0
    %v455 = vadd.f32 0.0, %v454
    %456 = vmatmul.bf16.gmra.mxu0 %v333
    %v457 = vpop.f32.mrf.mxu0
    %v458 = vadd.f32 0.0, %v457
    %v459 = vpop.f32.mrf.mxu0
    %v460 = vadd.f32 0.0, %v459
    %461 = vmatmul.bf16.gmra.mxu0 %v336
    %v462 = vpop.f32.mrf.mxu0
    %v463 = vadd.f32 0.0, %v462
    %v464 = vpop.f32.mrf.mxu0
    %v465 = vadd.f32 0.0, %v464
    %466 = vmatmul.bf16.gmra.mxu0 %v339
    %v467 = vpop.f32.mrf.mxu0
    %v468 = vadd.f32 0.0, %v467
    %v469 = vpop.f32.mrf.mxu0
    %v470 = vadd.f32 0.0, %v469
    %471 = vmatmul.bf16.gmra.mxu0 %v342
    %v472 = vpop.f32.mrf.mxu0
    %v473 = vadd.f32 0.0, %v472
    %v474 = vpop.f32.mrf.mxu0
    %v475 = vadd.f32 0.0, %v474
    %476 = vmatmul.bf16.gmra.mxu0 %v345
    %v477 = vpop.f32.mrf.mxu0
    %v478 = vadd.f32 0.0, %v477
    %v479 = vpop.f32.mrf.mxu0
    %v480 = vadd.f32 0.0, %v479
    %481 = vmatmul.bf16.gmra.mxu0 %v348
    %v482 = vpop.f32.mrf.mxu0
    %v483 = vadd.f32 0.0, %v482
    %v484 = vpop.f32.mrf.mxu0
    %v485 = vadd.f32 0.0, %v484
    %486 = vmatmul.bf16.gmra.mxu0 %v351
    %v487 = vpop.f32.mrf.mxu0
    %v488 = vadd.f32 0.0, %v487
    %v489 = vpop.f32.mrf.mxu0
    %v490 = vadd.f32 0.0, %v489
    %491 = vmatmul.bf16.gmra.mxu0 %v354
    %v492 = vpop.f32.mrf.mxu0
    %v493 = vadd.f32 0.0, %v492
    %v494 = vpop.f32.mrf.mxu0
    %v495 = vadd.f32 0.0, %v494
    %496 = vmatmul.bf16.gmra.mxu0 %v357
    %v497 = vpop.f32.mrf.mxu0
    %v498 = vadd.f32 0.0, %v497
    %v499 = vpop.f32.mrf.mxu0
    %v500 = vadd.f32 0.0, %v499
    %501 = vmatmul.bf16.gmra.mxu0 %v360
    %v502 = vpop.f32.mrf.mxu0
    %v503 = vadd.f32 0.0, %v502
    %v504 = vpop.f32.mrf.mxu0
    %v505 = vadd.f32 0.0, %v504
    %506 = vmatmul.bf16.gmra.mxu0 %v363
    %v507 = vpop.f32.mrf.mxu0
    %v508 = vadd.f32 0.0, %v507
    %v509 = vpop.f32.mrf.mxu0
    %v510 = vadd.f32 0.0, %v509
    %511 = vmatmul.bf16.gmra.mxu0 %v366
    %v512 = vpop.f32.mrf.mxu0
    %v513 = vadd.f32 0.0, %v512
    %v514 = vpop.f32.mrf.mxu0
    %v515 = vadd.f32 0.0, %v514
    %516 = vmatmul.bf16.gmra.mxu0 %v369
    %v517 = vpop.f32.mrf.mxu0
    %v518 = vadd.f32 0.0, %v517
    %v519 = vpop.f32.mrf.mxu0
    %v520 = vadd.f32 0.0, %v519
    %521 = vmatmul.bf16.gmra.mxu0 %v372
    %v522 = vpop.f32.mrf.mxu0
    %v523 = vadd.f32 0.0, %v522
    %v524 = vpop.f32.mrf.mxu0
    %v525 = vadd.f32 0.0, %v524
    %526 = vmatmul.bf16.gmra.mxu0 %v375
    %v527 = vpop.f32.mrf.mxu0
    %v528 = vadd.f32 0.0, %v527
    %v529 = vpop.f32.mrf.mxu0
    %v530 = vadd.f32 0.0, %v529
    %531 = vmatmul.bf16.gmra.mxu0 %v378
    %v532 = vpop.f32.mrf.mxu0
    %v533 = vadd.f32 0.0, %v532
    %v534 = vpop.f32.mrf.mxu0
    %v535 = vadd.f32 0.0, %v534
    %536 = vmatmul.bf16.gmra.mxu0 %v381
    %v537 = vpop.f32.mrf.mxu0
    %v538 = vadd.f32 0.0, %v537
    %v539 = vpop.f32.mrf.mxu0
    %v540 = vadd.f32 0.0, %v539
    %541 = vmatmul.bf16.gmra.mxu0 %v384
    %v542 = vpop.f32.mrf.mxu0
    %v543 = vadd.f32 0.0, %v542
    %v544 = vpop.f32.mrf.mxu0
    %v545 = vadd.f32 0.0, %v544
    %546 = vmatmul.bf16.gmra.mxu0 %v387
    %v547 = vpop.f32.mrf.mxu0
    %v548 = vadd.f32 0.0, %v547
    %v549 = vpop.f32.mrf.mxu0
    %v550 = vadd.f32 0.0, %v549
    %551 = vmatmul.bf16.gmra.mxu0 %v390
    %v552 = vpop.f32.mrf.mxu0
    %v553 = vadd.f32 0.0, %v552
    %v554 = vpop.f32.mrf.mxu0
    %v555 = vadd.f32 0.0, %v554
    %556 = vmatmul.bf16.gmra.mxu0 %v393
    %v557 = vpop.f32.mrf.mxu0
    %v558 = vadd.f32 0.0, %v557
    %v559 = vpop.f32.mrf.mxu0
    %v560 = vadd.f32 0.0, %v559
    %561 = vmatmul.bf16.gmra.mxu0 %v396
    %v562 = vpop.f32.mrf.mxu0
    %v563 = vadd.f32 0.0, %v562
    %v564 = vpop.f32.mrf.mxu0
    %v565 = vadd.f32 0.0, %v564
    %566 = vdwg.mxu0
    %v567 = vadd.f32 %v408, %v410
    %v568 = vadd.f32 %v567, %v413
    %v569 = vadd.f32 %v568, %v415
    %v570 = vadd.f32 %v569, %v418
    %v571 = vadd.f32 %v570, %v420
    %v572 = vadd.f32 %v571, %v423
    %v573 = vadd.f32 %v572, %v425
    %v574 = vadd.f32 %v573, %v428
    %v575 = vadd.f32 %v574, %v430
    %v576 = vadd.f32 %v575, %v433
    %v577 = vadd.f32 %v576, %v435
    %v578 = vadd.f32 %v577, %v438
    %v579 = vadd.f32 %v578, %v440
    %v580 = vadd.f32 %v579, %v443
    %v581 = vadd.f32 %v580, %v445
    %v582 = vadd.f32 %v581, %v448
    %v583 = vadd.f32 %v582, %v450
    %v584 = vadd.f32 %v583, %v453
    %v585 = vadd.f32 %v584, %v455
    %v586 = vadd.f32 %v585, %v458
    %v587 = vadd.f32 %v586, %v460
    %v588 = vadd.f32 %v587, %v463
    %v589 = vadd.f32 %v588, %v465
    %v590 = vadd.f32 %v589, %v468
    %v591 = vadd.f32 %v590, %v470
    %v592 = vadd.f32 %v591, %v473
    %v593 = vadd.f32 %v592, %v475
    %v594 = vadd.f32 %v593, %v478
    %v595 = vadd.f32 %v594, %v480
    %v596 = vadd.f32 %v595, %v483
    %v597 = vadd.f32 %v596, %v485
    %v598 = vadd.f32 %v597, %v488
    %v599 = vadd.f32 %v598, %v490
    %v600 = vadd.f32 %v599, %v493
    %v601 = vadd.f32 %v600, %v495
    %v602 = vadd.f32 %v601, %v498
    %v603 = vadd.f32 %v602, %v500
    %v604 = vadd.f32 %v603, %v503
    %v605 = vadd.f32 %v604, %v505
    %v606 = vadd.f32 %v605, %v508
    %v607 = vadd.f32 %v606, %v510
    %v608 = vadd.f32 %v607, %v513
    %v609 = vadd.f32 %v608, %v515
    %v610 = vadd.f32 %v609, %v518
    %v611 = vadd.f32 %v610, %v520
    %v612 = vadd.f32 %v611, %v523
    %v613 = vadd.f32 %v612, %v525
    %v614 = vadd.f32 %v613, %v528
    %v615 = vadd.f32 %v614, %v530
    %v616 = vadd.f32 %v615, %v533
    %v617 = vadd.f32 %v616, %v535
    %v618 = vadd.f32 %v617, %v538
    %v619 = vadd.f32 %v618, %v540
    %v620 = vadd.f32 %v619, %v543
    %v621 = vadd.f32 %v620, %v545
    %v622 = vadd.f32 %v621, %v548
    %v623 = vadd.f32 %v622, %v550
    %v624 = vadd.f32 %v623, %v553
    %v625 = vadd.f32 %v624, %v555
    %v626 = vadd.f32 %v625, %v558
    %v627 = vadd.f32 %v626, %v560
    %v628 = vadd.f32 %v627, %v563
    %v629 = vadd.f32 %v628, %v565
    %v630 = vrot.slane %v629, 4
    %v631 = vadd.f32 %v629, %v630
    %v632 = vrot.slane %v631, 2
    %v633 = vadd.f32 %v631, %v632
    %v634 = vrot.slane %v633, 1
    %v635 = vadd.f32 %v633, %v634
    %v636 = vmul.f32 %v408, %v408
    %v637 = vmul.f32 %v410, %v410
    %v638 = vmul.f32 %v413, %v413
    %v639 = vmul.f32 %v415, %v415
    %v640 = vmul.f32 %v418, %v418
    %v641 = vmul.f32 %v420, %v420
    %v642 = vmul.f32 %v423, %v423
    %v643 = vmul.f32 %v425, %v425
    %v644 = vmul.f32 %v428, %v428
    %v645 = vmul.f32 %v430, %v430
    %v646 = vmul.f32 %v433, %v433
    %v647 = vmul.f32 %v435, %v435
    %v648 = vmul.f32 %v438, %v438
    %v649 = vmul.f32 %v440, %v440
    %v650 = vmul.f32 %v443, %v443
    %v651 = vmul.f32 %v445, %v445
    %v652 = vmul.f32 %v448, %v448
    %v653 = vmul.f32 %v450, %v450
    %v654 = vmul.f32 %v453, %v453
    %v655 = vmul.f32 %v455, %v455
    %v656 = vmul.f32 %v458, %v458
    %v657 = vmul.f32 %v460, %v460
    %v658 = vmul.f32 %v463, %v463
    %v659 = vmul.f32 %v465, %v465
    %v660 = vmul.f32 %v468, %v468
    %v661 = vmul.f32 %v470, %v470
    %v662 = vmul.f32 %v473, %v473
    %v663 = vmul.f32 %v475, %v475
    %v664 = vmul.f32 %v478, %v478
    %v665 = vmul.f32 %v480, %v480
    %v666 = vmul.f32 %v483, %v483
    %v667 = vmul.f32 %v485, %v485
    %v668 = vmul.f32 %v488, %v488
    %v669 = vmul.f32 %v490, %v490
    %v670 = vmul.f32 %v493, %v493
    %v671 = vmul.f32 %v495, %v495
    %v672 = vmul.f32 %v498, %v498
    %v673 = vmul.f32 %v500, %v500
    %v674 = vmul.f32 %v503, %v503
    %v675 = vmul.f32 %v505, %v505
    %v676 = vmul.f32 %v508, %v508
    %v677 = vmul.f32 %v510, %v510
    %v678 = vmul.f32 %v513, %v513
    %v679 = vmul.f32 %v515, %v515
    %v680 = vmul.f32 %v518, %v518
    %v681 = vmul.f32 %v520, %v520
    %v682 = vmul.f32 %v523, %v523
    %v683 = vmul.f32 %v525, %v525
    %v684 = vmul.f32 %v528, %v528
    %v685 = vmul.f32 %v530, %v530
    %v686 = vmul.f32 %v533, %v533
    %v687 = vmul.f32 %v535, %v535
    %v688 = vmul.f32 %v538, %v538
    %v689 = vmul.f32 %v540, %v540
    %v690 = vmul.f32 %v543, %v543
    %v691 = vmul.f32 %v545, %v545
    %v692 = vmul.f32 %v548, %v548
    %v693 = vmul.f32 %v550, %v550
    %v694 = vmul.f32 %v553, %v553
    %v695 = vmul.f32 %v555, %v555
    %v696 = vmul.f32 %v558, %v558
    %v697 = vmul.f32 %v560, %v560
    %v698 = vmul.f32 %v563, %v563
    %v699 = vmul.f32 %v565, %v565
    %v700 = vadd.f32 %v636, %v637
    %v701 = vadd.f32 %v700, %v638
    %v702 = vadd.f32 %v701, %v639
    %v703 = vadd.f32 %v702, %v640
    %v704 = vadd.f32 %v703, %v641
    %v705 = vadd.f32 %v704, %v642
    %v706 = vadd.f32 %v705, %v643
    %v707 = vadd.f32 %v706, %v644
    %v708 = vadd.f32 %v707, %v645
    %v709 = vadd.f32 %v708, %v646
    %v710 = vadd.f32 %v709, %v647
    %v711 = vadd.f32 %v710, %v648
    %v712 = vadd.f32 %v711, %v649
    %v713 = vadd.f32 %v712, %v650
    %v714 = vadd.f32 %v713, %v651
    %v715 = vadd.f32 %v714, %v652
    %v716 = vadd.f32 %v715, %v653
    %v717 = vadd.f32 %v716, %v654
    %v718 = vadd.f32 %v717, %v655
    %v719 = vadd.f32 %v718, %v656
    %v720 = vadd.f32 %v719, %v657
    %v721 = vadd.f32 %v720, %v658
    %v722 = vadd.f32 %v721, %v659
    %v723 = vadd.f32 %v722, %v660
    %v724 = vadd.f32 %v723, %v661
    %v725 = vadd.f32 %v724, %v662
    %v726 = vadd.f32 %v725, %v663
    %v727 = vadd.f32 %v726, %v664
    %v728 = vadd.f32 %v727, %v665
    %v729 = vadd.f32 %v728, %v666
    %v730 = vadd.f32 %v729, %v667
    %v731 = vadd.f32 %v730, %v668
    %v732 = vadd.f32 %v731, %v669
    %v733 = vadd.f32 %v732, %v670
    %v734 = vadd.f32 %v733, %v671
    %v735 = vadd.f32 %v734, %v672
    %v736 = vadd.f32 %v735, %v673
    %v737 = vadd.f32 %v736, %v674
    %v738 = vadd.f32 %v737, %v675
    %v739 = vadd.f32 %v738, %v676
    %v740 = vadd.f32 %v739, %v677
    %v741 = vadd.f32 %v740, %v678
    %v742 = vadd.f32 %v741, %v679
    %v743 = vadd.f32 %v742, %v680
    %v744 = vadd.f32 %v743, %v681
    %v745 = vadd.f32 %v744, %v682
    %v746 = vadd.f32 %v745, %v683
    %v747 = vadd.f32 %v746, %v684
    %v748 = vadd.f32 %v747, %v685
    %v749 = vadd.f32 %v748, %v686
    %v750 = vadd.f32 %v749, %v687
    %v751 = vadd.f32 %v750, %v688
    %v752 = vadd.f32 %v751, %v689
    %v753 = vadd.f32 %v752, %v690
    %v754 = vadd.f32 %v753, %v691
    %v755 = vadd.f32 %v754, %v692
    %v756 = vadd.f32 %v755, %v693
    %v757 = vadd.f32 %v756, %v694
    %v758 = vadd.f32 %v757, %v695
    %v759 = vadd.f32 %v758, %v696
    %v760 = vadd.f32 %v759, %v697
    %v761 = vadd.f32 %v760, %v698
    %v762 = vadd.f32 %v761, %v699
    %v763 = vrot.slane %v762, 4
    %v764 = vadd.f32 %v762, %v763
    %v765 = vrot.slane %v764, 2
    %v766 = vadd.f32 %v764, %v765
    %v767 = vrot.slane %v766, 1
    %v768 = vadd.f32 %v766, %v767
    %vm769 = vcmask 1040384
    %v770 = vsel %vm769, %v635, %v768
    %p771 = scmp.eq.s32.totalorder 0, 0
    // Predicated region
    $region30: #{deep_cnn_forward.5} parent=1 // pred_check
      %p772 = pneg %p771
    $region31: #{deep_cnn_forward.5} parent=1 // pred_check_branch
      %774 = sbr.rel (%p772) target = $region33
    $region32: #{deep_cnn_forward.5} parent=1 // pred_region
      %775 = vst [vmem:[#allocation2] sm:$0x3] %v770
    $region33: #{deep_cnn_forward.5} parent=1 // pred_fallthru
      _
    %p776 = scmp.gt.s32.totalorder 0, 0
    // Predicated region
    $region34: #{deep_cnn_forward.5} parent=1 // pred_check
      %p777 = pneg %p776
    $region35: #{deep_cnn_forward.5} parent=1 // pred_check_branch
      %779 = sbr.rel (%p777) target = $region37
    $region36: #{deep_cnn_forward.5} parent=1 // pred_region
      %v780 = vld [vmem:[#allocation2] sm:$0x3]
      %v781 = vadd.f32 %v780, %v770
      %782 = vst [vmem:[#allocation2] sm:$0x3] %v781
    $region37: #{deep_cnn_forward.5} parent=1 // pred_fallthru
      _
    %s783 = smul.u32 0, 512
    %v784 = vpack.c.bf16 %v408, %v408
    %v785 = vpack.c.bf16 %v410, %v410
    %v786 = vpack.c.bf16 %v413, %v413
    %v787 = vpack.c.bf16 %v415, %v415
    %v788 = vpack.c.bf16 %v418, %v418
    %v789 = vpack.c.bf16 %v420, %v420
    %v790 = vpack.c.bf16 %v423, %v423
    %v791 = vpack.c.bf16 %v425, %v425
    %v792 = vpack.c.bf16 %v428, %v428
    %v793 = vpack.c.bf16 %v430, %v430
    %v794 = vpack.c.bf16 %v433, %v433
    %v795 = vpack.c.bf16 %v435, %v435
    %v796 = vpack.c.bf16 %v438, %v438
    %v797 = vpack.c.bf16 %v440, %v440
    %v798 = vpack.c.bf16 %v443, %v443
    %v799 = vpack.c.bf16 %v445, %v445
    %v800 = vpack.c.bf16 %v448, %v448
    %v801 = vpack.c.bf16 %v450, %v450
    %v802 = vpack.c.bf16 %v453, %v453
    %v803 = vpack.c.bf16 %v455, %v455
    %v804 = vpack.c.bf16 %v458, %v458
    %v805 = vpack.c.bf16 %v460, %v460
    %v806 = vpack.c.bf16 %v463, %v463
    %v807 = vpack.c.bf16 %v465, %v465
    %v808 = vpack.c.bf16 %v468, %v468
    %v809 = vpack.c.bf16 %v470, %v470
    %v810 = vpack.c.bf16 %v473, %v473
    %v811 = vpack.c.bf16 %v475, %v475
    %v812 = vpack.c.bf16 %v478, %v478
    %v813 = vpack.c.bf16 %v480, %v480
    %v814 = vpack.c.bf16 %v483, %v483
    %v815 = vpack.c.bf16 %v485, %v485
    %v816 = vpack.c.bf16 %v488, %v488
    %v817 = vpack.c.bf16 %v490, %v490
    %v818 = vpack.c.bf16 %v493, %v493
    %v819 = vpack.c.bf16 %v495, %v495
    %v820 = vpack.c.bf16 %v498, %v498
    %v821 = vpack.c.bf16 %v500, %v500
    %v822 = vpack.c.bf16 %v503, %v503
    %v823 = vpack.c.bf16 %v505, %v505
    %v824 = vpack.c.bf16 %v508, %v508
    %v825 = vpack.c.bf16 %v510, %v510
    %v826 = vpack.c.bf16 %v513, %v513
    %v827 = vpack.c.bf16 %v515, %v515
    %v828 = vpack.c.bf16 %v518, %v518
    %v829 = vpack.c.bf16 %v520, %v520
    %v830 = vpack.c.bf16 %v523, %v523
    %v831 = vpack.c.bf16 %v525, %v525
    %v832 = vpack.c.bf16 %v528, %v528
    %v833 = vpack.c.bf16 %v530, %v530
    %v834 = vpack.c.bf16 %v533, %v533
    %v835 = vpack.c.bf16 %v535, %v535
    %v836 = vpack.c.bf16 %v538, %v538
    %v837 = vpack.c.bf16 %v540, %v540
    %v838 = vpack.c.bf16 %v543, %v543
    %v839 = vpack.c.bf16 %v545, %v545
    %v840 = vpack.c.bf16 %v548, %v548
    %v841 = vpack.c.bf16 %v550, %v550
    %v842 = vpack.c.bf16 %v553, %v553
    %v843 = vpack.c.bf16 %v555, %v555
    %v844 = vpack.c.bf16 %v558, %v558
    %v845 = vpack.c.bf16 %v560, %v560
    %v846 = vpack.c.bf16 %v563, %v563
    %v847 = vpack.c.bf16 %v565, %v565
    %s848 = sshra.s32 %s783, 3
    %s849 = sand.u32 %s783, 7
    %s850 = smul.addr %s848, 4
    %s851 = scalar_lea.vmem %s4, %s850
    %852 = vst [vmem:[%s851] sm:$0xf] %v784
    %853 = vst [vmem:[%s851 + $0x4] sm:$0xf] %v785
    %854 = vst [vmem:[%s851 + $0x8] sm:$0xf] %v786
    %855 = vst [vmem:[%s851 + $0xc] sm:$0xf] %v787
    %856 = vst [vmem:[%s851 + $0x10] sm:$0xf] %v788
    %857 = vst [vmem:[%s851 + $0x14] sm:$0xf] %v789
    %858 = vst [vmem:[%s851 + $0x18] sm:$0xf] %v790
    %859 = vst [vmem:[%s851 + $0x1c] sm:$0xf] %v791
    %860 = vst [vmem:[%s851 + $0x20] sm:$0xf] %v792
    %861 = vst [vmem:[%s851 + $0x24] sm:$0xf] %v793
    %862 = vst [vmem:[%s851 + $0x28] sm:$0xf] %v794
    %863 = vst [vmem:[%s851 + $0x2c] sm:$0xf] %v795
    %864 = vst [vmem:[%s851 + $0x30] sm:$0xf] %v796
    %865 = vst [vmem:[%s851 + $0x34] sm:$0xf] %v797
    %866 = vst [vmem:[%s851 + $0x38] sm:$0xf] %v798
    %867 = vst [vmem:[%s851 + $0x3c] sm:$0xf] %v799
    %868 = vst [vmem:[%s851 + $0x40] sm:$0xf] %v800
    %869 = vst [vmem:[%s851 + $0x44] sm:$0xf] %v801
    %870 = vst [vmem:[%s851 + $0x48] sm:$0xf] %v802
    %871 = vst [vmem:[%s851 + $0x4c] sm:$0xf] %v803
    %872 = vst [vmem:[%s851 + $0x50] sm:$0xf] %v804
    %873 = vst [vmem:[%s851 + $0x54] sm:$0xf] %v805
    %874 = vst [vmem:[%s851 + $0x58] sm:$0xf] %v806
    %875 = vst [vmem:[%s851 + $0x5c] sm:$0xf] %v807
    %876 = vst [vmem:[%s851 + $0x60] sm:$0xf] %v808
    %877 = vst [vmem:[%s851 + $0x64] sm:$0xf] %v809
    %878 = vst [vmem:[%s851 + $0x68] sm:$0xf] %v810
    %879 = vst [vmem:[%s851 + $0x6c] sm:$0xf] %v811
    %880 = vst [vmem:[%s851 + $0x70] sm:$0xf] %v812
    %881 = vst [vmem:[%s851 + $0x74] sm:$0xf] %v813
    %882 = vst [vmem:[%s851 + $0x78] sm:$0xf] %v814
    %883 = vst [vmem:[%s851 + $0x7c] sm:$0xf] %v815
    %884 = vst [vmem:[%s851 + $0x80] sm:$0xf] %v816
    %885 = vst [vmem:[%s851 + $0x84] sm:$0xf] %v817
    %886 = vst [vmem:[%s851 + $0x88] sm:$0xf] %v818
    %887 = vst [vmem:[%s851 + $0x8c] sm:$0xf] %v819
    %888 = vst [vmem:[%s851 + $0x90] sm:$0xf] %v820
    %889 = vst [vmem:[%s851 + $0x94] sm:$0xf] %v821
    %890 = vst [vmem:[%s851 + $0x98] sm:$0xf] %v822
    %891 = vst [vmem:[%s851 + $0x9c] sm:$0xf] %v823
    %892 = vst [vmem:[%s851 + $0xa0] sm:$0xf] %v824
    %893 = vst [vmem:[%s851 + $0xa4] sm:$0xf] %v825
    %894 = vst [vmem:[%s851 + $0xa8] sm:$0xf] %v826
    %895 = vst [vmem:[%s851 + $0xac] sm:$0xf] %v827
    %896 = vst [vmem:[%s851 + $0xb0] sm:$0xf] %v828
    %897 = vst [vmem:[%s851 + $0xb4] sm:$0xf] %v829
    %898 = vst [vmem:[%s851 + $0xb8] sm:$0xf] %v830
    %899 = vst [vmem:[%s851 + $0xbc] sm:$0xf] %v831
    %900 = vst [vmem:[%s851 + $0xc0] sm:$0xf] %v832
    %901 = vst [vmem:[%s851 + $0xc4] sm:$0xf] %v833
    %902 = vst [vmem:[%s851 + $0xc8] sm:$0xf] %v834
    %903 = vst [vmem:[%s851 + $0xcc] sm:$0xf] %v835
    %904 = vst [vmem:[%s851 + $0xd0] sm:$0xf] %v836
    %905 = vst [vmem:[%s851 + $0xd4] sm:$0xf] %v837
    %906 = vst [vmem:[%s851 + $0xd8] sm:$0xf] %v838
    %907 = vst [vmem:[%s851 + $0xdc] sm:$0xf] %v839
    %908 = vst [vmem:[%s851 + $0xe0] sm:$0xf] %v840
    %909 = vst [vmem:[%s851 + $0xe4] sm:$0xf] %v841
    %910 = vst [vmem:[%s851 + $0xe8] sm:$0xf] %v842
    %911 = vst [vmem:[%s851 + $0xec] sm:$0xf] %v843
    %912 = vst [vmem:[%s851 + $0xf0] sm:$0xf] %v844
    %913 = vst [vmem:[%s851 + $0xf4] sm:$0xf] %v845
    %914 = vst [vmem:[%s851 + $0xf8] sm:$0xf] %v846
    %915 = vst [vmem:[%s851 + $0xfc] sm:$0xf] %v847
    // Predicated region
    $region38: #{deep_cnn_forward.5} parent=1 // pred_check
      %p916 = pneg %p771
    $region39: #{deep_cnn_forward.5} parent=1 // pred_check_branch
      %918 = sbr.rel (%p916) target = $region41
    $region40: #{deep_cnn_forward.5} parent=1 // pred_region
      %v919 = vld [vmem:[#allocation2] sm:$0x1]
      %v920 = vmul.f32 %v919, 0.001953125
      %v921 = vld [vmem:[#allocation2 + $0x1] sm:$0x1]
      %v922 = vmul.f32 %v921, 0.001953125
      %v923 = vmul.f32 %v920, %v920
      %v924 = vsub.f32 %v922, %v923
      %v925 = vadd.f32 %v924, 1e-05
      %v926 = vrsqrt.pop %v925
      %v927 = vmul.f32 %v926, %v925
      %v928 = vmul.f32 %v927, %v926
      %v929 = vmul.f32 0.5, %v928
      %v930 = vsub.f32 1.5, %v929
      %v931 = vmul.f32 %v926, %v930
      %vm932 = vweird.f32 %v925
      %vm933 = vweird.f32 %v926
      %vm934 = vmor %vm932, %vm933
      %v935 = vsel %vm934, %v926, %v931
      %v936 = vld [vmem:[#allocation5] sm:$0x1]
      %v937 = vmul.f32 %v935, %v936
      %v938 = vld [vmem:[#allocation7] sm:$0x1]
      %v939 = vmul.f32 %v920, %v937
      %v940 = vsub.f32 %v938, %v939
      %v941 = vld [vmem:[%s4] sm:$0xf]
      %v942 = vld [vmem:[%s4 + $0x4] sm:$0xf]
      %v943 = vld [vmem:[%s4 + $0x8] sm:$0xf]
      %v944 = vld [vmem:[%s4 + $0xc] sm:$0xf]
      %v945 = vld [vmem:[%s4 + $0x10] sm:$0xf]
      %v946 = vld [vmem:[%s4 + $0x14] sm:$0xf]
      %v947 = vld [vmem:[%s4 + $0x18] sm:$0xf]
      %v948 = vld [vmem:[%s4 + $0x1c] sm:$0xf]
      %v949 = vld [vmem:[%s4 + $0x20] sm:$0xf]
      %v950 = vld [vmem:[%s4 + $0x24] sm:$0xf]
      %v951 = vld [vmem:[%s4 + $0x28] sm:$0xf]
      %v952 = vld [vmem:[%s4 + $0x2c] sm:$0xf]
      %v953 = vld [vmem:[%s4 + $0x30] sm:$0xf]
      %v954 = vld [vmem:[%s4 + $0x34] sm:$0xf]
      %v955 = vld [vmem:[%s4 + $0x38] sm:$0xf]
      %v956 = vld [vmem:[%s4 + $0x3c] sm:$0xf]
      %v957 = vld [vmem:[%s4 + $0x40] sm:$0xf]
      %v958 = vld [vmem:[%s4 + $0x44] sm:$0xf]
      %v959 = vld [vmem:[%s4 + $0x48] sm:$0xf]
      %v960 = vld [vmem:[%s4 + $0x4c] sm:$0xf]
      %v961 = vld [vmem:[%s4 + $0x50] sm:$0xf]
      %v962 = vld [vmem:[%s4 + $0x54] sm:$0xf]
      %v963 = vld [vmem:[%s4 + $0x58] sm:$0xf]
      %v964 = vld [vmem:[%s4 + $0x5c] sm:$0xf]
      %v965 = vld [vmem:[%s4 + $0x60] sm:$0xf]
      %v966 = vld [vmem:[%s4 + $0x64] sm:$0xf]
      %v967 = vld [vmem:[%s4 + $0x68] sm:$0xf]
      %v968 = vld [vmem:[%s4 + $0x6c] sm:$0xf]
      %v969 = vld [vmem:[%s4 + $0x70] sm:$0xf]
      %v970 = vld [vmem:[%s4 + $0x74] sm:$0xf]
      %v971 = vld [vmem:[%s4 + $0x78] sm:$0xf]
      %v972 = vld [vmem:[%s4 + $0x7c] sm:$0xf]
      %v973 = vld [vmem:[%s4 + $0x80] sm:$0xf]
      %v974 = vld [vmem:[%s4 + $0x84] sm:$0xf]
      %v975 = vld [vmem:[%s4 + $0x88] sm:$0xf]
      %v976 = vld [vmem:[%s4 + $0x8c] sm:$0xf]
      %v977 = vld [vmem:[%s4 + $0x90] sm:$0xf]
      %v978 = vld [vmem:[%s4 + $0x94] sm:$0xf]
      %v979 = vld [vmem:[%s4 + $0x98] sm:$0xf]
      %v980 = vld [vmem:[%s4 + $0x9c] sm:$0xf]
      %v981 = vld [vmem:[%s4 + $0xa0] sm:$0xf]
      %v982 = vld [vmem:[%s4 + $0xa4] sm:$0xf]
      %v983 = vld [vmem:[%s4 + $0xa8] sm:$0xf]
      %v984 = vld [vmem:[%s4 + $0xac] sm:$0xf]
      %v985 = vld [vmem:[%s4 + $0xb0] sm:$0xf]
      %v986 = vld [vmem:[%s4 + $0xb4] sm:$0xf]
      %v987 = vld [vmem:[%s4 + $0xb8] sm:$0xf]
      %v988 = vld [vmem:[%s4 + $0xbc] sm:$0xf]
      %v989 = vld [vmem:[%s4 + $0xc0] sm:$0xf]
      %v990 = vld [vmem:[%s4 + $0xc4] sm:$0xf]
      %v991 = vld [vmem:[%s4 + $0xc8] sm:$0xf]
      %v992 = vld [vmem:[%s4 + $0xcc] sm:$0xf]
      %v993 = vld [vmem:[%s4 + $0xd0] sm:$0xf]
      %v994 = vld [vmem:[%s4 + $0xd4] sm:$0xf]
      %v995 = vld [vmem:[%s4 + $0xd8] sm:$0xf]
      %v996 = vld [vmem:[%s4 + $0xdc] sm:$0xf]
      %v997 = vld [vmem:[%s4 + $0xe0] sm:$0xf]
      %v998 = vld [vmem:[%s4 + $0xe4] sm:$0xf]
      %v999 = vld [vmem:[%s4 + $0xe8] sm:$0xf]
      %v1000 = vld [vmem:[%s4 + $0xec] sm:$0xf]
      %v1001 = vld [vmem:[%s4 + $0xf0] sm:$0xf]
      %v1002 = vld [vmem:[%s4 + $0xf4] sm:$0xf]
      %v1003 = vld [vmem:[%s4 + $0xf8] sm:$0xf]
      %v1004 = vld [vmem:[%s4 + $0xfc] sm:$0xf]
      %v1005 = vunpack.c.l.bf16 %v941
      %v1006 = vunpack.c.l.bf16 %v942
      %v1007 = vunpack.c.l.bf16 %v943
      %v1008 = vunpack.c.l.bf16 %v944
      %v1009 = vunpack.c.l.bf16 %v945
      %v1010 = vunpack.c.l.bf16 %v946
      %v1011 = vunpack.c.l.bf16 %v947
      %v1012 = vunpack.c.l.bf16 %v948
      %v1013 = vunpack.c.l.bf16 %v949
      %v1014 = vunpack.c.l.bf16 %v950
      %v1015 = vunpack.c.l.bf16 %v951
      %v1016 = vunpack.c.l.bf16 %v952
      %v1017 = vunpack.c.l.bf16 %v953
      %v1018 = vunpack.c.l.bf16 %v954
      %v1019 = vunpack.c.l.bf16 %v955
      %v1020 = vunpack.c.l.bf16 %v956
      %v1021 = vunpack.c.l.bf16 %v957
      %v1022 = vunpack.c.l.bf16 %v958
      %v1023 = vunpack.c.l.bf16 %v959
      %v1024 = vunpack.c.l.bf16 %v960
      %v1025 = vunpack.c.l.bf16 %v961
      %v1026 = vunpack.c.l.bf16 %v962
      %v1027 = vunpack.c.l.bf16 %v963
      %v1028 = vunpack.c.l.bf16 %v964
      %v1029 = vunpack.c.l.bf16 %v965
      %v1030 = vunpack.c.l.bf16 %v966
      %v1031 = vunpack.c.l.bf16 %v967
      %v1032 = vunpack.c.l.bf16 %v968
      %v1033 = vunpack.c.l.bf16 %v969
      %v1034 = vunpack.c.l.bf16 %v970
      %v1035 = vunpack.c.l.bf16 %v971
      %v1036 = vunpack.c.l.bf16 %v972
      %v1037 = vunpack.c.l.bf16 %v973
      %v1038 = vunpack.c.l.bf16 %v974
      %v1039 = vunpack.c.l.bf16 %v975
      %v1040 = vunpack.c.l.bf16 %v976
      %v1041 = vunpack.c.l.bf16 %v977
      %v1042 = vunpack.c.l.bf16 %v978
      %v1043 = vunpack.c.l.bf16 %v979
      %v1044 = vunpack.c.l.bf16 %v980
      %v1045 = vunpack.c.l.bf16 %v981
      %v1046 = vunpack.c.l.bf16 %v982
      %v1047 = vunpack.c.l.bf16 %v983
      %v1048 = vunpack.c.l.bf16 %v984
      %v1049 = vunpack.c.l.bf16 %v985
      %v1050 = vunpack.c.l.bf16 %v986
      %v1051 = vunpack.c.l.bf16 %v987
      %v1052 = vunpack.c.l.bf16 %v988
      %v1053 = vunpack.c.l.bf16 %v989
      %v1054 = vunpack.c.l.bf16 %v990
      %v1055 = vunpack.c.l.bf16 %v991
      %v1056 = vunpack.c.l.bf16 %v992
      %v1057 = vunpack.c.l.bf16 %v993
      %v1058 = vunpack.c.l.bf16 %v994
      %v1059 = vunpack.c.l.bf16 %v995
      %v1060 = vunpack.c.l.bf16 %v996
      %v1061 = vunpack.c.l.bf16 %v997
      %v1062 = vunpack.c.l.bf16 %v998
      %v1063 = vunpack.c.l.bf16 %v999
      %v1064 = vunpack.c.l.bf16 %v1000
      %v1065 = vunpack.c.l.bf16 %v1001
      %v1066 = vunpack.c.l.bf16 %v1002
      %v1067 = vunpack.c.l.bf16 %v1003
      %v1068 = vunpack.c.l.bf16 %v1004
      %v1069 = vperm.slane %v937, 0
      %v1070 = vmul.f32 %v1005, %v1069
      %v1071 = vmul.f32 %v1006, %v1069
      %v1072 = vmul.f32 %v1007, %v1069
      %v1073 = vmul.f32 %v1008, %v1069
      %v1074 = vmul.f32 %v1009, %v1069
      %v1075 = vmul.f32 %v1010, %v1069
      %v1076 = vmul.f32 %v1011, %v1069
      %v1077 = vmul.f32 %v1012, %v1069
      %v1078 = vmul.f32 %v1013, %v1069
      %v1079 = vmul.f32 %v1014, %v1069
      %v1080 = vmul.f32 %v1015, %v1069
      %v1081 = vmul.f32 %v1016, %v1069
      %v1082 = vmul.f32 %v1017, %v1069
      %v1083 = vmul.f32 %v1018, %v1069
      %v1084 = vmul.f32 %v1019, %v1069
      %v1085 = vmul.f32 %v1020, %v1069
      %v1086 = vmul.f32 %v1021, %v1069
      %v1087 = vmul.f32 %v1022, %v1069
      %v1088 = vmul.f32 %v1023, %v1069
      %v1089 = vmul.f32 %v1024, %v1069
      %v1090 = vmul.f32 %v1025, %v1069
      %v1091 = vmul.f32 %v1026, %v1069
      %v1092 = vmul.f32 %v1027, %v1069
      %v1093 = vmul.f32 %v1028, %v1069
      %v1094 = vmul.f32 %v1029, %v1069
      %v1095 = vmul.f32 %v1030, %v1069
      %v1096 = vmul.f32 %v1031, %v1069
      %v1097 = vmul.f32 %v1032, %v1069
      %v1098 = vmul.f32 %v1033, %v1069
      %v1099 = vmul.f32 %v1034, %v1069
      %v1100 = vmul.f32 %v1035, %v1069
      %v1101 = vmul.f32 %v1036, %v1069
      %v1102 = vmul.f32 %v1037, %v1069
      %v1103 = vmul.f32 %v1038, %v1069
      %v1104 = vmul.f32 %v1039, %v1069
      %v1105 = vmul.f32 %v1040, %v1069
      %v1106 = vmul.f32 %v1041, %v1069
      %v1107 = vmul.f32 %v1042, %v1069
      %v1108 = vmul.f32 %v1043, %v1069
      %v1109 = vmul.f32 %v1044, %v1069
      %v1110 = vmul.f32 %v1045, %v1069
      %v1111 = vmul.f32 %v1046, %v1069
      %v1112 = vmul.f32 %v1047, %v1069
      %v1113 = vmul.f32 %v1048, %v1069
      %v1114 = vmul.f32 %v1049, %v1069
      %v1115 = vmul.f32 %v1050, %v1069
      %v1116 = vmul.f32 %v1051, %v1069
      %v1117 = vmul.f32 %v1052, %v1069
      %v1118 = vmul.f32 %v1053, %v1069
      %v1119 = vmul.f32 %v1054, %v1069
      %v1120 = vmul.f32 %v1055, %v1069
      %v1121 = vmul.f32 %v1056, %v1069
      %v1122 = vmul.f32 %v1057, %v1069
      %v1123 = vmul.f32 %v1058, %v1069
      %v1124 = vmul.f32 %v1059, %v1069
      %v1125 = vmul.f32 %v1060, %v1069
      %v1126 = vmul.f32 %v1061, %v1069
      %v1127 = vmul.f32 %v1062, %v1069
      %v1128 = vmul.f32 %v1063, %v1069
      %v1129 = vmul.f32 %v1064, %v1069
      %v1130 = vmul.f32 %v1065, %v1069
      %v1131 = vmul.f32 %v1066, %v1069
      %v1132 = vmul.f32 %v1067, %v1069
      %v1133 = vmul.f32 %v1068, %v1069
      %v1135 = vperm.slane %v940, 0
      %v1137 = vadd.f32 %v1070, %v1135
      %v1138 = vadd.f32 %v1071, %v1135
      %v1139 = vadd.f32 %v1072, %v1135
      %v1140 = vadd.f32 %v1073, %v1135
      %v1141 = vadd.f32 %v1074, %v1135
      %v1142 = vadd.f32 %v1075, %v1135
      %v1143 = vadd.f32 %v1076, %v1135
      %v1144 = vadd.f32 %v1077, %v1135
      %v1145 = vadd.f32 %v1078, %v1135
      %v1146 = vadd.f32 %v1079, %v1135
      %v1147 = vadd.f32 %v1080, %v1135
      %v1148 = vadd.f32 %v1081, %v1135
      %v1149 = vadd.f32 %v1082, %v1135
      %v1150 = vadd.f32 %v1083, %v1135
      %v1151 = vadd.f32 %v1084, %v1135
      %v1152 = vadd.f32 %v1085, %v1135
      %v1153 = vadd.f32 %v1086, %v1135
      %v1154 = vadd.f32 %v1087, %v1135
      %v1155 = vadd.f32 %v1088, %v1135
      %v1156 = vadd.f32 %v1089, %v1135
      %v1157 = vadd.f32 %v1090, %v1135
      %v1158 = vadd.f32 %v1091, %v1135
      %v1159 = vadd.f32 %v1092, %v1135
      %v1160 = vadd.f32 %v1093, %v1135
      %v1161 = vadd.f32 %v1094, %v1135
      %v1162 = vadd.f32 %v1095, %v1135
      %v1163 = vadd.f32 %v1096, %v1135
      %v1164 = vadd.f32 %v1097, %v1135
      %v1165 = vadd.f32 %v1098, %v1135
      %v1166 = vadd.f32 %v1099, %v1135
      %v1167 = vadd.f32 %v1100, %v1135
      %v1168 = vadd.f32 %v1101, %v1135
      %v1169 = vadd.f32 %v1102, %v1135
      %v1170 = vadd.f32 %v1103, %v1135
      %v1171 = vadd.f32 %v1104, %v1135
      %v1172 = vadd.f32 %v1105, %v1135
      %v1173 = vadd.f32 %v1106, %v1135
      %v1174 = vadd.f32 %v1107, %v1135
      %v1175 = vadd.f32 %v1108, %v1135
      %v1176 = vadd.f32 %v1109, %v1135
      %v1177 = vadd.f32 %v1110, %v1135
      %v1178 = vadd.f32 %v1111, %v1135
      %v1179 = vadd.f32 %v1112, %v1135
      %v1180 = vadd.f32 %v1113, %v1135
      %v1181 = vadd.f32 %v1114, %v1135
      %v1182 = vadd.f32 %v1115, %v1135
      %v1183 = vadd.f32 %v1116, %v1135
      %v1184 = vadd.f32 %v1117, %v1135
      %v1185 = vadd.f32 %v1118, %v1135
      %v1186 = vadd.f32 %v1119, %v1135
      %v1187 = vadd.f32 %v1120, %v1135
      %v1188 = vadd.f32 %v1121, %v1135
      %v1189 = vadd.f32 %v1122, %v1135
      %v1190 = vadd.f32 %v1123, %v1135
      %v1191 = vadd.f32 %v1124, %v1135
      %v1192 = vadd.f32 %v1125, %v1135
      %v1193 = vadd.f32 %v1126, %v1135
      %v1194 = vadd.f32 %v1127, %v1135
      %v1195 = vadd.f32 %v1128, %v1135
      %v1196 = vadd.f32 %v1129, %v1135
      %v1197 = vadd.f32 %v1130, %v1135
      %v1198 = vadd.f32 %v1131, %v1135
      %v1199 = vadd.f32 %v1132, %v1135
      %v1200 = vadd.f32 %v1133, %v1135
      %v1201 = vmax.f32 %v1137, 0.0
      %v1202 = vmax.f32 %v1138, 0.0
      %v1203 = vmax.f32 %v1139, 0.0
      %v1204 = vmax.f32 %v1140, 0.0
      %v1205 = vmax.f32 %v1141, 0.0
      %v1206 = vmax.f32 %v1142, 0.0
      %v1207 = vmax.f32 %v1143, 0.0
      %v1208 = vmax.f32 %v1144, 0.0
      %v1209 = vmax.f32 %v1145, 0.0
      %v1210 = vmax.f32 %v1146, 0.0
      %v1211 = vmax.f32 %v1147, 0.0
      %v1212 = vmax.f32 %v1148, 0.0
      %v1213 = vmax.f32 %v1149, 0.0
      %v1214 = vmax.f32 %v1150, 0.0
      %v1215 = vmax.f32 %v1151, 0.0
      %v1216 = vmax.f32 %v1152, 0.0
      %v1217 = vmax.f32 %v1153, 0.0
      %v1218 = vmax.f32 %v1154, 0.0
      %v1219 = vmax.f32 %v1155, 0.0
      %v1220 = vmax.f32 %v1156, 0.0
      %v1221 = vmax.f32 %v1157, 0.0
      %v1222 = vmax.f32 %v1158, 0.0
      %v1223 = vmax.f32 %v1159, 0.0
      %v1224 = vmax.f32 %v1160, 0.0
      %v1225 = vmax.f32 %v1161, 0.0
      %v1226 = vmax.f32 %v1162, 0.0
      %v1227 = vmax.f32 %v1163, 0.0
      %v1228 = vmax.f32 %v1164, 0.0
      %v1229 = vmax.f32 %v1165, 0.0
      %v1230 = vmax.f32 %v1166, 0.0
      %v1231 = vmax.f32 %v1167, 0.0
      %v1232 = vmax.f32 %v1168, 0.0
      %v1233 = vmax.f32 %v1169, 0.0
      %v1234 = vmax.f32 %v1170, 0.0
      %v1235 = vmax.f32 %v1171, 0.0
      %v1236 = vmax.f32 %v1172, 0.0
      %v1237 = vmax.f32 %v1173, 0.0
      %v1238 = vmax.f32 %v1174, 0.0
      %v1239 = vmax.f32 %v1175, 0.0
      %v1240 = vmax.f32 %v1176, 0.0
      %v1241 = vmax.f32 %v1177, 0.0
      %v1242 = vmax.f32 %v1178, 0.0
      %v1243 = vmax.f32 %v1179, 0.0
      %v1244 = vmax.f32 %v1180, 0.0
      %v1245 = vmax.f32 %v1181, 0.0
      %v1246 = vmax.f32 %v1182, 0.0
      %v1247 = vmax.f32 %v1183, 0.0
      %v1248 = vmax.f32 %v1184, 0.0
      %v1249 = vmax.f32 %v1185, 0.0
      %v1250 = vmax.f32 %v1186, 0.0
      %v1251 = vmax.f32 %v1187, 0.0
      %v1252 = vmax.f32 %v1188, 0.0
      %v1253 = vmax.f32 %v1189, 0.0
      %v1254 = vmax.f32 %v1190, 0.0
      %v1255 = vmax.f32 %v1191, 0.0
      %v1256 = vmax.f32 %v1192, 0.0
      %v1257 = vmax.f32 %v1193, 0.0
      %v1258 = vmax.f32 %v1194, 0.0
      %v1259 = vmax.f32 %v1195, 0.0
      %v1260 = vmax.f32 %v1196, 0.0
      %v1261 = vmax.f32 %v1197, 0.0
      %v1262 = vmax.f32 %v1198, 0.0
      %v1263 = vmax.f32 %v1199, 0.0
      %v1264 = vmax.f32 %v1200, 0.0
      %v1265 = vpack.c.bf16 %v1201, %v1201
      %v1266 = vpack.c.bf16 %v1202, %v1202
      %v1267 = vpack.c.bf16 %v1203, %v1203
      %v1268 = vpack.c.bf16 %v1204, %v1204
      %v1269 = vpack.c.bf16 %v1205, %v1205
      %v1270 = vpack.c.bf16 %v1206, %v1206
      %v1271 = vpack.c.bf16 %v1207, %v1207
      %v1272 = vpack.c.bf16 %v1208, %v1208
      %v1273 = vpack.c.bf16 %v1209, %v1209
      %v1274 = vpack.c.bf16 %v1210, %v1210
      %v1275 = vpack.c.bf16 %v1211, %v1211
      %v1276 = vpack.c.bf16 %v1212, %v1212
      %v1277 = vpack.c.bf16 %v1213, %v1213
      %v1278 = vpack.c.bf16 %v1214, %v1214
      %v1279 = vpack.c.bf16 %v1215, %v1215
      %v1280 = vpack.c.bf16 %v1216, %v1216
      %v1281 = vpack.c.bf16 %v1217, %v1217
      %v1282 = vpack.c.bf16 %v1218, %v1218
      %v1283 = vpack.c.bf16 %v1219, %v1219
      %v1284 = vpack.c.bf16 %v1220, %v1220
      %v1285 = vpack.c.bf16 %v1221, %v1221
      %v1286 = vpack.c.bf16 %v1222, %v1222
      %v1287 = vpack.c.bf16 %v1223, %v1223
      %v1288 = vpack.c.bf16 %v1224, %v1224
      %v1289 = vpack.c.bf16 %v1225, %v1225
      %v1290 = vpack.c.bf16 %v1226, %v1226
      %v1291 = vpack.c.bf16 %v1227, %v1227
      %v1292 = vpack.c.bf16 %v1228, %v1228
      %v1293 = vpack.c.bf16 %v1229, %v1229
      %v1294 = vpack.c.bf16 %v1230, %v1230
      %v1295 = vpack.c.bf16 %v1231, %v1231
      %v1296 = vpack.c.bf16 %v1232, %v1232
      %v1297 = vpack.c.bf16 %v1233, %v1233
      %v1298 = vpack.c.bf16 %v1234, %v1234
      %v1299 = vpack.c.bf16 %v1235, %v1235
      %v1300 = vpack.c.bf16 %v1236, %v1236
      %v1301 = vpack.c.bf16 %v1237, %v1237
      %v1302 = vpack.c.bf16 %v1238, %v1238
      %v1303 = vpack.c.bf16 %v1239, %v1239
      %v1304 = vpack.c.bf16 %v1240, %v1240
      %v1305 = vpack.c.bf16 %v1241, %v1241
      %v1306 = vpack.c.bf16 %v1242, %v1242
      %v1307 = vpack.c.bf16 %v1243, %v1243
      %v1308 = vpack.c.bf16 %v1244, %v1244
      %v1309 = vpack.c.bf16 %v1245, %v1245
      %v1310 = vpack.c.bf16 %v1246, %v1246
      %v1311 = vpack.c.bf16 %v1247, %v1247
      %v1312 = vpack.c.bf16 %v1248, %v1248
      %v1313 = vpack.c.bf16 %v1249, %v1249
      %v1314 = vpack.c.bf16 %v1250, %v1250
      %v1315 = vpack.c.bf16 %v1251, %v1251
      %v1316 = vpack.c.bf16 %v1252, %v1252
      %v1317 = vpack.c.bf16 %v1253, %v1253
      %v1318 = vpack.c.bf16 %v1254, %v1254
      %v1319 = vpack.c.bf16 %v1255, %v1255
      %v1320 = vpack.c.bf16 %v1256, %v1256
      %v1321 = vpack.c.bf16 %v1257, %v1257
      %v1322 = vpack.c.bf16 %v1258, %v1258
      %v1323 = vpack.c.bf16 %v1259, %v1259
      %v1324 = vpack.c.bf16 %v1260, %v1260
      %v1325 = vpack.c.bf16 %v1261, %v1261
      %v1326 = vpack.c.bf16 %v1262, %v1262
      %v1327 = vpack.c.bf16 %v1263, %v1263
      %v1328 = vpack.c.bf16 %v1264, %v1264
      %1329 = vst [vmem:[%s4] sm:$0xf] %v1265
      %1330 = vst [vmem:[%s4 + $0x4] sm:$0xf] %v1266
      %1331 = vst [vmem:[%s4 + $0x8] sm:$0xf] %v1267
      %1332 = vst [vmem:[%s4 + $0xc] sm:$0xf] %v1268
      %1333 = vst [vmem:[%s4 + $0x10] sm:$0xf] %v1269
      %1334 = vst [vmem:[%s4 + $0x14] sm:$0xf] %v1270
      %1335 = vst [vmem:[%s4 + $0x18] sm:$0xf] %v1271
      %1336 = vst [vmem:[%s4 + $0x1c] sm:$0xf] %v1272
      %1337 = vst [vmem:[%s4 + $0x20] sm:$0xf] %v1273
      %1338 = vst [vmem:[%s4 + $0x24] sm:$0xf] %v1274
      %1339 = vst [vmem:[%s4 + $0x28] sm:$0xf] %v1275
      %1340 = vst [vmem:[%s4 + $0x2c] sm:$0xf] %v1276
      %1341 = vst [vmem:[%s4 + $0x30] sm:$0xf] %v1277
      %1342 = vst [vmem:[%s4 + $0x34] sm:$0xf] %v1278
      %1343 = vst [vmem:[%s4 + $0x38] sm:$0xf] %v1279
      %1344 = vst [vmem:[%s4 + $0x3c] sm:$0xf] %v1280
      %1345 = vst [vmem:[%s4 + $0x40] sm:$0xf] %v1281
      %1346 = vst [vmem:[%s4 + $0x44] sm:$0xf] %v1282
      %1347 = vst [vmem:[%s4 + $0x48] sm:$0xf] %v1283
      %1348 = vst [vmem:[%s4 + $0x4c] sm:$0xf] %v1284
      %1349 = vst [vmem:[%s4 + $0x50] sm:$0xf] %v1285
      %1350 = vst [vmem:[%s4 + $0x54] sm:$0xf] %v1286
      %1351 = vst [vmem:[%s4 + $0x58] sm:$0xf] %v1287
      %1352 = vst [vmem:[%s4 + $0x5c] sm:$0xf] %v1288
      %1353 = vst [vmem:[%s4 + $0x60] sm:$0xf] %v1289
      %1354 = vst [vmem:[%s4 + $0x64] sm:$0xf] %v1290
      %1355 = vst [vmem:[%s4 + $0x68] sm:$0xf] %v1291
      %1356 = vst [vmem:[%s4 + $0x6c] sm:$0xf] %v1292
      %1357 = vst [vmem:[%s4 + $0x70] sm:$0xf] %v1293
      %1358 = vst [vmem:[%s4 + $0x74] sm:$0xf] %v1294
      %1359 = vst [vmem:[%s4 + $0x78] sm:$0xf] %v1295
      %1360 = vst [vmem:[%s4 + $0x7c] sm:$0xf] %v1296
      %1361 = vst [vmem:[%s4 + $0x80] sm:$0xf] %v1297
      %1362 = vst [vmem:[%s4 + $0x84] sm:$0xf] %v1298
      %1363 = vst [vmem:[%s4 + $0x88] sm:$0xf] %v1299
      %1364 = vst [vmem:[%s4 + $0x8c] sm:$0xf] %v1300
      %1365 = vst [vmem:[%s4 + $0x90] sm:$0xf] %v1301
      %1366 = vst [vmem:[%s4 + $0x94] sm:$0xf] %v1302
      %1367 = vst [vmem:[%s4 + $0x98] sm:$0xf] %v1303
      %1368 = vst [vmem:[%s4 + $0x9c] sm:$0xf] %v1304
      %1369 = vst [vmem:[%s4 + $0xa0] sm:$0xf] %v1305
      %1370 = vst [vmem:[%s4 + $0xa4] sm:$0xf] %v1306
      %1371 = vst [vmem:[%s4 + $0xa8] sm:$0xf] %v1307
      %1372 = vst [vmem:[%s4 + $0xac] sm:$0xf] %v1308
      %1373 = vst [vmem:[%s4 + $0xb0] sm:$0xf] %v1309
      %1374 = vst [vmem:[%s4 + $0xb4] sm:$0xf] %v1310
      %1375 = vst [vmem:[%s4 + $0xb8] sm:$0xf] %v1311
      %1376 = vst [vmem:[%s4 + $0xbc] sm:$0xf] %v1312
      %1377 = vst [vmem:[%s4 + $0xc0] sm:$0xf] %v1313
      %1378 = vst [vmem:[%s4 + $0xc4] sm:$0xf] %v1314
      %1379 = vst [vmem:[%s4 + $0xc8] sm:$0xf] %v1315
      %1380 = vst [vmem:[%s4 + $0xcc] sm:$0xf] %v1316
      %1381 = vst [vmem:[%s4 + $0xd0] sm:$0xf] %v1317
      %1382 = vst [vmem:[%s4 + $0xd4] sm:$0xf] %v1318
      %1383 = vst [vmem:[%s4 + $0xd8] sm:$0xf] %v1319
      %1384 = vst [vmem:[%s4 + $0xdc] sm:$0xf] %v1320
      %1385 = vst [vmem:[%s4 + $0xe0] sm:$0xf] %v1321
      %1386 = vst [vmem:[%s4 + $0xe4] sm:$0xf] %v1322
      %1387 = vst [vmem:[%s4 + $0xe8] sm:$0xf] %v1323
      %1388 = vst [vmem:[%s4 + $0xec] sm:$0xf] %v1324
      %1389 = vst [vmem:[%s4 + $0xf0] sm:$0xf] %v1325
      %1390 = vst [vmem:[%s4 + $0xf4] sm:$0xf] %v1326
      %1391 = vst [vmem:[%s4 + $0xf8] sm:$0xf] %v1327
      %1392 = vst [vmem:[%s4 + $0xfc] sm:$0xf] %v1328
    $region41: #{deep_cnn_forward.5} parent=1 // pred_fallthru
      _
    // Predicated region
    $region42: #{deep_cnn_forward.5} parent=1 // pred_check
      _
    $region43: #{deep_cnn_forward.5} parent=1 // pred_check_branch
      %1394 = sbr.rel (0) target = $region45
    $region44: #{deep_cnn_forward.5} parent=1 // pred_region
      _
    $region45: #{deep_cnn_forward.5} parent=1 // pred_fallthru
      _
    // Predicated region
    $region46: #{deep_cnn_forward.5} parent=1 // pred_check
      _
    $region47: #{deep_cnn_forward.5} parent=1 // pred_check_branch
      %1396 = sbr.rel (0) target = $region49
    $region48: #{deep_cnn_forward.5} parent=1 // pred_region
      _
    $region49: #{deep_cnn_forward.5} parent=1 // pred_fallthru
      _
    %1397 = vsyncpa [#allocation4], 1
    %1398 = vsyncpa [#allocation6], 1

// kernel: deep_cnn_forward.6
$region0: #{deep_cnn_forward.6}
  #allocation0 [shape = 'u32[]', space=smem, size = 0x4, offset = 0x4, fixed_abs, tag = 'smem constant byte address 0x4 - core index']
  #allocation1 [shape = 'u32[72,128]{1,0:T(1,128)}', space=vmem, size = 0x9000, scoped, tag = 'internal scratch']
  #allocation2 [shape = 'f32[2,128]{1,0:T(2,128)}', space=vmem, size = 0x400, scoped, tag = 'scratch operand']
  %s0 = inlined_call_operand.vmem [shape: bf16[128,640], index: 0, kind: input, shape index: {}]
  %s1 = inlined_call_operand.vmem [shape: bf16[640,128], index: 1, kind: input, shape index: {}]
  %s2 = inlined_call_operand.vmem [shape: f32[1,128], index: 2, kind: input, shape index: {}]
  %s3 = inlined_call_operand.vmem [shape: f32[1,128], index: 3, kind: input, shape index: {}]
  %s4 = inlined_call_operand.vmem [shape: bf16[128,128], index: 4, kind: output, shape index: {}]
  %s5 = sld [smem:[#allocation0]]
  $region38: #{deep_cnn_forward.6} parent=0
    _
  %s7 = ssub.s32 1, %s5
  %s8 = scalar_select 0, %s7, %s5
  // Predicated region
  $region2: #{deep_cnn_forward.6} parent=0 // pred_check
    _
  $region3: #{deep_cnn_forward.6} parent=0 // pred_check_branch
    %10 = sbr.rel (0) target = $region5
  $region4: #{deep_cnn_forward.6} parent=0 // pred_region
    _
  $region5: #{deep_cnn_forward.6} parent=0 // pred_fallthru
    _
  // Predicated region
  $region6: #{deep_cnn_forward.6} parent=0 // pred_check
    _
  $region7: #{deep_cnn_forward.6} parent=0 // pred_check_branch
    %12 = sbr.rel (0) target = $region9
  $region8: #{deep_cnn_forward.6} parent=0 // pred_region
    _
  $region9: #{deep_cnn_forward.6} parent=0 // pred_fallthru
    _
  // Predicated region
  $region10: #{deep_cnn_forward.6} parent=0 // pred_check
    _
  $region11: #{deep_cnn_forward.6} parent=0 // pred_check_branch
    %14 = sbr.rel (0) target = $region13
  $region12: #{deep_cnn_forward.6} parent=0 // pred_region
    _
  $region13: #{deep_cnn_forward.6} parent=0 // pred_fallthru
    _
  // Predicated region
  $region14: #{deep_cnn_forward.6} parent=0 // pred_check
    _
  $region15: #{deep_cnn_forward.6} parent=0 // pred_check_branch
    %16 = sbr.rel (0) target = $region17
  $region16: #{deep_cnn_forward.6} parent=0 // pred_region
    _
  $region17: #{deep_cnn_forward.6} parent=0 // pred_fallthru
    _
  %v17 = vld [vmem:[%s0] sm:$0xff]
  %v18 = vld [vmem:[%s0 + $0x8] sm:$0xff]
  %v19 = vld [vmem:[%s0 + $0x10] sm:$0xf]
  %v20 = vld [vmem:[%s0 + $0x14] sm:$0xff]
  %v21 = vld [vmem:[%s0 + $0x1c] sm:$0xff]
  %v22 = vld [vmem:[%s0 + $0x24] sm:$0xf]
  %v23 = vld [vmem:[%s0 + $0x28] sm:$0xff]
  %v24 = vld [vmem:[%s0 + $0x30] sm:$0xff]
  %v25 = vld [vmem:[%s0 + $0x38] sm:$0xf]
  %v26 = vld [vmem:[%s0 + $0x3c] sm:$0xff]
  %v27 = vld [vmem:[%s0 + $0x44] sm:$0xff]
  %v28 = vld [vmem:[%s0 + $0x4c] sm:$0xf]
  %v29 = vld [vmem:[%s0 + $0x50] sm:$0xff]
  %v30 = vld [vmem:[%s0 + $0x58] sm:$0xff]
  %v31 = vld [vmem:[%s0 + $0x60] sm:$0xf]
  %v32 = vld [vmem:[%s0 + $0x64] sm:$0xff]
  %v33 = vld [vmem:[%s0 + $0x6c] sm:$0xff]
  %v34 = vld [vmem:[%s0 + $0x74] sm:$0xf]
  %v35 = vld [vmem:[%s0 + $0x78] sm:$0xff]
  %v36 = vld [vmem:[%s0 + $0x80] sm:$0xff]
  %v37 = vld [vmem:[%s0 + $0x88] sm:$0xf]
  %v38 = vld [vmem:[%s0 + $0x8c] sm:$0xff]
  %v39 = vld [vmem:[%s0 + $0x94] sm:$0xff]
  %v40 = vld [vmem:[%s0 + $0x9c] sm:$0xf]
  %v41 = vld [vmem:[%s0 + $0xa0] sm:$0xff]
  %v42 = vld [vmem:[%s0 + $0xa8] sm:$0xff]
  %v43 = vld [vmem:[%s0 + $0xb0] sm:$0xf]
  %v44 = vld [vmem:[%s0 + $0xb4] sm:$0xff]
  %v45 = vld [vmem:[%s0 + $0xbc] sm:$0xff]
  %v46 = vld [vmem:[%s0 + $0xc4] sm:$0xf]
  %v47 = vld [vmem:[%s0 + $0xc8] sm:$0xff]
  %v48 = vld [vmem:[%s0 + $0xd0] sm:$0xff]
  %v49 = vld [vmem:[%s0 + $0xd8] sm:$0xf]
  %v50 = vld [vmem:[%s0 + $0xdc] sm:$0xff]
  %v51 = vld [vmem:[%s0 + $0xe4] sm:$0xff]
  %v52 = vld [vmem:[%s0 + $0xec] sm:$0xf]
  %v53 = vld [vmem:[%s0 + $0xf0] sm:$0xff]
  %v54 = vld [vmem:[%s0 + $0xf8] sm:$0xff]
  %v55 = vld [vmem:[%s0 + $0x100] sm:$0xf]
  %v56 = vld [vmem:[%s0 + $0x104] sm:$0xff]
  %v57 = vld [vmem:[%s0 + $0x10c] sm:$0xff]
  %v58 = vld [vmem:[%s0 + $0x114] sm:$0xf]
  %v59 = vld [vmem:[%s0 + $0x118] sm:$0xff]
  %v60 = vld [vmem:[%s0 + $0x120] sm:$0xff]
  %v61 = vld [vmem:[%s0 + $0x128] sm:$0xf]
  %v62 = vld [vmem:[%s0 + $0x12c] sm:$0xff]
  %v63 = vld [vmem:[%s0 + $0x134] sm:$0xff]
  %v64 = vld [vmem:[%s0 + $0x13c] sm:$0xf]
  %v65 = vld [vmem:[%s1] sm:$0xf]
  %v66 = vld [vmem:[%s1 + $0x4] sm:$0xf]
  %v67 = vld [vmem:[%s1 + $0x8] sm:$0xf]
  %v68 = vld [vmem:[%s1 + $0xc] sm:$0xf]
  %v69 = vld [vmem:[%s1 + $0x10] sm:$0xf]
  %v70 = vld [vmem:[%s1 + $0x14] sm:$0xf]
  %v71 = vld [vmem:[%s1 + $0x18] sm:$0xf]
  %v72 = vld [vmem:[%s1 + $0x1c] sm:$0xf]
  %v73 = vld [vmem:[%s1 + $0x20] sm:$0xf]
  %v74 = vld [vmem:[%s1 + $0x24] sm:$0xf]
  %v75 = vld [vmem:[%s1 + $0x28] sm:$0xf]
  %v76 = vld [vmem:[%s1 + $0x2c] sm:$0xf]
  %v77 = vld [vmem:[%s1 + $0x30] sm:$0xf]
  %v78 = vld [vmem:[%s1 + $0x34] sm:$0xf]
  %v79 = vld [vmem:[%s1 + $0x38] sm:$0xf]
  %v80 = vld [vmem:[%s1 + $0x3c] sm:$0xf]
  %v81 = vld [vmem:[%s1 + $0x40] sm:$0xf]
  %v82 = vld [vmem:[%s1 + $0x44] sm:$0xf]
  %v83 = vld [vmem:[%s1 + $0x48] sm:$0xf]
  %v84 = vld [vmem:[%s1 + $0x4c] sm:$0xf]
  %v85 = vld [vmem:[%s1 + $0x50] sm:$0xf]
  %v86 = vld [vmem:[%s1 + $0x54] sm:$0xf]
  %v87 = vld [vmem:[%s1 + $0x58] sm:$0xf]
  %v88 = vld [vmem:[%s1 + $0x5c] sm:$0xf]
  %v89 = vld [vmem:[%s1 + $0x60] sm:$0xf]
  %v90 = vld [vmem:[%s1 + $0x64] sm:$0xf]
  %v91 = vld [vmem:[%s1 + $0x68] sm:$0xf]
  %v92 = vld [vmem:[%s1 + $0x6c] sm:$0xf]
  %v93 = vld [vmem:[%s1 + $0x70] sm:$0xf]
  %v94 = vld [vmem:[%s1 + $0x74] sm:$0xf]
  %v95 = vld [vmem:[%s1 + $0x78] sm:$0xf]
  %v96 = vld [vmem:[%s1 + $0x7c] sm:$0xf]
  %v97 = vld [vmem:[%s1 + $0x80] sm:$0xf]
  %v98 = vld [vmem:[%s1 + $0x84] sm:$0xf]
  %v99 = vld [vmem:[%s1 + $0x88] sm:$0xf]
  %v100 = vld [vmem:[%s1 + $0x8c] sm:$0xf]
  %v101 = vld [vmem:[%s1 + $0x90] sm:$0xf]
  %v102 = vld [vmem:[%s1 + $0x94] sm:$0xf]
  %v103 = vld [vmem:[%s1 + $0x98] sm:$0xf]
  %v104 = vld [vmem:[%s1 + $0x9c] sm:$0xf]
  %v105 = vld [vmem:[%s1 + $0xa0] sm:$0xf]
  %v106 = vld [vmem:[%s1 + $0xa4] sm:$0xf]
  %v107 = vld [vmem:[%s1 + $0xa8] sm:$0xf]
  %v108 = vld [vmem:[%s1 + $0xac] sm:$0xf]
  %v109 = vld [vmem:[%s1 + $0xb0] sm:$0xf]
  %v110 = vld [vmem:[%s1 + $0xb4] sm:$0xf]
  %v111 = vld [vmem:[%s1 + $0xb8] sm:$0xf]
  %v112 = vld [vmem:[%s1 + $0xbc] sm:$0xf]
  %v113 = vld [vmem:[%s1 + $0xc0] sm:$0xf]
  %v114 = vld [vmem:[%s1 + $0xc4] sm:$0xf]
  %v115 = vld [vmem:[%s1 + $0xc8] sm:$0xf]
  %v116 = vld [vmem:[%s1 + $0xcc] sm:$0xf]
  %v117 = vld [vmem:[%s1 + $0xd0] sm:$0xf]
  %v118 = vld [vmem:[%s1 + $0xd4] sm:$0xf]
  %v119 = vld [vmem:[%s1 + $0xd8] sm:$0xf]
  %v120 = vld [vmem:[%s1 + $0xdc] sm:$0xf]
  %v121 = vld [vmem:[%s1 + $0xe0] sm:$0xf]
  %v122 = vld [vmem:[%s1 + $0xe4] sm:$0xf]
  %v123 = vld [vmem:[%s1 + $0xe8] sm:$0xf]
  %v124 = vld [vmem:[%s1 + $0xec] sm:$0xf]
  %v125 = vld [vmem:[%s1 + $0xf0] sm:$0xf]
  %v126 = vld [vmem:[%s1 + $0xf4] sm:$0xf]
  %v127 = vld [vmem:[%s1 + $0xf8] sm:$0xf]
  %v128 = vld [vmem:[%s1 + $0xfc] sm:$0xf]
  %v129 = vld [vmem:[%s1 + $0x100] sm:$0xf]
  %v130 = vld [vmem:[%s1 + $0x104] sm:$0xf]
  %v131 = vld [vmem:[%s1 + $0x108] sm:$0xf]
  %v132 = vld [vmem:[%s1 + $0x10c] sm:$0xf]
  %v133 = vld [vmem:[%s1 + $0x110] sm:$0xf]
  %v134 = vld [vmem:[%s1 + $0x114] sm:$0xf]
  %v135 = vld [vmem:[%s1 + $0x118] sm:$0xf]
  %v136 = vld [vmem:[%s1 + $0x11c] sm:$0xf]
  %v137 = vld [vmem:[%s1 + $0x120] sm:$0xf]
  %v138 = vld [vmem:[%s1 + $0x124] sm:$0xf]
  %v139 = vld [vmem:[%s1 + $0x128] sm:$0xf]
  %v140 = vld [vmem:[%s1 + $0x12c] sm:$0xf]
  %v141 = vld [vmem:[%s1 + $0x130] sm:$0xf]
  %v142 = vld [vmem:[%s1 + $0x134] sm:$0xf]
  %v143 = vld [vmem:[%s1 + $0x138] sm:$0xf]
  %v144 = vld [vmem:[%s1 + $0x13c] sm:$0xf]
  %v193 = vunpack.c.l.b16 %v17
  %v194 = vunpack.c.h.b16 %v17
  %v195 = vunpack.c.l.b16 %v18
  %v196 = vunpack.c.h.b16 %v18
  %v197 = vunpack.c.l.b16 %v19
  %v198 = vunpack.c.l.b16 %v20
  %v199 = vunpack.c.h.b16 %v20
  %v200 = vunpack.c.l.b16 %v21
  %v201 = vunpack.c.h.b16 %v21
  %v202 = vunpack.c.l.b16 %v22
  %v203 = vunpack.c.l.b16 %v23
  %v204 = vunpack.c.h.b16 %v23
  %v205 = vunpack.c.l.b16 %v24
  %v206 = vunpack.c.h.b16 %v24
  %v207 = vunpack.c.l.b16 %v25
  %v208 = vunpack.c.l.b16 %v26
  %v209 = vunpack.c.h.b16 %v26
  %v210 = vunpack.c.l.b16 %v27
  %v211 = vunpack.c.h.b16 %v27
  %v212 = vunpack.c.l.b16 %v28
  %v213 = vunpack.c.l.b16 %v29
  %v214 = vunpack.c.h.b16 %v29
  %v215 = vunpack.c.l.b16 %v30
  %v216 = vunpack.c.h.b16 %v30
  %v217 = vunpack.c.l.b16 %v31
  %v218 = vunpack.c.l.b16 %v32
  %v219 = vunpack.c.h.b16 %v32
  %v220 = vunpack.c.l.b16 %v33
  %v221 = vunpack.c.h.b16 %v33
  %v222 = vunpack.c.l.b16 %v34
  %v223 = vunpack.c.l.b16 %v35
  %v224 = vunpack.c.h.b16 %v35
  %v225 = vunpack.c.l.b16 %v36
  %v226 = vunpack.c.h.b16 %v36
  %v227 = vunpack.c.l.b16 %v37
  %v228 = vunpack.c.l.b16 %v38
  %v229 = vunpack.c.h.b16 %v38
  %v230 = vunpack.c.l.b16 %v39
  %v231 = vunpack.c.h.b16 %v39
  %v232 = vunpack.c.l.b16 %v40
  %v233 = vunpack.c.l.b16 %v41
  %v234 = vunpack.c.h.b16 %v41
  %v235 = vunpack.c.l.b16 %v42
  %v236 = vunpack.c.h.b16 %v42
  %v237 = vunpack.c.l.b16 %v43
  %v238 = vunpack.c.l.b16 %v44
  %v239 = vunpack.c.h.b16 %v44
  %v240 = vunpack.c.l.b16 %v45
  %v241 = vunpack.c.h.b16 %v45
  %v242 = vunpack.c.l.b16 %v46
  %v243 = vunpack.c.l.b16 %v47
  %v244 = vunpack.c.h.b16 %v47
  %v245 = vunpack.c.l.b16 %v48
  %v246 = vunpack.c.h.b16 %v48
  %v247 = vunpack.c.l.b16 %v49
  %v248 = vunpack.c.l.b16 %v50
  %v249 = vunpack.c.h.b16 %v50
  %v250 = vunpack.c.l.b16 %v51
  %v251 = vunpack.c.h.b16 %v51
  %v252 = vunpack.c.l.b16 %v52
  %v253 = vunpack.c.l.b16 %v53
  %v254 = vunpack.c.h.b16 %v53
  %v255 = vunpack.c.l.b16 %v54
  %v256 = vunpack.c.h.b16 %v54
  %v257 = vunpack.c.l.b16 %v55
  %v258 = vunpack.c.l.b16 %v56
  %v259 = vunpack.c.h.b16 %v56
  %v260 = vunpack.c.l.b16 %v57
  %v261 = vunpack.c.h.b16 %v57
  %v262 = vunpack.c.l.b16 %v58
  %v263 = vunpack.c.l.b16 %v59
  %v264 = vunpack.c.h.b16 %v59
  %v265 = vunpack.c.l.b16 %v60
  %v266 = vunpack.c.h.b16 %v60
  %v267 = vunpack.c.l.b16 %v61
  %v268 = vunpack.c.l.b16 %v62
  %v269 = vunpack.c.h.b16 %v62
  %v270 = vunpack.c.l.b16 %v63
  %v271 = vunpack.c.h.b16 %v63
  %v272 = vunpack.c.l.b16 %v64
  %v273 = vpack.c.b16 %v198, %v193
  %v274 = vpack.c.b16 %v199, %v194
  %v275 = vpack.c.b16 %v200, %v195
  %v276 = vpack.c.b16 %v201, %v196
  %v277 = vpack.c.b16 %v202, %v197
  %v278 = vpack.c.b16 %v208, %v203
  %v279 = vpack.c.b16 %v209, %v204
  %v280 = vpack.c.b16 %v210, %v205
  %v281 = vpack.c.b16 %v211, %v206
  %v282 = vpack.c.b16 %v212, %v207
  %v283 = vpack.c.b16 %v218, %v213
  %v284 = vpack.c.b16 %v219, %v214
  %v285 = vpack.c.b16 %v220, %v215
  %v286 = vpack.c.b16 %v221, %v216
  %v287 = vpack.c.b16 %v222, %v217
  %v288 = vpack.c.b16 %v228, %v223
  %v289 = vpack.c.b16 %v229, %v224
  %v290 = vpack.c.b16 %v230, %v225
  %v291 = vpack.c.b16 %v231, %v226
  %v292 = vpack.c.b16 %v232, %v227
  %v293 = vpack.c.b16 %v238, %v233
  %v294 = vpack.c.b16 %v239, %v234
  %v295 = vpack.c.b16 %v240, %v235
  %v296 = vpack.c.b16 %v241, %v236
  %v297 = vpack.c.b16 %v242, %v237
  %v298 = vpack.c.b16 %v248, %v243
  %v299 = vpack.c.b16 %v249, %v244
  %v300 = vpack.c.b16 %v250, %v245
  %v301 = vpack.c.b16 %v251, %v246
  %v302 = vpack.c.b16 %v252, %v247
  %v303 = vpack.c.b16 %v258, %v253
  %v304 = vpack.c.b16 %v259, %v254
  %v305 = vpack.c.b16 %v260, %v255
  %v306 = vpack.c.b16 %v261, %v256
  %v307 = vpack.c.b16 %v262, %v257
  %v308 = vpack.c.b16 %v268, %v263
  %v309 = vpack.c.b16 %v269, %v264
  %v310 = vpack.c.b16 %v270, %v265
  %v311 = vpack.c.b16 %v271, %v266
  %v312 = vpack.c.b16 %v272, %v267
  %v433 = vunpack.c.l.b16 %v65
  %v434 = vunpack.c.l.b16 %v66
  %v435 = vunpack.c.l.b16 %v67
  %v436 = vunpack.c.l.b16 %v68
  %v437 = vunpack.c.l.b16 %v69
  %v438 = vunpack.c.l.b16 %v70
  %v439 = vunpack.c.l.b16 %v71
  %v440 = vunpack.c.l.b16 %v72
  %v441 = vunpack.c.l.b16 %v73
  %v442 = vunpack.c.l.b16 %v74
  %v443 = vunpack.c.l.b16 %v75
  %v444 = vunpack.c.l.b16 %v76
  %v445 = vunpack.c.l.b16 %v77
  %v446 = vunpack.c.l.b16 %v78
  %v447 = vunpack.c.l.b16 %v79
  %v448 = vunpack.c.l.b16 %v80
  %v449 = vunpack.c.l.b16 %v81
  %v450 = vunpack.c.l.b16 %v82
  %v451 = vunpack.c.l.b16 %v83
  %v452 = vunpack.c.l.b16 %v84
  %v453 = vunpack.c.l.b16 %v85
  %v454 = vunpack.c.l.b16 %v86
  %v455 = vunpack.c.l.b16 %v87
  %v456 = vunpack.c.l.b16 %v88
  %v457 = vunpack.c.l.b16 %v89
  %v458 = vunpack.c.l.b16 %v90
  %v459 = vunpack.c.l.b16 %v91
  %v460 = vunpack.c.l.b16 %v92
  %v461 = vunpack.c.l.b16 %v93
  %v462 = vunpack.c.l.b16 %v94
  %v463 = vunpack.c.l.b16 %v95
  %v464 = vunpack.c.l.b16 %v96
  %v465 = vunpack.c.l.b16 %v97
  %v466 = vunpack.c.l.b16 %v98
  %v467 = vunpack.c.l.b16 %v99
  %v468 = vunpack.c.l.b16 %v100
  %v469 = vunpack.c.l.b16 %v101
  %v470 = vunpack.c.l.b16 %v102
  %v471 = vunpack.c.l.b16 %v103
  %v472 = vunpack.c.l.b16 %v104
  %v473 = vunpack.c.l.b16 %v105
  %v474 = vunpack.c.l.b16 %v106
  %v475 = vunpack.c.l.b16 %v107
  %v476 = vunpack.c.l.b16 %v108
  %v477 = vunpack.c.l.b16 %v109
  %v478 = vunpack.c.l.b16 %v110
  %v479 = vunpack.c.l.b16 %v111
  %v480 = vunpack.c.l.b16 %v112
  %v481 = vunpack.c.l.b16 %v113
  %v482 = vunpack.c.l.b16 %v114
  %v483 = vunpack.c.l.b16 %v115
  %v484 = vunpack.c.l.b16 %v116
  %v485 = vunpack.c.l.b16 %v117
  %v486 = vunpack.c.l.b16 %v118
  %v487 = vunpack.c.l.b16 %v119
  %v488 = vunpack.c.l.b16 %v120
  %v489 = vunpack.c.l.b16 %v121
  %v490 = vunpack.c.l.b16 %v122
  %v491 = vunpack.c.l.b16 %v123
  %v492 = vunpack.c.l.b16 %v124
  %v493 = vunpack.c.l.b16 %v125
  %v494 = vunpack.c.l.b16 %v126
  %v495 = vunpack.c.l.b16 %v127
  %v496 = vunpack.c.l.b16 %v128
  %v497 = vunpack.c.l.b16 %v129
  %v498 = vunpack.c.l.b16 %v130
  %v499 = vunpack.c.l.b16 %v131
  %v500 = vunpack.c.l.b16 %v132
  %v501 = vunpack.c.l.b16 %v133
  %v502 = vunpack.c.l.b16 %v134
  %v503 = vunpack.c.l.b16 %v135
  %v504 = vunpack.c.l.b16 %v136
  %v505 = vunpack.c.l.b16 %v137
  %v506 = vunpack.c.l.b16 %v138
  %v507 = vunpack.c.l.b16 %v139
  %v508 = vunpack.c.l.b16 %v140
  %v509 = vunpack.c.l.b16 %v141
  %v510 = vunpack.c.l.b16 %v142
  %v511 = vunpack.c.l.b16 %v143
  %v512 = vunpack.c.l.b16 %v144
  %v513 = vpack.c.b16 %v434, %v433
  %v514 = vpack.c.b16 %v436, %v435
  %v515 = vpack.c.b16 %v438, %v437
  %v516 = vpack.c.b16 %v440, %v439
  %v517 = vpack.c.b16 %v442, %v441
  %v518 = vpack.c.b16 %v444, %v443
  %v519 = vpack.c.b16 %v446, %v445
  %v520 = vpack.c.b16 %v448, %v447
  %v521 = vpack.c.b16 %v450, %v449
  %v522 = vpack.c.b16 %v452, %v451
  %v523 = vpack.c.b16 %v454, %v453
  %v524 = vpack.c.b16 %v456, %v455
  %v525 = vpack.c.b16 %v458, %v457
  %v526 = vpack.c.b16 %v460, %v459
  %v527 = vpack.c.b16 %v462, %v461
  %v528 = vpack.c.b16 %v464, %v463
  %v529 = vpack.c.b16 %v466, %v465
  %v530 = vpack.c.b16 %v468, %v467
  %v531 = vpack.c.b16 %v470, %v469
  %v532 = vpack.c.b16 %v472, %v471
  %v533 = vpack.c.b16 %v474, %v473
  %v534 = vpack.c.b16 %v476, %v475
  %v535 = vpack.c.b16 %v478, %v477
  %v536 = vpack.c.b16 %v480, %v479
  %v537 = vpack.c.b16 %v482, %v481
  %v538 = vpack.c.b16 %v484, %v483
  %v539 = vpack.c.b16 %v486, %v485
  %v540 = vpack.c.b16 %v488, %v487
  %v541 = vpack.c.b16 %v490, %v489
  %v542 = vpack.c.b16 %v492, %v491
  %v543 = vpack.c.b16 %v494, %v493
  %v544 = vpack.c.b16 %v496, %v495
  %v545 = vpack.c.b16 %v498, %v497
  %v546 = vpack.c.b16 %v500, %v499
  %v547 = vpack.c.b16 %v502, %v501
  %v548 = vpack.c.b16 %v504, %v503
  %v549 = vpack.c.b16 %v506, %v505
  %v550 = vpack.c.b16 %v508, %v507
  %v551 = vpack.c.b16 %v510, %v509
  %v552 = vpack.c.b16 %v512, %v511
  %593 = vmatpush.bf16.msra.mxu0 %v520
  %594 = vmatpush.bf16.msra.mxu0 %v519
  %595 = vmatpush.bf16.msra.mxu0 %v518
  %596 = vmatpush.bf16.msra.mxu0 %v517
  %597 = vmatpush.bf16.msra.mxu0 %v516
  %598 = vmatpush.bf16.msra.mxu0 %v515
  %599 = vmatpush.bf16.msra.mxu0 %v514
  %600 = vmatpush.bf16.msra.mxu0 %v513
  %601 = vmatmul.bf16.gmra.mxu0 %v273
  %v602 = vpop.f32.mrf.mxu0
  %v603 = vadd.f32 0.0, %v602
  %v604 = vpop.f32.mrf.mxu0
  %v605 = vadd.f32 0.0, %v604
  %606 = vmatmul.bf16.gmra.mxu0 %v278
  %v607 = vpop.f32.mrf.mxu0
  %v608 = vadd.f32 0.0, %v607
  %v609 = vpop.f32.mrf.mxu0
  %v610 = vadd.f32 0.0, %v609
  %611 = vmatmul.bf16.gmra.mxu0 %v283
  %v612 = vpop.f32.mrf.mxu0
  %v613 = vadd.f32 0.0, %v612
  %v614 = vpop.f32.mrf.mxu0
  %v615 = vadd.f32 0.0, %v614
  %616 = vmatmul.bf16.gmra.mxu0 %v288
  %v617 = vpop.f32.mrf.mxu0
  %v618 = vadd.f32 0.0, %v617
  %v619 = vpop.f32.mrf.mxu0
  %v620 = vadd.f32 0.0, %v619
  %621 = vmatmul.bf16.gmra.mxu0 %v293
  %v622 = vpop.f32.mrf.mxu0
  %v623 = vadd.f32 0.0, %v622
  %v624 = vpop.f32.mrf.mxu0
  %v625 = vadd.f32 0.0, %v624
  %626 = vmatmul.bf16.gmra.mxu0 %v298
  %v627 = vpop.f32.mrf.mxu0
  %v628 = vadd.f32 0.0, %v627
  %v629 = vpop.f32.mrf.mxu0
  %v630 = vadd.f32 0.0, %v629
  %631 = vmatmul.bf16.gmra.mxu0 %v303
  %v632 = vpop.f32.mrf.mxu0
  %v633 = vadd.f32 0.0, %v632
  %v634 = vpop.f32.mrf.mxu0
  %v635 = vadd.f32 0.0, %v634
  %636 = vmatmul.bf16.gmra.mxu0 %v308
  %v637 = vpop.f32.mrf.mxu0
  %v638 = vadd.f32 0.0, %v637
  %v639 = vpop.f32.mrf.mxu0
  %v640 = vadd.f32 0.0, %v639
  %641 = vdwg.mxu0
  %642 = vmatpush.bf16.msra.mxu0 %v528
  %643 = vmatpush.bf16.msra.mxu0 %v527
  %644 = vmatpush.bf16.msra.mxu0 %v526
  %645 = vmatpush.bf16.msra.mxu0 %v525
  %646 = vmatpush.bf16.msra.mxu0 %v524
  %647 = vmatpush.bf16.msra.mxu0 %v523
  %648 = vmatpush.bf16.msra.mxu0 %v522
  %649 = vmatpush.bf16.msra.mxu0 %v521
  %650 = vmatmul.bf16.gmra.mxu0 %v274
  %v651 = vpop.f32.mrf.mxu0
  %v652 = vadd.f32 %v603, %v651
  %v653 = vpop.f32.mrf.mxu0
  %v654 = vadd.f32 %v605, %v653
  %655 = vmatmul.bf16.gmra.mxu0 %v279
  %v656 = vpop.f32.mrf.mxu0
  %v657 = vadd.f32 %v608, %v656
  %v658 = vpop.f32.mrf.mxu0
  %v659 = vadd.f32 %v610, %v658
  %660 = vmatmul.bf16.gmra.mxu0 %v284
  %v661 = vpop.f32.mrf.mxu0
  %v662 = vadd.f32 %v613, %v661
  %v663 = vpop.f32.mrf.mxu0
  %v664 = vadd.f32 %v615, %v663
  %665 = vmatmul.bf16.gmra.mxu0 %v289
  %v666 = vpop.f32.mrf.mxu0
  %v667 = vadd.f32 %v618, %v666
  %v668 = vpop.f32.mrf.mxu0
  %v669 = vadd.f32 %v620, %v668
  %670 = vmatmul.bf16.gmra.mxu0 %v294
  %v671 = vpop.f32.mrf.mxu0
  %v672 = vadd.f32 %v623, %v671
  %v673 = vpop.f32.mrf.mxu0
  %v674 = vadd.f32 %v625, %v673
  %675 = vmatmul.bf16.gmra.mxu0 %v299
  %v676 = vpop.f32.mrf.mxu0
  %v677 = vadd.f32 %v628, %v676
  %v678 = vpop.f32.mrf.mxu0
  %v679 = vadd.f32 %v630, %v678
  %680 = vmatmul.bf16.gmra.mxu0 %v304
  %v681 = vpop.f32.mrf.mxu0
  %v682 = vadd.f32 %v633, %v681
  %v683 = vpop.f32.mrf.mxu0
  %v684 = vadd.f32 %v635, %v683
  %685 = vmatmul.bf16.gmra.mxu0 %v309
  %v686 = vpop.f32.mrf.mxu0
  %v687 = vadd.f32 %v638, %v686
  %v688 = vpop.f32.mrf.mxu0
  %v689 = vadd.f32 %v640, %v688
  %690 = vdwg.mxu0
  %691 = vmatpush.bf16.msra.mxu0 %v536
  %692 = vmatpush.bf16.msra.mxu0 %v535
  %693 = vmatpush.bf16.msra.mxu0 %v534
  %694 = vmatpush.bf16.msra.mxu0 %v533
  %695 = vmatpush.bf16.msra.mxu0 %v532
  %696 = vmatpush.bf16.msra.mxu0 %v531
  %697 = vmatpush.bf16.msra.mxu0 %v530
  %698 = vmatpush.bf16.msra.mxu0 %v529
  %699 = vmatmul.bf16.gmra.mxu0 %v275
  %v700 = vpop.f32.mrf.mxu0
  %v701 = vadd.f32 %v652, %v700
  %v702 = vpop.f32.mrf.mxu0
  %v703 = vadd.f32 %v654, %v702
  %704 = vmatmul.bf16.gmra.mxu0 %v280
  %v705 = vpop.f32.mrf.mxu0
  %v706 = vadd.f32 %v657, %v705
  %v707 = vpop.f32.mrf.mxu0
  %v708 = vadd.f32 %v659, %v707
  %709 = vmatmul.bf16.gmra.mxu0 %v285
  %v710 = vpop.f32.mrf.mxu0
  %v711 = vadd.f32 %v662, %v710
  %v712 = vpop.f32.mrf.mxu0
  %v713 = vadd.f32 %v664, %v712
  %714 = vmatmul.bf16.gmra.mxu0 %v290
  %v715 = vpop.f32.mrf.mxu0
  %v716 = vadd.f32 %v667, %v715
  %v717 = vpop.f32.mrf.mxu0
  %v718 = vadd.f32 %v669, %v717
  %719 = vmatmul.bf16.gmra.mxu0 %v295
  %v720 = vpop.f32.mrf.mxu0
  %v721 = vadd.f32 %v672, %v720
  %v722 = vpop.f32.mrf.mxu0
  %v723 = vadd.f32 %v674, %v722
  %724 = vmatmul.bf16.gmra.mxu0 %v300
  %v725 = vpop.f32.mrf.mxu0
  %v726 = vadd.f32 %v677, %v725
  %v727 = vpop.f32.mrf.mxu0
  %v728 = vadd.f32 %v679, %v727
  %729 = vmatmul.bf16.gmra.mxu0 %v305
  %v730 = vpop.f32.mrf.mxu0
  %v731 = vadd.f32 %v682, %v730
  %v732 = vpop.f32.mrf.mxu0
  %v733 = vadd.f32 %v684, %v732
  %734 = vmatmul.bf16.gmra.mxu0 %v310
  %v735 = vpop.f32.mrf.mxu0
  %v736 = vadd.f32 %v687, %v735
  %v737 = vpop.f32.mrf.mxu0
  %v738 = vadd.f32 %v689, %v737
  %739 = vdwg.mxu0
  %740 = vmatpush.bf16.msra.mxu0 %v544
  %741 = vmatpush.bf16.msra.mxu0 %v543
  %742 = vmatpush.bf16.msra.mxu0 %v542
  %743 = vmatpush.bf16.msra.mxu0 %v541
  %744 = vmatpush.bf16.msra.mxu0 %v540
  %745 = vmatpush.bf16.msra.mxu0 %v539
  %746 = vmatpush.bf16.msra.mxu0 %v538
  %747 = vmatpush.bf16.msra.mxu0 %v537
  %748 = vmatmul.bf16.gmra.mxu0 %v276
  %v749 = vpop.f32.mrf.mxu0
  %v750 = vadd.f32 %v701, %v749
  %v751 = vpop.f32.mrf.mxu0
  %v752 = vadd.f32 %v703, %v751
  %753 = vmatmul.bf16.gmra.mxu0 %v281
  %v754 = vpop.f32.mrf.mxu0
  %v755 = vadd.f32 %v706, %v754
  %v756 = vpop.f32.mrf.mxu0
  %v757 = vadd.f32 %v708, %v756
  %758 = vmatmul.bf16.gmra.mxu0 %v286
  %v759 = vpop.f32.mrf.mxu0
  %v760 = vadd.f32 %v711, %v759
  %v761 = vpop.f32.mrf.mxu0
  %v762 = vadd.f32 %v713, %v761
  %763 = vmatmul.bf16.gmra.mxu0 %v291
  %v764 = vpop.f32.mrf.mxu0
  %v765 = vadd.f32 %v716, %v764
  %v766 = vpop.f32.mrf.mxu0
  %v767 = vadd.f32 %v718, %v766
  %768 = vmatmul.bf16.gmra.mxu0 %v296
  %v769 = vpop.f32.mrf.mxu0
  %v770 = vadd.f32 %v721, %v769
  %v771 = vpop.f32.mrf.mxu0
  %v772 = vadd.f32 %v723, %v771
  %773 = vmatmul.bf16.gmra.mxu0 %v301
  %v774 = vpop.f32.mrf.mxu0
  %v775 = vadd.f32 %v726, %v774
  %v776 = vpop.f32.mrf.mxu0
  %v777 = vadd.f32 %v728, %v776
  %778 = vmatmul.bf16.gmra.mxu0 %v306
  %v779 = vpop.f32.mrf.mxu0
  %v780 = vadd.f32 %v731, %v779
  %v781 = vpop.f32.mrf.mxu0
  %v782 = vadd.f32 %v733, %v781
  %783 = vmatmul.bf16.gmra.mxu0 %v311
  %v784 = vpop.f32.mrf.mxu0
  %v785 = vadd.f32 %v736, %v784
  %v786 = vpop.f32.mrf.mxu0
  %v787 = vadd.f32 %v738, %v786
  %788 = vdwg.mxu0
  %789 = vmatpush.bf16.msra.mxu0 %v552
  %790 = vmatpush.bf16.msra.mxu0 %v551
  %791 = vmatpush.bf16.msra.mxu0 %v550
  %792 = vmatpush.bf16.msra.mxu0 %v549
  %793 = vmatpush.bf16.msra.mxu0 %v548
  %794 = vmatpush.bf16.msra.mxu0 %v547
  %795 = vmatpush.bf16.msra.mxu0 %v546
  %796 = vmatpush.bf16.msra.mxu0 %v545
  %797 = vmatmul.bf16.gmra.mxu0 %v277
  %v798 = vpop.f32.mrf.mxu0
  %v799 = vadd.f32 %v750, %v798
  %v800 = vpop.f32.mrf.mxu0
  %v801 = vadd.f32 %v752, %v800
  %802 = vmatmul.bf16.gmra.mxu0 %v282
  %v803 = vpop.f32.mrf.mxu0
  %v804 = vadd.f32 %v755, %v803
  %v805 = vpop.f32.mrf.mxu0
  %v806 = vadd.f32 %v757, %v805
  %807 = vmatmul.bf16.gmra.mxu0 %v287
  %v808 = vpop.f32.mrf.mxu0
  %v809 = vadd.f32 %v760, %v808
  %v810 = vpop.f32.mrf.mxu0
  %v811 = vadd.f32 %v762, %v810
  %812 = vmatmul.bf16.gmra.mxu0 %v292
  %v813 = vpop.f32.mrf.mxu0
  %v814 = vadd.f32 %v765, %v813
  %v815 = vpop.f32.mrf.mxu0
  %v816 = vadd.f32 %v767, %v815
  %817 = vmatmul.bf16.gmra.mxu0 %v297
  %v818 = vpop.f32.mrf.mxu0
  %v819 = vadd.f32 %v770, %v818
  %v820 = vpop.f32.mrf.mxu0
  %v821 = vadd.f32 %v772, %v820
  %822 = vmatmul.bf16.gmra.mxu0 %v302
  %v823 = vpop.f32.mrf.mxu0
  %v824 = vadd.f32 %v775, %v823
  %v825 = vpop.f32.mrf.mxu0
  %v826 = vadd.f32 %v777, %v825
  %827 = vmatmul.bf16.gmra.mxu0 %v307
  %v828 = vpop.f32.mrf.mxu0
  %v829 = vadd.f32 %v780, %v828
  %v830 = vpop.f32.mrf.mxu0
  %v831 = vadd.f32 %v782, %v830
  %832 = vmatmul.bf16.gmra.mxu0 %v312
  %v833 = vpop.f32.mrf.mxu0
  %v834 = vadd.f32 %v785, %v833
  %v835 = vpop.f32.mrf.mxu0
  %v836 = vadd.f32 %v787, %v835
  %837 = vdwg.mxu0
  %v838 = vadd.f32 %v799, %v801
  %v839 = vadd.f32 %v838, %v804
  %v840 = vadd.f32 %v839, %v806
  %v841 = vadd.f32 %v840, %v809
  %v842 = vadd.f32 %v841, %v811
  %v843 = vadd.f32 %v842, %v814
  %v844 = vadd.f32 %v843, %v816
  %v845 = vadd.f32 %v844, %v819
  %v846 = vadd.f32 %v845, %v821
  %v847 = vadd.f32 %v846, %v824
  %v848 = vadd.f32 %v847, %v826
  %v849 = vadd.f32 %v848, %v829
  %v850 = vadd.f32 %v849, %v831
  %v851 = vadd.f32 %v850, %v834
  %v852 = vadd.f32 %v851, %v836
  %v853 = vrot.slane %v852, 4
  %v854 = vadd.f32 %v852, %v853
  %v855 = vrot.slane %v854, 2
  %v856 = vadd.f32 %v854, %v855
  %v857 = vrot.slane %v856, 1
  %v858 = vadd.f32 %v856, %v857
  %v859 = vmul.f32 %v799, %v799
  %v860 = vmul.f32 %v801, %v801
  %v861 = vmul.f32 %v804, %v804
  %v862 = vmul.f32 %v806, %v806
  %v863 = vmul.f32 %v809, %v809
  %v864 = vmul.f32 %v811, %v811
  %v865 = vmul.f32 %v814, %v814
  %v866 = vmul.f32 %v816, %v816
  %v867 = vmul.f32 %v819, %v819
  %v868 = vmul.f32 %v821, %v821
  %v869 = vmul.f32 %v824, %v824
  %v870 = vmul.f32 %v826, %v826
  %v871 = vmul.f32 %v829, %v829
  %v872 = vmul.f32 %v831, %v831
  %v873 = vmul.f32 %v834, %v834
  %v874 = vmul.f32 %v836, %v836
  %v875 = vadd.f32 %v859, %v860
  %v876 = vadd.f32 %v875, %v861
  %v877 = vadd.f32 %v876, %v862
  %v878 = vadd.f32 %v877, %v863
  %v879 = vadd.f32 %v878, %v864
  %v880 = vadd.f32 %v879, %v865
  %v881 = vadd.f32 %v880, %v866
  %v882 = vadd.f32 %v881, %v867
  %v883 = vadd.f32 %v882, %v868
  %v884 = vadd.f32 %v883, %v869
  %v885 = vadd.f32 %v884, %v870
  %v886 = vadd.f32 %v885, %v871
  %v887 = vadd.f32 %v886, %v872
  %v888 = vadd.f32 %v887, %v873
  %v889 = vadd.f32 %v888, %v874
  %v890 = vrot.slane %v889, 4
  %v891 = vadd.f32 %v889, %v890
  %v892 = vrot.slane %v891, 2
  %v893 = vadd.f32 %v891, %v892
  %v894 = vrot.slane %v893, 1
  %v895 = vadd.f32 %v893, %v894
  %vm896 = vcmask 1040384
  %v897 = vsel %vm896, %v858, %v895
  %p898 = scmp.eq.s32.totalorder 0, 0
  // Predicated region
  $region18: #{deep_cnn_forward.6} parent=0 // pred_check
    %p899 = pneg %p898
  $region19: #{deep_cnn_forward.6} parent=0 // pred_check_branch
    %901 = sbr.rel (%p899) target = $region21
  $region20: #{deep_cnn_forward.6} parent=0 // pred_region
    %902 = vst [vmem:[#allocation2] sm:$0x3] %v897
  $region21: #{deep_cnn_forward.6} parent=0 // pred_fallthru
    _
  %p903 = scmp.gt.s32.totalorder 0, 0
  // Predicated region
  $region22: #{deep_cnn_forward.6} parent=0 // pred_check
    %p904 = pneg %p903
  $region23: #{deep_cnn_forward.6} parent=0 // pred_check_branch
    %906 = sbr.rel (%p904) target = $region25
  $region24: #{deep_cnn_forward.6} parent=0 // pred_region
    %v907 = vld [vmem:[#allocation2] sm:$0x3]
    %v908 = vadd.f32 %v907, %v897
    %909 = vst [vmem:[#allocation2] sm:$0x3] %v908
  $region25: #{deep_cnn_forward.6} parent=0 // pred_fallthru
    _
  %s910 = smul.u32 0, 128
  %v911 = vpack.c.bf16 %v799, %v799
  %v912 = vpack.c.bf16 %v801, %v801
  %v913 = vpack.c.bf16 %v804, %v804
  %v914 = vpack.c.bf16 %v806, %v806
  %v915 = vpack.c.bf16 %v809, %v809
  %v916 = vpack.c.bf16 %v811, %v811
  %v917 = vpack.c.bf16 %v814, %v814
  %v918 = vpack.c.bf16 %v816, %v816
  %v919 = vpack.c.bf16 %v819, %v819
  %v920 = vpack.c.bf16 %v821, %v821
  %v921 = vpack.c.bf16 %v824, %v824
  %v922 = vpack.c.bf16 %v826, %v826
  %v923 = vpack.c.bf16 %v829, %v829
  %v924 = vpack.c.bf16 %v831, %v831
  %v925 = vpack.c.bf16 %v834, %v834
  %v926 = vpack.c.bf16 %v836, %v836
  %s927 = sshra.s32 %s910, 3
  %s928 = sand.u32 %s910, 7
  %s929 = smul.addr %s927, 4
  %s930 = scalar_lea.vmem %s4, %s929
  %931 = vst [vmem:[%s930] sm:$0xf] %v911
  %932 = vst [vmem:[%s930 + $0x4] sm:$0xf] %v912
  %933 = vst [vmem:[%s930 + $0x8] sm:$0xf] %v913
  %934 = vst [vmem:[%s930 + $0xc] sm:$0xf] %v914
  %935 = vst [vmem:[%s930 + $0x10] sm:$0xf] %v915
  %936 = vst [vmem:[%s930 + $0x14] sm:$0xf] %v916
  %937 = vst [vmem:[%s930 + $0x18] sm:$0xf] %v917
  %938 = vst [vmem:[%s930 + $0x1c] sm:$0xf] %v918
  %939 = vst [vmem:[%s930 + $0x20] sm:$0xf] %v919
  %940 = vst [vmem:[%s930 + $0x24] sm:$0xf] %v920
  %941 = vst [vmem:[%s930 + $0x28] sm:$0xf] %v921
  %942 = vst [vmem:[%s930 + $0x2c] sm:$0xf] %v922
  %943 = vst [vmem:[%s930 + $0x30] sm:$0xf] %v923
  %944 = vst [vmem:[%s930 + $0x34] sm:$0xf] %v924
  %945 = vst [vmem:[%s930 + $0x38] sm:$0xf] %v925
  %946 = vst [vmem:[%s930 + $0x3c] sm:$0xf] %v926
  // Predicated region
  $region26: #{deep_cnn_forward.6} parent=0 // pred_check
    %p947 = pneg %p898
  $region27: #{deep_cnn_forward.6} parent=0 // pred_check_branch
    %949 = sbr.rel (%p947) target = $region29
  $region28: #{deep_cnn_forward.6} parent=0 // pred_region
    %v950 = vld [vmem:[#allocation2] sm:$0x1]
    %v951 = vmul.f32 %v950, 0.0078125
    %v952 = vld [vmem:[#allocation2 + $0x1] sm:$0x1]
    %v953 = vmul.f32 %v952, 0.0078125
    %v954 = vmul.f32 %v951, %v951
    %v955 = vsub.f32 %v953, %v954
    %v956 = vadd.f32 %v955, 1e-05
    %v957 = vrsqrt.pop %v956
    %v958 = vmul.f32 %v957, %v956
    %v959 = vmul.f32 %v958, %v957
    %v960 = vmul.f32 0.5, %v959
    %v961 = vsub.f32 1.5, %v960
    %v962 = vmul.f32 %v957, %v961
    %vm963 = vweird.f32 %v956
    %vm964 = vweird.f32 %v957
    %vm965 = vmor %vm963, %vm964
    %v966 = vsel %vm965, %v957, %v962
    %v967 = vld [vmem:[%s2] sm:$0x1]
    %v968 = vmul.f32 %v966, %v967
    %v969 = vld [vmem:[%s3] sm:$0x1]
    %v970 = vmul.f32 %v951, %v968
    %v971 = vsub.f32 %v969, %v970
    %v972 = vld [vmem:[%s4] sm:$0xf]
    %v973 = vld [vmem:[%s4 + $0x4] sm:$0xf]
    %v974 = vld [vmem:[%s4 + $0x8] sm:$0xf]
    %v975 = vld [vmem:[%s4 + $0xc] sm:$0xf]
    %v976 = vld [vmem:[%s4 + $0x10] sm:$0xf]
    %v977 = vld [vmem:[%s4 + $0x14] sm:$0xf]
    %v978 = vld [vmem:[%s4 + $0x18] sm:$0xf]
    %v979 = vld [vmem:[%s4 + $0x1c] sm:$0xf]
    %v980 = vld [vmem:[%s4 + $0x20] sm:$0xf]
    %v981 = vld [vmem:[%s4 + $0x24] sm:$0xf]
    %v982 = vld [vmem:[%s4 + $0x28] sm:$0xf]
    %v983 = vld [vmem:[%s4 + $0x2c] sm:$0xf]
    %v984 = vld [vmem:[%s4 + $0x30] sm:$0xf]
    %v985 = vld [vmem:[%s4 + $0x34] sm:$0xf]
    %v986 = vld [vmem:[%s4 + $0x38] sm:$0xf]
    %v987 = vld [vmem:[%s4 + $0x3c] sm:$0xf]
    %v988 = vunpack.c.l.bf16 %v972
    %v989 = vunpack.c.l.bf16 %v973
    %v990 = vunpack.c.l.bf16 %v974
    %v991 = vunpack.c.l.bf16 %v975
    %v992 = vunpack.c.l.bf16 %v976
    %v993 = vunpack.c.l.bf16 %v977
    %v994 = vunpack.c.l.bf16 %v978
    %v995 = vunpack.c.l.bf16 %v979
    %v996 = vunpack.c.l.bf16 %v980
    %v997 = vunpack.c.l.bf16 %v981
    %v998 = vunpack.c.l.bf16 %v982
    %v999 = vunpack.c.l.bf16 %v983
    %v1000 = vunpack.c.l.bf16 %v984
    %v1001 = vunpack.c.l.bf16 %v985
    %v1002 = vunpack.c.l.bf16 %v986
    %v1003 = vunpack.c.l.bf16 %v987
    %v1004 = vperm.slane %v968, 0
    %v1005 = vmul.f32 %v988, %v1004
    %v1006 = vmul.f32 %v989, %v1004
    %v1007 = vmul.f32 %v990, %v1004
    %v1008 = vmul.f32 %v991, %v1004
    %v1009 = vmul.f32 %v992, %v1004
    %v1010 = vmul.f32 %v993, %v1004
    %v1011 = vmul.f32 %v994, %v1004
    %v1012 = vmul.f32 %v995, %v1004
    %v1013 = vmul.f32 %v996, %v1004
    %v1014 = vmul.f32 %v997, %v1004
    %v1015 = vmul.f32 %v998, %v1004
    %v1016 = vmul.f32 %v999, %v1004
    %v1017 = vmul.f32 %v1000, %v1004
    %v1018 = vmul.f32 %v1001, %v1004
    %v1019 = vmul.f32 %v1002, %v1004
    %v1020 = vmul.f32 %v1003, %v1004
    %v1022 = vperm.slane %v971, 0
    %v1024 = vadd.f32 %v1005, %v1022
    %v1025 = vadd.f32 %v1006, %v1022
    %v1026 = vadd.f32 %v1007, %v1022
    %v1027 = vadd.f32 %v1008, %v1022
    %v1028 = vadd.f32 %v1009, %v1022
    %v1029 = vadd.f32 %v1010, %v1022
    %v1030 = vadd.f32 %v1011, %v1022
    %v1031 = vadd.f32 %v1012, %v1022
    %v1032 = vadd.f32 %v1013, %v1022
    %v1033 = vadd.f32 %v1014, %v1022
    %v1034 = vadd.f32 %v1015, %v1022
    %v1035 = vadd.f32 %v1016, %v1022
    %v1036 = vadd.f32 %v1017, %v1022
    %v1037 = vadd.f32 %v1018, %v1022
    %v1038 = vadd.f32 %v1019, %v1022
    %v1039 = vadd.f32 %v1020, %v1022
    %v1040 = vmax.f32 %v1024, 0.0
    %v1041 = vmax.f32 %v1025, 0.0
    %v1042 = vmax.f32 %v1026, 0.0
    %v1043 = vmax.f32 %v1027, 0.0
    %v1044 = vmax.f32 %v1028, 0.0
    %v1045 = vmax.f32 %v1029, 0.0
    %v1046 = vmax.f32 %v1030, 0.0
    %v1047 = vmax.f32 %v1031, 0.0
    %v1048 = vmax.f32 %v1032, 0.0
    %v1049 = vmax.f32 %v1033, 0.0
    %v1050 = vmax.f32 %v1034, 0.0
    %v1051 = vmax.f32 %v1035, 0.0
    %v1052 = vmax.f32 %v1036, 0.0
    %v1053 = vmax.f32 %v1037, 0.0
    %v1054 = vmax.f32 %v1038, 0.0
    %v1055 = vmax.f32 %v1039, 0.0
    %v1056 = vpack.c.bf16 %v1040, %v1040
    %v1057 = vpack.c.bf16 %v1041, %v1041
    %v1058 = vpack.c.bf16 %v1042, %v1042
    %v1059 = vpack.c.bf16 %v1043, %v1043
    %v1060 = vpack.c.bf16 %v1044, %v1044
    %v1061 = vpack.c.bf16 %v1045, %v1045
    %v1062 = vpack.c.bf16 %v1046, %v1046
    %v1063 = vpack.c.bf16 %v1047, %v1047
    %v1064 = vpack.c.bf16 %v1048, %v1048
    %v1065 = vpack.c.bf16 %v1049, %v1049
    %v1066 = vpack.c.bf16 %v1050, %v1050
    %v1067 = vpack.c.bf16 %v1051, %v1051
    %v1068 = vpack.c.bf16 %v1052, %v1052
    %v1069 = vpack.c.bf16 %v1053, %v1053
    %v1070 = vpack.c.bf16 %v1054, %v1054
    %v1071 = vpack.c.bf16 %v1055, %v1055
    %1072 = vst [vmem:[%s4] sm:$0xf] %v1056
    %1073 = vst [vmem:[%s4 + $0x4] sm:$0xf] %v1057
    %1074 = vst [vmem:[%s4 + $0x8] sm:$0xf] %v1058
    %1075 = vst [vmem:[%s4 + $0xc] sm:$0xf] %v1059
    %1076 = vst [vmem:[%s4 + $0x10] sm:$0xf] %v1060
    %1077 = vst [vmem:[%s4 + $0x14] sm:$0xf] %v1061
    %1078 = vst [vmem:[%s4 + $0x18] sm:$0xf] %v1062
    %1079 = vst [vmem:[%s4 + $0x1c] sm:$0xf] %v1063
    %1080 = vst [vmem:[%s4 + $0x20] sm:$0xf] %v1064
    %1081 = vst [vmem:[%s4 + $0x24] sm:$0xf] %v1065
    %1082 = vst [vmem:[%s4 + $0x28] sm:$0xf] %v1066
    %1083 = vst [vmem:[%s4 + $0x2c] sm:$0xf] %v1067
    %1084 = vst [vmem:[%s4 + $0x30] sm:$0xf] %v1068
    %1085 = vst [vmem:[%s4 + $0x34] sm:$0xf] %v1069
    %1086 = vst [vmem:[%s4 + $0x38] sm:$0xf] %v1070
    %1087 = vst [vmem:[%s4 + $0x3c] sm:$0xf] %v1071
  $region29: #{deep_cnn_forward.6} parent=0 // pred_fallthru
    _
  // Predicated region
  $region30: #{deep_cnn_forward.6} parent=0 // pred_check
    _
  $region31: #{deep_cnn_forward.6} parent=0 // pred_check_branch
    %1089 = sbr.rel (0) target = $region33
  $region32: #{deep_cnn_forward.6} parent=0 // pred_region
    _
  $region33: #{deep_cnn_forward.6} parent=0 // pred_fallthru
    _
  // Predicated region
  $region34: #{deep_cnn_forward.6} parent=0 // pred_check
    _
  $region35: #{deep_cnn_forward.6} parent=0 // pred_check_branch
    %1091 = sbr.rel (0) target = $region37
  $region36: #{deep_cnn_forward.6} parent=0 // pred_region
    _
  $region37: #{deep_cnn_forward.6} parent=0 // pred_fallthru
    _

// kernel: deep_cnn_forward.7
$region0: #{deep_cnn_forward.7}
  #allocation0 [shape = 'u32[]', space=smem, size = 0x4, offset = 0x4, fixed_abs, tag = 'smem constant byte address 0x4 - core index']
  #allocation1 [shape = 'u32[72,128]{1,0:T(1,128)}', space=vmem, size = 0x9000, scoped, tag = 'internal scratch']
  #allocation2 [shape = 'f32[2,256]{1,0:T(2,128)}', space=vmem, size = 0x800, scoped, tag = 'scratch operand']
  %s0 = inlined_call_operand.vmem [shape: bf16[32,1152], index: 0, kind: input, shape index: {}]
  %s1 = inlined_call_operand.vmem [shape: bf16[1152,256], index: 1, kind: input, shape index: {}]
  %s2 = inlined_call_operand.vmem [shape: f32[1,256], index: 2, kind: input, shape index: {}]
  %s3 = inlined_call_operand.vmem [shape: f32[1,256], index: 3, kind: input, shape index: {}]
  %s4 = inlined_call_operand.vmem [shape: bf16[32,256], index: 4, kind: output, shape index: {}]
  %s5 = sld [smem:[#allocation0]]
  $region38: #{deep_cnn_forward.7} parent=0
    _
  %s7 = ssub.s32 1, %s5
  %s8 = scalar_select 0, %s7, %s5
  // Predicated region
  $region2: #{deep_cnn_forward.7} parent=0 // pred_check
    _
  $region3: #{deep_cnn_forward.7} parent=0 // pred_check_branch
    %10 = sbr.rel (0) target = $region5
  $region4: #{deep_cnn_forward.7} parent=0 // pred_region
    _
  $region5: #{deep_cnn_forward.7} parent=0 // pred_fallthru
    _
  // Predicated region
  $region6: #{deep_cnn_forward.7} parent=0 // pred_check
    _
  $region7: #{deep_cnn_forward.7} parent=0 // pred_check_branch
    %12 = sbr.rel (0) target = $region9
  $region8: #{deep_cnn_forward.7} parent=0 // pred_region
    _
  $region9: #{deep_cnn_forward.7} parent=0 // pred_fallthru
    _
  // Predicated region
  $region10: #{deep_cnn_forward.7} parent=0 // pred_check
    _
  $region11: #{deep_cnn_forward.7} parent=0 // pred_check_branch
    %14 = sbr.rel (0) target = $region13
  $region12: #{deep_cnn_forward.7} parent=0 // pred_region
    _
  $region13: #{deep_cnn_forward.7} parent=0 // pred_fallthru
    _
  // Predicated region
  $region14: #{deep_cnn_forward.7} parent=0 // pred_check
    _
  $region15: #{deep_cnn_forward.7} parent=0 // pred_check_branch
    %16 = sbr.rel (0) target = $region17
  $region16: #{deep_cnn_forward.7} parent=0 // pred_region
    _
  $region17: #{deep_cnn_forward.7} parent=0 // pred_fallthru
    _
  %v17 = vld [vmem:[%s0] sm:$0xff]
  %v18 = vld [vmem:[%s0 + $0x8] sm:$0xff]
  %v19 = vld [vmem:[%s0 + $0x10] sm:$0xff]
  %v20 = vld [vmem:[%s0 + $0x18] sm:$0xff]
  %v21 = vld [vmem:[%s0 + $0x20] sm:$0xf]
  %v22 = vld [vmem:[%s0 + $0x24] sm:$0xff]
  %v23 = vld [vmem:[%s0 + $0x2c] sm:$0xff]
  %v24 = vld [vmem:[%s0 + $0x34] sm:$0xff]
  %v25 = vld [vmem:[%s0 + $0x3c] sm:$0xff]
  %v26 = vld [vmem:[%s0 + $0x44] sm:$0xf]
  %v27 = vld [vmem:[%s0 + $0x48] sm:$0xff]
  %v28 = vld [vmem:[%s0 + $0x50] sm:$0xff]
  %v29 = vld [vmem:[%s0 + $0x58] sm:$0xff]
  %v30 = vld [vmem:[%s0 + $0x60] sm:$0xff]
  %v31 = vld [vmem:[%s0 + $0x68] sm:$0xf]
  %v32 = vld [vmem:[%s0 + $0x6c] sm:$0xff]
  %v33 = vld [vmem:[%s0 + $0x74] sm:$0xff]
  %v34 = vld [vmem:[%s0 + $0x7c] sm:$0xff]
  %v35 = vld [vmem:[%s0 + $0x84] sm:$0xff]
  %v36 = vld [vmem:[%s0 + $0x8c] sm:$0xf]
  %v37 = vld [vmem:[%s1] sm:$0xff]
  %v38 = vld [vmem:[%s1 + $0x8] sm:$0xff]
  %v39 = vld [vmem:[%s1 + $0x10] sm:$0xff]
  %v40 = vld [vmem:[%s1 + $0x18] sm:$0xff]
  %v41 = vld [vmem:[%s1 + $0x20] sm:$0xff]
  %v42 = vld [vmem:[%s1 + $0x28] sm:$0xff]
  %v43 = vld [vmem:[%s1 + $0x30] sm:$0xff]
  %v44 = vld [vmem:[%s1 + $0x38] sm:$0xff]
  %v45 = vld [vmem:[%s1 + $0x40] sm:$0xff]
  %v46 = vld [vmem:[%s1 + $0x48] sm:$0xff]
  %v47 = vld [vmem:[%s1 + $0x50] sm:$0xff]
  %v48 = vld [vmem:[%s1 + $0x58] sm:$0xff]
  %v49 = vld [vmem:[%s1 + $0x60] sm:$0xff]
  %v50 = vld [vmem:[%s1 + $0x68] sm:$0xff]
  %v51 = vld [vmem:[%s1 + $0x70] sm:$0xff]
  %v52 = vld [vmem:[%s1 + $0x78] sm:$0xff]
  %v53 = vld [vmem:[%s1 + $0x80] sm:$0xff]
  %v54 = vld [vmem:[%s1 + $0x88] sm:$0xff]
  %v55 = vld [vmem:[%s1 + $0x90] sm:$0xff]
  %v56 = vld [vmem:[%s1 + $0x98] sm:$0xff]
  %v57 = vld [vmem:[%s1 + $0xa0] sm:$0xff]
  %v58 = vld [vmem:[%s1 + $0xa8] sm:$0xff]
  %v59 = vld [vmem:[%s1 + $0xb0] sm:$0xff]
  %v60 = vld [vmem:[%s1 + $0xb8] sm:$0xff]
  %v61 = vld [vmem:[%s1 + $0xc0] sm:$0xff]
  %v62 = vld [vmem:[%s1 + $0xc8] sm:$0xff]
  %v63 = vld [vmem:[%s1 + $0xd0] sm:$0xff]
  %v64 = vld [vmem:[%s1 + $0xd8] sm:$0xff]
  %v65 = vld [vmem:[%s1 + $0xe0] sm:$0xff]
  %v66 = vld [vmem:[%s1 + $0xe8] sm:$0xff]
  %v67 = vld [vmem:[%s1 + $0xf0] sm:$0xff]
  %v68 = vld [vmem:[%s1 + $0xf8] sm:$0xff]
  %v69 = vld [vmem:[%s1 + $0x100] sm:$0xff]
  %v70 = vld [vmem:[%s1 + $0x108] sm:$0xff]
  %v71 = vld [vmem:[%s1 + $0x110] sm:$0xff]
  %v72 = vld [vmem:[%s1 + $0x118] sm:$0xff]
  %v73 = vld [vmem:[%s1 + $0x120] sm:$0xff]
  %v74 = vld [vmem:[%s1 + $0x128] sm:$0xff]
  %v75 = vld [vmem:[%s1 + $0x130] sm:$0xff]
  %v76 = vld [vmem:[%s1 + $0x138] sm:$0xff]
  %v77 = vld [vmem:[%s1 + $0x140] sm:$0xff]
  %v78 = vld [vmem:[%s1 + $0x148] sm:$0xff]
  %v79 = vld [vmem:[%s1 + $0x150] sm:$0xff]
  %v80 = vld [vmem:[%s1 + $0x158] sm:$0xff]
  %v81 = vld [vmem:[%s1 + $0x160] sm:$0xff]
  %v82 = vld [vmem:[%s1 + $0x168] sm:$0xff]
  %v83 = vld [vmem:[%s1 + $0x170] sm:$0xff]
  %v84 = vld [vmem:[%s1 + $0x178] sm:$0xff]
  %v85 = vld [vmem:[%s1 + $0x180] sm:$0xff]
  %v86 = vld [vmem:[%s1 + $0x188] sm:$0xff]
  %v87 = vld [vmem:[%s1 + $0x190] sm:$0xff]
  %v88 = vld [vmem:[%s1 + $0x198] sm:$0xff]
  %v89 = vld [vmem:[%s1 + $0x1a0] sm:$0xff]
  %v90 = vld [vmem:[%s1 + $0x1a8] sm:$0xff]
  %v91 = vld [vmem:[%s1 + $0x1b0] sm:$0xff]
  %v92 = vld [vmem:[%s1 + $0x1b8] sm:$0xff]
  %v93 = vld [vmem:[%s1 + $0x1c0] sm:$0xff]
  %v94 = vld [vmem:[%s1 + $0x1c8] sm:$0xff]
  %v95 = vld [vmem:[%s1 + $0x1d0] sm:$0xff]
  %v96 = vld [vmem:[%s1 + $0x1d8] sm:$0xff]
  %v97 = vld [vmem:[%s1 + $0x1e0] sm:$0xff]
  %v98 = vld [vmem:[%s1 + $0x1e8] sm:$0xff]
  %v99 = vld [vmem:[%s1 + $0x1f0] sm:$0xff]
  %v100 = vld [vmem:[%s1 + $0x1f8] sm:$0xff]
  %v101 = vld [vmem:[%s1 + $0x200] sm:$0xff]
  %v102 = vld [vmem:[%s1 + $0x208] sm:$0xff]
  %v103 = vld [vmem:[%s1 + $0x210] sm:$0xff]
  %v104 = vld [vmem:[%s1 + $0x218] sm:$0xff]
  %v105 = vld [vmem:[%s1 + $0x220] sm:$0xff]
  %v106 = vld [vmem:[%s1 + $0x228] sm:$0xff]
  %v107 = vld [vmem:[%s1 + $0x230] sm:$0xff]
  %v108 = vld [vmem:[%s1 + $0x238] sm:$0xff]
  %v109 = vld [vmem:[%s1 + $0x240] sm:$0xff]
  %v110 = vld [vmem:[%s1 + $0x248] sm:$0xff]
  %v111 = vld [vmem:[%s1 + $0x250] sm:$0xff]
  %v112 = vld [vmem:[%s1 + $0x258] sm:$0xff]
  %v113 = vld [vmem:[%s1 + $0x260] sm:$0xff]
  %v114 = vld [vmem:[%s1 + $0x268] sm:$0xff]
  %v115 = vld [vmem:[%s1 + $0x270] sm:$0xff]
  %v116 = vld [vmem:[%s1 + $0x278] sm:$0xff]
  %v117 = vld [vmem:[%s1 + $0x280] sm:$0xff]
  %v118 = vld [vmem:[%s1 + $0x288] sm:$0xff]
  %v119 = vld [vmem:[%s1 + $0x290] sm:$0xff]
  %v120 = vld [vmem:[%s1 + $0x298] sm:$0xff]
  %v121 = vld [vmem:[%s1 + $0x2a0] sm:$0xff]
  %v122 = vld [vmem:[%s1 + $0x2a8] sm:$0xff]
  %v123 = vld [vmem:[%s1 + $0x2b0] sm:$0xff]
  %v124 = vld [vmem:[%s1 + $0x2b8] sm:$0xff]
  %v125 = vld [vmem:[%s1 + $0x2c0] sm:$0xff]
  %v126 = vld [vmem:[%s1 + $0x2c8] sm:$0xff]
  %v127 = vld [vmem:[%s1 + $0x2d0] sm:$0xff]
  %v128 = vld [vmem:[%s1 + $0x2d8] sm:$0xff]
  %v129 = vld [vmem:[%s1 + $0x2e0] sm:$0xff]
  %v130 = vld [vmem:[%s1 + $0x2e8] sm:$0xff]
  %v131 = vld [vmem:[%s1 + $0x2f0] sm:$0xff]
  %v132 = vld [vmem:[%s1 + $0x2f8] sm:$0xff]
  %v133 = vld [vmem:[%s1 + $0x300] sm:$0xff]
  %v134 = vld [vmem:[%s1 + $0x308] sm:$0xff]
  %v135 = vld [vmem:[%s1 + $0x310] sm:$0xff]
  %v136 = vld [vmem:[%s1 + $0x318] sm:$0xff]
  %v137 = vld [vmem:[%s1 + $0x320] sm:$0xff]
  %v138 = vld [vmem:[%s1 + $0x328] sm:$0xff]
  %v139 = vld [vmem:[%s1 + $0x330] sm:$0xff]
  %v140 = vld [vmem:[%s1 + $0x338] sm:$0xff]
  %v141 = vld [vmem:[%s1 + $0x340] sm:$0xff]
  %v142 = vld [vmem:[%s1 + $0x348] sm:$0xff]
  %v143 = vld [vmem:[%s1 + $0x350] sm:$0xff]
  %v144 = vld [vmem:[%s1 + $0x358] sm:$0xff]
  %v145 = vld [vmem:[%s1 + $0x360] sm:$0xff]
  %v146 = vld [vmem:[%s1 + $0x368] sm:$0xff]
  %v147 = vld [vmem:[%s1 + $0x370] sm:$0xff]
  %v148 = vld [vmem:[%s1 + $0x378] sm:$0xff]
  %v149 = vld [vmem:[%s1 + $0x380] sm:$0xff]
  %v150 = vld [vmem:[%s1 + $0x388] sm:$0xff]
  %v151 = vld [vmem:[%s1 + $0x390] sm:$0xff]
  %v152 = vld [vmem:[%s1 + $0x398] sm:$0xff]
  %v153 = vld [vmem:[%s1 + $0x3a0] sm:$0xff]
  %v154 = vld [vmem:[%s1 + $0x3a8] sm:$0xff]
  %v155 = vld [vmem:[%s1 + $0x3b0] sm:$0xff]
  %v156 = vld [vmem:[%s1 + $0x3b8] sm:$0xff]
  %v157 = vld [vmem:[%s1 + $0x3c0] sm:$0xff]
  %v158 = vld [vmem:[%s1 + $0x3c8] sm:$0xff]
  %v159 = vld [vmem:[%s1 + $0x3d0] sm:$0xff]
  %v160 = vld [vmem:[%s1 + $0x3d8] sm:$0xff]
  %v161 = vld [vmem:[%s1 + $0x3e0] sm:$0xff]
  %v162 = vld [vmem:[%s1 + $0x3e8] sm:$0xff]
  %v163 = vld [vmem:[%s1 + $0x3f0] sm:$0xff]
  %v164 = vld [vmem:[%s1 + $0x3f8] sm:$0xff]
  %v165 = vld [vmem:[%s1 + $0x400] sm:$0xff]
  %v166 = vld [vmem:[%s1 + $0x408] sm:$0xff]
  %v167 = vld [vmem:[%s1 + $0x410] sm:$0xff]
  %v168 = vld [vmem:[%s1 + $0x418] sm:$0xff]
  %v169 = vld [vmem:[%s1 + $0x420] sm:$0xff]
  %v170 = vld [vmem:[%s1 + $0x428] sm:$0xff]
  %v171 = vld [vmem:[%s1 + $0x430] sm:$0xff]
  %v172 = vld [vmem:[%s1 + $0x438] sm:$0xff]
  %v173 = vld [vmem:[%s1 + $0x440] sm:$0xff]
  %v174 = vld [vmem:[%s1 + $0x448] sm:$0xff]
  %v175 = vld [vmem:[%s1 + $0x450] sm:$0xff]
  %v176 = vld [vmem:[%s1 + $0x458] sm:$0xff]
  %v177 = vld [vmem:[%s1 + $0x460] sm:$0xff]
  %v178 = vld [vmem:[%s1 + $0x468] sm:$0xff]
  %v179 = vld [vmem:[%s1 + $0x470] sm:$0xff]
  %v180 = vld [vmem:[%s1 + $0x478] sm:$0xff]
  %v201 = vunpack.c.l.b16 %v17
  %v202 = vunpack.c.h.b16 %v17
  %v203 = vunpack.c.l.b16 %v18
  %v204 = vunpack.c.h.b16 %v18
  %v205 = vunpack.c.l.b16 %v19
  %v206 = vunpack.c.h.b16 %v19
  %v207 = vunpack.c.l.b16 %v20
  %v208 = vunpack.c.h.b16 %v20
  %v209 = vunpack.c.l.b16 %v21
  %v210 = vunpack.c.l.b16 %v22
  %v211 = vunpack.c.h.b16 %v22
  %v212 = vunpack.c.l.b16 %v23
  %v213 = vunpack.c.h.b16 %v23
  %v214 = vunpack.c.l.b16 %v24
  %v215 = vunpack.c.h.b16 %v24
  %v216 = vunpack.c.l.b16 %v25
  %v217 = vunpack.c.h.b16 %v25
  %v218 = vunpack.c.l.b16 %v26
  %v219 = vunpack.c.l.b16 %v27
  %v220 = vunpack.c.h.b16 %v27
  %v221 = vunpack.c.l.b16 %v28
  %v222 = vunpack.c.h.b16 %v28
  %v223 = vunpack.c.l.b16 %v29
  %v224 = vunpack.c.h.b16 %v29
  %v225 = vunpack.c.l.b16 %v30
  %v226 = vunpack.c.h.b16 %v30
  %v227 = vunpack.c.l.b16 %v31
  %v228 = vunpack.c.l.b16 %v32
  %v229 = vunpack.c.h.b16 %v32
  %v230 = vunpack.c.l.b16 %v33
  %v231 = vunpack.c.h.b16 %v33
  %v232 = vunpack.c.l.b16 %v34
  %v233 = vunpack.c.h.b16 %v34
  %v234 = vunpack.c.l.b16 %v35
  %v235 = vunpack.c.h.b16 %v35
  %v236 = vunpack.c.l.b16 %v36
  %v237 = vpack.c.b16 %v210, %v201
  %v238 = vpack.c.b16 %v211, %v202
  %v239 = vpack.c.b16 %v212, %v203
  %v240 = vpack.c.b16 %v213, %v204
  %v241 = vpack.c.b16 %v214, %v205
  %v242 = vpack.c.b16 %v215, %v206
  %v243 = vpack.c.b16 %v216, %v207
  %v244 = vpack.c.b16 %v217, %v208
  %v245 = vpack.c.b16 %v218, %v209
  %v246 = vpack.c.b16 %v228, %v219
  %v247 = vpack.c.b16 %v229, %v220
  %v248 = vpack.c.b16 %v230, %v221
  %v249 = vpack.c.b16 %v231, %v222
  %v250 = vpack.c.b16 %v232, %v223
  %v251 = vpack.c.b16 %v233, %v224
  %v252 = vpack.c.b16 %v234, %v225
  %v253 = vpack.c.b16 %v235, %v226
  %v254 = vpack.c.b16 %v236, %v227
  %v417 = vunpack.c.l.b16 %v37
  %v418 = vunpack.c.h.b16 %v37
  %v419 = vunpack.c.l.b16 %v38
  %v420 = vunpack.c.h.b16 %v38
  %v421 = vunpack.c.l.b16 %v39
  %v422 = vunpack.c.h.b16 %v39
  %v423 = vunpack.c.l.b16 %v40
  %v424 = vunpack.c.h.b16 %v40
  %v425 = vunpack.c.l.b16 %v41
  %v426 = vunpack.c.h.b16 %v41
  %v427 = vunpack.c.l.b16 %v42
  %v428 = vunpack.c.h.b16 %v42
  %v429 = vunpack.c.l.b16 %v43
  %v430 = vunpack.c.h.b16 %v43
  %v431 = vunpack.c.l.b16 %v44
  %v432 = vunpack.c.h.b16 %v44
  %v433 = vunpack.c.l.b16 %v45
  %v434 = vunpack.c.h.b16 %v45
  %v435 = vunpack.c.l.b16 %v46
  %v436 = vunpack.c.h.b16 %v46
  %v437 = vunpack.c.l.b16 %v47
  %v438 = vunpack.c.h.b16 %v47
  %v439 = vunpack.c.l.b16 %v48
  %v440 = vunpack.c.h.b16 %v48
  %v441 = vunpack.c.l.b16 %v49
  %v442 = vunpack.c.h.b16 %v49
  %v443 = vunpack.c.l.b16 %v50
  %v444 = vunpack.c.h.b16 %v50
  %v445 = vunpack.c.l.b16 %v51
  %v446 = vunpack.c.h.b16 %v51
  %v447 = vunpack.c.l.b16 %v52
  %v448 = vunpack.c.h.b16 %v52
  %v449 = vunpack.c.l.b16 %v53
  %v450 = vunpack.c.h.b16 %v53
  %v451 = vunpack.c.l.b16 %v54
  %v452 = vunpack.c.h.b16 %v54
  %v453 = vunpack.c.l.b16 %v55
  %v454 = vunpack.c.h.b16 %v55
  %v455 = vunpack.c.l.b16 %v56
  %v456 = vunpack.c.h.b16 %v56
  %v457 = vunpack.c.l.b16 %v57
  %v458 = vunpack.c.h.b16 %v57
  %v459 = vunpack.c.l.b16 %v58
  %v460 = vunpack.c.h.b16 %v58
  %v461 = vunpack.c.l.b16 %v59
  %v462 = vunpack.c.h.b16 %v59
  %v463 = vunpack.c.l.b16 %v60
  %v464 = vunpack.c.h.b16 %v60
  %v465 = vunpack.c.l.b16 %v61
  %v466 = vunpack.c.h.b16 %v61
  %v467 = vunpack.c.l.b16 %v62
  %v468 = vunpack.c.h.b16 %v62
  %v469 = vunpack.c.l.b16 %v63
  %v470 = vunpack.c.h.b16 %v63
  %v471 = vunpack.c.l.b16 %v64
  %v472 = vunpack.c.h.b16 %v64
  %v473 = vunpack.c.l.b16 %v65
  %v474 = vunpack.c.h.b16 %v65
  %v475 = vunpack.c.l.b16 %v66
  %v476 = vunpack.c.h.b16 %v66
  %v477 = vunpack.c.l.b16 %v67
  %v478 = vunpack.c.h.b16 %v67
  %v479 = vunpack.c.l.b16 %v68
  %v480 = vunpack.c.h.b16 %v68
  %v481 = vunpack.c.l.b16 %v69
  %v482 = vunpack.c.h.b16 %v69
  %v483 = vunpack.c.l.b16 %v70
  %v484 = vunpack.c.h.b16 %v70
  %v485 = vunpack.c.l.b16 %v71
  %v486 = vunpack.c.h.b16 %v71
  %v487 = vunpack.c.l.b16 %v72
  %v488 = vunpack.c.h.b16 %v72
  %v489 = vunpack.c.l.b16 %v73
  %v490 = vunpack.c.h.b16 %v73
  %v491 = vunpack.c.l.b16 %v74
  %v492 = vunpack.c.h.b16 %v74
  %v493 = vunpack.c.l.b16 %v75
  %v494 = vunpack.c.h.b16 %v75
  %v495 = vunpack.c.l.b16 %v76
  %v496 = vunpack.c.h.b16 %v76
  %v497 = vunpack.c.l.b16 %v77
  %v498 = vunpack.c.h.b16 %v77
  %v499 = vunpack.c.l.b16 %v78
  %v500 = vunpack.c.h.b16 %v78
  %v501 = vunpack.c.l.b16 %v79
  %v502 = vunpack.c.h.b16 %v79
  %v503 = vunpack.c.l.b16 %v80
  %v504 = vunpack.c.h.b16 %v80
  %v505 = vunpack.c.l.b16 %v81
  %v506 = vunpack.c.h.b16 %v81
  %v507 = vunpack.c.l.b16 %v82
  %v508 = vunpack.c.h.b16 %v82
  %v509 = vunpack.c.l.b16 %v83
  %v510 = vunpack.c.h.b16 %v83
  %v511 = vunpack.c.l.b16 %v84
  %v512 = vunpack.c.h.b16 %v84
  %v513 = vunpack.c.l.b16 %v85
  %v514 = vunpack.c.h.b16 %v85
  %v515 = vunpack.c.l.b16 %v86
  %v516 = vunpack.c.h.b16 %v86
  %v517 = vunpack.c.l.b16 %v87
  %v518 = vunpack.c.h.b16 %v87
  %v519 = vunpack.c.l.b16 %v88
  %v520 = vunpack.c.h.b16 %v88
  %v521 = vunpack.c.l.b16 %v89
  %v522 = vunpack.c.h.b16 %v89
  %v523 = vunpack.c.l.b16 %v90
  %v524 = vunpack.c.h.b16 %v90
  %v525 = vunpack.c.l.b16 %v91
  %v526 = vunpack.c.h.b16 %v91
  %v527 = vunpack.c.l.b16 %v92
  %v528 = vunpack.c.h.b16 %v92
  %v529 = vunpack.c.l.b16 %v93
  %v530 = vunpack.c.h.b16 %v93
  %v531 = vunpack.c.l.b16 %v94
  %v532 = vunpack.c.h.b16 %v94
  %v533 = vunpack.c.l.b16 %v95
  %v534 = vunpack.c.h.b16 %v95
  %v535 = vunpack.c.l.b16 %v96
  %v536 = vunpack.c.h.b16 %v96
  %v537 = vunpack.c.l.b16 %v97
  %v538 = vunpack.c.h.b16 %v97
  %v539 = vunpack.c.l.b16 %v98
  %v540 = vunpack.c.h.b16 %v98
  %v541 = vunpack.c.l.b16 %v99
  %v542 = vunpack.c.h.b16 %v99
  %v543 = vunpack.c.l.b16 %v100
  %v544 = vunpack.c.h.b16 %v100
  %v545 = vunpack.c.l.b16 %v101
  %v546 = vunpack.c.h.b16 %v101
  %v547 = vunpack.c.l.b16 %v102
  %v548 = vunpack.c.h.b16 %v102
  %v549 = vunpack.c.l.b16 %v103
  %v550 = vunpack.c.h.b16 %v103
  %v551 = vunpack.c.l.b16 %v104
  %v552 = vunpack.c.h.b16 %v104
  %v553 = vunpack.c.l.b16 %v105
  %v554 = vunpack.c.h.b16 %v105
  %v555 = vunpack.c.l.b16 %v106
  %v556 = vunpack.c.h.b16 %v106
  %v557 = vunpack.c.l.b16 %v107
  %v558 = vunpack.c.h.b16 %v107
  %v559 = vunpack.c.l.b16 %v108
  %v560 = vunpack.c.h.b16 %v108
  %v561 = vunpack.c.l.b16 %v109
  %v562 = vunpack.c.h.b16 %v109
  %v563 = vunpack.c.l.b16 %v110
  %v564 = vunpack.c.h.b16 %v110
  %v565 = vunpack.c.l.b16 %v111
  %v566 = vunpack.c.h.b16 %v111
  %v567 = vunpack.c.l.b16 %v112
  %v568 = vunpack.c.h.b16 %v112
  %v569 = vunpack.c.l.b16 %v113
  %v570 = vunpack.c.h.b16 %v113
  %v571 = vunpack.c.l.b16 %v114
  %v572 = vunpack.c.h.b16 %v114
  %v573 = vunpack.c.l.b16 %v115
  %v574 = vunpack.c.h.b16 %v115
  %v575 = vunpack.c.l.b16 %v116
  %v576 = vunpack.c.h.b16 %v116
  %v577 = vunpack.c.l.b16 %v117
  %v578 = vunpack.c.h.b16 %v117
  %v579 = vunpack.c.l.b16 %v118
  %v580 = vunpack.c.h.b16 %v118
  %v581 = vunpack.c.l.b16 %v119
  %v582 = vunpack.c.h.b16 %v119
  %v583 = vunpack.c.l.b16 %v120
  %v584 = vunpack.c.h.b16 %v120
  %v585 = vunpack.c.l.b16 %v121
  %v586 = vunpack.c.h.b16 %v121
  %v587 = vunpack.c.l.b16 %v122
  %v588 = vunpack.c.h.b16 %v122
  %v589 = vunpack.c.l.b16 %v123
  %v590 = vunpack.c.h.b16 %v123
  %v591 = vunpack.c.l.b16 %v124
  %v592 = vunpack.c.h.b16 %v124
  %v593 = vunpack.c.l.b16 %v125
  %v594 = vunpack.c.h.b16 %v125
  %v595 = vunpack.c.l.b16 %v126
  %v596 = vunpack.c.h.b16 %v126
  %v597 = vunpack.c.l.b16 %v127
  %v598 = vunpack.c.h.b16 %v127
  %v599 = vunpack.c.l.b16 %v128
  %v600 = vunpack.c.h.b16 %v128
  %v601 = vunpack.c.l.b16 %v129
  %v602 = vunpack.c.h.b16 %v129
  %v603 = vunpack.c.l.b16 %v130
  %v604 = vunpack.c.h.b16 %v130
  %v605 = vunpack.c.l.b16 %v131
  %v606 = vunpack.c.h.b16 %v131
  %v607 = vunpack.c.l.b16 %v132
  %v608 = vunpack.c.h.b16 %v132
  %v609 = vunpack.c.l.b16 %v133
  %v610 = vunpack.c.h.b16 %v133
  %v611 = vunpack.c.l.b16 %v134
  %v612 = vunpack.c.h.b16 %v134
  %v613 = vunpack.c.l.b16 %v135
  %v614 = vunpack.c.h.b16 %v135
  %v615 = vunpack.c.l.b16 %v136
  %v616 = vunpack.c.h.b16 %v136
  %v617 = vunpack.c.l.b16 %v137
  %v618 = vunpack.c.h.b16 %v137
  %v619 = vunpack.c.l.b16 %v138
  %v620 = vunpack.c.h.b16 %v138
  %v621 = vunpack.c.l.b16 %v139
  %v622 = vunpack.c.h.b16 %v139
  %v623 = vunpack.c.l.b16 %v140
  %v624 = vunpack.c.h.b16 %v140
  %v625 = vunpack.c.l.b16 %v141
  %v626 = vunpack.c.h.b16 %v141
  %v627 = vunpack.c.l.b16 %v142
  %v628 = vunpack.c.h.b16 %v142
  %v629 = vunpack.c.l.b16 %v143
  %v630 = vunpack.c.h.b16 %v143
  %v631 = vunpack.c.l.b16 %v144
  %v632 = vunpack.c.h.b16 %v144
  %v633 = vunpack.c.l.b16 %v145
  %v634 = vunpack.c.h.b16 %v145
  %v635 = vunpack.c.l.b16 %v146
  %v636 = vunpack.c.h.b16 %v146
  %v637 = vunpack.c.l.b16 %v147
  %v638 = vunpack.c.h.b16 %v147
  %v639 = vunpack.c.l.b16 %v148
  %v640 = vunpack.c.h.b16 %v148
  %v641 = vunpack.c.l.b16 %v149
  %v642 = vunpack.c.h.b16 %v149
  %v643 = vunpack.c.l.b16 %v150
  %v644 = vunpack.c.h.b16 %v150
  %v645 = vunpack.c.l.b16 %v151
  %v646 = vunpack.c.h.b16 %v151
  %v647 = vunpack.c.l.b16 %v152
  %v648 = vunpack.c.h.b16 %v152
  %v649 = vunpack.c.l.b16 %v153
  %v650 = vunpack.c.h.b16 %v153
  %v651 = vunpack.c.l.b16 %v154
  %v652 = vunpack.c.h.b16 %v154
  %v653 = vunpack.c.l.b16 %v155
  %v654 = vunpack.c.h.b16 %v155
  %v655 = vunpack.c.l.b16 %v156
  %v656 = vunpack.c.h.b16 %v156
  %v657 = vunpack.c.l.b16 %v157
  %v658 = vunpack.c.h.b16 %v157
  %v659 = vunpack.c.l.b16 %v158
  %v660 = vunpack.c.h.b16 %v158
  %v661 = vunpack.c.l.b16 %v159
  %v662 = vunpack.c.h.b16 %v159
  %v663 = vunpack.c.l.b16 %v160
  %v664 = vunpack.c.h.b16 %v160
  %v665 = vunpack.c.l.b16 %v161
  %v666 = vunpack.c.h.b16 %v161
  %v667 = vunpack.c.l.b16 %v162
  %v668 = vunpack.c.h.b16 %v162
  %v669 = vunpack.c.l.b16 %v163
  %v670 = vunpack.c.h.b16 %v163
  %v671 = vunpack.c.l.b16 %v164
  %v672 = vunpack.c.h.b16 %v164
  %v673 = vunpack.c.l.b16 %v165
  %v674 = vunpack.c.h.b16 %v165
  %v675 = vunpack.c.l.b16 %v166
  %v676 = vunpack.c.h.b16 %v166
  %v677 = vunpack.c.l.b16 %v167
  %v678 = vunpack.c.h.b16 %v167
  %v679 = vunpack.c.l.b16 %v168
  %v680 = vunpack.c.h.b16 %v168
  %v681 = vunpack.c.l.b16 %v169
  %v682 = vunpack.c.h.b16 %v169
  %v683 = vunpack.c.l.b16 %v170
  %v684 = vunpack.c.h.b16 %v170
  %v685 = vunpack.c.l.b16 %v171
  %v686 = vunpack.c.h.b16 %v171
  %v687 = vunpack.c.l.b16 %v172
  %v688 = vunpack.c.h.b16 %v172
  %v689 = vunpack.c.l.b16 %v173
  %v690 = vunpack.c.h.b16 %v173
  %v691 = vunpack.c.l.b16 %v174
  %v692 = vunpack.c.h.b16 %v174
  %v693 = vunpack.c.l.b16 %v175
  %v694 = vunpack.c.h.b16 %v175
  %v695 = vunpack.c.l.b16 %v176
  %v696 = vunpack.c.h.b16 %v176
  %v697 = vunpack.c.l.b16 %v177
  %v698 = vunpack.c.h.b16 %v177
  %v699 = vunpack.c.l.b16 %v178
  %v700 = vunpack.c.h.b16 %v178
  %v701 = vunpack.c.l.b16 %v179
  %v702 = vunpack.c.h.b16 %v179
  %v703 = vunpack.c.l.b16 %v180
  %v704 = vunpack.c.h.b16 %v180
  %v705 = vpack.c.b16 %v419, %v417
  %v706 = vpack.c.b16 %v420, %v418
  %v707 = vpack.c.b16 %v423, %v421
  %v708 = vpack.c.b16 %v424, %v422
  %v709 = vpack.c.b16 %v427, %v425
  %v710 = vpack.c.b16 %v428, %v426
  %v711 = vpack.c.b16 %v431, %v429
  %v712 = vpack.c.b16 %v432, %v430
  %v713 = vpack.c.b16 %v435, %v433
  %v714 = vpack.c.b16 %v436, %v434
  %v715 = vpack.c.b16 %v439, %v437
  %v716 = vpack.c.b16 %v440, %v438
  %v717 = vpack.c.b16 %v443, %v441
  %v718 = vpack.c.b16 %v444, %v442
  %v719 = vpack.c.b16 %v447, %v445
  %v720 = vpack.c.b16 %v448, %v446
  %v721 = vpack.c.b16 %v451, %v449
  %v722 = vpack.c.b16 %v452, %v450
  %v723 = vpack.c.b16 %v455, %v453
  %v724 = vpack.c.b16 %v456, %v454
  %v725 = vpack.c.b16 %v459, %v457
  %v726 = vpack.c.b16 %v460, %v458
  %v727 = vpack.c.b16 %v463, %v461
  %v728 = vpack.c.b16 %v464, %v462
  %v729 = vpack.c.b16 %v467, %v465
  %v730 = vpack.c.b16 %v468, %v466
  %v731 = vpack.c.b16 %v471, %v469
  %v732 = vpack.c.b16 %v472, %v470
  %v733 = vpack.c.b16 %v475, %v473
  %v734 = vpack.c.b16 %v476, %v474
  %v735 = vpack.c.b16 %v479, %v477
  %v736 = vpack.c.b16 %v480, %v478
  %v737 = vpack.c.b16 %v483, %v481
  %v738 = vpack.c.b16 %v484, %v482
  %v739 = vpack.c.b16 %v487, %v485
  %v740 = vpack.c.b16 %v488, %v486
  %v741 = vpack.c.b16 %v491, %v489
  %v742 = vpack.c.b16 %v492, %v490
  %v743 = vpack.c.b16 %v495, %v493
  %v744 = vpack.c.b16 %v496, %v494
  %v745 = vpack.c.b16 %v499, %v497
  %v746 = vpack.c.b16 %v500, %v498
  %v747 = vpack.c.b16 %v503, %v501
  %v748 = vpack.c.b16 %v504, %v502
  %v749 = vpack.c.b16 %v507, %v505
  %v750 = vpack.c.b16 %v508, %v506
  %v751 = vpack.c.b16 %v511, %v509
  %v752 = vpack.c.b16 %v512, %v510
  %v753 = vpack.c.b16 %v515, %v513
  %v754 = vpack.c.b16 %v516, %v514
  %v755 = vpack.c.b16 %v519, %v517
  %v756 = vpack.c.b16 %v520, %v518
  %v757 = vpack.c.b16 %v523, %v521
  %v758 = vpack.c.b16 %v524, %v522
  %v759 = vpack.c.b16 %v527, %v525
  %v760 = vpack.c.b16 %v528, %v526
  %v761 = vpack.c.b16 %v531, %v529
  %v762 = vpack.c.b16 %v532, %v530
  %v763 = vpack.c.b16 %v535, %v533
  %v764 = vpack.c.b16 %v536, %v534
  %v765 = vpack.c.b16 %v539, %v537
  %v766 = vpack.c.b16 %v540, %v538
  %v767 = vpack.c.b16 %v543, %v541
  %v768 = vpack.c.b16 %v544, %v542
  %v769 = vpack.c.b16 %v547, %v545
  %v770 = vpack.c.b16 %v548, %v546
  %v771 = vpack.c.b16 %v551, %v549
  %v772 = vpack.c.b16 %v552, %v550
  %v773 = vpack.c.b16 %v555, %v553
  %v774 = vpack.c.b16 %v556, %v554
  %v775 = vpack.c.b16 %v559, %v557
  %v776 = vpack.c.b16 %v560, %v558
  %v777 = vpack.c.b16 %v563, %v561
  %v778 = vpack.c.b16 %v564, %v562
  %v779 = vpack.c.b16 %v567, %v565
  %v780 = vpack.c.b16 %v568, %v566
  %v781 = vpack.c.b16 %v571, %v569
  %v782 = vpack.c.b16 %v572, %v570
  %v783 = vpack.c.b16 %v575, %v573
  %v784 = vpack.c.b16 %v576, %v574
  %v785 = vpack.c.b16 %v579, %v577
  %v786 = vpack.c.b16 %v580, %v578
  %v787 = vpack.c.b16 %v583, %v581
  %v788 = vpack.c.b16 %v584, %v582
  %v789 = vpack.c.b16 %v587, %v585
  %v790 = vpack.c.b16 %v588, %v586
  %v791 = vpack.c.b16 %v591, %v589
  %v792 = vpack.c.b16 %v592, %v590
  %v793 = vpack.c.b16 %v595, %v593
  %v794 = vpack.c.b16 %v596, %v594
  %v795 = vpack.c.b16 %v599, %v597
  %v796 = vpack.c.b16 %v600, %v598
  %v797 = vpack.c.b16 %v603, %v601
  %v798 = vpack.c.b16 %v604, %v602
  %v799 = vpack.c.b16 %v607, %v605
  %v800 = vpack.c.b16 %v608, %v606
  %v801 = vpack.c.b16 %v611, %v609
  %v802 = vpack.c.b16 %v612, %v610
  %v803 = vpack.c.b16 %v615, %v613
  %v804 = vpack.c.b16 %v616, %v614
  %v805 = vpack.c.b16 %v619, %v617
  %v806 = vpack.c.b16 %v620, %v618
  %v807 = vpack.c.b16 %v623, %v621
  %v808 = vpack.c.b16 %v624, %v622
  %v809 = vpack.c.b16 %v627, %v625
  %v810 = vpack.c.b16 %v628, %v626
  %v811 = vpack.c.b16 %v631, %v629
  %v812 = vpack.c.b16 %v632, %v630
  %v813 = vpack.c.b16 %v635, %v633
  %v814 = vpack.c.b16 %v636, %v634
  %v815 = vpack.c.b16 %v639, %v637
  %v816 = vpack.c.b16 %v640, %v638
  %v817 = vpack.c.b16 %v643, %v641
  %v818 = vpack.c.b16 %v644, %v642
  %v819 = vpack.c.b16 %v647, %v645
  %v820 = vpack.c.b16 %v648, %v646
  %v821 = vpack.c.b16 %v651, %v649
  %v822 = vpack.c.b16 %v652, %v650
  %v823 = vpack.c.b16 %v655, %v653
  %v824 = vpack.c.b16 %v656, %v654
  %v825 = vpack.c.b16 %v659, %v657
  %v826 = vpack.c.b16 %v660, %v658
  %v827 = vpack.c.b16 %v663, %v661
  %v828 = vpack.c.b16 %v664, %v662
  %v829 = vpack.c.b16 %v667, %v665
  %v830 = vpack.c.b16 %v668, %v666
  %v831 = vpack.c.b16 %v671, %v669
  %v832 = vpack.c.b16 %v672, %v670
  %v833 = vpack.c.b16 %v675, %v673
  %v834 = vpack.c.b16 %v676, %v674
  %v835 = vpack.c.b16 %v679, %v677
  %v836 = vpack.c.b16 %v680, %v678
  %v837 = vpack.c.b16 %v683, %v681
  %v838 = vpack.c.b16 %v684, %v682
  %v839 = vpack.c.b16 %v687, %v685
  %v840 = vpack.c.b16 %v688, %v686
  %v841 = vpack.c.b16 %v691, %v689
  %v842 = vpack.c.b16 %v692, %v690
  %v843 = vpack.c.b16 %v695, %v693
  %v844 = vpack.c.b16 %v696, %v694
  %v845 = vpack.c.b16 %v699, %v697
  %v846 = vpack.c.b16 %v700, %v698
  %v847 = vpack.c.b16 %v703, %v701
  %v848 = vpack.c.b16 %v704, %v702
  %993 = vmatpush.bf16.msra.mxu0 %v719
  %994 = vmatpush.bf16.msra.mxu0 %v717
  %995 = vmatpush.bf16.msra.mxu0 %v715
  %996 = vmatpush.bf16.msra.mxu0 %v713
  %997 = vmatpush.bf16.msra.mxu0 %v711
  %998 = vmatpush.bf16.msra.mxu0 %v709
  %999 = vmatpush.bf16.msra.mxu0 %v707
  %1000 = vmatpush.bf16.msra.mxu0 %v705
  %1001 = vmatmul.bf16.gmra.mxu0 %v237
  %v1002 = vpop.f32.mrf.mxu0
  %v1003 = vadd.f32 0.0, %v1002
  %v1004 = vpop.f32.mrf.mxu0
  %v1005 = vadd.f32 0.0, %v1004
  %1006 = vmatmul.bf16.gmra.mxu0 %v246
  %v1007 = vpop.f32.mrf.mxu0
  %v1008 = vadd.f32 0.0, %v1007
  %v1009 = vpop.f32.mrf.mxu0
  %v1010 = vadd.f32 0.0, %v1009
  %1011 = vdwg.mxu0
  %1012 = vmatpush.bf16.msra.mxu0 %v735
  %1013 = vmatpush.bf16.msra.mxu0 %v733
  %1014 = vmatpush.bf16.msra.mxu0 %v731
  %1015 = vmatpush.bf16.msra.mxu0 %v729
  %1016 = vmatpush.bf16.msra.mxu0 %v727
  %1017 = vmatpush.bf16.msra.mxu0 %v725
  %1018 = vmatpush.bf16.msra.mxu0 %v723
  %1019 = vmatpush.bf16.msra.mxu0 %v721
  %1020 = vmatmul.bf16.gmra.mxu0 %v238
  %v1021 = vpop.f32.mrf.mxu0
  %v1022 = vadd.f32 %v1003, %v1021
  %v1023 = vpop.f32.mrf.mxu0
  %v1024 = vadd.f32 %v1005, %v1023
  %1025 = vmatmul.bf16.gmra.mxu0 %v247
  %v1026 = vpop.f32.mrf.mxu0
  %v1027 = vadd.f32 %v1008, %v1026
  %v1028 = vpop.f32.mrf.mxu0
  %v1029 = vadd.f32 %v1010, %v1028
  %1030 = vdwg.mxu0
  %1031 = vmatpush.bf16.msra.mxu0 %v751
  %1032 = vmatpush.bf16.msra.mxu0 %v749
  %1033 = vmatpush.bf16.msra.mxu0 %v747
  %1034 = vmatpush.bf16.msra.mxu0 %v745
  %1035 = vmatpush.bf16.msra.mxu0 %v743
  %1036 = vmatpush.bf16.msra.mxu0 %v741
  %1037 = vmatpush.bf16.msra.mxu0 %v739
  %1038 = vmatpush.bf16.msra.mxu0 %v737
  %1039 = vmatmul.bf16.gmra.mxu0 %v239
  %v1040 = vpop.f32.mrf.mxu0
  %v1041 = vadd.f32 %v1022, %v1040
  %v1042 = vpop.f32.mrf.mxu0
  %v1043 = vadd.f32 %v1024, %v1042
  %1044 = vmatmul.bf16.gmra.mxu0 %v248
  %v1045 = vpop.f32.mrf.mxu0
  %v1046 = vadd.f32 %v1027, %v1045
  %v1047 = vpop.f32.mrf.mxu0
  %v1048 = vadd.f32 %v1029, %v1047
  %1049 = vdwg.mxu0
  %1050 = vmatpush.bf16.msra.mxu0 %v767
  %1051 = vmatpush.bf16.msra.mxu0 %v765
  %1052 = vmatpush.bf16.msra.mxu0 %v763
  %1053 = vmatpush.bf16.msra.mxu0 %v761
  %1054 = vmatpush.bf16.msra.mxu0 %v759
  %1055 = vmatpush.bf16.msra.mxu0 %v757
  %1056 = vmatpush.bf16.msra.mxu0 %v755
  %1057 = vmatpush.bf16.msra.mxu0 %v753
  %1058 = vmatmul.bf16.gmra.mxu0 %v240
  %v1059 = vpop.f32.mrf.mxu0
  %v1060 = vadd.f32 %v1041, %v1059
  %v1061 = vpop.f32.mrf.mxu0
  %v1062 = vadd.f32 %v1043, %v1061
  %1063 = vmatmul.bf16.gmra.mxu0 %v249
  %v1064 = vpop.f32.mrf.mxu0
  %v1065 = vadd.f32 %v1046, %v1064
  %v1066 = vpop.f32.mrf.mxu0
  %v1067 = vadd.f32 %v1048, %v1066
  %1068 = vdwg.mxu0
  %1069 = vmatpush.bf16.msra.mxu0 %v783
  %1070 = vmatpush.bf16.msra.mxu0 %v781
  %1071 = vmatpush.bf16.msra.mxu0 %v779
  %1072 = vmatpush.bf16.msra.mxu0 %v777
  %1073 = vmatpush.bf16.msra.mxu0 %v775
  %1074 = vmatpush.bf16.msra.mxu0 %v773
  %1075 = vmatpush.bf16.msra.mxu0 %v771
  %1076 = vmatpush.bf16.msra.mxu0 %v769
  %1077 = vmatmul.bf16.gmra.mxu0 %v241
  %v1078 = vpop.f32.mrf.mxu0
  %v1079 = vadd.f32 %v1060, %v1078
  %v1080 = vpop.f32.mrf.mxu0
  %v1081 = vadd.f32 %v1062, %v1080
  %1082 = vmatmul.bf16.gmra.mxu0 %v250
  %v1083 = vpop.f32.mrf.mxu0
  %v1084 = vadd.f32 %v1065, %v1083
  %v1085 = vpop.f32.mrf.mxu0
  %v1086 = vadd.f32 %v1067, %v1085
  %1087 = vdwg.mxu0
  %1088 = vmatpush.bf16.msra.mxu0 %v799
  %1089 = vmatpush.bf16.msra.mxu0 %v797
  %1090 = vmatpush.bf16.msra.mxu0 %v795
  %1091 = vmatpush.bf16.msra.mxu0 %v793
  %1092 = vmatpush.bf16.msra.mxu0 %v791
  %1093 = vmatpush.bf16.msra.mxu0 %v789
  %1094 = vmatpush.bf16.msra.mxu0 %v787
  %1095 = vmatpush.bf16.msra.mxu0 %v785
  %1096 = vmatmul.bf16.gmra.mxu0 %v242
  %v1097 = vpop.f32.mrf.mxu0
  %v1098 = vadd.f32 %v1079, %v1097
  %v1099 = vpop.f32.mrf.mxu0
  %v1100 = vadd.f32 %v1081, %v1099
  %1101 = vmatmul.bf16.gmra.mxu0 %v251
  %v1102 = vpop.f32.mrf.mxu0
  %v1103 = vadd.f32 %v1084, %v1102
  %v1104 = vpop.f32.mrf.mxu0
  %v1105 = vadd.f32 %v1086, %v1104
  %1106 = vdwg.mxu0
  %1107 = vmatpush.bf16.msra.mxu0 %v815
  %1108 = vmatpush.bf16.msra.mxu0 %v813
  %1109 = vmatpush.bf16.msra.mxu0 %v811
  %1110 = vmatpush.bf16.msra.mxu0 %v809
  %1111 = vmatpush.bf16.msra.mxu0 %v807
  %1112 = vmatpush.bf16.msra.mxu0 %v805
  %1113 = vmatpush.bf16.msra.mxu0 %v803
  %1114 = vmatpush.bf16.msra.mxu0 %v801
  %1115 = vmatmul.bf16.gmra.mxu0 %v243
  %v1116 = vpop.f32.mrf.mxu0
  %v1117 = vadd.f32 %v1098, %v1116
  %v1118 = vpop.f32.mrf.mxu0
  %v1119 = vadd.f32 %v1100, %v1118
  %1120 = vmatmul.bf16.gmra.mxu0 %v252
  %v1121 = vpop.f32.mrf.mxu0
  %v1122 = vadd.f32 %v1103, %v1121
  %v1123 = vpop.f32.mrf.mxu0
  %v1124 = vadd.f32 %v1105, %v1123
  %1125 = vdwg.mxu0
  %1126 = vmatpush.bf16.msra.mxu0 %v831
  %1127 = vmatpush.bf16.msra.mxu0 %v829
  %1128 = vmatpush.bf16.msra.mxu0 %v827
  %1129 = vmatpush.bf16.msra.mxu0 %v825
  %1130 = vmatpush.bf16.msra.mxu0 %v823
  %1131 = vmatpush.bf16.msra.mxu0 %v821
  %1132 = vmatpush.bf16.msra.mxu0 %v819
  %1133 = vmatpush.bf16.msra.mxu0 %v817
  %1134 = vmatmul.bf16.gmra.mxu0 %v244
  %v1135 = vpop.f32.mrf.mxu0
  %v1136 = vadd.f32 %v1117, %v1135
  %v1137 = vpop.f32.mrf.mxu0
  %v1138 = vadd.f32 %v1119, %v1137
  %1139 = vmatmul.bf16.gmra.mxu0 %v253
  %v1140 = vpop.f32.mrf.mxu0
  %v1141 = vadd.f32 %v1122, %v1140
  %v1142 = vpop.f32.mrf.mxu0
  %v1143 = vadd.f32 %v1124, %v1142
  %1144 = vdwg.mxu0
  %1145 = vmatpush.bf16.msra.mxu0 %v847
  %1146 = vmatpush.bf16.msra.mxu0 %v845
  %1147 = vmatpush.bf16.msra.mxu0 %v843
  %1148 = vmatpush.bf16.msra.mxu0 %v841
  %1149 = vmatpush.bf16.msra.mxu0 %v839
  %1150 = vmatpush.bf16.msra.mxu0 %v837
  %1151 = vmatpush.bf16.msra.mxu0 %v835
  %1152 = vmatpush.bf16.msra.mxu0 %v833
  %1153 = vmatmul.bf16.gmra.mxu0 %v245
  %v1154 = vpop.f32.mrf.mxu0
  %v1155 = vadd.f32 %v1136, %v1154
  %v1156 = vpop.f32.mrf.mxu0
  %v1157 = vadd.f32 %v1138, %v1156
  %1158 = vmatmul.bf16.gmra.mxu0 %v254
  %v1159 = vpop.f32.mrf.mxu0
  %v1160 = vadd.f32 %v1141, %v1159
  %v1161 = vpop.f32.mrf.mxu0
  %v1162 = vadd.f32 %v1143, %v1161
  %1163 = vdwg.mxu0
  %1164 = vmatpush.bf16.msra.mxu0 %v720
  %1165 = vmatpush.bf16.msra.mxu0 %v718
  %1166 = vmatpush.bf16.msra.mxu0 %v716
  %1167 = vmatpush.bf16.msra.mxu0 %v714
  %1168 = vmatpush.bf16.msra.mxu0 %v712
  %1169 = vmatpush.bf16.msra.mxu0 %v710
  %1170 = vmatpush.bf16.msra.mxu0 %v708
  %1171 = vmatpush.bf16.msra.mxu0 %v706
  %1172 = vmatmul.bf16.gmra.mxu0 %v237
  %v1173 = vpop.f32.mrf.mxu0
  %v1174 = vadd.f32 0.0, %v1173
  %v1175 = vpop.f32.mrf.mxu0
  %v1176 = vadd.f32 0.0, %v1175
  %1177 = vmatmul.bf16.gmra.mxu0 %v246
  %v1178 = vpop.f32.mrf.mxu0
  %v1179 = vadd.f32 0.0, %v1178
  %v1180 = vpop.f32.mrf.mxu0
  %v1181 = vadd.f32 0.0, %v1180
  %1182 = vdwg.mxu0
  %1183 = vmatpush.bf16.msra.mxu0 %v736
  %1184 = vmatpush.bf16.msra.mxu0 %v734
  %1185 = vmatpush.bf16.msra.mxu0 %v732
  %1186 = vmatpush.bf16.msra.mxu0 %v730
  %1187 = vmatpush.bf16.msra.mxu0 %v728
  %1188 = vmatpush.bf16.msra.mxu0 %v726
  %1189 = vmatpush.bf16.msra.mxu0 %v724
  %1190 = vmatpush.bf16.msra.mxu0 %v722
  %1191 = vmatmul.bf16.gmra.mxu0 %v238
  %v1192 = vpop.f32.mrf.mxu0
  %v1193 = vadd.f32 %v1174, %v1192
  %v1194 = vpop.f32.mrf.mxu0
  %v1195 = vadd.f32 %v1176, %v1194
  %1196 = vmatmul.bf16.gmra.mxu0 %v247
  %v1197 = vpop.f32.mrf.mxu0
  %v1198 = vadd.f32 %v1179, %v1197
  %v1199 = vpop.f32.mrf.mxu0
  %v1200 = vadd.f32 %v1181, %v1199
  %1201 = vdwg.mxu0
  %1202 = vmatpush.bf16.msra.mxu0 %v752
  %1203 = vmatpush.bf16.msra.mxu0 %v750
  %1204 = vmatpush.bf16.msra.mxu0 %v748
  %1205 = vmatpush.bf16.msra.mxu0 %v746
  %1206 = vmatpush.bf16.msra.mxu0 %v744
  %1207 = vmatpush.bf16.msra.mxu0 %v742
  %1208 = vmatpush.bf16.msra.mxu0 %v740
  %1209 = vmatpush.bf16.msra.mxu0 %v738
  %1210 = vmatmul.bf16.gmra.mxu0 %v239
  %v1211 = vpop.f32.mrf.mxu0
  %v1212 = vadd.f32 %v1193, %v1211
  %v1213 = vpop.f32.mrf.mxu0
  %v1214 = vadd.f32 %v1195, %v1213
  %1215 = vmatmul.bf16.gmra.mxu0 %v248
  %v1216 = vpop.f32.mrf.mxu0
  %v1217 = vadd.f32 %v1198, %v1216
  %v1218 = vpop.f32.mrf.mxu0
  %v1219 = vadd.f32 %v1200, %v1218
  %1220 = vdwg.mxu0
  %1221 = vmatpush.bf16.msra.mxu0 %v768
  %1222 = vmatpush.bf16.msra.mxu0 %v766
  %1223 = vmatpush.bf16.msra.mxu0 %v764
  %1224 = vmatpush.bf16.msra.mxu0 %v762
  %1225 = vmatpush.bf16.msra.mxu0 %v760
  %1226 = vmatpush.bf16.msra.mxu0 %v758
  %1227 = vmatpush.bf16.msra.mxu0 %v756
  %1228 = vmatpush.bf16.msra.mxu0 %v754
  %1229 = vmatmul.bf16.gmra.mxu0 %v240
  %v1230 = vpop.f32.mrf.mxu0
  %v1231 = vadd.f32 %v1212, %v1230
  %v1232 = vpop.f32.mrf.mxu0
  %v1233 = vadd.f32 %v1214, %v1232
  %1234 = vmatmul.bf16.gmra.mxu0 %v249
  %v1235 = vpop.f32.mrf.mxu0
  %v1236 = vadd.f32 %v1217, %v1235
  %v1237 = vpop.f32.mrf.mxu0
  %v1238 = vadd.f32 %v1219, %v1237
  %1239 = vdwg.mxu0
  %1240 = vmatpush.bf16.msra.mxu0 %v784
  %1241 = vmatpush.bf16.msra.mxu0 %v782
  %1242 = vmatpush.bf16.msra.mxu0 %v780
  %1243 = vmatpush.bf16.msra.mxu0 %v778
  %1244 = vmatpush.bf16.msra.mxu0 %v776
  %1245 = vmatpush.bf16.msra.mxu0 %v774
  %1246 = vmatpush.bf16.msra.mxu0 %v772
  %1247 = vmatpush.bf16.msra.mxu0 %v770
  %1248 = vmatmul.bf16.gmra.mxu0 %v241
  %v1249 = vpop.f32.mrf.mxu0
  %v1250 = vadd.f32 %v1231, %v1249
  %v1251 = vpop.f32.mrf.mxu0
  %v1252 = vadd.f32 %v1233, %v1251
  %1253 = vmatmul.bf16.gmra.mxu0 %v250
  %v1254 = vpop.f32.mrf.mxu0
  %v1255 = vadd.f32 %v1236, %v1254
  %v1256 = vpop.f32.mrf.mxu0
  %v1257 = vadd.f32 %v1238, %v1256
  %1258 = vdwg.mxu0
  %1259 = vmatpush.bf16.msra.mxu0 %v800
  %1260 = vmatpush.bf16.msra.mxu0 %v798
  %1261 = vmatpush.bf16.msra.mxu0 %v796
  %1262 = vmatpush.bf16.msra.mxu0 %v794
  %1263 = vmatpush.bf16.msra.mxu0 %v792
  %1264 = vmatpush.bf16.msra.mxu0 %v790
  %1265 = vmatpush.bf16.msra.mxu0 %v788
  %1266 = vmatpush.bf16.msra.mxu0 %v786
  %1267 = vmatmul.bf16.gmra.mxu0 %v242
  %v1268 = vpop.f32.mrf.mxu0
  %v1269 = vadd.f32 %v1250, %v1268
  %v1270 = vpop.f32.mrf.mxu0
  %v1271 = vadd.f32 %v1252, %v1270
  %1272 = vmatmul.bf16.gmra.mxu0 %v251
  %v1273 = vpop.f32.mrf.mxu0
  %v1274 = vadd.f32 %v1255, %v1273
  %v1275 = vpop.f32.mrf.mxu0
  %v1276 = vadd.f32 %v1257, %v1275
  %1277 = vdwg.mxu0
  %1278 = vmatpush.bf16.msra.mxu0 %v816
  %1279 = vmatpush.bf16.msra.mxu0 %v814
  %1280 = vmatpush.bf16.msra.mxu0 %v812
  %1281 = vmatpush.bf16.msra.mxu0 %v810
  %1282 = vmatpush.bf16.msra.mxu0 %v808
  %1283 = vmatpush.bf16.msra.mxu0 %v806
  %1284 = vmatpush.bf16.msra.mxu0 %v804
  %1285 = vmatpush.bf16.msra.mxu0 %v802
  %1286 = vmatmul.bf16.gmra.mxu0 %v243
  %v1287 = vpop.f32.mrf.mxu0
  %v1288 = vadd.f32 %v1269, %v1287
  %v1289 = vpop.f32.mrf.mxu0
  %v1290 = vadd.f32 %v1271, %v1289
  %1291 = vmatmul.bf16.gmra.mxu0 %v252
  %v1292 = vpop.f32.mrf.mxu0
  %v1293 = vadd.f32 %v1274, %v1292
  %v1294 = vpop.f32.mrf.mxu0
  %v1295 = vadd.f32 %v1276, %v1294
  %1296 = vdwg.mxu0
  %1297 = vmatpush.bf16.msra.mxu0 %v832
  %1298 = vmatpush.bf16.msra.mxu0 %v830
  %1299 = vmatpush.bf16.msra.mxu0 %v828
  %1300 = vmatpush.bf16.msra.mxu0 %v826
  %1301 = vmatpush.bf16.msra.mxu0 %v824
  %1302 = vmatpush.bf16.msra.mxu0 %v822
  %1303 = vmatpush.bf16.msra.mxu0 %v820
  %1304 = vmatpush.bf16.msra.mxu0 %v818
  %1305 = vmatmul.bf16.gmra.mxu0 %v244
  %v1306 = vpop.f32.mrf.mxu0
  %v1307 = vadd.f32 %v1288, %v1306
  %v1308 = vpop.f32.mrf.mxu0
  %v1309 = vadd.f32 %v1290, %v1308
  %1310 = vmatmul.bf16.gmra.mxu0 %v253
  %v1311 = vpop.f32.mrf.mxu0
  %v1312 = vadd.f32 %v1293, %v1311
  %v1313 = vpop.f32.mrf.mxu0
  %v1314 = vadd.f32 %v1295, %v1313
  %1315 = vdwg.mxu0
  %1316 = vmatpush.bf16.msra.mxu0 %v848
  %1317 = vmatpush.bf16.msra.mxu0 %v846
  %1318 = vmatpush.bf16.msra.mxu0 %v844
  %1319 = vmatpush.bf16.msra.mxu0 %v842
  %1320 = vmatpush.bf16.msra.mxu0 %v840
  %1321 = vmatpush.bf16.msra.mxu0 %v838
  %1322 = vmatpush.bf16.msra.mxu0 %v836
  %1323 = vmatpush.bf16.msra.mxu0 %v834
  %1324 = vmatmul.bf16.gmra.mxu0 %v245
  %v1325 = vpop.f32.mrf.mxu0
  %v1326 = vadd.f32 %v1307, %v1325
  %v1327 = vpop.f32.mrf.mxu0
  %v1328 = vadd.f32 %v1309, %v1327
  %1329 = vmatmul.bf16.gmra.mxu0 %v254
  %v1330 = vpop.f32.mrf.mxu0
  %v1331 = vadd.f32 %v1312, %v1330
  %v1332 = vpop.f32.mrf.mxu0
  %v1333 = vadd.f32 %v1314, %v1332
  %1334 = vdwg.mxu0
  %v1335 = vadd.f32 %v1155, %v1157
  %v1336 = vadd.f32 %v1335, %v1160
  %v1337 = vadd.f32 %v1336, %v1162
  %v1338 = vrot.slane %v1337, 4
  %v1339 = vadd.f32 %v1337, %v1338
  %v1340 = vrot.slane %v1339, 2
  %v1341 = vadd.f32 %v1339, %v1340
  %v1342 = vrot.slane %v1341, 1
  %v1343 = vadd.f32 %v1341, %v1342
  %v1344 = vadd.f32 %v1326, %v1328
  %v1345 = vadd.f32 %v1344, %v1331
  %v1346 = vadd.f32 %v1345, %v1333
  %v1347 = vrot.slane %v1346, 4
  %v1348 = vadd.f32 %v1346, %v1347
  %v1349 = vrot.slane %v1348, 2
  %v1350 = vadd.f32 %v1348, %v1349
  %v1351 = vrot.slane %v1350, 1
  %v1352 = vadd.f32 %v1350, %v1351
  %v1353 = vmul.f32 %v1155, %v1155
  %v1354 = vmul.f32 %v1326, %v1326
  %v1355 = vmul.f32 %v1157, %v1157
  %v1356 = vmul.f32 %v1328, %v1328
  %v1357 = vmul.f32 %v1160, %v1160
  %v1358 = vmul.f32 %v1331, %v1331
  %v1359 = vmul.f32 %v1162, %v1162
  %v1360 = vmul.f32 %v1333, %v1333
  %v1361 = vadd.f32 %v1353, %v1355
  %v1362 = vadd.f32 %v1361, %v1357
  %v1363 = vadd.f32 %v1362, %v1359
  %v1364 = vrot.slane %v1363, 4
  %v1365 = vadd.f32 %v1363, %v1364
  %v1366 = vrot.slane %v1365, 2
  %v1367 = vadd.f32 %v1365, %v1366
  %v1368 = vrot.slane %v1367, 1
  %v1369 = vadd.f32 %v1367, %v1368
  %v1370 = vadd.f32 %v1354, %v1356
  %v1371 = vadd.f32 %v1370, %v1358
  %v1372 = vadd.f32 %v1371, %v1360
  %v1373 = vrot.slane %v1372, 4
  %v1374 = vadd.f32 %v1372, %v1373
  %v1375 = vrot.slane %v1374, 2
  %v1376 = vadd.f32 %v1374, %v1375
  %v1377 = vrot.slane %v1376, 1
  %v1378 = vadd.f32 %v1376, %v1377
  %vm1379 = vcmask 1040384
  %v1380 = vsel %vm1379, %v1343, %v1369
  %v1381 = vsel %vm1379, %v1352, %v1378
  %p1382 = scmp.eq.s32.totalorder 0, 0
  // Predicated region
  $region18: #{deep_cnn_forward.7} parent=0 // pred_check
    %p1383 = pneg %p1382
  $region19: #{deep_cnn_forward.7} parent=0 // pred_check_branch
    %1385 = sbr.rel (%p1383) target = $region21
  $region20: #{deep_cnn_forward.7} parent=0 // pred_region
    %v1388 = vrot.slane %v1381, 6
    %vm1389 = vcmask 1041408
    %v1390 = vsel %vm1389, %v1380, %v1388
    %1392 = vst [vmem:[#allocation2] sm:$0xf] %v1390
  $region21: #{deep_cnn_forward.7} parent=0 // pred_fallthru
    _
  %p1393 = scmp.gt.s32.totalorder 0, 0
  // Predicated region
  $region22: #{deep_cnn_forward.7} parent=0 // pred_check
    %p1394 = pneg %p1393
  $region23: #{deep_cnn_forward.7} parent=0 // pred_check_branch
    %1396 = sbr.rel (%p1394) target = $region25
  $region24: #{deep_cnn_forward.7} parent=0 // pred_region
    %v1397 = vld [vmem:[#allocation2] sm:$0xf]
    %v1400 = vrot.slane %v1381, 6
    %vm1401 = vcmask 1041408
    %v1402 = vsel %vm1401, %v1380, %v1400
    %v1404 = vadd.f32 %v1397, %v1402
    %1405 = vst [vmem:[#allocation2] sm:$0xf] %v1404
  $region25: #{deep_cnn_forward.7} parent=0 // pred_fallthru
    _
  %s1406 = smul.u32 0, 32
  %v1407 = vpack.c.bf16 %v1326, %v1155
  %v1408 = vpack.c.bf16 %v1328, %v1157
  %v1409 = vpack.c.bf16 %v1331, %v1160
  %v1410 = vpack.c.bf16 %v1333, %v1162
  %s1411 = sshra.s32 %s1406, 3
  %s1412 = sand.u32 %s1406, 7
  %s1413 = smul.u32 %s1411, 2
  %s1414 = smul.addr %s1413, 4
  %s1415 = scalar_lea.vmem %s4, %s1414
  %1416 = vst [vmem:[%s1415] sm:$0xff] %v1407
  %1417 = vst [vmem:[%s1415 + $0x8] sm:$0xff] %v1408
  %1418 = vst [vmem:[%s1415 + $0x10] sm:$0xff] %v1409
  %1419 = vst [vmem:[%s1415 + $0x18] sm:$0xff] %v1410
  // Predicated region
  $region26: #{deep_cnn_forward.7} parent=0 // pred_check
    %p1420 = pneg %p1382
  $region27: #{deep_cnn_forward.7} parent=0 // pred_check_branch
    %1422 = sbr.rel (%p1420) target = $region29
  $region28: #{deep_cnn_forward.7} parent=0 // pred_region
    %v1423 = vld [vmem:[#allocation2] ss:$2 sm:$0x3]
    %v1424 = vmul.f32 %v1423, 0.03125
    %s1425 = scalar_lea.vmem [#allocation2], 1
    %v1426 = vld [vmem:[%s1425] ss:$2 sm:$0x3]
    %v1427 = vmul.f32 %v1426, 0.03125
    %v1428 = vmul.f32 %v1424, %v1424
    %v1429 = vsub.f32 %v1427, %v1428
    %v1430 = vadd.f32 %v1429, 1e-05
    %v1431 = vrsqrt.pop %v1430
    %v1432 = vmul.f32 %v1431, %v1430
    %v1433 = vmul.f32 %v1432, %v1431
    %v1434 = vmul.f32 0.5, %v1433
    %v1435 = vsub.f32 1.5, %v1434
    %v1436 = vmul.f32 %v1431, %v1435
    %vm1437 = vweird.f32 %v1430
    %vm1438 = vweird.f32 %v1431
    %vm1439 = vmor %vm1437, %vm1438
    %v1440 = vsel %vm1439, %v1431, %v1436
    %v1441 = vld [vmem:[%s2] sm:$0x3]
    %v1442 = vmul.f32 %v1440, %v1441
    %v1443 = vld [vmem:[%s3] sm:$0x3]
    %v1444 = vmul.f32 %v1424, %v1442
    %v1445 = vsub.f32 %v1443, %v1444
    %v1446 = vld [vmem:[%s4] sm:$0xff]
    %v1447 = vld [vmem:[%s4 + $0x8] sm:$0xff]
    %v1448 = vld [vmem:[%s4 + $0x10] sm:$0xff]
    %v1449 = vld [vmem:[%s4 + $0x18] sm:$0xff]
    %v1450 = vunpack.c.l.bf16 %v1446
    %v1451 = vunpack.c.h.bf16 %v1446
    %v1452 = vunpack.c.l.bf16 %v1447
    %v1453 = vunpack.c.h.bf16 %v1447
    %v1454 = vunpack.c.l.bf16 %v1448
    %v1455 = vunpack.c.h.bf16 %v1448
    %v1456 = vunpack.c.l.bf16 %v1449
    %v1457 = vunpack.c.h.bf16 %v1449
    %v1459 = vperm.slane %v1442, 0
    %v1460 = vperm.slane %v1442, 1
    %v1463 = vmul.f32 %v1450, %v1459
    %v1464 = vmul.f32 %v1451, %v1460
    %v1465 = vmul.f32 %v1452, %v1459
    %v1466 = vmul.f32 %v1453, %v1460
    %v1467 = vmul.f32 %v1454, %v1459
    %v1468 = vmul.f32 %v1455, %v1460
    %v1469 = vmul.f32 %v1456, %v1459
    %v1470 = vmul.f32 %v1457, %v1460
    %v1472 = vperm.slane %v1445, 0
    %v1473 = vperm.slane %v1445, 1
    %v1476 = vadd.f32 %v1463, %v1472
    %v1477 = vadd.f32 %v1464, %v1473
    %v1478 = vadd.f32 %v1465, %v1472
    %v1479 = vadd.f32 %v1466, %v1473
    %v1480 = vadd.f32 %v1467, %v1472
    %v1481 = vadd.f32 %v1468, %v1473
    %v1482 = vadd.f32 %v1469, %v1472
    %v1483 = vadd.f32 %v1470, %v1473
    %v1484 = vmax.f32 %v1476, 0.0
    %v1485 = vmax.f32 %v1477, 0.0
    %v1486 = vmax.f32 %v1478, 0.0
    %v1487 = vmax.f32 %v1479, 0.0
    %v1488 = vmax.f32 %v1480, 0.0
    %v1489 = vmax.f32 %v1481, 0.0
    %v1490 = vmax.f32 %v1482, 0.0
    %v1491 = vmax.f32 %v1483, 0.0
    %v1492 = vpack.c.bf16 %v1485, %v1484
    %v1493 = vpack.c.bf16 %v1487, %v1486
    %v1494 = vpack.c.bf16 %v1489, %v1488
    %v1495 = vpack.c.bf16 %v1491, %v1490
    %1496 = vst [vmem:[%s4] sm:$0xff] %v1492
    %1497 = vst [vmem:[%s4 + $0x8] sm:$0xff] %v1493
    %1498 = vst [vmem:[%s4 + $0x10] sm:$0xff] %v1494
    %1499 = vst [vmem:[%s4 + $0x18] sm:$0xff] %v1495
  $region29: #{deep_cnn_forward.7} parent=0 // pred_fallthru
    _
  // Predicated region
  $region30: #{deep_cnn_forward.7} parent=0 // pred_check
    _
  $region31: #{deep_cnn_forward.7} parent=0 // pred_check_branch
    %1501 = sbr.rel (0) target = $region33
  $region32: #{deep_cnn_forward.7} parent=0 // pred_region
    _
  $region33: #{deep_cnn_forward.7} parent=0 // pred_fallthru
    _
  // Predicated region
  $region34: #{deep_cnn_forward.7} parent=0 // pred_check
    _
  $region35: #{deep_cnn_forward.7} parent=0 // pred_check_branch
    %1503 = sbr.rel (0) target = $region37
  $region36: #{deep_cnn_forward.7} parent=0 // pred_region
    _
  $region37: #{deep_cnn_forward.7} parent=0 // pred_fallthru
    _

// kernel: deep_cnn_forward.9
$region0: #{deep_cnn_forward.9}
  #allocation0 [shape = 'u32[]', space=smem, size = 0x4, offset = 0x4, fixed_abs, tag = 'smem constant byte address 0x4 - core index']
  #allocation1 [shape = 'u32[72,128]{1,0:T(1,128)}', space=vmem, size = 0x9000, scoped, tag = 'internal scratch']
  %s0 = inlined_call_operand.vmem [shape: bf16[2,2048], index: 0, kind: input, shape index: {}]
  %s1 = inlined_call_operand.vmem [shape: bf16[2048,128], index: 1, kind: input, shape index: {}]
  %s2 = inlined_call_operand.vmem [shape: f32[1,128], index: 2, kind: input, shape index: {}]
  %s3 = inlined_call_operand.vmem [shape: bf16[128,128], index: 3, kind: input, shape index: {}]
  %s4 = inlined_call_operand.vmem [shape: f32[1,128], index: 4, kind: input, shape index: {}]
  %s5 = inlined_call_operand.hbm [shape: f32[2,128], index: 5, kind: output, shape index: {}]
  %s6 = sld [smem:[#allocation0]]
  $region30: #{deep_cnn_forward.9} parent=0
    _
  %s8 = ssub.s32 1, %s6
  %s9 = scalar_select 0, %s8, %s6
  $region1: #{deep_cnn_forward.9} parent=0
    #allocation2 [shape = 'u8[1024]{0}', space=vmem, size = 0x400, scoped, tag = 'output window, operand 0, single buffered']
    #allocation3 [shape = 's32[1]{0}', space=sflag, size = 0x4, scoped, tag = 'scoped memory for deep_cnn_forward.9']
    %10 = vsyncpa [#allocation3], 0
    // Predicated region
    $region2: #{deep_cnn_forward.9} parent=1 // pred_check
      _
    $region3: #{deep_cnn_forward.9} parent=1 // pred_check_branch
      %12 = sbr.rel (0) target = $region5
    $region4: #{deep_cnn_forward.9} parent=1 // pred_region
      _
    $region5: #{deep_cnn_forward.9} parent=1 // pred_fallthru
      _
    // Predicated region
    $region6: #{deep_cnn_forward.9} parent=1 // pred_check
      _
    $region7: #{deep_cnn_forward.9} parent=1 // pred_check_branch
      %14 = sbr.rel (0) target = $region9
    $region8: #{deep_cnn_forward.9} parent=1 // pred_region
      _
    $region9: #{deep_cnn_forward.9} parent=1 // pred_fallthru
      _
    // Predicated region
    $region10: #{deep_cnn_forward.9} parent=1 // pred_check
      _
    $region11: #{deep_cnn_forward.9} parent=1 // pred_check_branch
      %16 = sbr.rel (0) target = $region13
    $region12: #{deep_cnn_forward.9} parent=1 // pred_region
      _
    $region13: #{deep_cnn_forward.9} parent=1 // pred_fallthru
      _
    // Predicated region
    $region14: #{deep_cnn_forward.9} parent=1 // pred_check
      _
    $region15: #{deep_cnn_forward.9} parent=1 // pred_check_branch
      %18 = sbr.rel (0) target = $region17
    $region16: #{deep_cnn_forward.9} parent=1 // pred_region
      _
    $region17: #{deep_cnn_forward.9} parent=1 // pred_fallthru
      _
    // Predicated region
    $region18: #{deep_cnn_forward.9} parent=1 // pred_check
      _
    $region19: #{deep_cnn_forward.9} parent=1 // pred_check_branch
      %20 = sbr.rel (0) target = $region21
    $region20: #{deep_cnn_forward.9} parent=1 // pred_region
      _
    $region21: #{deep_cnn_forward.9} parent=1 // pred_fallthru
      _
    %v21 = vld [vmem:[%s0] sm:$0xff]
    %v22 = vld [vmem:[%s0 + $0x8] sm:$0xff]
    %v23 = vld [vmem:[%s1] sm:$0xf]
    %v24 = vld [vmem:[%s1 + $0x4] sm:$0xf]
    %v25 = vld [vmem:[%s1 + $0x8] sm:$0xf]
    %v26 = vld [vmem:[%s1 + $0xc] sm:$0xf]
    %v27 = vld [vmem:[%s1 + $0x10] sm:$0xf]
    %v28 = vld [vmem:[%s1 + $0x14] sm:$0xf]
    %v29 = vld [vmem:[%s1 + $0x18] sm:$0xf]
    %v30 = vld [vmem:[%s1 + $0x1c] sm:$0xf]
    %v31 = vld [vmem:[%s1 + $0x20] sm:$0xf]
    %v32 = vld [vmem:[%s1 + $0x24] sm:$0xf]
    %v33 = vld [vmem:[%s1 + $0x28] sm:$0xf]
    %v34 = vld [vmem:[%s1 + $0x2c] sm:$0xf]
    %v35 = vld [vmem:[%s1 + $0x30] sm:$0xf]
    %v36 = vld [vmem:[%s1 + $0x34] sm:$0xf]
    %v37 = vld [vmem:[%s1 + $0x38] sm:$0xf]
    %v38 = vld [vmem:[%s1 + $0x3c] sm:$0xf]
    %v39 = vld [vmem:[%s1 + $0x40] sm:$0xf]
    %v40 = vld [vmem:[%s1 + $0x44] sm:$0xf]
    %v41 = vld [vmem:[%s1 + $0x48] sm:$0xf]
    %v42 = vld [vmem:[%s1 + $0x4c] sm:$0xf]
    %v43 = vld [vmem:[%s1 + $0x50] sm:$0xf]
    %v44 = vld [vmem:[%s1 + $0x54] sm:$0xf]
    %v45 = vld [vmem:[%s1 + $0x58] sm:$0xf]
    %v46 = vld [vmem:[%s1 + $0x5c] sm:$0xf]
    %v47 = vld [vmem:[%s1 + $0x60] sm:$0xf]
    %v48 = vld [vmem:[%s1 + $0x64] sm:$0xf]
    %v49 = vld [vmem:[%s1 + $0x68] sm:$0xf]
    %v50 = vld [vmem:[%s1 + $0x6c] sm:$0xf]
    %v51 = vld [vmem:[%s1 + $0x70] sm:$0xf]
    %v52 = vld [vmem:[%s1 + $0x74] sm:$0xf]
    %v53 = vld [vmem:[%s1 + $0x78] sm:$0xf]
    %v54 = vld [vmem:[%s1 + $0x7c] sm:$0xf]
    %v55 = vld [vmem:[%s1 + $0x80] sm:$0xf]
    %v56 = vld [vmem:[%s1 + $0x84] sm:$0xf]
    %v57 = vld [vmem:[%s1 + $0x88] sm:$0xf]
    %v58 = vld [vmem:[%s1 + $0x8c] sm:$0xf]
    %v59 = vld [vmem:[%s1 + $0x90] sm:$0xf]
    %v60 = vld [vmem:[%s1 + $0x94] sm:$0xf]
    %v61 = vld [vmem:[%s1 + $0x98] sm:$0xf]
    %v62 = vld [vmem:[%s1 + $0x9c] sm:$0xf]
    %v63 = vld [vmem:[%s1 + $0xa0] sm:$0xf]
    %v64 = vld [vmem:[%s1 + $0xa4] sm:$0xf]
    %v65 = vld [vmem:[%s1 + $0xa8] sm:$0xf]
    %v66 = vld [vmem:[%s1 + $0xac] sm:$0xf]
    %v67 = vld [vmem:[%s1 + $0xb0] sm:$0xf]
    %v68 = vld [vmem:[%s1 + $0xb4] sm:$0xf]
    %v69 = vld [vmem:[%s1 + $0xb8] sm:$0xf]
    %v70 = vld [vmem:[%s1 + $0xbc] sm:$0xf]
    %v71 = vld [vmem:[%s1 + $0xc0] sm:$0xf]
    %v72 = vld [vmem:[%s1 + $0xc4] sm:$0xf]
    %v73 = vld [vmem:[%s1 + $0xc8] sm:$0xf]
    %v74 = vld [vmem:[%s1 + $0xcc] sm:$0xf]
    %v75 = vld [vmem:[%s1 + $0xd0] sm:$0xf]
    %v76 = vld [vmem:[%s1 + $0xd4] sm:$0xf]
    %v77 = vld [vmem:[%s1 + $0xd8] sm:$0xf]
    %v78 = vld [vmem:[%s1 + $0xdc] sm:$0xf]
    %v79 = vld [vmem:[%s1 + $0xe0] sm:$0xf]
    %v80 = vld [vmem:[%s1 + $0xe4] sm:$0xf]
    %v81 = vld [vmem:[%s1 + $0xe8] sm:$0xf]
    %v82 = vld [vmem:[%s1 + $0xec] sm:$0xf]
    %v83 = vld [vmem:[%s1 + $0xf0] sm:$0xf]
    %v84 = vld [vmem:[%s1 + $0xf4] sm:$0xf]
    %v85 = vld [vmem:[%s1 + $0xf8] sm:$0xf]
    %v86 = vld [vmem:[%s1 + $0xfc] sm:$0xf]
    %v87 = vld [vmem:[%s1 + $0x100] sm:$0xf]
    %v88 = vld [vmem:[%s1 + $0x104] sm:$0xf]
    %v89 = vld [vmem:[%s1 + $0x108] sm:$0xf]
    %v90 = vld [vmem:[%s1 + $0x10c] sm:$0xf]
    %v91 = vld [vmem:[%s1 + $0x110] sm:$0xf]
    %v92 = vld [vmem:[%s1 + $0x114] sm:$0xf]
    %v93 = vld [vmem:[%s1 + $0x118] sm:$0xf]
    %v94 = vld [vmem:[%s1 + $0x11c] sm:$0xf]
    %v95 = vld [vmem:[%s1 + $0x120] sm:$0xf]
    %v96 = vld [vmem:[%s1 + $0x124] sm:$0xf]
    %v97 = vld [vmem:[%s1 + $0x128] sm:$0xf]
    %v98 = vld [vmem:[%s1 + $0x12c] sm:$0xf]
    %v99 = vld [vmem:[%s1 + $0x130] sm:$0xf]
    %v100 = vld [vmem:[%s1 + $0x134] sm:$0xf]
    %v101 = vld [vmem:[%s1 + $0x138] sm:$0xf]
    %v102 = vld [vmem:[%s1 + $0x13c] sm:$0xf]
    %v103 = vld [vmem:[%s1 + $0x140] sm:$0xf]
    %v104 = vld [vmem:[%s1 + $0x144] sm:$0xf]
    %v105 = vld [vmem:[%s1 + $0x148] sm:$0xf]
    %v106 = vld [vmem:[%s1 + $0x14c] sm:$0xf]
    %v107 = vld [vmem:[%s1 + $0x150] sm:$0xf]
    %v108 = vld [vmem:[%s1 + $0x154] sm:$0xf]
    %v109 = vld [vmem:[%s1 + $0x158] sm:$0xf]
    %v110 = vld [vmem:[%s1 + $0x15c] sm:$0xf]
    %v111 = vld [vmem:[%s1 + $0x160] sm:$0xf]
    %v112 = vld [vmem:[%s1 + $0x164] sm:$0xf]
    %v113 = vld [vmem:[%s1 + $0x168] sm:$0xf]
    %v114 = vld [vmem:[%s1 + $0x16c] sm:$0xf]
    %v115 = vld [vmem:[%s1 + $0x170] sm:$0xf]
    %v116 = vld [vmem:[%s1 + $0x174] sm:$0xf]
    %v117 = vld [vmem:[%s1 + $0x178] sm:$0xf]
    %v118 = vld [vmem:[%s1 + $0x17c] sm:$0xf]
    %v119 = vld [vmem:[%s1 + $0x180] sm:$0xf]
    %v120 = vld [vmem:[%s1 + $0x184] sm:$0xf]
    %v121 = vld [vmem:[%s1 + $0x188] sm:$0xf]
    %v122 = vld [vmem:[%s1 + $0x18c] sm:$0xf]
    %v123 = vld [vmem:[%s1 + $0x190] sm:$0xf]
    %v124 = vld [vmem:[%s1 + $0x194] sm:$0xf]
    %v125 = vld [vmem:[%s1 + $0x198] sm:$0xf]
    %v126 = vld [vmem:[%s1 + $0x19c] sm:$0xf]
    %v127 = vld [vmem:[%s1 + $0x1a0] sm:$0xf]
    %v128 = vld [vmem:[%s1 + $0x1a4] sm:$0xf]
    %v129 = vld [vmem:[%s1 + $0x1a8] sm:$0xf]
    %v130 = vld [vmem:[%s1 + $0x1ac] sm:$0xf]
    %v131 = vld [vmem:[%s1 + $0x1b0] sm:$0xf]
    %v132 = vld [vmem:[%s1 + $0x1b4] sm:$0xf]
    %v133 = vld [vmem:[%s1 + $0x1b8] sm:$0xf]
    %v134 = vld [vmem:[%s1 + $0x1bc] sm:$0xf]
    %v135 = vld [vmem:[%s1 + $0x1c0] sm:$0xf]
    %v136 = vld [vmem:[%s1 + $0x1c4] sm:$0xf]
    %v137 = vld [vmem:[%s1 + $0x1c8] sm:$0xf]
    %v138 = vld [vmem:[%s1 + $0x1cc] sm:$0xf]
    %v139 = vld [vmem:[%s1 + $0x1d0] sm:$0xf]
    %v140 = vld [vmem:[%s1 + $0x1d4] sm:$0xf]
    %v141 = vld [vmem:[%s1 + $0x1d8] sm:$0xf]
    %v142 = vld [vmem:[%s1 + $0x1dc] sm:$0xf]
    %v143 = vld [vmem:[%s1 + $0x1e0] sm:$0xf]
    %v144 = vld [vmem:[%s1 + $0x1e4] sm:$0xf]
    %v145 = vld [vmem:[%s1 + $0x1e8] sm:$0xf]
    %v146 = vld [vmem:[%s1 + $0x1ec] sm:$0xf]
    %v147 = vld [vmem:[%s1 + $0x1f0] sm:$0xf]
    %v148 = vld [vmem:[%s1 + $0x1f4] sm:$0xf]
    %v149 = vld [vmem:[%s1 + $0x1f8] sm:$0xf]
    %v150 = vld [vmem:[%s1 + $0x1fc] sm:$0xf]
    %v151 = vld [vmem:[%s1 + $0x200] sm:$0xf]
    %v152 = vld [vmem:[%s1 + $0x204] sm:$0xf]
    %v153 = vld [vmem:[%s1 + $0x208] sm:$0xf]
    %v154 = vld [vmem:[%s1 + $0x20c] sm:$0xf]
    %v155 = vld [vmem:[%s1 + $0x210] sm:$0xf]
    %v156 = vld [vmem:[%s1 + $0x214] sm:$0xf]
    %v157 = vld [vmem:[%s1 + $0x218] sm:$0xf]
    %v158 = vld [vmem:[%s1 + $0x21c] sm:$0xf]
    %v159 = vld [vmem:[%s1 + $0x220] sm:$0xf]
    %v160 = vld [vmem:[%s1 + $0x224] sm:$0xf]
    %v161 = vld [vmem:[%s1 + $0x228] sm:$0xf]
    %v162 = vld [vmem:[%s1 + $0x22c] sm:$0xf]
    %v163 = vld [vmem:[%s1 + $0x230] sm:$0xf]
    %v164 = vld [vmem:[%s1 + $0x234] sm:$0xf]
    %v165 = vld [vmem:[%s1 + $0x238] sm:$0xf]
    %v166 = vld [vmem:[%s1 + $0x23c] sm:$0xf]
    %v167 = vld [vmem:[%s1 + $0x240] sm:$0xf]
    %v168 = vld [vmem:[%s1 + $0x244] sm:$0xf]
    %v169 = vld [vmem:[%s1 + $0x248] sm:$0xf]
    %v170 = vld [vmem:[%s1 + $0x24c] sm:$0xf]
    %v171 = vld [vmem:[%s1 + $0x250] sm:$0xf]
    %v172 = vld [vmem:[%s1 + $0x254] sm:$0xf]
    %v173 = vld [vmem:[%s1 + $0x258] sm:$0xf]
    %v174 = vld [vmem:[%s1 + $0x25c] sm:$0xf]
    %v175 = vld [vmem:[%s1 + $0x260] sm:$0xf]
    %v176 = vld [vmem:[%s1 + $0x264] sm:$0xf]
    %v177 = vld [vmem:[%s1 + $0x268] sm:$0xf]
    %v178 = vld [vmem:[%s1 + $0x26c] sm:$0xf]
    %v179 = vld [vmem:[%s1 + $0x270] sm:$0xf]
    %v180 = vld [vmem:[%s1 + $0x274] sm:$0xf]
    %v181 = vld [vmem:[%s1 + $0x278] sm:$0xf]
    %v182 = vld [vmem:[%s1 + $0x27c] sm:$0xf]
    %v183 = vld [vmem:[%s1 + $0x280] sm:$0xf]
    %v184 = vld [vmem:[%s1 + $0x284] sm:$0xf]
    %v185 = vld [vmem:[%s1 + $0x288] sm:$0xf]
    %v186 = vld [vmem:[%s1 + $0x28c] sm:$0xf]
    %v187 = vld [vmem:[%s1 + $0x290] sm:$0xf]
    %v188 = vld [vmem:[%s1 + $0x294] sm:$0xf]
    %v189 = vld [vmem:[%s1 + $0x298] sm:$0xf]
    %v190 = vld [vmem:[%s1 + $0x29c] sm:$0xf]
    %v191 = vld [vmem:[%s1 + $0x2a0] sm:$0xf]
    %v192 = vld [vmem:[%s1 + $0x2a4] sm:$0xf]
    %v193 = vld [vmem:[%s1 + $0x2a8] sm:$0xf]
    %v194 = vld [vmem:[%s1 + $0x2ac] sm:$0xf]
    %v195 = vld [vmem:[%s1 + $0x2b0] sm:$0xf]
    %v196 = vld [vmem:[%s1 + $0x2b4] sm:$0xf]
    %v197 = vld [vmem:[%s1 + $0x2b8] sm:$0xf]
    %v198 = vld [vmem:[%s1 + $0x2bc] sm:$0xf]
    %v199 = vld [vmem:[%s1 + $0x2c0] sm:$0xf]
    %v200 = vld [vmem:[%s1 + $0x2c4] sm:$0xf]
    %v201 = vld [vmem:[%s1 + $0x2c8] sm:$0xf]
    %v202 = vld [vmem:[%s1 + $0x2cc] sm:$0xf]
    %v203 = vld [vmem:[%s1 + $0x2d0] sm:$0xf]
    %v204 = vld [vmem:[%s1 + $0x2d4] sm:$0xf]
    %v205 = vld [vmem:[%s1 + $0x2d8] sm:$0xf]
    %v206 = vld [vmem:[%s1 + $0x2dc] sm:$0xf]
    %v207 = vld [vmem:[%s1 + $0x2e0] sm:$0xf]
    %v208 = vld [vmem:[%s1 + $0x2e4] sm:$0xf]
    %v209 = vld [vmem:[%s1 + $0x2e8] sm:$0xf]
    %v210 = vld [vmem:[%s1 + $0x2ec] sm:$0xf]
    %v211 = vld [vmem:[%s1 + $0x2f0] sm:$0xf]
    %v212 = vld [vmem:[%s1 + $0x2f4] sm:$0xf]
    %v213 = vld [vmem:[%s1 + $0x2f8] sm:$0xf]
    %v214 = vld [vmem:[%s1 + $0x2fc] sm:$0xf]
    %v215 = vld [vmem:[%s1 + $0x300] sm:$0xf]
    %v216 = vld [vmem:[%s1 + $0x304] sm:$0xf]
    %v217 = vld [vmem:[%s1 + $0x308] sm:$0xf]
    %v218 = vld [vmem:[%s1 + $0x30c] sm:$0xf]
    %v219 = vld [vmem:[%s1 + $0x310] sm:$0xf]
    %v220 = vld [vmem:[%s1 + $0x314] sm:$0xf]
    %v221 = vld [vmem:[%s1 + $0x318] sm:$0xf]
    %v222 = vld [vmem:[%s1 + $0x31c] sm:$0xf]
    %v223 = vld [vmem:[%s1 + $0x320] sm:$0xf]
    %v224 = vld [vmem:[%s1 + $0x324] sm:$0xf]
    %v225 = vld [vmem:[%s1 + $0x328] sm:$0xf]
    %v226 = vld [vmem:[%s1 + $0x32c] sm:$0xf]
    %v227 = vld [vmem:[%s1 + $0x330] sm:$0xf]
    %v228 = vld [vmem:[%s1 + $0x334] sm:$0xf]
    %v229 = vld [vmem:[%s1 + $0x338] sm:$0xf]
    %v230 = vld [vmem:[%s1 + $0x33c] sm:$0xf]
    %v231 = vld [vmem:[%s1 + $0x340] sm:$0xf]
    %v232 = vld [vmem:[%s1 + $0x344] sm:$0xf]
    %v233 = vld [vmem:[%s1 + $0x348] sm:$0xf]
    %v234 = vld [vmem:[%s1 + $0x34c] sm:$0xf]
    %v235 = vld [vmem:[%s1 + $0x350] sm:$0xf]
    %v236 = vld [vmem:[%s1 + $0x354] sm:$0xf]
    %v237 = vld [vmem:[%s1 + $0x358] sm:$0xf]
    %v238 = vld [vmem:[%s1 + $0x35c] sm:$0xf]
    %v239 = vld [vmem:[%s1 + $0x360] sm:$0xf]
    %v240 = vld [vmem:[%s1 + $0x364] sm:$0xf]
    %v241 = vld [vmem:[%s1 + $0x368] sm:$0xf]
    %v242 = vld [vmem:[%s1 + $0x36c] sm:$0xf]
    %v243 = vld [vmem:[%s1 + $0x370] sm:$0xf]
    %v244 = vld [vmem:[%s1 + $0x374] sm:$0xf]
    %v245 = vld [vmem:[%s1 + $0x378] sm:$0xf]
    %v246 = vld [vmem:[%s1 + $0x37c] sm:$0xf]
    %v247 = vld [vmem:[%s1 + $0x380] sm:$0xf]
    %v248 = vld [vmem:[%s1 + $0x384] sm:$0xf]
    %v249 = vld [vmem:[%s1 + $0x388] sm:$0xf]
    %v250 = vld [vmem:[%s1 + $0x38c] sm:$0xf]
    %v251 = vld [vmem:[%s1 + $0x390] sm:$0xf]
    %v252 = vld [vmem:[%s1 + $0x394] sm:$0xf]
    %v253 = vld [vmem:[%s1 + $0x398] sm:$0xf]
    %v254 = vld [vmem:[%s1 + $0x39c] sm:$0xf]
    %v255 = vld [vmem:[%s1 + $0x3a0] sm:$0xf]
    %v256 = vld [vmem:[%s1 + $0x3a4] sm:$0xf]
    %v257 = vld [vmem:[%s1 + $0x3a8] sm:$0xf]
    %v258 = vld [vmem:[%s1 + $0x3ac] sm:$0xf]
    %v259 = vld [vmem:[%s1 + $0x3b0] sm:$0xf]
    %v260 = vld [vmem:[%s1 + $0x3b4] sm:$0xf]
    %v261 = vld [vmem:[%s1 + $0x3b8] sm:$0xf]
    %v262 = vld [vmem:[%s1 + $0x3bc] sm:$0xf]
    %v263 = vld [vmem:[%s1 + $0x3c0] sm:$0xf]
    %v264 = vld [vmem:[%s1 + $0x3c4] sm:$0xf]
    %v265 = vld [vmem:[%s1 + $0x3c8] sm:$0xf]
    %v266 = vld [vmem:[%s1 + $0x3cc] sm:$0xf]
    %v267 = vld [vmem:[%s1 + $0x3d0] sm:$0xf]
    %v268 = vld [vmem:[%s1 + $0x3d4] sm:$0xf]
    %v269 = vld [vmem:[%s1 + $0x3d8] sm:$0xf]
    %v270 = vld [vmem:[%s1 + $0x3dc] sm:$0xf]
    %v271 = vld [vmem:[%s1 + $0x3e0] sm:$0xf]
    %v272 = vld [vmem:[%s1 + $0x3e4] sm:$0xf]
    %v273 = vld [vmem:[%s1 + $0x3e8] sm:$0xf]
    %v274 = vld [vmem:[%s1 + $0x3ec] sm:$0xf]
    %v275 = vld [vmem:[%s1 + $0x3f0] sm:$0xf]
    %v276 = vld [vmem:[%s1 + $0x3f4] sm:$0xf]
    %v277 = vld [vmem:[%s1 + $0x3f8] sm:$0xf]
    %v278 = vld [vmem:[%s1 + $0x3fc] sm:$0xf]
    %v279 = vld [vmem:[%s2] sm:$0x1]
    %v281 = vperm.slane %v279, 0
    %284 = vst [vmem:[#allocation1] ss:$9 sm:$0xff] %v21
    %v285 = vld [vmem:[#allocation1] sm:$0xff]
    %v286 = vld [vmem:[#allocation1 + $0x9] sm:$0xff]
    %v287 = vld [vmem:[#allocation1 + $0x12] sm:$0xff]
    %v288 = vld [vmem:[#allocation1 + $0x1b] sm:$0xff]
    %v289 = vld [vmem:[#allocation1 + $0x24] sm:$0xff]
    %v290 = vld [vmem:[#allocation1 + $0x2d] sm:$0xff]
    %v291 = vld [vmem:[#allocation1 + $0x36] sm:$0xff]
    %v292 = vld [vmem:[#allocation1 + $0x3f] sm:$0xff]
    %294 = vst [vmem:[#allocation1] ss:$9 sm:$0xff] %v22
    %v295 = vld [vmem:[#allocation1] sm:$0xff]
    %v296 = vld [vmem:[#allocation1 + $0x9] sm:$0xff]
    %v297 = vld [vmem:[#allocation1 + $0x12] sm:$0xff]
    %v298 = vld [vmem:[#allocation1 + $0x1b] sm:$0xff]
    %v299 = vld [vmem:[#allocation1 + $0x24] sm:$0xff]
    %v300 = vld [vmem:[#allocation1 + $0x2d] sm:$0xff]
    %v301 = vld [vmem:[#allocation1 + $0x36] sm:$0xff]
    %v302 = vld [vmem:[#allocation1 + $0x3f] sm:$0xff]
    %v575 = vunpack.c.l.b16 %v23
    %v576 = vunpack.c.l.b16 %v24
    %v577 = vunpack.c.l.b16 %v25
    %v578 = vunpack.c.l.b16 %v26
    %v579 = vunpack.c.l.b16 %v27
    %v580 = vunpack.c.l.b16 %v28
    %v581 = vunpack.c.l.b16 %v29
    %v582 = vunpack.c.l.b16 %v30
    %v583 = vunpack.c.l.b16 %v31
    %v584 = vunpack.c.l.b16 %v32
    %v585 = vunpack.c.l.b16 %v33
    %v586 = vunpack.c.l.b16 %v34
    %v587 = vunpack.c.l.b16 %v35
    %v588 = vunpack.c.l.b16 %v36
    %v589 = vunpack.c.l.b16 %v37
    %v590 = vunpack.c.l.b16 %v38
    %v591 = vunpack.c.l.b16 %v39
    %v592 = vunpack.c.l.b16 %v40
    %v593 = vunpack.c.l.b16 %v41
    %v594 = vunpack.c.l.b16 %v42
    %v595 = vunpack.c.l.b16 %v43
    %v596 = vunpack.c.l.b16 %v44
    %v597 = vunpack.c.l.b16 %v45
    %v598 = vunpack.c.l.b16 %v46
    %v599 = vunpack.c.l.b16 %v47
    %v600 = vunpack.c.l.b16 %v48
    %v601 = vunpack.c.l.b16 %v49
    %v602 = vunpack.c.l.b16 %v50
    %v603 = vunpack.c.l.b16 %v51
    %v604 = vunpack.c.l.b16 %v52
    %v605 = vunpack.c.l.b16 %v53
    %v606 = vunpack.c.l.b16 %v54
    %v607 = vunpack.c.l.b16 %v55
    %v608 = vunpack.c.l.b16 %v56
    %v609 = vunpack.c.l.b16 %v57
    %v610 = vunpack.c.l.b16 %v58
    %v611 = vunpack.c.l.b16 %v59
    %v612 = vunpack.c.l.b16 %v60
    %v613 = vunpack.c.l.b16 %v61
    %v614 = vunpack.c.l.b16 %v62
    %v615 = vunpack.c.l.b16 %v63
    %v616 = vunpack.c.l.b16 %v64
    %v617 = vunpack.c.l.b16 %v65
    %v618 = vunpack.c.l.b16 %v66
    %v619 = vunpack.c.l.b16 %v67
    %v620 = vunpack.c.l.b16 %v68
    %v621 = vunpack.c.l.b16 %v69
    %v622 = vunpack.c.l.b16 %v70
    %v623 = vunpack.c.l.b16 %v71
    %v624 = vunpack.c.l.b16 %v72
    %v625 = vunpack.c.l.b16 %v73
    %v626 = vunpack.c.l.b16 %v74
    %v627 = vunpack.c.l.b16 %v75
    %v628 = vunpack.c.l.b16 %v76
    %v629 = vunpack.c.l.b16 %v77
    %v630 = vunpack.c.l.b16 %v78
    %v631 = vunpack.c.l.b16 %v79
    %v632 = vunpack.c.l.b16 %v80
    %v633 = vunpack.c.l.b16 %v81
    %v634 = vunpack.c.l.b16 %v82
    %v635 = vunpack.c.l.b16 %v83
    %v636 = vunpack.c.l.b16 %v84
    %v637 = vunpack.c.l.b16 %v85
    %v638 = vunpack.c.l.b16 %v86
    %v639 = vunpack.c.l.b16 %v87
    %v640 = vunpack.c.l.b16 %v88
    %v641 = vunpack.c.l.b16 %v89
    %v642 = vunpack.c.l.b16 %v90
    %v643 = vunpack.c.l.b16 %v91
    %v644 = vunpack.c.l.b16 %v92
    %v645 = vunpack.c.l.b16 %v93
    %v646 = vunpack.c.l.b16 %v94
    %v647 = vunpack.c.l.b16 %v95
    %v648 = vunpack.c.l.b16 %v96
    %v649 = vunpack.c.l.b16 %v97
    %v650 = vunpack.c.l.b16 %v98
    %v651 = vunpack.c.l.b16 %v99
    %v652 = vunpack.c.l.b16 %v100
    %v653 = vunpack.c.l.b16 %v101
    %v654 = vunpack.c.l.b16 %v102
    %v655 = vunpack.c.l.b16 %v103
    %v656 = vunpack.c.l.b16 %v104
    %v657 = vunpack.c.l.b16 %v105
    %v658 = vunpack.c.l.b16 %v106
    %v659 = vunpack.c.l.b16 %v107
    %v660 = vunpack.c.l.b16 %v108
    %v661 = vunpack.c.l.b16 %v109
    %v662 = vunpack.c.l.b16 %v110
    %v663 = vunpack.c.l.b16 %v111
    %v664 = vunpack.c.l.b16 %v112
    %v665 = vunpack.c.l.b16 %v113
    %v666 = vunpack.c.l.b16 %v114
    %v667 = vunpack.c.l.b16 %v115
    %v668 = vunpack.c.l.b16 %v116
    %v669 = vunpack.c.l.b16 %v117
    %v670 = vunpack.c.l.b16 %v118
    %v671 = vunpack.c.l.b16 %v119
    %v672 = vunpack.c.l.b16 %v120
    %v673 = vunpack.c.l.b16 %v121
    %v674 = vunpack.c.l.b16 %v122
    %v675 = vunpack.c.l.b16 %v123
    %v676 = vunpack.c.l.b16 %v124
    %v677 = vunpack.c.l.b16 %v125
    %v678 = vunpack.c.l.b16 %v126
    %v679 = vunpack.c.l.b16 %v127
    %v680 = vunpack.c.l.b16 %v128
    %v681 = vunpack.c.l.b16 %v129
    %v682 = vunpack.c.l.b16 %v130
    %v683 = vunpack.c.l.b16 %v131
    %v684 = vunpack.c.l.b16 %v132
    %v685 = vunpack.c.l.b16 %v133
    %v686 = vunpack.c.l.b16 %v134
    %v687 = vunpack.c.l.b16 %v135
    %v688 = vunpack.c.l.b16 %v136
    %v689 = vunpack.c.l.b16 %v137
    %v690 = vunpack.c.l.b16 %v138
    %v691 = vunpack.c.l.b16 %v139
    %v692 = vunpack.c.l.b16 %v140
    %v693 = vunpack.c.l.b16 %v141
    %v694 = vunpack.c.l.b16 %v142
    %v695 = vunpack.c.l.b16 %v143
    %v696 = vunpack.c.l.b16 %v144
    %v697 = vunpack.c.l.b16 %v145
    %v698 = vunpack.c.l.b16 %v146
    %v699 = vunpack.c.l.b16 %v147
    %v700 = vunpack.c.l.b16 %v148
    %v701 = vunpack.c.l.b16 %v149
    %v702 = vunpack.c.l.b16 %v150
    %v703 = vunpack.c.l.b16 %v151
    %v704 = vunpack.c.l.b16 %v152
    %v705 = vunpack.c.l.b16 %v153
    %v706 = vunpack.c.l.b16 %v154
    %v707 = vunpack.c.l.b16 %v155
    %v708 = vunpack.c.l.b16 %v156
    %v709 = vunpack.c.l.b16 %v157
    %v710 = vunpack.c.l.b16 %v158
    %v711 = vunpack.c.l.b16 %v159
    %v712 = vunpack.c.l.b16 %v160
    %v713 = vunpack.c.l.b16 %v161
    %v714 = vunpack.c.l.b16 %v162
    %v715 = vunpack.c.l.b16 %v163
    %v716 = vunpack.c.l.b16 %v164
    %v717 = vunpack.c.l.b16 %v165
    %v718 = vunpack.c.l.b16 %v166
    %v719 = vunpack.c.l.b16 %v167
    %v720 = vunpack.c.l.b16 %v168
    %v721 = vunpack.c.l.b16 %v169
    %v722 = vunpack.c.l.b16 %v170
    %v723 = vunpack.c.l.b16 %v171
    %v724 = vunpack.c.l.b16 %v172
    %v725 = vunpack.c.l.b16 %v173
    %v726 = vunpack.c.l.b16 %v174
    %v727 = vunpack.c.l.b16 %v175
    %v728 = vunpack.c.l.b16 %v176
    %v729 = vunpack.c.l.b16 %v177
    %v730 = vunpack.c.l.b16 %v178
    %v731 = vunpack.c.l.b16 %v179
    %v732 = vunpack.c.l.b16 %v180
    %v733 = vunpack.c.l.b16 %v181
    %v734 = vunpack.c.l.b16 %v182
    %v735 = vunpack.c.l.b16 %v183
    %v736 = vunpack.c.l.b16 %v184
    %v737 = vunpack.c.l.b16 %v185
    %v738 = vunpack.c.l.b16 %v186
    %v739 = vunpack.c.l.b16 %v187
    %v740 = vunpack.c.l.b16 %v188
    %v741 = vunpack.c.l.b16 %v189
    %v742 = vunpack.c.l.b16 %v190
    %v743 = vunpack.c.l.b16 %v191
    %v744 = vunpack.c.l.b16 %v192
    %v745 = vunpack.c.l.b16 %v193
    %v746 = vunpack.c.l.b16 %v194
    %v747 = vunpack.c.l.b16 %v195
    %v748 = vunpack.c.l.b16 %v196
    %v749 = vunpack.c.l.b16 %v197
    %v750 = vunpack.c.l.b16 %v198
    %v751 = vunpack.c.l.b16 %v199
    %v752 = vunpack.c.l.b16 %v200
    %v753 = vunpack.c.l.b16 %v201
    %v754 = vunpack.c.l.b16 %v202
    %v755 = vunpack.c.l.b16 %v203
    %v756 = vunpack.c.l.b16 %v204
    %v757 = vunpack.c.l.b16 %v205
    %v758 = vunpack.c.l.b16 %v206
    %v759 = vunpack.c.l.b16 %v207
    %v760 = vunpack.c.l.b16 %v208
    %v761 = vunpack.c.l.b16 %v209
    %v762 = vunpack.c.l.b16 %v210
    %v763 = vunpack.c.l.b16 %v211
    %v764 = vunpack.c.l.b16 %v212
    %v765 = vunpack.c.l.b16 %v213
    %v766 = vunpack.c.l.b16 %v214
    %v767 = vunpack.c.l.b16 %v215
    %v768 = vunpack.c.l.b16 %v216
    %v769 = vunpack.c.l.b16 %v217
    %v770 = vunpack.c.l.b16 %v218
    %v771 = vunpack.c.l.b16 %v219
    %v772 = vunpack.c.l.b16 %v220
    %v773 = vunpack.c.l.b16 %v221
    %v774 = vunpack.c.l.b16 %v222
    %v775 = vunpack.c.l.b16 %v223
    %v776 = vunpack.c.l.b16 %v224
    %v777 = vunpack.c.l.b16 %v225
    %v778 = vunpack.c.l.b16 %v226
    %v779 = vunpack.c.l.b16 %v227
    %v780 = vunpack.c.l.b16 %v228
    %v781 = vunpack.c.l.b16 %v229
    %v782 = vunpack.c.l.b16 %v230
    %v783 = vunpack.c.l.b16 %v231
    %v784 = vunpack.c.l.b16 %v232
    %v785 = vunpack.c.l.b16 %v233
    %v786 = vunpack.c.l.b16 %v234
    %v787 = vunpack.c.l.b16 %v235
    %v788 = vunpack.c.l.b16 %v236
    %v789 = vunpack.c.l.b16 %v237
    %v790 = vunpack.c.l.b16 %v238
    %v791 = vunpack.c.l.b16 %v239
    %v792 = vunpack.c.l.b16 %v240
    %v793 = vunpack.c.l.b16 %v241
    %v794 = vunpack.c.l.b16 %v242
    %v795 = vunpack.c.l.b16 %v243
    %v796 = vunpack.c.l.b16 %v244
    %v797 = vunpack.c.l.b16 %v245
    %v798 = vunpack.c.l.b16 %v246
    %v799 = vunpack.c.l.b16 %v247
    %v800 = vunpack.c.l.b16 %v248
    %v801 = vunpack.c.l.b16 %v249
    %v802 = vunpack.c.l.b16 %v250
    %v803 = vunpack.c.l.b16 %v251
    %v804 = vunpack.c.l.b16 %v252
    %v805 = vunpack.c.l.b16 %v253
    %v806 = vunpack.c.l.b16 %v254
    %v807 = vunpack.c.l.b16 %v255
    %v808 = vunpack.c.l.b16 %v256
    %v809 = vunpack.c.l.b16 %v257
    %v810 = vunpack.c.l.b16 %v258
    %v811 = vunpack.c.l.b16 %v259
    %v812 = vunpack.c.l.b16 %v260
    %v813 = vunpack.c.l.b16 %v261
    %v814 = vunpack.c.l.b16 %v262
    %v815 = vunpack.c.l.b16 %v263
    %v816 = vunpack.c.l.b16 %v264
    %v817 = vunpack.c.l.b16 %v265
    %v818 = vunpack.c.l.b16 %v266
    %v819 = vunpack.c.l.b16 %v267
    %v820 = vunpack.c.l.b16 %v268
    %v821 = vunpack.c.l.b16 %v269
    %v822 = vunpack.c.l.b16 %v270
    %v823 = vunpack.c.l.b16 %v271
    %v824 = vunpack.c.l.b16 %v272
    %v825 = vunpack.c.l.b16 %v273
    %v826 = vunpack.c.l.b16 %v274
    %v827 = vunpack.c.l.b16 %v275
    %v828 = vunpack.c.l.b16 %v276
    %v829 = vunpack.c.l.b16 %v277
    %v830 = vunpack.c.l.b16 %v278
    %v831 = vpack.c.b16 %v576, %v575
    %v832 = vpack.c.b16 %v578, %v577
    %v833 = vpack.c.b16 %v580, %v579
    %v834 = vpack.c.b16 %v582, %v581
    %v835 = vpack.c.b16 %v584, %v583
    %v836 = vpack.c.b16 %v586, %v585
    %v837 = vpack.c.b16 %v588, %v587
    %v838 = vpack.c.b16 %v590, %v589
    %v839 = vpack.c.b16 %v592, %v591
    %v840 = vpack.c.b16 %v594, %v593
    %v841 = vpack.c.b16 %v596, %v595
    %v842 = vpack.c.b16 %v598, %v597
    %v843 = vpack.c.b16 %v600, %v599
    %v844 = vpack.c.b16 %v602, %v601
    %v845 = vpack.c.b16 %v604, %v603
    %v846 = vpack.c.b16 %v606, %v605
    %v847 = vpack.c.b16 %v608, %v607
    %v848 = vpack.c.b16 %v610, %v609
    %v849 = vpack.c.b16 %v612, %v611
    %v850 = vpack.c.b16 %v614, %v613
    %v851 = vpack.c.b16 %v616, %v615
    %v852 = vpack.c.b16 %v618, %v617
    %v853 = vpack.c.b16 %v620, %v619
    %v854 = vpack.c.b16 %v622, %v621
    %v855 = vpack.c.b16 %v624, %v623
    %v856 = vpack.c.b16 %v626, %v625
    %v857 = vpack.c.b16 %v628, %v627
    %v858 = vpack.c.b16 %v630, %v629
    %v859 = vpack.c.b16 %v632, %v631
    %v860 = vpack.c.b16 %v634, %v633
    %v861 = vpack.c.b16 %v636, %v635
    %v862 = vpack.c.b16 %v638, %v637
    %v863 = vpack.c.b16 %v640, %v639
    %v864 = vpack.c.b16 %v642, %v641
    %v865 = vpack.c.b16 %v644, %v643
    %v866 = vpack.c.b16 %v646, %v645
    %v867 = vpack.c.b16 %v648, %v647
    %v868 = vpack.c.b16 %v650, %v649
    %v869 = vpack.c.b16 %v652, %v651
    %v870 = vpack.c.b16 %v654, %v653
    %v871 = vpack.c.b16 %v656, %v655
    %v872 = vpack.c.b16 %v658, %v657
    %v873 = vpack.c.b16 %v660, %v659
    %v874 = vpack.c.b16 %v662, %v661
    %v875 = vpack.c.b16 %v664, %v663
    %v876 = vpack.c.b16 %v666, %v665
    %v877 = vpack.c.b16 %v668, %v667
    %v878 = vpack.c.b16 %v670, %v669
    %v879 = vpack.c.b16 %v672, %v671
    %v880 = vpack.c.b16 %v674, %v673
    %v881 = vpack.c.b16 %v676, %v675
    %v882 = vpack.c.b16 %v678, %v677
    %v883 = vpack.c.b16 %v680, %v679
    %v884 = vpack.c.b16 %v682, %v681
    %v885 = vpack.c.b16 %v684, %v683
    %v886 = vpack.c.b16 %v686, %v685
    %v887 = vpack.c.b16 %v688, %v687
    %v888 = vpack.c.b16 %v690, %v689
    %v889 = vpack.c.b16 %v692, %v691
    %v890 = vpack.c.b16 %v694, %v693
    %v891 = vpack.c.b16 %v696, %v695
    %v892 = vpack.c.b16 %v698, %v697
    %v893 = vpack.c.b16 %v700, %v699
    %v894 = vpack.c.b16 %v702, %v701
    %v895 = vpack.c.b16 %v704, %v703
    %v896 = vpack.c.b16 %v706, %v705
    %v897 = vpack.c.b16 %v708, %v707
    %v898 = vpack.c.b16 %v710, %v709
    %v899 = vpack.c.b16 %v712, %v711
    %v900 = vpack.c.b16 %v714, %v713
    %v901 = vpack.c.b16 %v716, %v715
    %v902 = vpack.c.b16 %v718, %v717
    %v903 = vpack.c.b16 %v720, %v719
    %v904 = vpack.c.b16 %v722, %v721
    %v905 = vpack.c.b16 %v724, %v723
    %v906 = vpack.c.b16 %v726, %v725
    %v907 = vpack.c.b16 %v728, %v727
    %v908 = vpack.c.b16 %v730, %v729
    %v909 = vpack.c.b16 %v732, %v731
    %v910 = vpack.c.b16 %v734, %v733
    %v911 = vpack.c.b16 %v736, %v735
    %v912 = vpack.c.b16 %v738, %v737
    %v913 = vpack.c.b16 %v740, %v739
    %v914 = vpack.c.b16 %v742, %v741
    %v915 = vpack.c.b16 %v744, %v743
    %v916 = vpack.c.b16 %v746, %v745
    %v917 = vpack.c.b16 %v748, %v747
    %v918 = vpack.c.b16 %v750, %v749
    %v919 = vpack.c.b16 %v752, %v751
    %v920 = vpack.c.b16 %v754, %v753
    %v921 = vpack.c.b16 %v756, %v755
    %v922 = vpack.c.b16 %v758, %v757
    %v923 = vpack.c.b16 %v760, %v759
    %v924 = vpack.c.b16 %v762, %v761
    %v925 = vpack.c.b16 %v764, %v763
    %v926 = vpack.c.b16 %v766, %v765
    %v927 = vpack.c.b16 %v768, %v767
    %v928 = vpack.c.b16 %v770, %v769
    %v929 = vpack.c.b16 %v772, %v771
    %v930 = vpack.c.b16 %v774, %v773
    %v931 = vpack.c.b16 %v776, %v775
    %v932 = vpack.c.b16 %v778, %v777
    %v933 = vpack.c.b16 %v780, %v779
    %v934 = vpack.c.b16 %v782, %v781
    %v935 = vpack.c.b16 %v784, %v783
    %v936 = vpack.c.b16 %v786, %v785
    %v937 = vpack.c.b16 %v788, %v787
    %v938 = vpack.c.b16 %v790, %v789
    %v939 = vpack.c.b16 %v792, %v791
    %v940 = vpack.c.b16 %v794, %v793
    %v941 = vpack.c.b16 %v796, %v795
    %v942 = vpack.c.b16 %v798, %v797
    %v943 = vpack.c.b16 %v800, %v799
    %v944 = vpack.c.b16 %v802, %v801
    %v945 = vpack.c.b16 %v804, %v803
    %v946 = vpack.c.b16 %v806, %v805
    %v947 = vpack.c.b16 %v808, %v807
    %v948 = vpack.c.b16 %v810, %v809
    %v949 = vpack.c.b16 %v812, %v811
    %v950 = vpack.c.b16 %v814, %v813
    %v951 = vpack.c.b16 %v816, %v815
    %v952 = vpack.c.b16 %v818, %v817
    %v953 = vpack.c.b16 %v820, %v819
    %v954 = vpack.c.b16 %v822, %v821
    %v955 = vpack.c.b16 %v824, %v823
    %v956 = vpack.c.b16 %v826, %v825
    %v957 = vpack.c.b16 %v828, %v827
    %v958 = vpack.c.b16 %v830, %v829
    %1087 = vmatpush.bf16.msra.mxu0 %v838
    %1088 = vmatpush.bf16.msra.mxu0 %v837
    %1089 = vmatpush.bf16.msra.mxu0 %v836
    %1090 = vmatpush.bf16.msra.mxu0 %v835
    %1091 = vmatpush.bf16.msra.mxu0 %v834
    %1092 = vmatpush.bf16.msra.mxu0 %v833
    %1093 = vmatpush.bf16.msra.mxu0 %v832
    %1094 = vmatpush.bf16.msra.mxu0 %v831
    %1095 = vmatmul.bf16.gmra.mxu0 %v285
    %v1096 = vpop.f32.mrf.mxu0
    %v1097 = vadd.f32 %v281, %v1096
    %v1098 = vpop.f32.mrf.mxu0
    %1099 = vdwg.mxu0
    %1100 = vmatpush.bf16.msra.mxu0 %v846
    %1101 = vmatpush.bf16.msra.mxu0 %v845
    %1102 = vmatpush.bf16.msra.mxu0 %v844
    %1103 = vmatpush.bf16.msra.mxu0 %v843
    %1104 = vmatpush.bf16.msra.mxu0 %v842
    %1105 = vmatpush.bf16.msra.mxu0 %v841
    %1106 = vmatpush.bf16.msra.mxu0 %v840
    %1107 = vmatpush.bf16.msra.mxu0 %v839
    %1108 = vmatmul.bf16.gmra.mxu0 %v286
    %v1109 = vpop.f32.mrf.mxu0
    %v1110 = vadd.f32 %v1097, %v1109
    %v1111 = vpop.f32.mrf.mxu0
    %1112 = vdwg.mxu0
    %1113 = vmatpush.bf16.msra.mxu0 %v854
    %1114 = vmatpush.bf16.msra.mxu0 %v853
    %1115 = vmatpush.bf16.msra.mxu0 %v852
    %1116 = vmatpush.bf16.msra.mxu0 %v851
    %1117 = vmatpush.bf16.msra.mxu0 %v850
    %1118 = vmatpush.bf16.msra.mxu0 %v849
    %1119 = vmatpush.bf16.msra.mxu0 %v848
    %1120 = vmatpush.bf16.msra.mxu0 %v847
    %1121 = vmatmul.bf16.gmra.mxu0 %v287
    %v1122 = vpop.f32.mrf.mxu0
    %v1123 = vadd.f32 %v1110, %v1122
    %v1124 = vpop.f32.mrf.mxu0
    %1125 = vdwg.mxu0
    %1126 = vmatpush.bf16.msra.mxu0 %v862
    %1127 = vmatpush.bf16.msra.mxu0 %v861
    %1128 = vmatpush.bf16.msra.mxu0 %v860
    %1129 = vmatpush.bf16.msra.mxu0 %v859
    %1130 = vmatpush.bf16.msra.mxu0 %v858
    %1131 = vmatpush.bf16.msra.mxu0 %v857
    %1132 = vmatpush.bf16.msra.mxu0 %v856
    %1133 = vmatpush.bf16.msra.mxu0 %v855
    %1134 = vmatmul.bf16.gmra.mxu0 %v288
    %v1135 = vpop.f32.mrf.mxu0
    %v1136 = vadd.f32 %v1123, %v1135
    %v1137 = vpop.f32.mrf.mxu0
    %1138 = vdwg.mxu0
    %1139 = vmatpush.bf16.msra.mxu0 %v870
    %1140 = vmatpush.bf16.msra.mxu0 %v869
    %1141 = vmatpush.bf16.msra.mxu0 %v868
    %1142 = vmatpush.bf16.msra.mxu0 %v867
    %1143 = vmatpush.bf16.msra.mxu0 %v866
    %1144 = vmatpush.bf16.msra.mxu0 %v865
    %1145 = vmatpush.bf16.msra.mxu0 %v864
    %1146 = vmatpush.bf16.msra.mxu0 %v863
    %1147 = vmatmul.bf16.gmra.mxu0 %v289
    %v1148 = vpop.f32.mrf.mxu0
    %v1149 = vadd.f32 %v1136, %v1148
    %v1150 = vpop.f32.mrf.mxu0
    %1151 = vdwg.mxu0
    %1152 = vmatpush.bf16.msra.mxu0 %v878
    %1153 = vmatpush.bf16.msra.mxu0 %v877
    %1154 = vmatpush.bf16.msra.mxu0 %v876
    %1155 = vmatpush.bf16.msra.mxu0 %v875
    %1156 = vmatpush.bf16.msra.mxu0 %v874
    %1157 = vmatpush.bf16.msra.mxu0 %v873
    %1158 = vmatpush.bf16.msra.mxu0 %v872
    %1159 = vmatpush.bf16.msra.mxu0 %v871
    %1160 = vmatmul.bf16.gmra.mxu0 %v290
    %v1161 = vpop.f32.mrf.mxu0
    %v1162 = vadd.f32 %v1149, %v1161
    %v1163 = vpop.f32.mrf.mxu0
    %1164 = vdwg.mxu0
    %1165 = vmatpush.bf16.msra.mxu0 %v886
    %1166 = vmatpush.bf16.msra.mxu0 %v885
    %1167 = vmatpush.bf16.msra.mxu0 %v884
    %1168 = vmatpush.bf16.msra.mxu0 %v883
    %1169 = vmatpush.bf16.msra.mxu0 %v882
    %1170 = vmatpush.bf16.msra.mxu0 %v881
    %1171 = vmatpush.bf16.msra.mxu0 %v880
    %1172 = vmatpush.bf16.msra.mxu0 %v879
    %1173 = vmatmul.bf16.gmra.mxu0 %v291
    %v1174 = vpop.f32.mrf.mxu0
    %v1175 = vadd.f32 %v1162, %v1174
    %v1176 = vpop.f32.mrf.mxu0
    %1177 = vdwg.mxu0
    %1178 = vmatpush.bf16.msra.mxu0 %v894
    %1179 = vmatpush.bf16.msra.mxu0 %v893
    %1180 = vmatpush.bf16.msra.mxu0 %v892
    %1181 = vmatpush.bf16.msra.mxu0 %v891
    %1182 = vmatpush.bf16.msra.mxu0 %v890
    %1183 = vmatpush.bf16.msra.mxu0 %v889
    %1184 = vmatpush.bf16.msra.mxu0 %v888
    %1185 = vmatpush.bf16.msra.mxu0 %v887
    %1186 = vmatmul.bf16.gmra.mxu0 %v292
    %v1187 = vpop.f32.mrf.mxu0
    %v1188 = vadd.f32 %v1175, %v1187
    %v1189 = vpop.f32.mrf.mxu0
    %1190 = vdwg.mxu0
    %1191 = vmatpush.bf16.msra.mxu0 %v902
    %1192 = vmatpush.bf16.msra.mxu0 %v901
    %1193 = vmatpush.bf16.msra.mxu0 %v900
    %1194 = vmatpush.bf16.msra.mxu0 %v899
    %1195 = vmatpush.bf16.msra.mxu0 %v898
    %1196 = vmatpush.bf16.msra.mxu0 %v897
    %1197 = vmatpush.bf16.msra.mxu0 %v896
    %1198 = vmatpush.bf16.msra.mxu0 %v895
    %1199 = vmatmul.bf16.gmra.mxu0 %v295
    %v1200 = vpop.f32.mrf.mxu0
    %v1201 = vadd.f32 %v1188, %v1200
    %v1202 = vpop.f32.mrf.mxu0
    %1203 = vdwg.mxu0
    %1204 = vmatpush.bf16.msra.mxu0 %v910
    %1205 = vmatpush.bf16.msra.mxu0 %v909
    %1206 = vmatpush.bf16.msra.mxu0 %v908
    %1207 = vmatpush.bf16.msra.mxu0 %v907
    %1208 = vmatpush.bf16.msra.mxu0 %v906
    %1209 = vmatpush.bf16.msra.mxu0 %v905
    %1210 = vmatpush.bf16.msra.mxu0 %v904
    %1211 = vmatpush.bf16.msra.mxu0 %v903
    %1212 = vmatmul.bf16.gmra.mxu0 %v296
    %v1213 = vpop.f32.mrf.mxu0
    %v1214 = vadd.f32 %v1201, %v1213
    %v1215 = vpop.f32.mrf.mxu0
    %1216 = vdwg.mxu0
    %1217 = vmatpush.bf16.msra.mxu0 %v918
    %1218 = vmatpush.bf16.msra.mxu0 %v917
    %1219 = vmatpush.bf16.msra.mxu0 %v916
    %1220 = vmatpush.bf16.msra.mxu0 %v915
    %1221 = vmatpush.bf16.msra.mxu0 %v914
    %1222 = vmatpush.bf16.msra.mxu0 %v913
    %1223 = vmatpush.bf16.msra.mxu0 %v912
    %1224 = vmatpush.bf16.msra.mxu0 %v911
    %1225 = vmatmul.bf16.gmra.mxu0 %v297
    %v1226 = vpop.f32.mrf.mxu0
    %v1227 = vadd.f32 %v1214, %v1226
    %v1228 = vpop.f32.mrf.mxu0
    %1229 = vdwg.mxu0
    %1230 = vmatpush.bf16.msra.mxu0 %v926
    %1231 = vmatpush.bf16.msra.mxu0 %v925
    %1232 = vmatpush.bf16.msra.mxu0 %v924
    %1233 = vmatpush.bf16.msra.mxu0 %v923
    %1234 = vmatpush.bf16.msra.mxu0 %v922
    %1235 = vmatpush.bf16.msra.mxu0 %v921
    %1236 = vmatpush.bf16.msra.mxu0 %v920
    %1237 = vmatpush.bf16.msra.mxu0 %v919
    %1238 = vmatmul.bf16.gmra.mxu0 %v298
    %v1239 = vpop.f32.mrf.mxu0
    %v1240 = vadd.f32 %v1227, %v1239
    %v1241 = vpop.f32.mrf.mxu0
    %1242 = vdwg.mxu0
    %1243 = vmatpush.bf16.msra.mxu0 %v934
    %1244 = vmatpush.bf16.msra.mxu0 %v933
    %1245 = vmatpush.bf16.msra.mxu0 %v932
    %1246 = vmatpush.bf16.msra.mxu0 %v931
    %1247 = vmatpush.bf16.msra.mxu0 %v930
    %1248 = vmatpush.bf16.msra.mxu0 %v929
    %1249 = vmatpush.bf16.msra.mxu0 %v928
    %1250 = vmatpush.bf16.msra.mxu0 %v927
    %1251 = vmatmul.bf16.gmra.mxu0 %v299
    %v1252 = vpop.f32.mrf.mxu0
    %v1253 = vadd.f32 %v1240, %v1252
    %v1254 = vpop.f32.mrf.mxu0
    %1255 = vdwg.mxu0
    %1256 = vmatpush.bf16.msra.mxu0 %v942
    %1257 = vmatpush.bf16.msra.mxu0 %v941
    %1258 = vmatpush.bf16.msra.mxu0 %v940
    %1259 = vmatpush.bf16.msra.mxu0 %v939
    %1260 = vmatpush.bf16.msra.mxu0 %v938
    %1261 = vmatpush.bf16.msra.mxu0 %v937
    %1262 = vmatpush.bf16.msra.mxu0 %v936
    %1263 = vmatpush.bf16.msra.mxu0 %v935
    %1264 = vmatmul.bf16.gmra.mxu0 %v300
    %v1265 = vpop.f32.mrf.mxu0
    %v1266 = vadd.f32 %v1253, %v1265
    %v1267 = vpop.f32.mrf.mxu0
    %1268 = vdwg.mxu0
    %1269 = vmatpush.bf16.msra.mxu0 %v950
    %1270 = vmatpush.bf16.msra.mxu0 %v949
    %1271 = vmatpush.bf16.msra.mxu0 %v948
    %1272 = vmatpush.bf16.msra.mxu0 %v947
    %1273 = vmatpush.bf16.msra.mxu0 %v946
    %1274 = vmatpush.bf16.msra.mxu0 %v945
    %1275 = vmatpush.bf16.msra.mxu0 %v944
    %1276 = vmatpush.bf16.msra.mxu0 %v943
    %1277 = vmatmul.bf16.gmra.mxu0 %v301
    %v1278 = vpop.f32.mrf.mxu0
    %v1279 = vadd.f32 %v1266, %v1278
    %v1280 = vpop.f32.mrf.mxu0
    %1281 = vdwg.mxu0
    %1282 = vmatpush.bf16.msra.mxu0 %v958
    %1283 = vmatpush.bf16.msra.mxu0 %v957
    %1284 = vmatpush.bf16.msra.mxu0 %v956
    %1285 = vmatpush.bf16.msra.mxu0 %v955
    %1286 = vmatpush.bf16.msra.mxu0 %v954
    %1287 = vmatpush.bf16.msra.mxu0 %v953
    %1288 = vmatpush.bf16.msra.mxu0 %v952
    %1289 = vmatpush.bf16.msra.mxu0 %v951
    %1290 = vmatmul.bf16.gmra.mxu0 %v302
    %v1291 = vpop.f32.mrf.mxu0
    %v1292 = vadd.f32 %v1279, %v1291
    %v1293 = vpop.f32.mrf.mxu0
    %1294 = vdwg.mxu0
    %v1295 = vpack.c.bf16 %v1292, %v1292
    %v1296 = vld [vmem:[%s3] sm:$0xf]
    %v1297 = vld [vmem:[%s3 + $0x4] sm:$0xf]
    %v1298 = vld [vmem:[%s3 + $0x8] sm:$0xf]
    %v1299 = vld [vmem:[%s3 + $0xc] sm:$0xf]
    %v1300 = vld [vmem:[%s3 + $0x10] sm:$0xf]
    %v1301 = vld [vmem:[%s3 + $0x14] sm:$0xf]
    %v1302 = vld [vmem:[%s3 + $0x18] sm:$0xf]
    %v1303 = vld [vmem:[%s3 + $0x1c] sm:$0xf]
    %v1304 = vld [vmem:[%s3 + $0x20] sm:$0xf]
    %v1305 = vld [vmem:[%s3 + $0x24] sm:$0xf]
    %v1306 = vld [vmem:[%s3 + $0x28] sm:$0xf]
    %v1307 = vld [vmem:[%s3 + $0x2c] sm:$0xf]
    %v1308 = vld [vmem:[%s3 + $0x30] sm:$0xf]
    %v1309 = vld [vmem:[%s3 + $0x34] sm:$0xf]
    %v1310 = vld [vmem:[%s3 + $0x38] sm:$0xf]
    %v1311 = vld [vmem:[%s3 + $0x3c] sm:$0xf]
    %v1312 = vld [vmem:[%s4] sm:$0x1]
    %v1314 = vperm.slane %v1312, 0
    %v1332 = vunpack.c.l.b16 %v1296
    %v1333 = vunpack.c.l.b16 %v1297
    %v1334 = vunpack.c.l.b16 %v1298
    %v1335 = vunpack.c.l.b16 %v1299
    %v1336 = vunpack.c.l.b16 %v1300
    %v1337 = vunpack.c.l.b16 %v1301
    %v1338 = vunpack.c.l.b16 %v1302
    %v1339 = vunpack.c.l.b16 %v1303
    %v1340 = vunpack.c.l.b16 %v1304
    %v1341 = vunpack.c.l.b16 %v1305
    %v1342 = vunpack.c.l.b16 %v1306
    %v1343 = vunpack.c.l.b16 %v1307
    %v1344 = vunpack.c.l.b16 %v1308
    %v1345 = vunpack.c.l.b16 %v1309
    %v1346 = vunpack.c.l.b16 %v1310
    %v1347 = vunpack.c.l.b16 %v1311
    %v1348 = vpack.c.b16 %v1333, %v1332
    %v1349 = vpack.c.b16 %v1335, %v1334
    %v1350 = vpack.c.b16 %v1337, %v1336
    %v1351 = vpack.c.b16 %v1339, %v1338
    %v1352 = vpack.c.b16 %v1341, %v1340
    %v1353 = vpack.c.b16 %v1343, %v1342
    %v1354 = vpack.c.b16 %v1345, %v1344
    %v1355 = vpack.c.b16 %v1347, %v1346
    %1364 = vmatpush.bf16.msra.mxu0 %v1355
    %1365 = vmatpush.bf16.msra.mxu0 %v1354
    %1366 = vmatpush.bf16.msra.mxu0 %v1353
    %1367 = vmatpush.bf16.msra.mxu0 %v1352
    %1368 = vmatpush.bf16.msra.mxu0 %v1351
    %1369 = vmatpush.bf16.msra.mxu0 %v1350
    %1370 = vmatpush.bf16.msra.mxu0 %v1349
    %1371 = vmatpush.bf16.msra.mxu0 %v1348
    %1372 = vmatmul.bf16.gmra.mxu0 %v1295
    %v1373 = vpop.f32.mrf.mxu0
    %v1374 = vadd.f32 %v1314, %v1373
    %v1375 = vpop.f32.mrf.mxu0
    %1376 = vdwg.mxu0
    %1377 = vst [vmem:[#allocation2] sm:$0x3] %v1374
    // Predicated region
    $region22: #{deep_cnn_forward.9} parent=1 // pred_check
      _
    $region23: #{deep_cnn_forward.9} parent=1 // pred_check_branch
      %1379 = sbr.rel (0) target = $region25
    $region24: #{deep_cnn_forward.9} parent=1 // pred_region
      %1381 = vsyncadd [#allocation3], 0
      %s1383 = sshll.u32 [#allocation2], 4
      %s1384 = int_to_ptr.vmem [resolvable:$true] %s1383
      %s1385 = sshll.u32 %s5, 4
      %s1386 = int_to_ptr.hbm [resolvable:$true] %s1385
      %1388 = dma.vmem_to_hbm [thread:$0]  %s1384, 32, %s1386, [#allocation3]
    $region25: #{deep_cnn_forward.9} parent=1 // pred_fallthru
      _
    // Predicated region
    $region26: #{deep_cnn_forward.9} parent=1 // pred_check
      _
    $region27: #{deep_cnn_forward.9} parent=1 // pred_check_branch
      %1390 = sbr.rel (0) target = $region29
    $region28: #{deep_cnn_forward.9} parent=1 // pred_region
      %1392 = dma.done [#allocation3], 32
    $region29: #{deep_cnn_forward.9} parent=1 // pred_fallthru
      _
    %1393 = vsyncpa [#allocation3], 1

// kernel: deep_cnn_forward.8
$region0: #{deep_cnn_forward.8}
  #allocation0 [shape = 'u32[]', space=smem, size = 0x4, offset = 0x4, fixed_abs, tag = 'smem constant byte address 0x4 - core index']
  #allocation1 [shape = 'u32[72,128]{1,0:T(1,128)}', space=vmem, size = 0x9000, scoped, tag = 'internal scratch']
  #allocation2 [shape = 'f32[2,512]{1,0:T(2,128)}', space=vmem, size = 0x1000, scoped, tag = 'scratch operand']
  %s0 = inlined_call_operand.vmem [shape: bf16[16,2304], index: 0, kind: input, shape index: {}]
  %s1 = inlined_call_operand.vmem [shape: bf16[2304,512], index: 1, kind: input, shape index: {}]
  %s2 = inlined_call_operand.vmem [shape: f32[1,512], index: 2, kind: input, shape index: {}]
  %s3 = inlined_call_operand.vmem [shape: f32[1,512], index: 3, kind: input, shape index: {}]
  %s4 = inlined_call_operand.vmem [shape: bf16[16,512], index: 4, kind: output, shape index: {}]
  %s5 = sld [smem:[#allocation0]]
  $region38: #{deep_cnn_forward.8} parent=0
    _
  %s7 = ssub.s32 1, %s5
  %s8 = scalar_select 0, %s7, %s5
  // Predicated region
  $region2: #{deep_cnn_forward.8} parent=0 // pred_check
    _
  $region3: #{deep_cnn_forward.8} parent=0 // pred_check_branch
    %10 = sbr.rel (0) target = $region5
  $region4: #{deep_cnn_forward.8} parent=0 // pred_region
    _
  $region5: #{deep_cnn_forward.8} parent=0 // pred_fallthru
    _
  // Predicated region
  $region6: #{deep_cnn_forward.8} parent=0 // pred_check
    _
  $region7: #{deep_cnn_forward.8} parent=0 // pred_check_branch
    %12 = sbr.rel (0) target = $region9
  $region8: #{deep_cnn_forward.8} parent=0 // pred_region
    _
  $region9: #{deep_cnn_forward.8} parent=0 // pred_fallthru
    _
  // Predicated region
  $region10: #{deep_cnn_forward.8} parent=0 // pred_check
    _
  $region11: #{deep_cnn_forward.8} parent=0 // pred_check_branch
    %14 = sbr.rel (0) target = $region13
  $region12: #{deep_cnn_forward.8} parent=0 // pred_region
    _
  $region13: #{deep_cnn_forward.8} parent=0 // pred_fallthru
    _
  // Predicated region
  $region14: #{deep_cnn_forward.8} parent=0 // pred_check
    _
  $region15: #{deep_cnn_forward.8} parent=0 // pred_check_branch
    %16 = sbr.rel (0) target = $region17
  $region16: #{deep_cnn_forward.8} parent=0 // pred_region
    _
  $region17: #{deep_cnn_forward.8} parent=0 // pred_fallthru
    _
  %v17 = vld [vmem:[%s0] sm:$0xff]
  %v18 = vld [vmem:[%s0 + $0x8] sm:$0xff]
  %v19 = vld [vmem:[%s0 + $0x10] sm:$0xff]
  %v20 = vld [vmem:[%s0 + $0x18] sm:$0xff]
  %v21 = vld [vmem:[%s0 + $0x20] sm:$0xff]
  %v22 = vld [vmem:[%s0 + $0x28] sm:$0xff]
  %v23 = vld [vmem:[%s0 + $0x30] sm:$0xff]
  %v24 = vld [vmem:[%s0 + $0x38] sm:$0xff]
  %v25 = vld [vmem:[%s0 + $0x40] sm:$0xff]
  %v26 = vld [vmem:[%s0 + $0x48] sm:$0xff]
  %v27 = vld [vmem:[%s0 + $0x50] sm:$0xff]
  %v28 = vld [vmem:[%s0 + $0x58] sm:$0xff]
  %v29 = vld [vmem:[%s0 + $0x60] sm:$0xff]
  %v30 = vld [vmem:[%s0 + $0x68] sm:$0xff]
  %v31 = vld [vmem:[%s0 + $0x70] sm:$0xff]
  %v32 = vld [vmem:[%s0 + $0x78] sm:$0xff]
  %v33 = vld [vmem:[%s0 + $0x80] sm:$0xff]
  %v34 = vld [vmem:[%s0 + $0x88] sm:$0xff]
  %v35 = vld [vmem:[%s1] sm:$0xff]
  %v36 = vld [vmem:[%s1 + $0x8] sm:$0xff]
  %v37 = vld [vmem:[%s1 + $0x10] sm:$0xff]
  %v38 = vld [vmem:[%s1 + $0x18] sm:$0xff]
  %v39 = vld [vmem:[%s1 + $0x20] sm:$0xff]
  %v40 = vld [vmem:[%s1 + $0x28] sm:$0xff]
  %v41 = vld [vmem:[%s1 + $0x30] sm:$0xff]
  %v42 = vld [vmem:[%s1 + $0x38] sm:$0xff]
  %v43 = vld [vmem:[%s1 + $0x40] sm:$0xff]
  %v44 = vld [vmem:[%s1 + $0x48] sm:$0xff]
  %v45 = vld [vmem:[%s1 + $0x50] sm:$0xff]
  %v46 = vld [vmem:[%s1 + $0x58] sm:$0xff]
  %v47 = vld [vmem:[%s1 + $0x60] sm:$0xff]
  %v48 = vld [vmem:[%s1 + $0x68] sm:$0xff]
  %v49 = vld [vmem:[%s1 + $0x70] sm:$0xff]
  %v50 = vld [vmem:[%s1 + $0x78] sm:$0xff]
  %v51 = vld [vmem:[%s1 + $0x80] sm:$0xff]
  %v52 = vld [vmem:[%s1 + $0x88] sm:$0xff]
  %v53 = vld [vmem:[%s1 + $0x90] sm:$0xff]
  %v54 = vld [vmem:[%s1 + $0x98] sm:$0xff]
  %v55 = vld [vmem:[%s1 + $0xa0] sm:$0xff]
  %v56 = vld [vmem:[%s1 + $0xa8] sm:$0xff]
  %v57 = vld [vmem:[%s1 + $0xb0] sm:$0xff]
  %v58 = vld [vmem:[%s1 + $0xb8] sm:$0xff]
  %v59 = vld [vmem:[%s1 + $0xc0] sm:$0xff]
  %v60 = vld [vmem:[%s1 + $0xc8] sm:$0xff]
  %v61 = vld [vmem:[%s1 + $0xd0] sm:$0xff]
  %v62 = vld [vmem:[%s1 + $0xd8] sm:$0xff]
  %v63 = vld [vmem:[%s1 + $0xe0] sm:$0xff]
  %v64 = vld [vmem:[%s1 + $0xe8] sm:$0xff]
  %v65 = vld [vmem:[%s1 + $0xf0] sm:$0xff]
  %v66 = vld [vmem:[%s1 + $0xf8] sm:$0xff]
  %v67 = vld [vmem:[%s1 + $0x100] sm:$0xff]
  %v68 = vld [vmem:[%s1 + $0x108] sm:$0xff]
  %v69 = vld [vmem:[%s1 + $0x110] sm:$0xff]
  %v70 = vld [vmem:[%s1 + $0x118] sm:$0xff]
  %v71 = vld [vmem:[%s1 + $0x120] sm:$0xff]
  %v72 = vld [vmem:[%s1 + $0x128] sm:$0xff]
  %v73 = vld [vmem:[%s1 + $0x130] sm:$0xff]
  %v74 = vld [vmem:[%s1 + $0x138] sm:$0xff]
  %v75 = vld [vmem:[%s1 + $0x140] sm:$0xff]
  %v76 = vld [vmem:[%s1 + $0x148] sm:$0xff]
  %v77 = vld [vmem:[%s1 + $0x150] sm:$0xff]
  %v78 = vld [vmem:[%s1 + $0x158] sm:$0xff]
  %v79 = vld [vmem:[%s1 + $0x160] sm:$0xff]
  %v80 = vld [vmem:[%s1 + $0x168] sm:$0xff]
  %v81 = vld [vmem:[%s1 + $0x170] sm:$0xff]
  %v82 = vld [vmem:[%s1 + $0x178] sm:$0xff]
  %v83 = vld [vmem:[%s1 + $0x180] sm:$0xff]
  %v84 = vld [vmem:[%s1 + $0x188] sm:$0xff]
  %v85 = vld [vmem:[%s1 + $0x190] sm:$0xff]
  %v86 = vld [vmem:[%s1 + $0x198] sm:$0xff]
  %v87 = vld [vmem:[%s1 + $0x1a0] sm:$0xff]
  %v88 = vld [vmem:[%s1 + $0x1a8] sm:$0xff]
  %v89 = vld [vmem:[%s1 + $0x1b0] sm:$0xff]
  %v90 = vld [vmem:[%s1 + $0x1b8] sm:$0xff]
  %v91 = vld [vmem:[%s1 + $0x1c0] sm:$0xff]
  %v92 = vld [vmem:[%s1 + $0x1c8] sm:$0xff]
  %v93 = vld [vmem:[%s1 + $0x1d0] sm:$0xff]
  %v94 = vld [vmem:[%s1 + $0x1d8] sm:$0xff]
  %v95 = vld [vmem:[%s1 + $0x1e0] sm:$0xff]
  %v96 = vld [vmem:[%s1 + $0x1e8] sm:$0xff]
  %v97 = vld [vmem:[%s1 + $0x1f0] sm:$0xff]
  %v98 = vld [vmem:[%s1 + $0x1f8] sm:$0xff]
  %v99 = vld [vmem:[%s1 + $0x200] sm:$0xff]
  %v100 = vld [vmem:[%s1 + $0x208] sm:$0xff]
  %v101 = vld [vmem:[%s1 + $0x210] sm:$0xff]
  %v102 = vld [vmem:[%s1 + $0x218] sm:$0xff]
  %v103 = vld [vmem:[%s1 + $0x220] sm:$0xff]
  %v104 = vld [vmem:[%s1 + $0x228] sm:$0xff]
  %v105 = vld [vmem:[%s1 + $0x230] sm:$0xff]
  %v106 = vld [vmem:[%s1 + $0x238] sm:$0xff]
  %v107 = vld [vmem:[%s1 + $0x240] sm:$0xff]
  %v108 = vld [vmem:[%s1 + $0x248] sm:$0xff]
  %v109 = vld [vmem:[%s1 + $0x250] sm:$0xff]
  %v110 = vld [vmem:[%s1 + $0x258] sm:$0xff]
  %v111 = vld [vmem:[%s1 + $0x260] sm:$0xff]
  %v112 = vld [vmem:[%s1 + $0x268] sm:$0xff]
  %v113 = vld [vmem:[%s1 + $0x270] sm:$0xff]
  %v114 = vld [vmem:[%s1 + $0x278] sm:$0xff]
  %v115 = vld [vmem:[%s1 + $0x280] sm:$0xff]
  %v116 = vld [vmem:[%s1 + $0x288] sm:$0xff]
  %v117 = vld [vmem:[%s1 + $0x290] sm:$0xff]
  %v118 = vld [vmem:[%s1 + $0x298] sm:$0xff]
  %v119 = vld [vmem:[%s1 + $0x2a0] sm:$0xff]
  %v120 = vld [vmem:[%s1 + $0x2a8] sm:$0xff]
  %v121 = vld [vmem:[%s1 + $0x2b0] sm:$0xff]
  %v122 = vld [vmem:[%s1 + $0x2b8] sm:$0xff]
  %v123 = vld [vmem:[%s1 + $0x2c0] sm:$0xff]
  %v124 = vld [vmem:[%s1 + $0x2c8] sm:$0xff]
  %v125 = vld [vmem:[%s1 + $0x2d0] sm:$0xff]
  %v126 = vld [vmem:[%s1 + $0x2d8] sm:$0xff]
  %v127 = vld [vmem:[%s1 + $0x2e0] sm:$0xff]
  %v128 = vld [vmem:[%s1 + $0x2e8] sm:$0xff]
  %v129 = vld [vmem:[%s1 + $0x2f0] sm:$0xff]
  %v130 = vld [vmem:[%s1 + $0x2f8] sm:$0xff]
  %v131 = vld [vmem:[%s1 + $0x300] sm:$0xff]
  %v132 = vld [vmem:[%s1 + $0x308] sm:$0xff]
  %v133 = vld [vmem:[%s1 + $0x310] sm:$0xff]
  %v134 = vld [vmem:[%s1 + $0x318] sm:$0xff]
  %v135 = vld [vmem:[%s1 + $0x320] sm:$0xff]
  %v136 = vld [vmem:[%s1 + $0x328] sm:$0xff]
  %v137 = vld [vmem:[%s1 + $0x330] sm:$0xff]
  %v138 = vld [vmem:[%s1 + $0x338] sm:$0xff]
  %v139 = vld [vmem:[%s1 + $0x340] sm:$0xff]
  %v140 = vld [vmem:[%s1 + $0x348] sm:$0xff]
  %v141 = vld [vmem:[%s1 + $0x350] sm:$0xff]
  %v142 = vld [vmem:[%s1 + $0x358] sm:$0xff]
  %v143 = vld [vmem:[%s1 + $0x360] sm:$0xff]
  %v144 = vld [vmem:[%s1 + $0x368] sm:$0xff]
  %v145 = vld [vmem:[%s1 + $0x370] sm:$0xff]
  %v146 = vld [vmem:[%s1 + $0x378] sm:$0xff]
  %v147 = vld [vmem:[%s1 + $0x380] sm:$0xff]
  %v148 = vld [vmem:[%s1 + $0x388] sm:$0xff]
  %v149 = vld [vmem:[%s1 + $0x390] sm:$0xff]
  %v150 = vld [vmem:[%s1 + $0x398] sm:$0xff]
  %v151 = vld [vmem:[%s1 + $0x3a0] sm:$0xff]
  %v152 = vld [vmem:[%s1 + $0x3a8] sm:$0xff]
  %v153 = vld [vmem:[%s1 + $0x3b0] sm:$0xff]
  %v154 = vld [vmem:[%s1 + $0x3b8] sm:$0xff]
  %v155 = vld [vmem:[%s1 + $0x3c0] sm:$0xff]
  %v156 = vld [vmem:[%s1 + $0x3c8] sm:$0xff]
  %v157 = vld [vmem:[%s1 + $0x3d0] sm:$0xff]
  %v158 = vld [vmem:[%s1 + $0x3d8] sm:$0xff]
  %v159 = vld [vmem:[%s1 + $0x3e0] sm:$0xff]
  %v160 = vld [vmem:[%s1 + $0x3e8] sm:$0xff]
  %v161 = vld [vmem:[%s1 + $0x3f0] sm:$0xff]
  %v162 = vld [vmem:[%s1 + $0x3f8] sm:$0xff]
  %v163 = vld [vmem:[%s1 + $0x400] sm:$0xff]
  %v164 = vld [vmem:[%s1 + $0x408] sm:$0xff]
  %v165 = vld [vmem:[%s1 + $0x410] sm:$0xff]
  %v166 = vld [vmem:[%s1 + $0x418] sm:$0xff]
  %v167 = vld [vmem:[%s1 + $0x420] sm:$0xff]
  %v168 = vld [vmem:[%s1 + $0x428] sm:$0xff]
  %v169 = vld [vmem:[%s1 + $0x430] sm:$0xff]
  %v170 = vld [vmem:[%s1 + $0x438] sm:$0xff]
  %v171 = vld [vmem:[%s1 + $0x440] sm:$0xff]
  %v172 = vld [vmem:[%s1 + $0x448] sm:$0xff]
  %v173 = vld [vmem:[%s1 + $0x450] sm:$0xff]
  %v174 = vld [vmem:[%s1 + $0x458] sm:$0xff]
  %v175 = vld [vmem:[%s1 + $0x460] sm:$0xff]
  %v176 = vld [vmem:[%s1 + $0x468] sm:$0xff]
  %v177 = vld [vmem:[%s1 + $0x470] sm:$0xff]
  %v178 = vld [vmem:[%s1 + $0x478] sm:$0xff]
  %v179 = vld [vmem:[%s1 + $0x480] sm:$0xff]
  %v180 = vld [vmem:[%s1 + $0x488] sm:$0xff]
  %v181 = vld [vmem:[%s1 + $0x490] sm:$0xff]
  %v182 = vld [vmem:[%s1 + $0x498] sm:$0xff]
  %v183 = vld [vmem:[%s1 + $0x4a0] sm:$0xff]
  %v184 = vld [vmem:[%s1 + $0x4a8] sm:$0xff]
  %v185 = vld [vmem:[%s1 + $0x4b0] sm:$0xff]
  %v186 = vld [vmem:[%s1 + $0x4b8] sm:$0xff]
  %v187 = vld [vmem:[%s1 + $0x4c0] sm:$0xff]
  %v188 = vld [vmem:[%s1 + $0x4c8] sm:$0xff]
  %v189 = vld [vmem:[%s1 + $0x4d0] sm:$0xff]
  %v190 = vld [vmem:[%s1 + $0x4d8] sm:$0xff]
  %v191 = vld [vmem:[%s1 + $0x4e0] sm:$0xff]
  %v192 = vld [vmem:[%s1 + $0x4e8] sm:$0xff]
  %v193 = vld [vmem:[%s1 + $0x4f0] sm:$0xff]
  %v194 = vld [vmem:[%s1 + $0x4f8] sm:$0xff]
  %v195 = vld [vmem:[%s1 + $0x500] sm:$0xff]
  %v196 = vld [vmem:[%s1 + $0x508] sm:$0xff]
  %v197 = vld [vmem:[%s1 + $0x510] sm:$0xff]
  %v198 = vld [vmem:[%s1 + $0x518] sm:$0xff]
  %v199 = vld [vmem:[%s1 + $0x520] sm:$0xff]
  %v200 = vld [vmem:[%s1 + $0x528] sm:$0xff]
  %v201 = vld [vmem:[%s1 + $0x530] sm:$0xff]
  %v202 = vld [vmem:[%s1 + $0x538] sm:$0xff]
  %v203 = vld [vmem:[%s1 + $0x540] sm:$0xff]
  %v204 = vld [vmem:[%s1 + $0x548] sm:$0xff]
  %v205 = vld [vmem:[%s1 + $0x550] sm:$0xff]
  %v206 = vld [vmem:[%s1 + $0x558] sm:$0xff]
  %v207 = vld [vmem:[%s1 + $0x560] sm:$0xff]
  %v208 = vld [vmem:[%s1 + $0x568] sm:$0xff]
  %v209 = vld [vmem:[%s1 + $0x570] sm:$0xff]
  %v210 = vld [vmem:[%s1 + $0x578] sm:$0xff]
  %v211 = vld [vmem:[%s1 + $0x580] sm:$0xff]
  %v212 = vld [vmem:[%s1 + $0x588] sm:$0xff]
  %v213 = vld [vmem:[%s1 + $0x590] sm:$0xff]
  %v214 = vld [vmem:[%s1 + $0x598] sm:$0xff]
  %v215 = vld [vmem:[%s1 + $0x5a0] sm:$0xff]
  %v216 = vld [vmem:[%s1 + $0x5a8] sm:$0xff]
  %v217 = vld [vmem:[%s1 + $0x5b0] sm:$0xff]
  %v218 = vld [vmem:[%s1 + $0x5b8] sm:$0xff]
  %v219 = vld [vmem:[%s1 + $0x5c0] sm:$0xff]
  %v220 = vld [vmem:[%s1 + $0x5c8] sm:$0xff]
  %v221 = vld [vmem:[%s1 + $0x5d0] sm:$0xff]
  %v222 = vld [vmem:[%s1 + $0x5d8] sm:$0xff]
  %v223 = vld [vmem:[%s1 + $0x5e0] sm:$0xff]
  %v224 = vld [vmem:[%s1 + $0x5e8] sm:$0xff]
  %v225 = vld [vmem:[%s1 + $0x5f0] sm:$0xff]
  %v226 = vld [vmem:[%s1 + $0x5f8] sm:$0xff]
  %v227 = vld [vmem:[%s1 + $0x600] sm:$0xff]
  %v228 = vld [vmem:[%s1 + $0x608] sm:$0xff]
  %v229 = vld [vmem:[%s1 + $0x610] sm:$0xff]
  %v230 = vld [vmem:[%s1 + $0x618] sm:$0xff]
  %v231 = vld [vmem:[%s1 + $0x620] sm:$0xff]
  %v232 = vld [vmem:[%s1 + $0x628] sm:$0xff]
  %v233 = vld [vmem:[%s1 + $0x630] sm:$0xff]
  %v234 = vld [vmem:[%s1 + $0x638] sm:$0xff]
  %v235 = vld [vmem:[%s1 + $0x640] sm:$0xff]
  %v236 = vld [vmem:[%s1 + $0x648] sm:$0xff]
  %v237 = vld [vmem:[%s1 + $0x650] sm:$0xff]
  %v238 = vld [vmem:[%s1 + $0x658] sm:$0xff]
  %v239 = vld [vmem:[%s1 + $0x660] sm:$0xff]
  %v240 = vld [vmem:[%s1 + $0x668] sm:$0xff]
  %v241 = vld [vmem:[%s1 + $0x670] sm:$0xff]
  %v242 = vld [vmem:[%s1 + $0x678] sm:$0xff]
  %v243 = vld [vmem:[%s1 + $0x680] sm:$0xff]
  %v244 = vld [vmem:[%s1 + $0x688] sm:$0xff]
  %v245 = vld [vmem:[%s1 + $0x690] sm:$0xff]
  %v246 = vld [vmem:[%s1 + $0x698] sm:$0xff]
  %v247 = vld [vmem:[%s1 + $0x6a0] sm:$0xff]
  %v248 = vld [vmem:[%s1 + $0x6a8] sm:$0xff]
  %v249 = vld [vmem:[%s1 + $0x6b0] sm:$0xff]
  %v250 = vld [vmem:[%s1 + $0x6b8] sm:$0xff]
  %v251 = vld [vmem:[%s1 + $0x6c0] sm:$0xff]
  %v252 = vld [vmem:[%s1 + $0x6c8] sm:$0xff]
  %v253 = vld [vmem:[%s1 + $0x6d0] sm:$0xff]
  %v254 = vld [vmem:[%s1 + $0x6d8] sm:$0xff]
  %v255 = vld [vmem:[%s1 + $0x6e0] sm:$0xff]
  %v256 = vld [vmem:[%s1 + $0x6e8] sm:$0xff]
  %v257 = vld [vmem:[%s1 + $0x6f0] sm:$0xff]
  %v258 = vld [vmem:[%s1 + $0x6f8] sm:$0xff]
  %v259 = vld [vmem:[%s1 + $0x700] sm:$0xff]
  %v260 = vld [vmem:[%s1 + $0x708] sm:$0xff]
  %v261 = vld [vmem:[%s1 + $0x710] sm:$0xff]
  %v262 = vld [vmem:[%s1 + $0x718] sm:$0xff]
  %v263 = vld [vmem:[%s1 + $0x720] sm:$0xff]
  %v264 = vld [vmem:[%s1 + $0x728] sm:$0xff]
  %v265 = vld [vmem:[%s1 + $0x730] sm:$0xff]
  %v266 = vld [vmem:[%s1 + $0x738] sm:$0xff]
  %v267 = vld [vmem:[%s1 + $0x740] sm:$0xff]
  %v268 = vld [vmem:[%s1 + $0x748] sm:$0xff]
  %v269 = vld [vmem:[%s1 + $0x750] sm:$0xff]
  %v270 = vld [vmem:[%s1 + $0x758] sm:$0xff]
  %v271 = vld [vmem:[%s1 + $0x760] sm:$0xff]
  %v272 = vld [vmem:[%s1 + $0x768] sm:$0xff]
  %v273 = vld [vmem:[%s1 + $0x770] sm:$0xff]
  %v274 = vld [vmem:[%s1 + $0x778] sm:$0xff]
  %v275 = vld [vmem:[%s1 + $0x780] sm:$0xff]
  %v276 = vld [vmem:[%s1 + $0x788] sm:$0xff]
  %v277 = vld [vmem:[%s1 + $0x790] sm:$0xff]
  %v278 = vld [vmem:[%s1 + $0x798] sm:$0xff]
  %v279 = vld [vmem:[%s1 + $0x7a0] sm:$0xff]
  %v280 = vld [vmem:[%s1 + $0x7a8] sm:$0xff]
  %v281 = vld [vmem:[%s1 + $0x7b0] sm:$0xff]
  %v282 = vld [vmem:[%s1 + $0x7b8] sm:$0xff]
  %v283 = vld [vmem:[%s1 + $0x7c0] sm:$0xff]
  %v284 = vld [vmem:[%s1 + $0x7c8] sm:$0xff]
  %v285 = vld [vmem:[%s1 + $0x7d0] sm:$0xff]
  %v286 = vld [vmem:[%s1 + $0x7d8] sm:$0xff]
  %v287 = vld [vmem:[%s1 + $0x7e0] sm:$0xff]
  %v288 = vld [vmem:[%s1 + $0x7e8] sm:$0xff]
  %v289 = vld [vmem:[%s1 + $0x7f0] sm:$0xff]
  %v290 = vld [vmem:[%s1 + $0x7f8] sm:$0xff]
  %v291 = vld [vmem:[%s1 + $0x800] sm:$0xff]
  %v292 = vld [vmem:[%s1 + $0x808] sm:$0xff]
  %v293 = vld [vmem:[%s1 + $0x810] sm:$0xff]
  %v294 = vld [vmem:[%s1 + $0x818] sm:$0xff]
  %v295 = vld [vmem:[%s1 + $0x820] sm:$0xff]
  %v296 = vld [vmem:[%s1 + $0x828] sm:$0xff]
  %v297 = vld [vmem:[%s1 + $0x830] sm:$0xff]
  %v298 = vld [vmem:[%s1 + $0x838] sm:$0xff]
  %v299 = vld [vmem:[%s1 + $0x840] sm:$0xff]
  %v300 = vld [vmem:[%s1 + $0x848] sm:$0xff]
  %v301 = vld [vmem:[%s1 + $0x850] sm:$0xff]
  %v302 = vld [vmem:[%s1 + $0x858] sm:$0xff]
  %v303 = vld [vmem:[%s1 + $0x860] sm:$0xff]
  %v304 = vld [vmem:[%s1 + $0x868] sm:$0xff]
  %v305 = vld [vmem:[%s1 + $0x870] sm:$0xff]
  %v306 = vld [vmem:[%s1 + $0x878] sm:$0xff]
  %v307 = vld [vmem:[%s1 + $0x880] sm:$0xff]
  %v308 = vld [vmem:[%s1 + $0x888] sm:$0xff]
  %v309 = vld [vmem:[%s1 + $0x890] sm:$0xff]
  %v310 = vld [vmem:[%s1 + $0x898] sm:$0xff]
  %v311 = vld [vmem:[%s1 + $0x8a0] sm:$0xff]
  %v312 = vld [vmem:[%s1 + $0x8a8] sm:$0xff]
  %v313 = vld [vmem:[%s1 + $0x8b0] sm:$0xff]
  %v314 = vld [vmem:[%s1 + $0x8b8] sm:$0xff]
  %v315 = vld [vmem:[%s1 + $0x8c0] sm:$0xff]
  %v316 = vld [vmem:[%s1 + $0x8c8] sm:$0xff]
  %v317 = vld [vmem:[%s1 + $0x8d0] sm:$0xff]
  %v318 = vld [vmem:[%s1 + $0x8d8] sm:$0xff]
  %v319 = vld [vmem:[%s1 + $0x8e0] sm:$0xff]
  %v320 = vld [vmem:[%s1 + $0x8e8] sm:$0xff]
  %v321 = vld [vmem:[%s1 + $0x8f0] sm:$0xff]
  %v322 = vld [vmem:[%s1 + $0x8f8] sm:$0xff]
  %v323 = vld [vmem:[%s1 + $0x900] sm:$0xff]
  %v324 = vld [vmem:[%s1 + $0x908] sm:$0xff]
  %v325 = vld [vmem:[%s1 + $0x910] sm:$0xff]
  %v326 = vld [vmem:[%s1 + $0x918] sm:$0xff]
  %v327 = vld [vmem:[%s1 + $0x920] sm:$0xff]
  %v328 = vld [vmem:[%s1 + $0x928] sm:$0xff]
  %v329 = vld [vmem:[%s1 + $0x930] sm:$0xff]
  %v330 = vld [vmem:[%s1 + $0x938] sm:$0xff]
  %v331 = vld [vmem:[%s1 + $0x940] sm:$0xff]
  %v332 = vld [vmem:[%s1 + $0x948] sm:$0xff]
  %v333 = vld [vmem:[%s1 + $0x950] sm:$0xff]
  %v334 = vld [vmem:[%s1 + $0x958] sm:$0xff]
  %v335 = vld [vmem:[%s1 + $0x960] sm:$0xff]
  %v336 = vld [vmem:[%s1 + $0x968] sm:$0xff]
  %v337 = vld [vmem:[%s1 + $0x970] sm:$0xff]
  %v338 = vld [vmem:[%s1 + $0x978] sm:$0xff]
  %v339 = vld [vmem:[%s1 + $0x980] sm:$0xff]
  %v340 = vld [vmem:[%s1 + $0x988] sm:$0xff]
  %v341 = vld [vmem:[%s1 + $0x990] sm:$0xff]
  %v342 = vld [vmem:[%s1 + $0x998] sm:$0xff]
  %v343 = vld [vmem:[%s1 + $0x9a0] sm:$0xff]
  %v344 = vld [vmem:[%s1 + $0x9a8] sm:$0xff]
  %v345 = vld [vmem:[%s1 + $0x9b0] sm:$0xff]
  %v346 = vld [vmem:[%s1 + $0x9b8] sm:$0xff]
  %v347 = vld [vmem:[%s1 + $0x9c0] sm:$0xff]
  %v348 = vld [vmem:[%s1 + $0x9c8] sm:$0xff]
  %v349 = vld [vmem:[%s1 + $0x9d0] sm:$0xff]
  %v350 = vld [vmem:[%s1 + $0x9d8] sm:$0xff]
  %v351 = vld [vmem:[%s1 + $0x9e0] sm:$0xff]
  %v352 = vld [vmem:[%s1 + $0x9e8] sm:$0xff]
  %v353 = vld [vmem:[%s1 + $0x9f0] sm:$0xff]
  %v354 = vld [vmem:[%s1 + $0x9f8] sm:$0xff]
  %v355 = vld [vmem:[%s1 + $0xa00] sm:$0xff]
  %v356 = vld [vmem:[%s1 + $0xa08] sm:$0xff]
  %v357 = vld [vmem:[%s1 + $0xa10] sm:$0xff]
  %v358 = vld [vmem:[%s1 + $0xa18] sm:$0xff]
  %v359 = vld [vmem:[%s1 + $0xa20] sm:$0xff]
  %v360 = vld [vmem:[%s1 + $0xa28] sm:$0xff]
  %v361 = vld [vmem:[%s1 + $0xa30] sm:$0xff]
  %v362 = vld [vmem:[%s1 + $0xa38] sm:$0xff]
  %v363 = vld [vmem:[%s1 + $0xa40] sm:$0xff]
  %v364 = vld [vmem:[%s1 + $0xa48] sm:$0xff]
  %v365 = vld [vmem:[%s1 + $0xa50] sm:$0xff]
  %v366 = vld [vmem:[%s1 + $0xa58] sm:$0xff]
  %v367 = vld [vmem:[%s1 + $0xa60] sm:$0xff]
  %v368 = vld [vmem:[%s1 + $0xa68] sm:$0xff]
  %v369 = vld [vmem:[%s1 + $0xa70] sm:$0xff]
  %v370 = vld [vmem:[%s1 + $0xa78] sm:$0xff]
  %v371 = vld [vmem:[%s1 + $0xa80] sm:$0xff]
  %v372 = vld [vmem:[%s1 + $0xa88] sm:$0xff]
  %v373 = vld [vmem:[%s1 + $0xa90] sm:$0xff]
  %v374 = vld [vmem:[%s1 + $0xa98] sm:$0xff]
  %v375 = vld [vmem:[%s1 + $0xaa0] sm:$0xff]
  %v376 = vld [vmem:[%s1 + $0xaa8] sm:$0xff]
  %v377 = vld [vmem:[%s1 + $0xab0] sm:$0xff]
  %v378 = vld [vmem:[%s1 + $0xab8] sm:$0xff]
  %v379 = vld [vmem:[%s1 + $0xac0] sm:$0xff]
  %v380 = vld [vmem:[%s1 + $0xac8] sm:$0xff]
  %v381 = vld [vmem:[%s1 + $0xad0] sm:$0xff]
  %v382 = vld [vmem:[%s1 + $0xad8] sm:$0xff]
  %v383 = vld [vmem:[%s1 + $0xae0] sm:$0xff]
  %v384 = vld [vmem:[%s1 + $0xae8] sm:$0xff]
  %v385 = vld [vmem:[%s1 + $0xaf0] sm:$0xff]
  %v386 = vld [vmem:[%s1 + $0xaf8] sm:$0xff]
  %v387 = vld [vmem:[%s1 + $0xb00] sm:$0xff]
  %v388 = vld [vmem:[%s1 + $0xb08] sm:$0xff]
  %v389 = vld [vmem:[%s1 + $0xb10] sm:$0xff]
  %v390 = vld [vmem:[%s1 + $0xb18] sm:$0xff]
  %v391 = vld [vmem:[%s1 + $0xb20] sm:$0xff]
  %v392 = vld [vmem:[%s1 + $0xb28] sm:$0xff]
  %v393 = vld [vmem:[%s1 + $0xb30] sm:$0xff]
  %v394 = vld [vmem:[%s1 + $0xb38] sm:$0xff]
  %v395 = vld [vmem:[%s1 + $0xb40] sm:$0xff]
  %v396 = vld [vmem:[%s1 + $0xb48] sm:$0xff]
  %v397 = vld [vmem:[%s1 + $0xb50] sm:$0xff]
  %v398 = vld [vmem:[%s1 + $0xb58] sm:$0xff]
  %v399 = vld [vmem:[%s1 + $0xb60] sm:$0xff]
  %v400 = vld [vmem:[%s1 + $0xb68] sm:$0xff]
  %v401 = vld [vmem:[%s1 + $0xb70] sm:$0xff]
  %v402 = vld [vmem:[%s1 + $0xb78] sm:$0xff]
  %v403 = vld [vmem:[%s1 + $0xb80] sm:$0xff]
  %v404 = vld [vmem:[%s1 + $0xb88] sm:$0xff]
  %v405 = vld [vmem:[%s1 + $0xb90] sm:$0xff]
  %v406 = vld [vmem:[%s1 + $0xb98] sm:$0xff]
  %v407 = vld [vmem:[%s1 + $0xba0] sm:$0xff]
  %v408 = vld [vmem:[%s1 + $0xba8] sm:$0xff]
  %v409 = vld [vmem:[%s1 + $0xbb0] sm:$0xff]
  %v410 = vld [vmem:[%s1 + $0xbb8] sm:$0xff]
  %v411 = vld [vmem:[%s1 + $0xbc0] sm:$0xff]
  %v412 = vld [vmem:[%s1 + $0xbc8] sm:$0xff]
  %v413 = vld [vmem:[%s1 + $0xbd0] sm:$0xff]
  %v414 = vld [vmem:[%s1 + $0xbd8] sm:$0xff]
  %v415 = vld [vmem:[%s1 + $0xbe0] sm:$0xff]
  %v416 = vld [vmem:[%s1 + $0xbe8] sm:$0xff]
  %v417 = vld [vmem:[%s1 + $0xbf0] sm:$0xff]
  %v418 = vld [vmem:[%s1 + $0xbf8] sm:$0xff]
  %v419 = vld [vmem:[%s1 + $0xc00] sm:$0xff]
  %v420 = vld [vmem:[%s1 + $0xc08] sm:$0xff]
  %v421 = vld [vmem:[%s1 + $0xc10] sm:$0xff]
  %v422 = vld [vmem:[%s1 + $0xc18] sm:$0xff]
  %v423 = vld [vmem:[%s1 + $0xc20] sm:$0xff]
  %v424 = vld [vmem:[%s1 + $0xc28] sm:$0xff]
  %v425 = vld [vmem:[%s1 + $0xc30] sm:$0xff]
  %v426 = vld [vmem:[%s1 + $0xc38] sm:$0xff]
  %v427 = vld [vmem:[%s1 + $0xc40] sm:$0xff]
  %v428 = vld [vmem:[%s1 + $0xc48] sm:$0xff]
  %v429 = vld [vmem:[%s1 + $0xc50] sm:$0xff]
  %v430 = vld [vmem:[%s1 + $0xc58] sm:$0xff]
  %v431 = vld [vmem:[%s1 + $0xc60] sm:$0xff]
  %v432 = vld [vmem:[%s1 + $0xc68] sm:$0xff]
  %v433 = vld [vmem:[%s1 + $0xc70] sm:$0xff]
  %v434 = vld [vmem:[%s1 + $0xc78] sm:$0xff]
  %v435 = vld [vmem:[%s1 + $0xc80] sm:$0xff]
  %v436 = vld [vmem:[%s1 + $0xc88] sm:$0xff]
  %v437 = vld [vmem:[%s1 + $0xc90] sm:$0xff]
  %v438 = vld [vmem:[%s1 + $0xc98] sm:$0xff]
  %v439 = vld [vmem:[%s1 + $0xca0] sm:$0xff]
  %v440 = vld [vmem:[%s1 + $0xca8] sm:$0xff]
  %v441 = vld [vmem:[%s1 + $0xcb0] sm:$0xff]
  %v442 = vld [vmem:[%s1 + $0xcb8] sm:$0xff]
  %v443 = vld [vmem:[%s1 + $0xcc0] sm:$0xff]
  %v444 = vld [vmem:[%s1 + $0xcc8] sm:$0xff]
  %v445 = vld [vmem:[%s1 + $0xcd0] sm:$0xff]
  %v446 = vld [vmem:[%s1 + $0xcd8] sm:$0xff]
  %v447 = vld [vmem:[%s1 + $0xce0] sm:$0xff]
  %v448 = vld [vmem:[%s1 + $0xce8] sm:$0xff]
  %v449 = vld [vmem:[%s1 + $0xcf0] sm:$0xff]
  %v450 = vld [vmem:[%s1 + $0xcf8] sm:$0xff]
  %v451 = vld [vmem:[%s1 + $0xd00] sm:$0xff]
  %v452 = vld [vmem:[%s1 + $0xd08] sm:$0xff]
  %v453 = vld [vmem:[%s1 + $0xd10] sm:$0xff]
  %v454 = vld [vmem:[%s1 + $0xd18] sm:$0xff]
  %v455 = vld [vmem:[%s1 + $0xd20] sm:$0xff]
  %v456 = vld [vmem:[%s1 + $0xd28] sm:$0xff]
  %v457 = vld [vmem:[%s1 + $0xd30] sm:$0xff]
  %v458 = vld [vmem:[%s1 + $0xd38] sm:$0xff]
  %v459 = vld [vmem:[%s1 + $0xd40] sm:$0xff]
  %v460 = vld [vmem:[%s1 + $0xd48] sm:$0xff]
  %v461 = vld [vmem:[%s1 + $0xd50] sm:$0xff]
  %v462 = vld [vmem:[%s1 + $0xd58] sm:$0xff]
  %v463 = vld [vmem:[%s1 + $0xd60] sm:$0xff]
  %v464 = vld [vmem:[%s1 + $0xd68] sm:$0xff]
  %v465 = vld [vmem:[%s1 + $0xd70] sm:$0xff]
  %v466 = vld [vmem:[%s1 + $0xd78] sm:$0xff]
  %v467 = vld [vmem:[%s1 + $0xd80] sm:$0xff]
  %v468 = vld [vmem:[%s1 + $0xd88] sm:$0xff]
  %v469 = vld [vmem:[%s1 + $0xd90] sm:$0xff]
  %v470 = vld [vmem:[%s1 + $0xd98] sm:$0xff]
  %v471 = vld [vmem:[%s1 + $0xda0] sm:$0xff]
  %v472 = vld [vmem:[%s1 + $0xda8] sm:$0xff]
  %v473 = vld [vmem:[%s1 + $0xdb0] sm:$0xff]
  %v474 = vld [vmem:[%s1 + $0xdb8] sm:$0xff]
  %v475 = vld [vmem:[%s1 + $0xdc0] sm:$0xff]
  %v476 = vld [vmem:[%s1 + $0xdc8] sm:$0xff]
  %v477 = vld [vmem:[%s1 + $0xdd0] sm:$0xff]
  %v478 = vld [vmem:[%s1 + $0xdd8] sm:$0xff]
  %v479 = vld [vmem:[%s1 + $0xde0] sm:$0xff]
  %v480 = vld [vmem:[%s1 + $0xde8] sm:$0xff]
  %v481 = vld [vmem:[%s1 + $0xdf0] sm:$0xff]
  %v482 = vld [vmem:[%s1 + $0xdf8] sm:$0xff]
  %v483 = vld [vmem:[%s1 + $0xe00] sm:$0xff]
  %v484 = vld [vmem:[%s1 + $0xe08] sm:$0xff]
  %v485 = vld [vmem:[%s1 + $0xe10] sm:$0xff]
  %v486 = vld [vmem:[%s1 + $0xe18] sm:$0xff]
  %v487 = vld [vmem:[%s1 + $0xe20] sm:$0xff]
  %v488 = vld [vmem:[%s1 + $0xe28] sm:$0xff]
  %v489 = vld [vmem:[%s1 + $0xe30] sm:$0xff]
  %v490 = vld [vmem:[%s1 + $0xe38] sm:$0xff]
  %v491 = vld [vmem:[%s1 + $0xe40] sm:$0xff]
  %v492 = vld [vmem:[%s1 + $0xe48] sm:$0xff]
  %v493 = vld [vmem:[%s1 + $0xe50] sm:$0xff]
  %v494 = vld [vmem:[%s1 + $0xe58] sm:$0xff]
  %v495 = vld [vmem:[%s1 + $0xe60] sm:$0xff]
  %v496 = vld [vmem:[%s1 + $0xe68] sm:$0xff]
  %v497 = vld [vmem:[%s1 + $0xe70] sm:$0xff]
  %v498 = vld [vmem:[%s1 + $0xe78] sm:$0xff]
  %v499 = vld [vmem:[%s1 + $0xe80] sm:$0xff]
  %v500 = vld [vmem:[%s1 + $0xe88] sm:$0xff]
  %v501 = vld [vmem:[%s1 + $0xe90] sm:$0xff]
  %v502 = vld [vmem:[%s1 + $0xe98] sm:$0xff]
  %v503 = vld [vmem:[%s1 + $0xea0] sm:$0xff]
  %v504 = vld [vmem:[%s1 + $0xea8] sm:$0xff]
  %v505 = vld [vmem:[%s1 + $0xeb0] sm:$0xff]
  %v506 = vld [vmem:[%s1 + $0xeb8] sm:$0xff]
  %v507 = vld [vmem:[%s1 + $0xec0] sm:$0xff]
  %v508 = vld [vmem:[%s1 + $0xec8] sm:$0xff]
  %v509 = vld [vmem:[%s1 + $0xed0] sm:$0xff]
  %v510 = vld [vmem:[%s1 + $0xed8] sm:$0xff]
  %v511 = vld [vmem:[%s1 + $0xee0] sm:$0xff]
  %v512 = vld [vmem:[%s1 + $0xee8] sm:$0xff]
  %v513 = vld [vmem:[%s1 + $0xef0] sm:$0xff]
  %v514 = vld [vmem:[%s1 + $0xef8] sm:$0xff]
  %v515 = vld [vmem:[%s1 + $0xf00] sm:$0xff]
  %v516 = vld [vmem:[%s1 + $0xf08] sm:$0xff]
  %v517 = vld [vmem:[%s1 + $0xf10] sm:$0xff]
  %v518 = vld [vmem:[%s1 + $0xf18] sm:$0xff]
  %v519 = vld [vmem:[%s1 + $0xf20] sm:$0xff]
  %v520 = vld [vmem:[%s1 + $0xf28] sm:$0xff]
  %v521 = vld [vmem:[%s1 + $0xf30] sm:$0xff]
  %v522 = vld [vmem:[%s1 + $0xf38] sm:$0xff]
  %v523 = vld [vmem:[%s1 + $0xf40] sm:$0xff]
  %v524 = vld [vmem:[%s1 + $0xf48] sm:$0xff]
  %v525 = vld [vmem:[%s1 + $0xf50] sm:$0xff]
  %v526 = vld [vmem:[%s1 + $0xf58] sm:$0xff]
  %v527 = vld [vmem:[%s1 + $0xf60] sm:$0xff]
  %v528 = vld [vmem:[%s1 + $0xf68] sm:$0xff]
  %v529 = vld [vmem:[%s1 + $0xf70] sm:$0xff]
  %v530 = vld [vmem:[%s1 + $0xf78] sm:$0xff]
  %v531 = vld [vmem:[%s1 + $0xf80] sm:$0xff]
  %v532 = vld [vmem:[%s1 + $0xf88] sm:$0xff]
  %v533 = vld [vmem:[%s1 + $0xf90] sm:$0xff]
  %v534 = vld [vmem:[%s1 + $0xf98] sm:$0xff]
  %v535 = vld [vmem:[%s1 + $0xfa0] sm:$0xff]
  %v536 = vld [vmem:[%s1 + $0xfa8] sm:$0xff]
  %v537 = vld [vmem:[%s1 + $0xfb0] sm:$0xff]
  %v538 = vld [vmem:[%s1 + $0xfb8] sm:$0xff]
  %v539 = vld [vmem:[%s1 + $0xfc0] sm:$0xff]
  %v540 = vld [vmem:[%s1 + $0xfc8] sm:$0xff]
  %v541 = vld [vmem:[%s1 + $0xfd0] sm:$0xff]
  %v542 = vld [vmem:[%s1 + $0xfd8] sm:$0xff]
  %v543 = vld [vmem:[%s1 + $0xfe0] sm:$0xff]
  %v544 = vld [vmem:[%s1 + $0xfe8] sm:$0xff]
  %v545 = vld [vmem:[%s1 + $0xff0] sm:$0xff]
  %v546 = vld [vmem:[%s1 + $0xff8] sm:$0xff]
  %v547 = vld [vmem:[%s1 + $0x1000] sm:$0xff]
  %v548 = vld [vmem:[%s1 + $0x1008] sm:$0xff]
  %v549 = vld [vmem:[%s1 + $0x1010] sm:$0xff]
  %v550 = vld [vmem:[%s1 + $0x1018] sm:$0xff]
  %v551 = vld [vmem:[%s1 + $0x1020] sm:$0xff]
  %v552 = vld [vmem:[%s1 + $0x1028] sm:$0xff]
  %v553 = vld [vmem:[%s1 + $0x1030] sm:$0xff]
  %v554 = vld [vmem:[%s1 + $0x1038] sm:$0xff]
  %v555 = vld [vmem:[%s1 + $0x1040] sm:$0xff]
  %v556 = vld [vmem:[%s1 + $0x1048] sm:$0xff]
  %v557 = vld [vmem:[%s1 + $0x1050] sm:$0xff]
  %v558 = vld [vmem:[%s1 + $0x1058] sm:$0xff]
  %v559 = vld [vmem:[%s1 + $0x1060] sm:$0xff]
  %v560 = vld [vmem:[%s1 + $0x1068] sm:$0xff]
  %v561 = vld [vmem:[%s1 + $0x1070] sm:$0xff]
  %v562 = vld [vmem:[%s1 + $0x1078] sm:$0xff]
  %v563 = vld [vmem:[%s1 + $0x1080] sm:$0xff]
  %v564 = vld [vmem:[%s1 + $0x1088] sm:$0xff]
  %v565 = vld [vmem:[%s1 + $0x1090] sm:$0xff]
  %v566 = vld [vmem:[%s1 + $0x1098] sm:$0xff]
  %v567 = vld [vmem:[%s1 + $0x10a0] sm:$0xff]
  %v568 = vld [vmem:[%s1 + $0x10a8] sm:$0xff]
  %v569 = vld [vmem:[%s1 + $0x10b0] sm:$0xff]
  %v570 = vld [vmem:[%s1 + $0x10b8] sm:$0xff]
  %v571 = vld [vmem:[%s1 + $0x10c0] sm:$0xff]
  %v572 = vld [vmem:[%s1 + $0x10c8] sm:$0xff]
  %v573 = vld [vmem:[%s1 + $0x10d0] sm:$0xff]
  %v574 = vld [vmem:[%s1 + $0x10d8] sm:$0xff]
  %v575 = vld [vmem:[%s1 + $0x10e0] sm:$0xff]
  %v576 = vld [vmem:[%s1 + $0x10e8] sm:$0xff]
  %v577 = vld [vmem:[%s1 + $0x10f0] sm:$0xff]
  %v578 = vld [vmem:[%s1 + $0x10f8] sm:$0xff]
  %v579 = vld [vmem:[%s1 + $0x1100] sm:$0xff]
  %v580 = vld [vmem:[%s1 + $0x1108] sm:$0xff]
  %v581 = vld [vmem:[%s1 + $0x1110] sm:$0xff]
  %v582 = vld [vmem:[%s1 + $0x1118] sm:$0xff]
  %v583 = vld [vmem:[%s1 + $0x1120] sm:$0xff]
  %v584 = vld [vmem:[%s1 + $0x1128] sm:$0xff]
  %v585 = vld [vmem:[%s1 + $0x1130] sm:$0xff]
  %v586 = vld [vmem:[%s1 + $0x1138] sm:$0xff]
  %v587 = vld [vmem:[%s1 + $0x1140] sm:$0xff]
  %v588 = vld [vmem:[%s1 + $0x1148] sm:$0xff]
  %v589 = vld [vmem:[%s1 + $0x1150] sm:$0xff]
  %v590 = vld [vmem:[%s1 + $0x1158] sm:$0xff]
  %v591 = vld [vmem:[%s1 + $0x1160] sm:$0xff]
  %v592 = vld [vmem:[%s1 + $0x1168] sm:$0xff]
  %v593 = vld [vmem:[%s1 + $0x1170] sm:$0xff]
  %v594 = vld [vmem:[%s1 + $0x1178] sm:$0xff]
  %v595 = vld [vmem:[%s1 + $0x1180] sm:$0xff]
  %v596 = vld [vmem:[%s1 + $0x1188] sm:$0xff]
  %v597 = vld [vmem:[%s1 + $0x1190] sm:$0xff]
  %v598 = vld [vmem:[%s1 + $0x1198] sm:$0xff]
  %v599 = vld [vmem:[%s1 + $0x11a0] sm:$0xff]
  %v600 = vld [vmem:[%s1 + $0x11a8] sm:$0xff]
  %v601 = vld [vmem:[%s1 + $0x11b0] sm:$0xff]
  %v602 = vld [vmem:[%s1 + $0x11b8] sm:$0xff]
  %v603 = vld [vmem:[%s1 + $0x11c0] sm:$0xff]
  %v604 = vld [vmem:[%s1 + $0x11c8] sm:$0xff]
  %v605 = vld [vmem:[%s1 + $0x11d0] sm:$0xff]
  %v606 = vld [vmem:[%s1 + $0x11d8] sm:$0xff]
  %v607 = vld [vmem:[%s1 + $0x11e0] sm:$0xff]
  %v608 = vld [vmem:[%s1 + $0x11e8] sm:$0xff]
  %v609 = vld [vmem:[%s1 + $0x11f0] sm:$0xff]
  %v610 = vld [vmem:[%s1 + $0x11f8] sm:$0xff]
  %v629 = vunpack.c.l.b16 %v17
  %v630 = vunpack.c.h.b16 %v17
  %v631 = vunpack.c.l.b16 %v18
  %v632 = vunpack.c.h.b16 %v18
  %v633 = vunpack.c.l.b16 %v19
  %v634 = vunpack.c.h.b16 %v19
  %v635 = vunpack.c.l.b16 %v20
  %v636 = vunpack.c.h.b16 %v20
  %v637 = vunpack.c.l.b16 %v21
  %v638 = vunpack.c.h.b16 %v21
  %v639 = vunpack.c.l.b16 %v22
  %v640 = vunpack.c.h.b16 %v22
  %v641 = vunpack.c.l.b16 %v23
  %v642 = vunpack.c.h.b16 %v23
  %v643 = vunpack.c.l.b16 %v24
  %v644 = vunpack.c.h.b16 %v24
  %v645 = vunpack.c.l.b16 %v25
  %v646 = vunpack.c.h.b16 %v25
  %v647 = vunpack.c.l.b16 %v26
  %v648 = vunpack.c.h.b16 %v26
  %v649 = vunpack.c.l.b16 %v27
  %v650 = vunpack.c.h.b16 %v27
  %v651 = vunpack.c.l.b16 %v28
  %v652 = vunpack.c.h.b16 %v28
  %v653 = vunpack.c.l.b16 %v29
  %v654 = vunpack.c.h.b16 %v29
  %v655 = vunpack.c.l.b16 %v30
  %v656 = vunpack.c.h.b16 %v30
  %v657 = vunpack.c.l.b16 %v31
  %v658 = vunpack.c.h.b16 %v31
  %v659 = vunpack.c.l.b16 %v32
  %v660 = vunpack.c.h.b16 %v32
  %v661 = vunpack.c.l.b16 %v33
  %v662 = vunpack.c.h.b16 %v33
  %v663 = vunpack.c.l.b16 %v34
  %v664 = vunpack.c.h.b16 %v34
  %v665 = vpack.c.b16 %v647, %v629
  %v666 = vpack.c.b16 %v648, %v630
  %v667 = vpack.c.b16 %v649, %v631
  %v668 = vpack.c.b16 %v650, %v632
  %v669 = vpack.c.b16 %v651, %v633
  %v670 = vpack.c.b16 %v652, %v634
  %v671 = vpack.c.b16 %v653, %v635
  %v672 = vpack.c.b16 %v654, %v636
  %v673 = vpack.c.b16 %v655, %v637
  %v674 = vpack.c.b16 %v656, %v638
  %v675 = vpack.c.b16 %v657, %v639
  %v676 = vpack.c.b16 %v658, %v640
  %v677 = vpack.c.b16 %v659, %v641
  %v678 = vpack.c.b16 %v660, %v642
  %v679 = vpack.c.b16 %v661, %v643
  %v680 = vpack.c.b16 %v662, %v644
  %v681 = vpack.c.b16 %v663, %v645
  %v682 = vpack.c.b16 %v664, %v646
  %v1277 = vunpack.c.l.b16 %v35
  %v1278 = vunpack.c.h.b16 %v35
  %v1279 = vunpack.c.l.b16 %v36
  %v1280 = vunpack.c.h.b16 %v36
  %v1281 = vunpack.c.l.b16 %v37
  %v1282 = vunpack.c.h.b16 %v37
  %v1283 = vunpack.c.l.b16 %v38
  %v1284 = vunpack.c.h.b16 %v38
  %v1285 = vunpack.c.l.b16 %v39
  %v1286 = vunpack.c.h.b16 %v39
  %v1287 = vunpack.c.l.b16 %v40
  %v1288 = vunpack.c.h.b16 %v40
  %v1289 = vunpack.c.l.b16 %v41
  %v1290 = vunpack.c.h.b16 %v41
  %v1291 = vunpack.c.l.b16 %v42
  %v1292 = vunpack.c.h.b16 %v42
  %v1293 = vunpack.c.l.b16 %v43
  %v1294 = vunpack.c.h.b16 %v43
  %v1295 = vunpack.c.l.b16 %v44
  %v1296 = vunpack.c.h.b16 %v44
  %v1297 = vunpack.c.l.b16 %v45
  %v1298 = vunpack.c.h.b16 %v45
  %v1299 = vunpack.c.l.b16 %v46
  %v1300 = vunpack.c.h.b16 %v46
  %v1301 = vunpack.c.l.b16 %v47
  %v1302 = vunpack.c.h.b16 %v47
  %v1303 = vunpack.c.l.b16 %v48
  %v1304 = vunpack.c.h.b16 %v48
  %v1305 = vunpack.c.l.b16 %v49
  %v1306 = vunpack.c.h.b16 %v49
  %v1307 = vunpack.c.l.b16 %v50
  %v1308 = vunpack.c.h.b16 %v50
  %v1309 = vunpack.c.l.b16 %v51
  %v1310 = vunpack.c.h.b16 %v51
  %v1311 = vunpack.c.l.b16 %v52
  %v1312 = vunpack.c.h.b16 %v52
  %v1313 = vunpack.c.l.b16 %v53
  %v1314 = vunpack.c.h.b16 %v53
  %v1315 = vunpack.c.l.b16 %v54
  %v1316 = vunpack.c.h.b16 %v54
  %v1317 = vunpack.c.l.b16 %v55
  %v1318 = vunpack.c.h.b16 %v55
  %v1319 = vunpack.c.l.b16 %v56
  %v1320 = vunpack.c.h.b16 %v56
  %v1321 = vunpack.c.l.b16 %v57
  %v1322 = vunpack.c.h.b16 %v57
  %v1323 = vunpack.c.l.b16 %v58
  %v1324 = vunpack.c.h.b16 %v58
  %v1325 = vunpack.c.l.b16 %v59
  %v1326 = vunpack.c.h.b16 %v59
  %v1327 = vunpack.c.l.b16 %v60
  %v1328 = vunpack.c.h.b16 %v60
  %v1329 = vunpack.c.l.b16 %v61
  %v1330 = vunpack.c.h.b16 %v61
  %v1331 = vunpack.c.l.b16 %v62
  %v1332 = vunpack.c.h.b16 %v62
  %v1333 = vunpack.c.l.b16 %v63
  %v1334 = vunpack.c.h.b16 %v63
  %v1335 = vunpack.c.l.b16 %v64
  %v1336 = vunpack.c.h.b16 %v64
  %v1337 = vunpack.c.l.b16 %v65
  %v1338 = vunpack.c.h.b16 %v65
  %v1339 = vunpack.c.l.b16 %v66
  %v1340 = vunpack.c.h.b16 %v66
  %v1341 = vunpack.c.l.b16 %v67
  %v1342 = vunpack.c.h.b16 %v67
  %v1343 = vunpack.c.l.b16 %v68
  %v1344 = vunpack.c.h.b16 %v68
  %v1345 = vunpack.c.l.b16 %v69
  %v1346 = vunpack.c.h.b16 %v69
  %v1347 = vunpack.c.l.b16 %v70
  %v1348 = vunpack.c.h.b16 %v70
  %v1349 = vunpack.c.l.b16 %v71
  %v1350 = vunpack.c.h.b16 %v71
  %v1351 = vunpack.c.l.b16 %v72
  %v1352 = vunpack.c.h.b16 %v72
  %v1353 = vunpack.c.l.b16 %v73
  %v1354 = vunpack.c.h.b16 %v73
  %v1355 = vunpack.c.l.b16 %v74
  %v1356 = vunpack.c.h.b16 %v74
  %v1357 = vunpack.c.l.b16 %v75
  %v1358 = vunpack.c.h.b16 %v75
  %v1359 = vunpack.c.l.b16 %v76
  %v1360 = vunpack.c.h.b16 %v76
  %v1361 = vunpack.c.l.b16 %v77
  %v1362 = vunpack.c.h.b16 %v77
  %v1363 = vunpack.c.l.b16 %v78
  %v1364 = vunpack.c.h.b16 %v78
  %v1365 = vunpack.c.l.b16 %v79
  %v1366 = vunpack.c.h.b16 %v79
  %v1367 = vunpack.c.l.b16 %v80
  %v1368 = vunpack.c.h.b16 %v80
  %v1369 = vunpack.c.l.b16 %v81
  %v1370 = vunpack.c.h.b16 %v81
  %v1371 = vunpack.c.l.b16 %v82
  %v1372 = vunpack.c.h.b16 %v82
  %v1373 = vunpack.c.l.b16 %v83
  %v1374 = vunpack.c.h.b16 %v83
  %v1375 = vunpack.c.l.b16 %v84
  %v1376 = vunpack.c.h.b16 %v84
  %v1377 = vunpack.c.l.b16 %v85
  %v1378 = vunpack.c.h.b16 %v85
  %v1379 = vunpack.c.l.b16 %v86
  %v1380 = vunpack.c.h.b16 %v86
  %v1381 = vunpack.c.l.b16 %v87
  %v1382 = vunpack.c.h.b16 %v87
  %v1383 = vunpack.c.l.b16 %v88
  %v1384 = vunpack.c.h.b16 %v88
  %v1385 = vunpack.c.l.b16 %v89
  %v1386 = vunpack.c.h.b16 %v89
  %v1387 = vunpack.c.l.b16 %v90
  %v1388 = vunpack.c.h.b16 %v90
  %v1389 = vunpack.c.l.b16 %v91
  %v1390 = vunpack.c.h.b16 %v91
  %v1391 = vunpack.c.l.b16 %v92
  %v1392 = vunpack.c.h.b16 %v92
  %v1393 = vunpack.c.l.b16 %v93
  %v1394 = vunpack.c.h.b16 %v93
  %v1395 = vunpack.c.l.b16 %v94
  %v1396 = vunpack.c.h.b16 %v94
  %v1397 = vunpack.c.l.b16 %v95
  %v1398 = vunpack.c.h.b16 %v95
  %v1399 = vunpack.c.l.b16 %v96
  %v1400 = vunpack.c.h.b16 %v96
  %v1401 = vunpack.c.l.b16 %v97
  %v1402 = vunpack.c.h.b16 %v97
  %v1403 = vunpack.c.l.b16 %v98
  %v1404 = vunpack.c.h.b16 %v98
  %v1405 = vunpack.c.l.b16 %v99
  %v1406 = vunpack.c.h.b16 %v99
  %v1407 = vunpack.c.l.b16 %v100
  %v1408 = vunpack.c.h.b16 %v100
  %v1409 = vunpack.c.l.b16 %v101
  %v1410 = vunpack.c.h.b16 %v101
  %v1411 = vunpack.c.l.b16 %v102
  %v1412 = vunpack.c.h.b16 %v102
  %v1413 = vunpack.c.l.b16 %v103
  %v1414 = vunpack.c.h.b16 %v103
  %v1415 = vunpack.c.l.b16 %v104
  %v1416 = vunpack.c.h.b16 %v104
  %v1417 = vunpack.c.l.b16 %v105
  %v1418 = vunpack.c.h.b16 %v105
  %v1419 = vunpack.c.l.b16 %v106
  %v1420 = vunpack.c.h.b16 %v106
  %v1421 = vunpack.c.l.b16 %v107
  %v1422 = vunpack.c.h.b16 %v107
  %v1423 = vunpack.c.l.b16 %v108
  %v1424 = vunpack.c.h.b16 %v108
  %v1425 = vunpack.c.l.b16 %v109
  %v1426 = vunpack.c.h.b16 %v109
  %v1427 = vunpack.c.l.b16 %v110
  %v1428 = vunpack.c.h.b16 %v110
  %v1429 = vunpack.c.l.b16 %v111
  %v1430 = vunpack.c.h.b16 %v111
  %v1431 = vunpack.c.l.b16 %v112
  %v1432 = vunpack.c.h.b16 %v112
  %v1433 = vunpack.c.l.b16 %v113
  %v1434 = vunpack.c.h.b16 %v113
  %v1435 = vunpack.c.l.b16 %v114
  %v1436 = vunpack.c.h.b16 %v114
  %v1437 = vunpack.c.l.b16 %v115
  %v1438 = vunpack.c.h.b16 %v115
  %v1439 = vunpack.c.l.b16 %v116
  %v1440 = vunpack.c.h.b16 %v116
  %v1441 = vunpack.c.l.b16 %v117
  %v1442 = vunpack.c.h.b16 %v117
  %v1443 = vunpack.c.l.b16 %v118
  %v1444 = vunpack.c.h.b16 %v118
  %v1445 = vunpack.c.l.b16 %v119
  %v1446 = vunpack.c.h.b16 %v119
  %v1447 = vunpack.c.l.b16 %v120
  %v1448 = vunpack.c.h.b16 %v120
  %v1449 = vunpack.c.l.b16 %v121
  %v1450 = vunpack.c.h.b16 %v121
  %v1451 = vunpack.c.l.b16 %v122
  %v1452 = vunpack.c.h.b16 %v122
  %v1453 = vunpack.c.l.b16 %v123
  %v1454 = vunpack.c.h.b16 %v123
  %v1455 = vunpack.c.l.b16 %v124
  %v1456 = vunpack.c.h.b16 %v124
  %v1457 = vunpack.c.l.b16 %v125
  %v1458 = vunpack.c.h.b16 %v125
  %v1459 = vunpack.c.l.b16 %v126
  %v1460 = vunpack.c.h.b16 %v126
  %v1461 = vunpack.c.l.b16 %v127
  %v1462 = vunpack.c.h.b16 %v127
  %v1463 = vunpack.c.l.b16 %v128
  %v1464 = vunpack.c.h.b16 %v128
  %v1465 = vunpack.c.l.b16 %v129
  %v1466 = vunpack.c.h.b16 %v129
  %v1467 = vunpack.c.l.b16 %v130
  %v1468 = vunpack.c.h.b16 %v130
  %v1469 = vunpack.c.l.b16 %v131
  %v1470 = vunpack.c.h.b16 %v131
  %v1471 = vunpack.c.l.b16 %v132
  %v1472 = vunpack.c.h.b16 %v132
  %v1473 = vunpack.c.l.b16 %v133
  %v1474 = vunpack.c.h.b16 %v133
  %v1475 = vunpack.c.l.b16 %v134
  %v1476 = vunpack.c.h.b16 %v134
  %v1477 = vunpack.c.l.b16 %v135
  %v1478 = vunpack.c.h.b16 %v135
  %v1479 = vunpack.c.l.b16 %v136
  %v1480 = vunpack.c.h.b16 %v136
  %v1481 = vunpack.c.l.b16 %v137
  %v1482 = vunpack.c.h.b16 %v137
  %v1483 = vunpack.c.l.b16 %v138
  %v1484 = vunpack.c.h.b16 %v138
  %v1485 = vunpack.c.l.b16 %v139
  %v1486 = vunpack.c.h.b16 %v139
  %v1487 = vunpack.c.l.b16 %v140
  %v1488 = vunpack.c.h.b16 %v140
  %v1489 = vunpack.c.l.b16 %v141
  %v1490 = vunpack.c.h.b16 %v141
  %v1491 = vunpack.c.l.b16 %v142
  %v1492 = vunpack.c.h.b16 %v142
  %v1493 = vunpack.c.l.b16 %v143
  %v1494 = vunpack.c.h.b16 %v143
  %v1495 = vunpack.c.l.b16 %v144
  %v1496 = vunpack.c.h.b16 %v144
  %v1497 = vunpack.c.l.b16 %v145
  %v1498 = vunpack.c.h.b16 %v145
  %v1499 = vunpack.c.l.b16 %v146
  %v1500 = vunpack.c.h.b16 %v146
  %v1501 = vunpack.c.l.b16 %v147
  %v1502 = vunpack.c.h.b16 %v147
  %v1503 = vunpack.c.l.b16 %v148
  %v1504 = vunpack.c.h.b16 %v148
  %v1505 = vunpack.c.l.b16 %v149
  %v1506 = vunpack.c.h.b16 %v149
  %v1507 = vunpack.c.l.b16 %v150
  %v1508 = vunpack.c.h.b16 %v150
  %v1509 = vunpack.c.l.b16 %v151
  %v1510 = vunpack.c.h.b16 %v151
  %v1511 = vunpack.c.l.b16 %v152
  %v1512 = vunpack.c.h.b16 %v152
  %v1513 = vunpack.c.l.b16 %v153
  %v1514 = vunpack.c.h.b16 %v153
  %v1515 = vunpack.c.l.b16 %v154
  %v1516 = vunpack.c.h.b16 %v154
  %v1517 = vunpack.c.l.b16 %v155
  %v1518 = vunpack.c.h.b16 %v155
  %v1519 = vunpack.c.l.b16 %v156
  %v1520 = vunpack.c.h.b16 %v156
  %v1521 = vunpack.c.l.b16 %v157
  %v1522 = vunpack.c.h.b16 %v157
  %v1523 = vunpack.c.l.b16 %v158
  %v1524 = vunpack.c.h.b16 %v158
  %v1525 = vunpack.c.l.b16 %v159
  %v1526 = vunpack.c.h.b16 %v159
  %v1527 = vunpack.c.l.b16 %v160
  %v1528 = vunpack.c.h.b16 %v160
  %v1529 = vunpack.c.l.b16 %v161
  %v1530 = vunpack.c.h.b16 %v161
  %v1531 = vunpack.c.l.b16 %v162
  %v1532 = vunpack.c.h.b16 %v162
  %v1533 = vunpack.c.l.b16 %v163
  %v1534 = vunpack.c.h.b16 %v163
  %v1535 = vunpack.c.l.b16 %v164
  %v1536 = vunpack.c.h.b16 %v164
  %v1537 = vunpack.c.l.b16 %v165
  %v1538 = vunpack.c.h.b16 %v165
  %v1539 = vunpack.c.l.b16 %v166
  %v1540 = vunpack.c.h.b16 %v166
  %v1541 = vunpack.c.l.b16 %v167
  %v1542 = vunpack.c.h.b16 %v167
  %v1543 = vunpack.c.l.b16 %v168
  %v1544 = vunpack.c.h.b16 %v168
  %v1545 = vunpack.c.l.b16 %v169
  %v1546 = vunpack.c.h.b16 %v169
  %v1547 = vunpack.c.l.b16 %v170
  %v1548 = vunpack.c.h.b16 %v170
  %v1549 = vunpack.c.l.b16 %v171
  %v1550 = vunpack.c.h.b16 %v171
  %v1551 = vunpack.c.l.b16 %v172
  %v1552 = vunpack.c.h.b16 %v172
  %v1553 = vunpack.c.l.b16 %v173
  %v1554 = vunpack.c.h.b16 %v173
  %v1555 = vunpack.c.l.b16 %v174
  %v1556 = vunpack.c.h.b16 %v174
  %v1557 = vunpack.c.l.b16 %v175
  %v1558 = vunpack.c.h.b16 %v175
  %v1559 = vunpack.c.l.b16 %v176
  %v1560 = vunpack.c.h.b16 %v176
  %v1561 = vunpack.c.l.b16 %v177
  %v1562 = vunpack.c.h.b16 %v177
  %v1563 = vunpack.c.l.b16 %v178
  %v1564 = vunpack.c.h.b16 %v178
  %v1565 = vunpack.c.l.b16 %v179
  %v1566 = vunpack.c.h.b16 %v179
  %v1567 = vunpack.c.l.b16 %v180
  %v1568 = vunpack.c.h.b16 %v180
  %v1569 = vunpack.c.l.b16 %v181
  %v1570 = vunpack.c.h.b16 %v181
  %v1571 = vunpack.c.l.b16 %v182
  %v1572 = vunpack.c.h.b16 %v182
  %v1573 = vunpack.c.l.b16 %v183
  %v1574 = vunpack.c.h.b16 %v183
  %v1575 = vunpack.c.l.b16 %v184
  %v1576 = vunpack.c.h.b16 %v184
  %v1577 = vunpack.c.l.b16 %v185
  %v1578 = vunpack.c.h.b16 %v185
  %v1579 = vunpack.c.l.b16 %v186
  %v1580 = vunpack.c.h.b16 %v186
  %v1581 = vunpack.c.l.b16 %v187
  %v1582 = vunpack.c.h.b16 %v187
  %v1583 = vunpack.c.l.b16 %v188
  %v1584 = vunpack.c.h.b16 %v188
  %v1585 = vunpack.c.l.b16 %v189
  %v1586 = vunpack.c.h.b16 %v189
  %v1587 = vunpack.c.l.b16 %v190
  %v1588 = vunpack.c.h.b16 %v190
  %v1589 = vunpack.c.l.b16 %v191
  %v1590 = vunpack.c.h.b16 %v191
  %v1591 = vunpack.c.l.b16 %v192
  %v1592 = vunpack.c.h.b16 %v192
  %v1593 = vunpack.c.l.b16 %v193
  %v1594 = vunpack.c.h.b16 %v193
  %v1595 = vunpack.c.l.b16 %v194
  %v1596 = vunpack.c.h.b16 %v194
  %v1597 = vunpack.c.l.b16 %v195
  %v1598 = vunpack.c.h.b16 %v195
  %v1599 = vunpack.c.l.b16 %v196
  %v1600 = vunpack.c.h.b16 %v196
  %v1601 = vunpack.c.l.b16 %v197
  %v1602 = vunpack.c.h.b16 %v197
  %v1603 = vunpack.c.l.b16 %v198
  %v1604 = vunpack.c.h.b16 %v198
  %v1605 = vunpack.c.l.b16 %v199
  %v1606 = vunpack.c.h.b16 %v199
  %v1607 = vunpack.c.l.b16 %v200
  %v1608 = vunpack.c.h.b16 %v200
  %v1609 = vunpack.c.l.b16 %v201
  %v1610 = vunpack.c.h.b16 %v201
  %v1611 = vunpack.c.l.b16 %v202
  %v1612 = vunpack.c.h.b16 %v202
  %v1613 = vunpack.c.l.b16 %v203
  %v1614 = vunpack.c.h.b16 %v203
  %v1615 = vunpack.c.l.b16 %v204
  %v1616 = vunpack.c.h.b16 %v204
  %v1617 = vunpack.c.l.b16 %v205
  %v1618 = vunpack.c.h.b16 %v205
  %v1619 = vunpack.c.l.b16 %v206
  %v1620 = vunpack.c.h.b16 %v206
  %v1621 = vunpack.c.l.b16 %v207
  %v1622 = vunpack.c.h.b16 %v207
  %v1623 = vunpack.c.l.b16 %v208
  %v1624 = vunpack.c.h.b16 %v208
  %v1625 = vunpack.c.l.b16 %v209
  %v1626 = vunpack.c.h.b16 %v209
  %v1627 = vunpack.c.l.b16 %v210
  %v1628 = vunpack.c.h.b16 %v210
  %v1629 = vunpack.c.l.b16 %v211
  %v1630 = vunpack.c.h.b16 %v211
  %v1631 = vunpack.c.l.b16 %v212
  %v1632 = vunpack.c.h.b16 %v212
  %v1633 = vunpack.c.l.b16 %v213
  %v1634 = vunpack.c.h.b16 %v213
  %v1635 = vunpack.c.l.b16 %v214
  %v1636 = vunpack.c.h.b16 %v214
  %v1637 = vunpack.c.l.b16 %v215
  %v1638 = vunpack.c.h.b16 %v215
  %v1639 = vunpack.c.l.b16 %v216
  %v1640 = vunpack.c.h.b16 %v216
  %v1641 = vunpack.c.l.b16 %v217
  %v1642 = vunpack.c.h.b16 %v217
  %v1643 = vunpack.c.l.b16 %v218
  %v1644 = vunpack.c.h.b16 %v218
  %v1645 = vunpack.c.l.b16 %v219
  %v1646 = vunpack.c.h.b16 %v219
  %v1647 = vunpack.c.l.b16 %v220
  %v1648 = vunpack.c.h.b16 %v220
  %v1649 = vunpack.c.l.b16 %v221
  %v1650 = vunpack.c.h.b16 %v221
  %v1651 = vunpack.c.l.b16 %v222
  %v1652 = vunpack.c.h.b16 %v222
  %v1653 = vunpack.c.l.b16 %v223
  %v1654 = vunpack.c.h.b16 %v223
  %v1655 = vunpack.c.l.b16 %v224
  %v1656 = vunpack.c.h.b16 %v224
  %v1657 = vunpack.c.l.b16 %v225
  %v1658 = vunpack.c.h.b16 %v225
  %v1659 = vunpack.c.l.b16 %v226
  %v1660 = vunpack.c.h.b16 %v226
  %v1661 = vunpack.c.l.b16 %v227
  %v1662 = vunpack.c.h.b16 %v227
  %v1663 = vunpack.c.l.b16 %v228
  %v1664 = vunpack.c.h.b16 %v228
  %v1665 = vunpack.c.l.b16 %v229
  %v1666 = vunpack.c.h.b16 %v229
  %v1667 = vunpack.c.l.b16 %v230
  %v1668 = vunpack.c.h.b16 %v230
  %v1669 = vunpack.c.l.b16 %v231
  %v1670 = vunpack.c.h.b16 %v231
  %v1671 = vunpack.c.l.b16 %v232
  %v1672 = vunpack.c.h.b16 %v232
  %v1673 = vunpack.c.l.b16 %v233
  %v1674 = vunpack.c.h.b16 %v233
  %v1675 = vunpack.c.l.b16 %v234
  %v1676 = vunpack.c.h.b16 %v234
  %v1677 = vunpack.c.l.b16 %v235
  %v1678 = vunpack.c.h.b16 %v235
  %v1679 = vunpack.c.l.b16 %v236
  %v1680 = vunpack.c.h.b16 %v236
  %v1681 = vunpack.c.l.b16 %v237
  %v1682 = vunpack.c.h.b16 %v237
  %v1683 = vunpack.c.l.b16 %v238
  %v1684 = vunpack.c.h.b16 %v238
  %v1685 = vunpack.c.l.b16 %v239
  %v1686 = vunpack.c.h.b16 %v239
  %v1687 = vunpack.c.l.b16 %v240
  %v1688 = vunpack.c.h.b16 %v240
  %v1689 = vunpack.c.l.b16 %v241
  %v1690 = vunpack.c.h.b16 %v241
  %v1691 = vunpack.c.l.b16 %v242
  %v1692 = vunpack.c.h.b16 %v242
  %v1693 = vunpack.c.l.b16 %v243
  %v1694 = vunpack.c.h.b16 %v243
  %v1695 = vunpack.c.l.b16 %v244
  %v1696 = vunpack.c.h.b16 %v244
  %v1697 = vunpack.c.l.b16 %v245
  %v1698 = vunpack.c.h.b16 %v245
  %v1699 = vunpack.c.l.b16 %v246
  %v1700 = vunpack.c.h.b16 %v246
  %v1701 = vunpack.c.l.b16 %v247
  %v1702 = vunpack.c.h.b16 %v247
  %v1703 = vunpack.c.l.b16 %v248
  %v1704 = vunpack.c.h.b16 %v248
  %v1705 = vunpack.c.l.b16 %v249
  %v1706 = vunpack.c.h.b16 %v249
  %v1707 = vunpack.c.l.b16 %v250
  %v1708 = vunpack.c.h.b16 %v250
  %v1709 = vunpack.c.l.b16 %v251
  %v1710 = vunpack.c.h.b16 %v251
  %v1711 = vunpack.c.l.b16 %v252
  %v1712 = vunpack.c.h.b16 %v252
  %v1713 = vunpack.c.l.b16 %v253
  %v1714 = vunpack.c.h.b16 %v253
  %v1715 = vunpack.c.l.b16 %v254
  %v1716 = vunpack.c.h.b16 %v254
  %v1717 = vunpack.c.l.b16 %v255
  %v1718 = vunpack.c.h.b16 %v255
  %v1719 = vunpack.c.l.b16 %v256
  %v1720 = vunpack.c.h.b16 %v256
  %v1721 = vunpack.c.l.b16 %v257
  %v1722 = vunpack.c.h.b16 %v257
  %v1723 = vunpack.c.l.b16 %v258
  %v1724 = vunpack.c.h.b16 %v258
  %v1725 = vunpack.c.l.b16 %v259
  %v1726 = vunpack.c.h.b16 %v259
  %v1727 = vunpack.c.l.b16 %v260
  %v1728 = vunpack.c.h.b16 %v260
  %v1729 = vunpack.c.l.b16 %v261
  %v1730 = vunpack.c.h.b16 %v261
  %v1731 = vunpack.c.l.b16 %v262
  %v1732 = vunpack.c.h.b16 %v262
  %v1733 = vunpack.c.l.b16 %v263
  %v1734 = vunpack.c.h.b16 %v263
  %v1735 = vunpack.c.l.b16 %v264
  %v1736 = vunpack.c.h.b16 %v264
  %v1737 = vunpack.c.l.b16 %v265
  %v1738 = vunpack.c.h.b16 %v265
  %v1739 = vunpack.c.l.b16 %v266
  %v1740 = vunpack.c.h.b16 %v266
  %v1741 = vunpack.c.l.b16 %v267
  %v1742 = vunpack.c.h.b16 %v267
  %v1743 = vunpack.c.l.b16 %v268
  %v1744 = vunpack.c.h.b16 %v268
  %v1745 = vunpack.c.l.b16 %v269
  %v1746 = vunpack.c.h.b16 %v269
  %v1747 = vunpack.c.l.b16 %v270
  %v1748 = vunpack.c.h.b16 %v270
  %v1749 = vunpack.c.l.b16 %v271
  %v1750 = vunpack.c.h.b16 %v271
  %v1751 = vunpack.c.l.b16 %v272
  %v1752 = vunpack.c.h.b16 %v272
  %v1753 = vunpack.c.l.b16 %v273
  %v1754 = vunpack.c.h.b16 %v273
  %v1755 = vunpack.c.l.b16 %v274
  %v1756 = vunpack.c.h.b16 %v274
  %v1757 = vunpack.c.l.b16 %v275
  %v1758 = vunpack.c.h.b16 %v275
  %v1759 = vunpack.c.l.b16 %v276
  %v1760 = vunpack.c.h.b16 %v276
  %v1761 = vunpack.c.l.b16 %v277
  %v1762 = vunpack.c.h.b16 %v277
  %v1763 = vunpack.c.l.b16 %v278
  %v1764 = vunpack.c.h.b16 %v278
  %v1765 = vunpack.c.l.b16 %v279
  %v1766 = vunpack.c.h.b16 %v279
  %v1767 = vunpack.c.l.b16 %v280
  %v1768 = vunpack.c.h.b16 %v280
  %v1769 = vunpack.c.l.b16 %v281
  %v1770 = vunpack.c.h.b16 %v281
  %v1771 = vunpack.c.l.b16 %v282
  %v1772 = vunpack.c.h.b16 %v282
  %v1773 = vunpack.c.l.b16 %v283
  %v1774 = vunpack.c.h.b16 %v283
  %v1775 = vunpack.c.l.b16 %v284
  %v1776 = vunpack.c.h.b16 %v284
  %v1777 = vunpack.c.l.b16 %v285
  %v1778 = vunpack.c.h.b16 %v285
  %v1779 = vunpack.c.l.b16 %v286
  %v1780 = vunpack.c.h.b16 %v286
  %v1781 = vunpack.c.l.b16 %v287
  %v1782 = vunpack.c.h.b16 %v287
  %v1783 = vunpack.c.l.b16 %v288
  %v1784 = vunpack.c.h.b16 %v288
  %v1785 = vunpack.c.l.b16 %v289
  %v1786 = vunpack.c.h.b16 %v289
  %v1787 = vunpack.c.l.b16 %v290
  %v1788 = vunpack.c.h.b16 %v290
  %v1789 = vunpack.c.l.b16 %v291
  %v1790 = vunpack.c.h.b16 %v291
  %v1791 = vunpack.c.l.b16 %v292
  %v1792 = vunpack.c.h.b16 %v292
  %v1793 = vunpack.c.l.b16 %v293
  %v1794 = vunpack.c.h.b16 %v293
  %v1795 = vunpack.c.l.b16 %v294
  %v1796 = vunpack.c.h.b16 %v294
  %v1797 = vunpack.c.l.b16 %v295
  %v1798 = vunpack.c.h.b16 %v295
  %v1799 = vunpack.c.l.b16 %v296
  %v1800 = vunpack.c.h.b16 %v296
  %v1801 = vunpack.c.l.b16 %v297
  %v1802 = vunpack.c.h.b16 %v297
  %v1803 = vunpack.c.l.b16 %v298
  %v1804 = vunpack.c.h.b16 %v298
  %v1805 = vunpack.c.l.b16 %v299
  %v1806 = vunpack.c.h.b16 %v299
  %v1807 = vunpack.c.l.b16 %v300
  %v1808 = vunpack.c.h.b16 %v300
  %v1809 = vunpack.c.l.b16 %v301
  %v1810 = vunpack.c.h.b16 %v301
  %v1811 = vunpack.c.l.b16 %v302
  %v1812 = vunpack.c.h.b16 %v302
  %v1813 = vunpack.c.l.b16 %v303
  %v1814 = vunpack.c.h.b16 %v303
  %v1815 = vunpack.c.l.b16 %v304
  %v1816 = vunpack.c.h.b16 %v304
  %v1817 = vunpack.c.l.b16 %v305
  %v1818 = vunpack.c.h.b16 %v305
  %v1819 = vunpack.c.l.b16 %v306
  %v1820 = vunpack.c.h.b16 %v306
  %v1821 = vunpack.c.l.b16 %v307
  %v1822 = vunpack.c.h.b16 %v307
  %v1823 = vunpack.c.l.b16 %v308
  %v1824 = vunpack.c.h.b16 %v308
  %v1825 = vunpack.c.l.b16 %v309
  %v1826 = vunpack.c.h.b16 %v309
  %v1827 = vunpack.c.l.b16 %v310
  %v1828 = vunpack.c.h.b16 %v310
  %v1829 = vunpack.c.l.b16 %v311
  %v1830 = vunpack.c.h.b16 %v311
  %v1831 = vunpack.c.l.b16 %v312
  %v1832 = vunpack.c.h.b16 %v312
  %v1833 = vunpack.c.l.b16 %v313
  %v1834 = vunpack.c.h.b16 %v313
  %v1835 = vunpack.c.l.b16 %v314
  %v1836 = vunpack.c.h.b16 %v314
  %v1837 = vunpack.c.l.b16 %v315
  %v1838 = vunpack.c.h.b16 %v315
  %v1839 = vunpack.c.l.b16 %v316
  %v1840 = vunpack.c.h.b16 %v316
  %v1841 = vunpack.c.l.b16 %v317
  %v1842 = vunpack.c.h.b16 %v317
  %v1843 = vunpack.c.l.b16 %v318
  %v1844 = vunpack.c.h.b16 %v318
  %v1845 = vunpack.c.l.b16 %v319
  %v1846 = vunpack.c.h.b16 %v319
  %v1847 = vunpack.c.l.b16 %v320
  %v1848 = vunpack.c.h.b16 %v320
  %v1849 = vunpack.c.l.b16 %v321
  %v1850 = vunpack.c.h.b16 %v321
  %v1851 = vunpack.c.l.b16 %v322
  %v1852 = vunpack.c.h.b16 %v322
  %v1853 = vunpack.c.l.b16 %v323
  %v1854 = vunpack.c.h.b16 %v323
  %v1855 = vunpack.c.l.b16 %v324
  %v1856 = vunpack.c.h.b16 %v324
  %v1857 = vunpack.c.l.b16 %v325
  %v1858 = vunpack.c.h.b16 %v325
  %v1859 = vunpack.c.l.b16 %v326
  %v1860 = vunpack.c.h.b16 %v326
  %v1861 = vunpack.c.l.b16 %v327
  %v1862 = vunpack.c.h.b16 %v327
  %v1863 = vunpack.c.l.b16 %v328
  %v1864 = vunpack.c.h.b16 %v328
  %v1865 = vunpack.c.l.b16 %v329
  %v1866 = vunpack.c.h.b16 %v329
  %v1867 = vunpack.c.l.b16 %v330
  %v1868 = vunpack.c.h.b16 %v330
  %v1869 = vunpack.c.l.b16 %v331
  %v1870 = vunpack.c.h.b16 %v331
  %v1871 = vunpack.c.l.b16 %v332
  %v1872 = vunpack.c.h.b16 %v332
  %v1873 = vunpack.c.l.b16 %v333
  %v1874 = vunpack.c.h.b16 %v333
  %v1875 = vunpack.c.l.b16 %v334
  %v1876 = vunpack.c.h.b16 %v334
  %v1877 = vunpack.c.l.b16 %v335
  %v1878 = vunpack.c.h.b16 %v335
  %v1879 = vunpack.c.l.b16 %v336
  %v1880 = vunpack.c.h.b16 %v336
  %v1881 = vunpack.c.l.b16 %v337
  %v1882 = vunpack.c.h.b16 %v337
  %v1883 = vunpack.c.l.b16 %v338
  %v1884 = vunpack.c.h.b16 %v338
  %v1885 = vunpack.c.l.b16 %v339
  %v1886 = vunpack.c.h.b16 %v339
  %v1887 = vunpack.c.l.b16 %v340
  %v1888 = vunpack.c.h.b16 %v340
  %v1889 = vunpack.c.l.b16 %v341
  %v1890 = vunpack.c.h.b16 %v341
  %v1891 = vunpack.c.l.b16 %v342
  %v1892 = vunpack.c.h.b16 %v342
  %v1893 = vunpack.c.l.b16 %v343
  %v1894 = vunpack.c.h.b16 %v343
  %v1895 = vunpack.c.l.b16 %v344
  %v1896 = vunpack.c.h.b16 %v344
  %v1897 = vunpack.c.l.b16 %v345
  %v1898 = vunpack.c.h.b16 %v345
  %v1899 = vunpack.c.l.b16 %v346
  %v1900 = vunpack.c.h.b16 %v346
  %v1901 = vunpack.c.l.b16 %v347
  %v1902 = vunpack.c.h.b16 %v347
  %v1903 = vunpack.c.l.b16 %v348
  %v1904 = vunpack.c.h.b16 %v348
  %v1905 = vunpack.c.l.b16 %v349
  %v1906 = vunpack.c.h.b16 %v349
  %v1907 = vunpack.c.l.b16 %v350
  %v1908 = vunpack.c.h.b16 %v350
  %v1909 = vunpack.c.l.b16 %v351
  %v1910 = vunpack.c.h.b16 %v351
  %v1911 = vunpack.c.l.b16 %v352
  %v1912 = vunpack.c.h.b16 %v352
  %v1913 = vunpack.c.l.b16 %v353
  %v1914 = vunpack.c.h.b16 %v353
  %v1915 = vunpack.c.l.b16 %v354
  %v1916 = vunpack.c.h.b16 %v354
  %v1917 = vunpack.c.l.b16 %v355
  %v1918 = vunpack.c.h.b16 %v355
  %v1919 = vunpack.c.l.b16 %v356
  %v1920 = vunpack.c.h.b16 %v356
  %v1921 = vunpack.c.l.b16 %v357
  %v1922 = vunpack.c.h.b16 %v357
  %v1923 = vunpack.c.l.b16 %v358
  %v1924 = vunpack.c.h.b16 %v358
  %v1925 = vunpack.c.l.b16 %v359
  %v1926 = vunpack.c.h.b16 %v359
  %v1927 = vunpack.c.l.b16 %v360
  %v1928 = vunpack.c.h.b16 %v360
  %v1929 = vunpack.c.l.b16 %v361
  %v1930 = vunpack.c.h.b16 %v361
  %v1931 = vunpack.c.l.b16 %v362
  %v1932 = vunpack.c.h.b16 %v362
  %v1933 = vunpack.c.l.b16 %v363
  %v1934 = vunpack.c.h.b16 %v363
  %v1935 = vunpack.c.l.b16 %v364
  %v1936 = vunpack.c.h.b16 %v364
  %v1937 = vunpack.c.l.b16 %v365
  %v1938 = vunpack.c.h.b16 %v365
  %v1939 = vunpack.c.l.b16 %v366
  %v1940 = vunpack.c.h.b16 %v366
  %v1941 = vunpack.c.l.b16 %v367
  %v1942 = vunpack.c.h.b16 %v367
  %v1943 = vunpack.c.l.b16 %v368
  %v1944 = vunpack.c.h.b16 %v368
  %v1945 = vunpack.c.l.b16 %v369
  %v1946 = vunpack.c.h.b16 %v369
  %v1947 = vunpack.c.l.b16 %v370
  %v1948 = vunpack.c.h.b16 %v370
  %v1949 = vunpack.c.l.b16 %v371
  %v1950 = vunpack.c.h.b16 %v371
  %v1951 = vunpack.c.l.b16 %v372
  %v1952 = vunpack.c.h.b16 %v372
  %v1953 = vunpack.c.l.b16 %v373
  %v1954 = vunpack.c.h.b16 %v373
  %v1955 = vunpack.c.l.b16 %v374
  %v1956 = vunpack.c.h.b16 %v374
  %v1957 = vunpack.c.l.b16 %v375
  %v1958 = vunpack.c.h.b16 %v375
  %v1959 = vunpack.c.l.b16 %v376
  %v1960 = vunpack.c.h.b16 %v376
  %v1961 = vunpack.c.l.b16 %v377
  %v1962 = vunpack.c.h.b16 %v377
  %v1963 = vunpack.c.l.b16 %v378
  %v1964 = vunpack.c.h.b16 %v378
  %v1965 = vunpack.c.l.b16 %v379
  %v1966 = vunpack.c.h.b16 %v379
  %v1967 = vunpack.c.l.b16 %v380
  %v1968 = vunpack.c.h.b16 %v380
  %v1969 = vunpack.c.l.b16 %v381
  %v1970 = vunpack.c.h.b16 %v381
  %v1971 = vunpack.c.l.b16 %v382
  %v1972 = vunpack.c.h.b16 %v382
  %v1973 = vunpack.c.l.b16 %v383
  %v1974 = vunpack.c.h.b16 %v383
  %v1975 = vunpack.c.l.b16 %v384
  %v1976 = vunpack.c.h.b16 %v384
  %v1977 = vunpack.c.l.b16 %v385
  %v1978 = vunpack.c.h.b16 %v385
  %v1979 = vunpack.c.l.b16 %v386
  %v1980 = vunpack.c.h.b16 %v386
  %v1981 = vunpack.c.l.b16 %v387
  %v1982 = vunpack.c.h.b16 %v387
  %v1983 = vunpack.c.l.b16 %v388
  %v1984 = vunpack.c.h.b16 %v388
  %v1985 = vunpack.c.l.b16 %v389
  %v1986 = vunpack.c.h.b16 %v389
  %v1987 = vunpack.c.l.b16 %v390
  %v1988 = vunpack.c.h.b16 %v390
  %v1989 = vunpack.c.l.b16 %v391
  %v1990 = vunpack.c.h.b16 %v391
  %v1991 = vunpack.c.l.b16 %v392
  %v1992 = vunpack.c.h.b16 %v392
  %v1993 = vunpack.c.l.b16 %v393
  %v1994 = vunpack.c.h.b16 %v393
  %v1995 = vunpack.c.l.b16 %v394
  %v1996 = vunpack.c.h.b16 %v394
  %v1997 = vunpack.c.l.b16 %v395
  %v1998 = vunpack.c.h.b16 %v395
  %v1999 = vunpack.c.l.b16 %v396
  %v2000 = vunpack.c.h.b16 %v396
  %v2001 = vunpack.c.l.b16 %v397
  %v2002 = vunpack.c.h.b16 %v397
  %v2003 = vunpack.c.l.b16 %v398
  %v2004 = vunpack.c.h.b16 %v398
  %v2005 = vunpack.c.l.b16 %v399
  %v2006 = vunpack.c.h.b16 %v399
  %v2007 = vunpack.c.l.b16 %v400
  %v2008 = vunpack.c.h.b16 %v400
  %v2009 = vunpack.c.l.b16 %v401
  %v2010 = vunpack.c.h.b16 %v401
  %v2011 = vunpack.c.l.b16 %v402
  %v2012 = vunpack.c.h.b16 %v402
  %v2013 = vunpack.c.l.b16 %v403
  %v2014 = vunpack.c.h.b16 %v403
  %v2015 = vunpack.c.l.b16 %v404
  %v2016 = vunpack.c.h.b16 %v404
  %v2017 = vunpack.c.l.b16 %v405
  %v2018 = vunpack.c.h.b16 %v405
  %v2019 = vunpack.c.l.b16 %v406
  %v2020 = vunpack.c.h.b16 %v406
  %v2021 = vunpack.c.l.b16 %v407
  %v2022 = vunpack.c.h.b16 %v407
  %v2023 = vunpack.c.l.b16 %v408
  %v2024 = vunpack.c.h.b16 %v408
  %v2025 = vunpack.c.l.b16 %v409
  %v2026 = vunpack.c.h.b16 %v409
  %v2027 = vunpack.c.l.b16 %v410
  %v2028 = vunpack.c.h.b16 %v410
  %v2029 = vunpack.c.l.b16 %v411
  %v2030 = vunpack.c.h.b16 %v411
  %v2031 = vunpack.c.l.b16 %v412
  %v2032 = vunpack.c.h.b16 %v412
  %v2033 = vunpack.c.l.b16 %v413
  %v2034 = vunpack.c.h.b16 %v413
  %v2035 = vunpack.c.l.b16 %v414
  %v2036 = vunpack.c.h.b16 %v414
  %v2037 = vunpack.c.l.b16 %v415
  %v2038 = vunpack.c.h.b16 %v415
  %v2039 = vunpack.c.l.b16 %v416
  %v2040 = vunpack.c.h.b16 %v416
  %v2041 = vunpack.c.l.b16 %v417
  %v2042 = vunpack.c.h.b16 %v417
  %v2043 = vunpack.c.l.b16 %v418
  %v2044 = vunpack.c.h.b16 %v418
  %v2045 = vunpack.c.l.b16 %v419
  %v2046 = vunpack.c.h.b16 %v419
  %v2047 = vunpack.c.l.b16 %v420
  %v2048 = vunpack.c.h.b16 %v420
  %v2049 = vunpack.c.l.b16 %v421
  %v2050 = vunpack.c.h.b16 %v421
  %v2051 = vunpack.c.l.b16 %v422
  %v2052 = vunpack.c.h.b16 %v422
  %v2053 = vunpack.c.l.b16 %v423
  %v2054 = vunpack.c.h.b16 %v423
  %v2055 = vunpack.c.l.b16 %v424
  %v2056 = vunpack.c.h.b16 %v424
  %v2057 = vunpack.c.l.b16 %v425
  %v2058 = vunpack.c.h.b16 %v425
  %v2059 = vunpack.c.l.b16 %v426
  %v2060 = vunpack.c.h.b16 %v426
  %v2061 = vunpack.c.l.b16 %v427
  %v2062 = vunpack.c.h.b16 %v427
  %v2063 = vunpack.c.l.b16 %v428
  %v2064 = vunpack.c.h.b16 %v428
  %v2065 = vunpack.c.l.b16 %v429
  %v2066 = vunpack.c.h.b16 %v429
  %v2067 = vunpack.c.l.b16 %v430
  %v2068 = vunpack.c.h.b16 %v430
  %v2069 = vunpack.c.l.b16 %v431
  %v2070 = vunpack.c.h.b16 %v431
  %v2071 = vunpack.c.l.b16 %v432
  %v2072 = vunpack.c.h.b16 %v432
  %v2073 = vunpack.c.l.b16 %v433
  %v2074 = vunpack.c.h.b16 %v433
  %v2075 = vunpack.c.l.b16 %v434
  %v2076 = vunpack.c.h.b16 %v434
  %v2077 = vunpack.c.l.b16 %v435
  %v2078 = vunpack.c.h.b16 %v435
  %v2079 = vunpack.c.l.b16 %v436
  %v2080 = vunpack.c.h.b16 %v436
  %v2081 = vunpack.c.l.b16 %v437
  %v2082 = vunpack.c.h.b16 %v437
  %v2083 = vunpack.c.l.b16 %v438
  %v2084 = vunpack.c.h.b16 %v438
  %v2085 = vunpack.c.l.b16 %v439
  %v2086 = vunpack.c.h.b16 %v439
  %v2087 = vunpack.c.l.b16 %v440
  %v2088 = vunpack.c.h.b16 %v440
  %v2089 = vunpack.c.l.b16 %v441
  %v2090 = vunpack.c.h.b16 %v441
  %v2091 = vunpack.c.l.b16 %v442
  %v2092 = vunpack.c.h.b16 %v442
  %v2093 = vunpack.c.l.b16 %v443
  %v2094 = vunpack.c.h.b16 %v443
  %v2095 = vunpack.c.l.b16 %v444
  %v2096 = vunpack.c.h.b16 %v444
  %v2097 = vunpack.c.l.b16 %v445
  %v2098 = vunpack.c.h.b16 %v445
  %v2099 = vunpack.c.l.b16 %v446
  %v2100 = vunpack.c.h.b16 %v446
  %v2101 = vunpack.c.l.b16 %v447
  %v2102 = vunpack.c.h.b16 %v447
  %v2103 = vunpack.c.l.b16 %v448
  %v2104 = vunpack.c.h.b16 %v448
  %v2105 = vunpack.c.l.b16 %v449
  %v2106 = vunpack.c.h.b16 %v449
  %v2107 = vunpack.c.l.b16 %v450
  %v2108 = vunpack.c.h.b16 %v450
  %v2109 = vunpack.c.l.b16 %v451
  %v2110 = vunpack.c.h.b16 %v451
  %v2111 = vunpack.c.l.b16 %v452
  %v2112 = vunpack.c.h.b16 %v452
  %v2113 = vunpack.c.l.b16 %v453
  %v2114 = vunpack.c.h.b16 %v453
  %v2115 = vunpack.c.l.b16 %v454
  %v2116 = vunpack.c.h.b16 %v454
  %v2117 = vunpack.c.l.b16 %v455
  %v2118 = vunpack.c.h.b16 %v455
  %v2119 = vunpack.c.l.b16 %v456
  %v2120 = vunpack.c.h.b16 %v456
  %v2121 = vunpack.c.l.b16 %v457
  %v2122 = vunpack.c.h.b16 %v457
  %v2123 = vunpack.c.l.b16 %v458
  %v2124 = vunpack.c.h.b16 %v458
  %v2125 = vunpack.c.l.b16 %v459
  %v2126 = vunpack.c.h.b16 %v459
  %v2127 = vunpack.c.l.b16 %v460
  %v2128 = vunpack.c.h.b16 %v460
  %v2129 = vunpack.c.l.b16 %v461
  %v2130 = vunpack.c.h.b16 %v461
  %v2131 = vunpack.c.l.b16 %v462
  %v2132 = vunpack.c.h.b16 %v462
  %v2133 = vunpack.c.l.b16 %v463
  %v2134 = vunpack.c.h.b16 %v463
  %v2135 = vunpack.c.l.b16 %v464
  %v2136 = vunpack.c.h.b16 %v464
  %v2137 = vunpack.c.l.b16 %v465
  %v2138 = vunpack.c.h.b16 %v465
  %v2139 = vunpack.c.l.b16 %v466
  %v2140 = vunpack.c.h.b16 %v466
  %v2141 = vunpack.c.l.b16 %v467
  %v2142 = vunpack.c.h.b16 %v467
  %v2143 = vunpack.c.l.b16 %v468
  %v2144 = vunpack.c.h.b16 %v468
  %v2145 = vunpack.c.l.b16 %v469
  %v2146 = vunpack.c.h.b16 %v469
  %v2147 = vunpack.c.l.b16 %v470
  %v2148 = vunpack.c.h.b16 %v470
  %v2149 = vunpack.c.l.b16 %v471
  %v2150 = vunpack.c.h.b16 %v471
  %v2151 = vunpack.c.l.b16 %v472
  %v2152 = vunpack.c.h.b16 %v472
  %v2153 = vunpack.c.l.b16 %v473
  %v2154 = vunpack.c.h.b16 %v473
  %v2155 = vunpack.c.l.b16 %v474
  %v2156 = vunpack.c.h.b16 %v474
  %v2157 = vunpack.c.l.b16 %v475
  %v2158 = vunpack.c.h.b16 %v475
  %v2159 = vunpack.c.l.b16 %v476
  %v2160 = vunpack.c.h.b16 %v476
  %v2161 = vunpack.c.l.b16 %v477
  %v2162 = vunpack.c.h.b16 %v477
  %v2163 = vunpack.c.l.b16 %v478
  %v2164 = vunpack.c.h.b16 %v478
  %v2165 = vunpack.c.l.b16 %v479
  %v2166 = vunpack.c.h.b16 %v479
  %v2167 = vunpack.c.l.b16 %v480
  %v2168 = vunpack.c.h.b16 %v480
  %v2169 = vunpack.c.l.b16 %v481
  %v2170 = vunpack.c.h.b16 %v481
  %v2171 = vunpack.c.l.b16 %v482
  %v2172 = vunpack.c.h.b16 %v482
  %v2173 = vunpack.c.l.b16 %v483
  %v2174 = vunpack.c.h.b16 %v483
  %v2175 = vunpack.c.l.b16 %v484
  %v2176 = vunpack.c.h.b16 %v484
  %v2177 = vunpack.c.l.b16 %v485
  %v2178 = vunpack.c.h.b16 %v485
  %v2179 = vunpack.c.l.b16 %v486
  %v2180 = vunpack.c.h.b16 %v486
  %v2181 = vunpack.c.l.b16 %v487
  %v2182 = vunpack.c.h.b16 %v487
  %v2183 = vunpack.c.l.b16 %v488
  %v2184 = vunpack.c.h.b16 %v488
  %v2185 = vunpack.c.l.b16 %v489
  %v2186 = vunpack.c.h.b16 %v489
  %v2187 = vunpack.c.l.b16 %v490
  %v2188 = vunpack.c.h.b16 %v490
  %v2189 = vunpack.c.l.b16 %v491
  %v2190 = vunpack.c.h.b16 %v491
  %v2191 = vunpack.c.l.b16 %v492
  %v2192 = vunpack.c.h.b16 %v492
  %v2193 = vunpack.c.l.b16 %v493
  %v2194 = vunpack.c.h.b16 %v493
  %v2195 = vunpack.c.l.b16 %v494
  %v2196 = vunpack.c.h.b16 %v494
  %v2197 = vunpack.c.l.b16 %v495
  %v2198 = vunpack.c.h.b16 %v495
  %v2199 = vunpack.c.l.b16 %v496
  %v2200 = vunpack.c.h.b16 %v496
  %v2201 = vunpack.c.l.b16 %v497
  %v2202 = vunpack.c.h.b16 %v497
  %v2203 = vunpack.c.l.b16 %v498
  %v2204 = vunpack.c.h.b16 %v498
  %v2205 = vunpack.c.l.b16 %v499
  %v2206 = vunpack.c.h.b16 %v499
  %v2207 = vunpack.c.l.b16 %v500
  %v2208 = vunpack.c.h.b16 %v500
  %v2209 = vunpack.c.l.b16 %v501
  %v2210 = vunpack.c.h.b16 %v501
  %v2211 = vunpack.c.l.b16 %v502
  %v2212 = vunpack.c.h.b16 %v502
  %v2213 = vunpack.c.l.b16 %v503
  %v2214 = vunpack.c.h.b16 %v503
  %v2215 = vunpack.c.l.b16 %v504
  %v2216 = vunpack.c.h.b16 %v504
  %v2217 = vunpack.c.l.b16 %v505
  %v2218 = vunpack.c.h.b16 %v505
  %v2219 = vunpack.c.l.b16 %v506
  %v2220 = vunpack.c.h.b16 %v506
  %v2221 = vunpack.c.l.b16 %v507
  %v2222 = vunpack.c.h.b16 %v507
  %v2223 = vunpack.c.l.b16 %v508
  %v2224 = vunpack.c.h.b16 %v508
  %v2225 = vunpack.c.l.b16 %v509
  %v2226 = vunpack.c.h.b16 %v509
  %v2227 = vunpack.c.l.b16 %v510
  %v2228 = vunpack.c.h.b16 %v510
  %v2229 = vunpack.c.l.b16 %v511
  %v2230 = vunpack.c.h.b16 %v511
  %v2231 = vunpack.c.l.b16 %v512
  %v2232 = vunpack.c.h.b16 %v512
  %v2233 = vunpack.c.l.b16 %v513
  %v2234 = vunpack.c.h.b16 %v513
  %v2235 = vunpack.c.l.b16 %v514
  %v2236 = vunpack.c.h.b16 %v514
  %v2237 = vunpack.c.l.b16 %v515
  %v2238 = vunpack.c.h.b16 %v515
  %v2239 = vunpack.c.l.b16 %v516
  %v2240 = vunpack.c.h.b16 %v516
  %v2241 = vunpack.c.l.b16 %v517
  %v2242 = vunpack.c.h.b16 %v517
  %v2243 = vunpack.c.l.b16 %v518
  %v2244 = vunpack.c.h.b16 %v518
  %v2245 = vunpack.c.l.b16 %v519
  %v2246 = vunpack.c.h.b16 %v519
  %v2247 = vunpack.c.l.b16 %v520
  %v2248 = vunpack.c.h.b16 %v520
  %v2249 = vunpack.c.l.b16 %v521
  %v2250 = vunpack.c.h.b16 %v521
  %v2251 = vunpack.c.l.b16 %v522
  %v2252 = vunpack.c.h.b16 %v522
  %v2253 = vunpack.c.l.b16 %v523
  %v2254 = vunpack.c.h.b16 %v523
  %v2255 = vunpack.c.l.b16 %v524
  %v2256 = vunpack.c.h.b16 %v524
  %v2257 = vunpack.c.l.b16 %v525
  %v2258 = vunpack.c.h.b16 %v525
  %v2259 = vunpack.c.l.b16 %v526
  %v2260 = vunpack.c.h.b16 %v526
  %v2261 = vunpack.c.l.b16 %v527
  %v2262 = vunpack.c.h.b16 %v527
  %v2263 = vunpack.c.l.b16 %v528
  %v2264 = vunpack.c.h.b16 %v528
  %v2265 = vunpack.c.l.b16 %v529
  %v2266 = vunpack.c.h.b16 %v529
  %v2267 = vunpack.c.l.b16 %v530
  %v2268 = vunpack.c.h.b16 %v530
  %v2269 = vunpack.c.l.b16 %v531
  %v2270 = vunpack.c.h.b16 %v531
  %v2271 = vunpack.c.l.b16 %v532
  %v2272 = vunpack.c.h.b16 %v532
  %v2273 = vunpack.c.l.b16 %v533
  %v2274 = vunpack.c.h.b16 %v533
  %v2275 = vunpack.c.l.b16 %v534
  %v2276 = vunpack.c.h.b16 %v534
  %v2277 = vunpack.c.l.b16 %v535
  %v2278 = vunpack.c.h.b16 %v535
  %v2279 = vunpack.c.l.b16 %v536
  %v2280 = vunpack.c.h.b16 %v536
  %v2281 = vunpack.c.l.b16 %v537
  %v2282 = vunpack.c.h.b16 %v537
  %v2283 = vunpack.c.l.b16 %v538
  %v2284 = vunpack.c.h.b16 %v538
  %v2285 = vunpack.c.l.b16 %v539
  %v2286 = vunpack.c.h.b16 %v539
  %v2287 = vunpack.c.l.b16 %v540
  %v2288 = vunpack.c.h.b16 %v540
  %v2289 = vunpack.c.l.b16 %v541
  %v2290 = vunpack.c.h.b16 %v541
  %v2291 = vunpack.c.l.b16 %v542
  %v2292 = vunpack.c.h.b16 %v542
  %v2293 = vunpack.c.l.b16 %v543
  %v2294 = vunpack.c.h.b16 %v543
  %v2295 = vunpack.c.l.b16 %v544
  %v2296 = vunpack.c.h.b16 %v544
  %v2297 = vunpack.c.l.b16 %v545
  %v2298 = vunpack.c.h.b16 %v545
  %v2299 = vunpack.c.l.b16 %v546
  %v2300 = vunpack.c.h.b16 %v546
  %v2301 = vunpack.c.l.b16 %v547
  %v2302 = vunpack.c.h.b16 %v547
  %v2303 = vunpack.c.l.b16 %v548
  %v2304 = vunpack.c.h.b16 %v548
  %v2305 = vunpack.c.l.b16 %v549
  %v2306 = vunpack.c.h.b16 %v549
  %v2307 = vunpack.c.l.b16 %v550
  %v2308 = vunpack.c.h.b16 %v550
  %v2309 = vunpack.c.l.b16 %v551
  %v2310 = vunpack.c.h.b16 %v551
  %v2311 = vunpack.c.l.b16 %v552
  %v2312 = vunpack.c.h.b16 %v552
  %v2313 = vunpack.c.l.b16 %v553
  %v2314 = vunpack.c.h.b16 %v553
  %v2315 = vunpack.c.l.b16 %v554
  %v2316 = vunpack.c.h.b16 %v554
  %v2317 = vunpack.c.l.b16 %v555
  %v2318 = vunpack.c.h.b16 %v555
  %v2319 = vunpack.c.l.b16 %v556
  %v2320 = vunpack.c.h.b16 %v556
  %v2321 = vunpack.c.l.b16 %v557
  %v2322 = vunpack.c.h.b16 %v557
  %v2323 = vunpack.c.l.b16 %v558
  %v2324 = vunpack.c.h.b16 %v558
  %v2325 = vunpack.c.l.b16 %v559
  %v2326 = vunpack.c.h.b16 %v559
  %v2327 = vunpack.c.l.b16 %v560
  %v2328 = vunpack.c.h.b16 %v560
  %v2329 = vunpack.c.l.b16 %v561
  %v2330 = vunpack.c.h.b16 %v561
  %v2331 = vunpack.c.l.b16 %v562
  %v2332 = vunpack.c.h.b16 %v562
  %v2333 = vunpack.c.l.b16 %v563
  %v2334 = vunpack.c.h.b16 %v563
  %v2335 = vunpack.c.l.b16 %v564
  %v2336 = vunpack.c.h.b16 %v564
  %v2337 = vunpack.c.l.b16 %v565
  %v2338 = vunpack.c.h.b16 %v565
  %v2339 = vunpack.c.l.b16 %v566
  %v2340 = vunpack.c.h.b16 %v566
  %v2341 = vunpack.c.l.b16 %v567
  %v2342 = vunpack.c.h.b16 %v567
  %v2343 = vunpack.c.l.b16 %v568
  %v2344 = vunpack.c.h.b16 %v568
  %v2345 = vunpack.c.l.b16 %v569
  %v2346 = vunpack.c.h.b16 %v569
  %v2347 = vunpack.c.l.b16 %v570
  %v2348 = vunpack.c.h.b16 %v570
  %v2349 = vunpack.c.l.b16 %v571
  %v2350 = vunpack.c.h.b16 %v571
  %v2351 = vunpack.c.l.b16 %v572
  %v2352 = vunpack.c.h.b16 %v572
  %v2353 = vunpack.c.l.b16 %v573
  %v2354 = vunpack.c.h.b16 %v573
  %v2355 = vunpack.c.l.b16 %v574
  %v2356 = vunpack.c.h.b16 %v574
  %v2357 = vunpack.c.l.b16 %v575
  %v2358 = vunpack.c.h.b16 %v575
  %v2359 = vunpack.c.l.b16 %v576
  %v2360 = vunpack.c.h.b16 %v576
  %v2361 = vunpack.c.l.b16 %v577
  %v2362 = vunpack.c.h.b16 %v577
  %v2363 = vunpack.c.l.b16 %v578
  %v2364 = vunpack.c.h.b16 %v578
  %v2365 = vunpack.c.l.b16 %v579
  %v2366 = vunpack.c.h.b16 %v579
  %v2367 = vunpack.c.l.b16 %v580
  %v2368 = vunpack.c.h.b16 %v580
  %v2369 = vunpack.c.l.b16 %v581
  %v2370 = vunpack.c.h.b16 %v581
  %v2371 = vunpack.c.l.b16 %v582
  %v2372 = vunpack.c.h.b16 %v582
  %v2373 = vunpack.c.l.b16 %v583
  %v2374 = vunpack.c.h.b16 %v583
  %v2375 = vunpack.c.l.b16 %v584
  %v2376 = vunpack.c.h.b16 %v584
  %v2377 = vunpack.c.l.b16 %v585
  %v2378 = vunpack.c.h.b16 %v585
  %v2379 = vunpack.c.l.b16 %v586
  %v2380 = vunpack.c.h.b16 %v586
  %v2381 = vunpack.c.l.b16 %v587
  %v2382 = vunpack.c.h.b16 %v587
  %v2383 = vunpack.c.l.b16 %v588
  %v2384 = vunpack.c.h.b16 %v588
  %v2385 = vunpack.c.l.b16 %v589
  %v2386 = vunpack.c.h.b16 %v589
  %v2387 = vunpack.c.l.b16 %v590
  %v2388 = vunpack.c.h.b16 %v590
  %v2389 = vunpack.c.l.b16 %v591
  %v2390 = vunpack.c.h.b16 %v591
  %v2391 = vunpack.c.l.b16 %v592
  %v2392 = vunpack.c.h.b16 %v592
  %v2393 = vunpack.c.l.b16 %v593
  %v2394 = vunpack.c.h.b16 %v593
  %v2395 = vunpack.c.l.b16 %v594
  %v2396 = vunpack.c.h.b16 %v594
  %v2397 = vunpack.c.l.b16 %v595
  %v2398 = vunpack.c.h.b16 %v595
  %v2399 = vunpack.c.l.b16 %v596
  %v2400 = vunpack.c.h.b16 %v596
  %v2401 = vunpack.c.l.b16 %v597
  %v2402 = vunpack.c.h.b16 %v597
  %v2403 = vunpack.c.l.b16 %v598
  %v2404 = vunpack.c.h.b16 %v598
  %v2405 = vunpack.c.l.b16 %v599
  %v2406 = vunpack.c.h.b16 %v599
  %v2407 = vunpack.c.l.b16 %v600
  %v2408 = vunpack.c.h.b16 %v600
  %v2409 = vunpack.c.l.b16 %v601
  %v2410 = vunpack.c.h.b16 %v601
  %v2411 = vunpack.c.l.b16 %v602
  %v2412 = vunpack.c.h.b16 %v602
  %v2413 = vunpack.c.l.b16 %v603
  %v2414 = vunpack.c.h.b16 %v603
  %v2415 = vunpack.c.l.b16 %v604
  %v2416 = vunpack.c.h.b16 %v604
  %v2417 = vunpack.c.l.b16 %v605
  %v2418 = vunpack.c.h.b16 %v605
  %v2419 = vunpack.c.l.b16 %v606
  %v2420 = vunpack.c.h.b16 %v606
  %v2421 = vunpack.c.l.b16 %v607
  %v2422 = vunpack.c.h.b16 %v607
  %v2423 = vunpack.c.l.b16 %v608
  %v2424 = vunpack.c.h.b16 %v608
  %v2425 = vunpack.c.l.b16 %v609
  %v2426 = vunpack.c.h.b16 %v609
  %v2427 = vunpack.c.l.b16 %v610
  %v2428 = vunpack.c.h.b16 %v610
  %v2429 = vpack.c.b16 %v1281, %v1277
  %v2430 = vpack.c.b16 %v1282, %v1278
  %v2431 = vpack.c.b16 %v1283, %v1279
  %v2432 = vpack.c.b16 %v1284, %v1280
  %v2433 = vpack.c.b16 %v1289, %v1285
  %v2434 = vpack.c.b16 %v1290, %v1286
  %v2435 = vpack.c.b16 %v1291, %v1287
  %v2436 = vpack.c.b16 %v1292, %v1288
  %v2437 = vpack.c.b16 %v1297, %v1293
  %v2438 = vpack.c.b16 %v1298, %v1294
  %v2439 = vpack.c.b16 %v1299, %v1295
  %v2440 = vpack.c.b16 %v1300, %v1296
  %v2441 = vpack.c.b16 %v1305, %v1301
  %v2442 = vpack.c.b16 %v1306, %v1302
  %v2443 = vpack.c.b16 %v1307, %v1303
  %v2444 = vpack.c.b16 %v1308, %v1304
  %v2445 = vpack.c.b16 %v1313, %v1309
  %v2446 = vpack.c.b16 %v1314, %v1310
  %v2447 = vpack.c.b16 %v1315, %v1311
  %v2448 = vpack.c.b16 %v1316, %v1312
  %v2449 = vpack.c.b16 %v1321, %v1317
  %v2450 = vpack.c.b16 %v1322, %v1318
  %v2451 = vpack.c.b16 %v1323, %v1319
  %v2452 = vpack.c.b16 %v1324, %v1320
  %v2453 = vpack.c.b16 %v1329, %v1325
  %v2454 = vpack.c.b16 %v1330, %v1326
  %v2455 = vpack.c.b16 %v1331, %v1327
  %v2456 = vpack.c.b16 %v1332, %v1328
  %v2457 = vpack.c.b16 %v1337, %v1333
  %v2458 = vpack.c.b16 %v1338, %v1334
  %v2459 = vpack.c.b16 %v1339, %v1335
  %v2460 = vpack.c.b16 %v1340, %v1336
  %v2461 = vpack.c.b16 %v1345, %v1341
  %v2462 = vpack.c.b16 %v1346, %v1342
  %v2463 = vpack.c.b16 %v1347, %v1343
  %v2464 = vpack.c.b16 %v1348, %v1344
  %v2465 = vpack.c.b16 %v1353, %v1349
  %v2466 = vpack.c.b16 %v1354, %v1350
  %v2467 = vpack.c.b16 %v1355, %v1351
  %v2468 = vpack.c.b16 %v1356, %v1352
  %v2469 = vpack.c.b16 %v1361, %v1357
  %v2470 = vpack.c.b16 %v1362, %v1358
  %v2471 = vpack.c.b16 %v1363, %v1359
  %v2472 = vpack.c.b16 %v1364, %v1360
  %v2473 = vpack.c.b16 %v1369, %v1365
  %v2474 = vpack.c.b16 %v1370, %v1366
  %v2475 = vpack.c.b16 %v1371, %v1367
  %v2476 = vpack.c.b16 %v1372, %v1368
  %v2477 = vpack.c.b16 %v1377, %v1373
  %v2478 = vpack.c.b16 %v1378, %v1374
  %v2479 = vpack.c.b16 %v1379, %v1375
  %v2480 = vpack.c.b16 %v1380, %v1376
  %v2481 = vpack.c.b16 %v1385, %v1381
  %v2482 = vpack.c.b16 %v1386, %v1382
  %v2483 = vpack.c.b16 %v1387, %v1383
  %v2484 = vpack.c.b16 %v1388, %v1384
  %v2485 = vpack.c.b16 %v1393, %v1389
  %v2486 = vpack.c.b16 %v1394, %v1390
  %v2487 = vpack.c.b16 %v1395, %v1391
  %v2488 = vpack.c.b16 %v1396, %v1392
  %v2489 = vpack.c.b16 %v1401, %v1397
  %v2490 = vpack.c.b16 %v1402, %v1398
  %v2491 = vpack.c.b16 %v1403, %v1399
  %v2492 = vpack.c.b16 %v1404, %v1400
  %v2493 = vpack.c.b16 %v1409, %v1405
  %v2494 = vpack.c.b16 %v1410, %v1406
  %v2495 = vpack.c.b16 %v1411, %v1407
  %v2496 = vpack.c.b16 %v1412, %v1408
  %v2497 = vpack.c.b16 %v1417, %v1413
  %v2498 = vpack.c.b16 %v1418, %v1414
  %v2499 = vpack.c.b16 %v1419, %v1415
  %v2500 = vpack.c.b16 %v1420, %v1416
  %v2501 = vpack.c.b16 %v1425, %v1421
  %v2502 = vpack.c.b16 %v1426, %v1422
  %v2503 = vpack.c.b16 %v1427, %v1423
  %v2504 = vpack.c.b16 %v1428, %v1424
  %v2505 = vpack.c.b16 %v1433, %v1429
  %v2506 = vpack.c.b16 %v1434, %v1430
  %v2507 = vpack.c.b16 %v1435, %v1431
  %v2508 = vpack.c.b16 %v1436, %v1432
  %v2509 = vpack.c.b16 %v1441, %v1437
  %v2510 = vpack.c.b16 %v1442, %v1438
  %v2511 = vpack.c.b16 %v1443, %v1439
  %v2512 = vpack.c.b16 %v1444, %v1440
  %v2513 = vpack.c.b16 %v1449, %v1445
  %v2514 = vpack.c.b16 %v1450, %v1446
  %v2515 = vpack.c.b16 %v1451, %v1447
  %v2516 = vpack.c.b16 %v1452, %v1448
  %v2517 = vpack.c.b16 %v1457, %v1453
  %v2518 = vpack.c.b16 %v1458, %v1454
  %v2519 = vpack.c.b16 %v1459, %v1455
  %v2520 = vpack.c.b16 %v1460, %v1456
  %v2521 = vpack.c.b16 %v1465, %v1461
  %v2522 = vpack.c.b16 %v1466, %v1462
  %v2523 = vpack.c.b16 %v1467, %v1463
  %v2524 = vpack.c.b16 %v1468, %v1464
  %v2525 = vpack.c.b16 %v1473, %v1469
  %v2526 = vpack.c.b16 %v1474, %v1470
  %v2527 = vpack.c.b16 %v1475, %v1471
  %v2528 = vpack.c.b16 %v1476, %v1472
  %v2529 = vpack.c.b16 %v1481, %v1477
  %v2530 = vpack.c.b16 %v1482, %v1478
  %v2531 = vpack.c.b16 %v1483, %v1479
  %v2532 = vpack.c.b16 %v1484, %v1480
  %v2533 = vpack.c.b16 %v1489, %v1485
  %v2534 = vpack.c.b16 %v1490, %v1486
  %v2535 = vpack.c.b16 %v1491, %v1487
  %v2536 = vpack.c.b16 %v1492, %v1488
  %v2537 = vpack.c.b16 %v1497, %v1493
  %v2538 = vpack.c.b16 %v1498, %v1494
  %v2539 = vpack.c.b16 %v1499, %v1495
  %v2540 = vpack.c.b16 %v1500, %v1496
  %v2541 = vpack.c.b16 %v1505, %v1501
  %v2542 = vpack.c.b16 %v1506, %v1502
  %v2543 = vpack.c.b16 %v1507, %v1503
  %v2544 = vpack.c.b16 %v1508, %v1504
  %v2545 = vpack.c.b16 %v1513, %v1509
  %v2546 = vpack.c.b16 %v1514, %v1510
  %v2547 = vpack.c.b16 %v1515, %v1511
  %v2548 = vpack.c.b16 %v1516, %v1512
  %v2549 = vpack.c.b16 %v1521, %v1517
  %v2550 = vpack.c.b16 %v1522, %v1518
  %v2551 = vpack.c.b16 %v1523, %v1519
  %v2552 = vpack.c.b16 %v1524, %v1520
  %v2553 = vpack.c.b16 %v1529, %v1525
  %v2554 = vpack.c.b16 %v1530, %v1526
  %v2555 = vpack.c.b16 %v1531, %v1527
  %v2556 = vpack.c.b16 %v1532, %v1528
  %v2557 = vpack.c.b16 %v1537, %v1533
  %v2558 = vpack.c.b16 %v1538, %v1534
  %v2559 = vpack.c.b16 %v1539, %v1535
  %v2560 = vpack.c.b16 %v1540, %v1536
  %v2561 = vpack.c.b16 %v1545, %v1541
  %v2562 = vpack.c.b16 %v1546, %v1542
  %v2563 = vpack.c.b16 %v1547, %v1543
  %v2564 = vpack.c.b16 %v1548, %v1544
  %v2565 = vpack.c.b16 %v1553, %v1549
  %v2566 = vpack.c.b16 %v1554, %v1550
  %v2567 = vpack.c.b16 %v1555, %v1551
  %v2568 = vpack.c.b16 %v1556, %v1552
  %v2569 = vpack.c.b16 %v1561, %v1557
  %v2570 = vpack.c.b16 %v1562, %v1558
  %v2571 = vpack.c.b16 %v1563, %v1559
  %v2572 = vpack.c.b16 %v1564, %v1560
  %v2573 = vpack.c.b16 %v1569, %v1565
  %v2574 = vpack.c.b16 %v1570, %v1566
  %v2575 = vpack.c.b16 %v1571, %v1567
  %v2576 = vpack.c.b16 %v1572, %v1568
  %v2577 = vpack.c.b16 %v1577, %v1573
  %v2578 = vpack.c.b16 %v1578, %v1574
  %v2579 = vpack.c.b16 %v1579, %v1575
  %v2580 = vpack.c.b16 %v1580, %v1576
  %v2581 = vpack.c.b16 %v1585, %v1581
  %v2582 = vpack.c.b16 %v1586, %v1582
  %v2583 = vpack.c.b16 %v1587, %v1583
  %v2584 = vpack.c.b16 %v1588, %v1584
  %v2585 = vpack.c.b16 %v1593, %v1589
  %v2586 = vpack.c.b16 %v1594, %v1590
  %v2587 = vpack.c.b16 %v1595, %v1591
  %v2588 = vpack.c.b16 %v1596, %v1592
  %v2589 = vpack.c.b16 %v1601, %v1597
  %v2590 = vpack.c.b16 %v1602, %v1598
  %v2591 = vpack.c.b16 %v1603, %v1599
  %v2592 = vpack.c.b16 %v1604, %v1600
  %v2593 = vpack.c.b16 %v1609, %v1605
  %v2594 = vpack.c.b16 %v1610, %v1606
  %v2595 = vpack.c.b16 %v1611, %v1607
  %v2596 = vpack.c.b16 %v1612, %v1608
  %v2597 = vpack.c.b16 %v1617, %v1613
  %v2598 = vpack.c.b16 %v1618, %v1614
  %v2599 = vpack.c.b16 %v1619, %v1615
  %v2600 = vpack.c.b16 %v1620, %v1616
  %v2601 = vpack.c.b16 %v1625, %v1621
  %v2602 = vpack.c.b16 %v1626, %v1622
  %v2603 = vpack.c.b16 %v1627, %v1623
  %v2604 = vpack.c.b16 %v1628, %v1624
  %v2605 = vpack.c.b16 %v1633, %v1629
  %v2606 = vpack.c.b16 %v1634, %v1630
  %v2607 = vpack.c.b16 %v1635, %v1631
  %v2608 = vpack.c.b16 %v1636, %v1632
  %v2609 = vpack.c.b16 %v1641, %v1637
  %v2610 = vpack.c.b16 %v1642, %v1638
  %v2611 = vpack.c.b16 %v1643, %v1639
  %v2612 = vpack.c.b16 %v1644, %v1640
  %v2613 = vpack.c.b16 %v1649, %v1645
  %v2614 = vpack.c.b16 %v1650, %v1646
  %v2615 = vpack.c.b16 %v1651, %v1647
  %v2616 = vpack.c.b16 %v1652, %v1648
  %v2617 = vpack.c.b16 %v1657, %v1653
  %v2618 = vpack.c.b16 %v1658, %v1654
  %v2619 = vpack.c.b16 %v1659, %v1655
  %v2620 = vpack.c.b16 %v1660, %v1656
  %v2621 = vpack.c.b16 %v1665, %v1661
  %v2622 = vpack.c.b16 %v1666, %v1662
  %v2623 = vpack.c.b16 %v1667, %v1663
  %v2624 = vpack.c.b16 %v1668, %v1664
  %v2625 = vpack.c.b16 %v1673, %v1669
  %v2626 = vpack.c.b16 %v1674, %v1670
  %v2627 = vpack.c.b16 %v1675, %v1671
  %v2628 = vpack.c.b16 %v1676, %v1672
  %v2629 = vpack.c.b16 %v1681, %v1677
  %v2630 = vpack.c.b16 %v1682, %v1678
  %v2631 = vpack.c.b16 %v1683, %v1679
  %v2632 = vpack.c.b16 %v1684, %v1680
  %v2633 = vpack.c.b16 %v1689, %v1685
  %v2634 = vpack.c.b16 %v1690, %v1686
  %v2635 = vpack.c.b16 %v1691, %v1687
  %v2636 = vpack.c.b16 %v1692, %v1688
  %v2637 = vpack.c.b16 %v1697, %v1693
  %v2638 = vpack.c.b16 %v1698, %v1694
  %v2639 = vpack.c.b16 %v1699, %v1695
  %v2640 = vpack.c.b16 %v1700, %v1696
  %v2641 = vpack.c.b16 %v1705, %v1701
  %v2642 = vpack.c.b16 %v1706, %v1702
  %v2643 = vpack.c.b16 %v1707, %v1703
  %v2644 = vpack.c.b16 %v1708, %v1704
  %v2645 = vpack.c.b16 %v1713, %v1709
  %v2646 = vpack.c.b16 %v1714, %v1710
  %v2647 = vpack.c.b16 %v1715, %v1711
  %v2648 = vpack.c.b16 %v1716, %v1712
  %v2649 = vpack.c.b16 %v1721, %v1717
  %v2650 = vpack.c.b16 %v1722, %v1718
  %v2651 = vpack.c.b16 %v1723, %v1719
  %v2652 = vpack.c.b16 %v1724, %v1720
  %v2653 = vpack.c.b16 %v1729, %v1725
  %v2654 = vpack.c.b16 %v1730, %v1726
  %v2655 = vpack.c.b16 %v1731, %v1727
  %v2656 = vpack.c.b16 %v1732, %v1728
  %v2657 = vpack.c.b16 %v1737, %v1733
  %v2658 = vpack.c.b16 %v1738, %v1734
  %v2659 = vpack.c.b16 %v1739, %v1735
  %v2660 = vpack.c.b16 %v1740, %v1736
  %v2661 = vpack.c.b16 %v1745, %v1741
  %v2662 = vpack.c.b16 %v1746, %v1742
  %v2663 = vpack.c.b16 %v1747, %v1743
  %v2664 = vpack.c.b16 %v1748, %v1744
  %v2665 = vpack.c.b16 %v1753, %v1749
  %v2666 = vpack.c.b16 %v1754, %v1750
  %v2667 = vpack.c.b16 %v1755, %v1751
  %v2668 = vpack.c.b16 %v1756, %v1752
  %v2669 = vpack.c.b16 %v1761, %v1757
  %v2670 = vpack.c.b16 %v1762, %v1758
  %v2671 = vpack.c.b16 %v1763, %v1759
  %v2672 = vpack.c.b16 %v1764, %v1760
  %v2673 = vpack.c.b16 %v1769, %v1765
  %v2674 = vpack.c.b16 %v1770, %v1766
  %v2675 = vpack.c.b16 %v1771, %v1767
  %v2676 = vpack.c.b16 %v1772, %v1768
  %v2677 = vpack.c.b16 %v1777, %v1773
  %v2678 = vpack.c.b16 %v1778, %v1774
  %v2679 = vpack.c.b16 %v1779, %v1775
  %v2680 = vpack.c.b16 %v1780, %v1776
  %v2681 = vpack.c.b16 %v1785, %v1781
  %v2682 = vpack.c.b16 %v1786, %v1782
  %v2683 = vpack.c.b16 %v1787, %v1783
  %v2684 = vpack.c.b16 %v1788, %v1784
  %v2685 = vpack.c.b16 %v1793, %v1789
  %v2686 = vpack.c.b16 %v1794, %v1790
  %v2687 = vpack.c.b16 %v1795, %v1791
  %v2688 = vpack.c.b16 %v1796, %v1792
  %v2689 = vpack.c.b16 %v1801, %v1797
  %v2690 = vpack.c.b16 %v1802, %v1798
  %v2691 = vpack.c.b16 %v1803, %v1799
  %v2692 = vpack.c.b16 %v1804, %v1800
  %v2693 = vpack.c.b16 %v1809, %v1805
  %v2694 = vpack.c.b16 %v1810, %v1806
  %v2695 = vpack.c.b16 %v1811, %v1807
  %v2696 = vpack.c.b16 %v1812, %v1808
  %v2697 = vpack.c.b16 %v1817, %v1813
  %v2698 = vpack.c.b16 %v1818, %v1814
  %v2699 = vpack.c.b16 %v1819, %v1815
  %v2700 = vpack.c.b16 %v1820, %v1816
  %v2701 = vpack.c.b16 %v1825, %v1821
  %v2702 = vpack.c.b16 %v1826, %v1822
  %v2703 = vpack.c.b16 %v1827, %v1823
  %v2704 = vpack.c.b16 %v1828, %v1824
  %v2705 = vpack.c.b16 %v1833, %v1829
  %v2706 = vpack.c.b16 %v1834, %v1830
  %v2707 = vpack.c.b16 %v1835, %v1831
  %v2708 = vpack.c.b16 %v1836, %v1832
  %v2709 = vpack.c.b16 %v1841, %v1837
  %v2710 = vpack.c.b16 %v1842, %v1838
  %v2711 = vpack.c.b16 %v1843, %v1839
  %v2712 = vpack.c.b16 %v1844, %v1840
  %v2713 = vpack.c.b16 %v1849, %v1845
  %v2714 = vpack.c.b16 %v1850, %v1846
  %v2715 = vpack.c.b16 %v1851, %v1847
  %v2716 = vpack.c.b16 %v1852, %v1848
  %v2717 = vpack.c.b16 %v1857, %v1853
  %v2718 = vpack.c.b16 %v1858, %v1854
  %v2719 = vpack.c.b16 %v1859, %v1855
  %v2720 = vpack.c.b16 %v1860, %v1856
  %v2721 = vpack.c.b16 %v1865, %v1861
  %v2722 = vpack.c.b16 %v1866, %v1862
  %v2723 = vpack.c.b16 %v1867, %v1863
  %v2724 = vpack.c.b16 %v1868, %v1864
  %v2725 = vpack.c.b16 %v1873, %v1869
  %v2726 = vpack.c.b16 %v1874, %v1870
  %v2727 = vpack.c.b16 %v1875, %v1871
  %v2728 = vpack.c.b16 %v1876, %v1872
  %v2729 = vpack.c.b16 %v1881, %v1877
  %v2730 = vpack.c.b16 %v1882, %v1878
  %v2731 = vpack.c.b16 %v1883, %v1879
  %v2732 = vpack.c.b16 %v1884, %v1880
  %v2733 = vpack.c.b16 %v1889, %v1885
  %v2734 = vpack.c.b16 %v1890, %v1886
  %v2735 = vpack.c.b16 %v1891, %v1887
  %v2736 = vpack.c.b16 %v1892, %v1888
  %v2737 = vpack.c.b16 %v1897, %v1893
  %v2738 = vpack.c.b16 %v1898, %v1894
  %v2739 = vpack.c.b16 %v1899, %v1895
  %v2740 = vpack.c.b16 %v1900, %v1896
  %v2741 = vpack.c.b16 %v1905, %v1901
  %v2742 = vpack.c.b16 %v1906, %v1902
  %v2743 = vpack.c.b16 %v1907, %v1903
  %v2744 = vpack.c.b16 %v1908, %v1904
  %v2745 = vpack.c.b16 %v1913, %v1909
  %v2746 = vpack.c.b16 %v1914, %v1910
  %v2747 = vpack.c.b16 %v1915, %v1911
  %v2748 = vpack.c.b16 %v1916, %v1912
  %v2749 = vpack.c.b16 %v1921, %v1917
  %v2750 = vpack.c.b16 %v1922, %v1918
  %v2751 = vpack.c.b16 %v1923, %v1919
  %v2752 = vpack.c.b16 %v1924, %v1920
  %v2753 = vpack.c.b16 %v1929, %v1925
  %v2754 = vpack.c.b16 %v1930, %v1926
  %v2755 = vpack.c.b16 %v1931, %v1927
  %v2756 = vpack.c.b16 %v1932, %v1928
  %v2757 = vpack.c.b16 %v1937, %v1933
  %v2758 = vpack.c.b16 %v1938, %v1934
  %v2759 = vpack.c.b16 %v1939, %v1935
  %v2760 = vpack.c.b16 %v1940, %v1936
  %v2761 = vpack.c.b16 %v1945, %v1941
  %v2762 = vpack.c.b16 %v1946, %v1942
  %v2763 = vpack.c.b16 %v1947, %v1943
  %v2764 = vpack.c.b16 %v1948, %v1944
  %v2765 = vpack.c.b16 %v1953, %v1949
  %v2766 = vpack.c.b16 %v1954, %v1950
  %v2767 = vpack.c.b16 %v1955, %v1951
  %v2768 = vpack.c.b16 %v1956, %v1952
  %v2769 = vpack.c.b16 %v1961, %v1957
  %v2770 = vpack.c.b16 %v1962, %v1958
  %v2771 = vpack.c.b16 %v1963, %v1959
  %v2772 = vpack.c.b16 %v1964, %v1960
  %v2773 = vpack.c.b16 %v1969, %v1965
  %v2774 = vpack.c.b16 %v1970, %v1966
  %v2775 = vpack.c.b16 %v1971, %v1967
  %v2776 = vpack.c.b16 %v1972, %v1968
  %v2777 = vpack.c.b16 %v1977, %v1973
  %v2778 = vpack.c.b16 %v1978, %v1974
  %v2779 = vpack.c.b16 %v1979, %v1975
  %v2780 = vpack.c.b16 %v1980, %v1976
  %v2781 = vpack.c.b16 %v1985, %v1981
  %v2782 = vpack.c.b16 %v1986, %v1982
  %v2783 = vpack.c.b16 %v1987, %v1983
  %v2784 = vpack.c.b16 %v1988, %v1984
  %v2785 = vpack.c.b16 %v1993, %v1989
  %v2786 = vpack.c.b16 %v1994, %v1990
  %v2787 = vpack.c.b16 %v1995, %v1991
  %v2788 = vpack.c.b16 %v1996, %v1992
  %v2789 = vpack.c.b16 %v2001, %v1997
  %v2790 = vpack.c.b16 %v2002, %v1998
  %v2791 = vpack.c.b16 %v2003, %v1999
  %v2792 = vpack.c.b16 %v2004, %v2000
  %v2793 = vpack.c.b16 %v2009, %v2005
  %v2794 = vpack.c.b16 %v2010, %v2006
  %v2795 = vpack.c.b16 %v2011, %v2007
  %v2796 = vpack.c.b16 %v2012, %v2008
  %v2797 = vpack.c.b16 %v2017, %v2013
  %v2798 = vpack.c.b16 %v2018, %v2014
  %v2799 = vpack.c.b16 %v2019, %v2015
  %v2800 = vpack.c.b16 %v2020, %v2016
  %v2801 = vpack.c.b16 %v2025, %v2021
  %v2802 = vpack.c.b16 %v2026, %v2022
  %v2803 = vpack.c.b16 %v2027, %v2023
  %v2804 = vpack.c.b16 %v2028, %v2024
  %v2805 = vpack.c.b16 %v2033, %v2029
  %v2806 = vpack.c.b16 %v2034, %v2030
  %v2807 = vpack.c.b16 %v2035, %v2031
  %v2808 = vpack.c.b16 %v2036, %v2032
  %v2809 = vpack.c.b16 %v2041, %v2037
  %v2810 = vpack.c.b16 %v2042, %v2038
  %v2811 = vpack.c.b16 %v2043, %v2039
  %v2812 = vpack.c.b16 %v2044, %v2040
  %v2813 = vpack.c.b16 %v2049, %v2045
  %v2814 = vpack.c.b16 %v2050, %v2046
  %v2815 = vpack.c.b16 %v2051, %v2047
  %v2816 = vpack.c.b16 %v2052, %v2048
  %v2817 = vpack.c.b16 %v2057, %v2053
  %v2818 = vpack.c.b16 %v2058, %v2054
  %v2819 = vpack.c.b16 %v2059, %v2055
  %v2820 = vpack.c.b16 %v2060, %v2056
  %v2821 = vpack.c.b16 %v2065, %v2061
  %v2822 = vpack.c.b16 %v2066, %v2062
  %v2823 = vpack.c.b16 %v2067, %v2063
  %v2824 = vpack.c.b16 %v2068, %v2064
  %v2825 = vpack.c.b16 %v2073, %v2069
  %v2826 = vpack.c.b16 %v2074, %v2070
  %v2827 = vpack.c.b16 %v2075, %v2071
  %v2828 = vpack.c.b16 %v2076, %v2072
  %v2829 = vpack.c.b16 %v2081, %v2077
  %v2830 = vpack.c.b16 %v2082, %v2078
  %v2831 = vpack.c.b16 %v2083, %v2079
  %v2832 = vpack.c.b16 %v2084, %v2080
  %v2833 = vpack.c.b16 %v2089, %v2085
  %v2834 = vpack.c.b16 %v2090, %v2086
  %v2835 = vpack.c.b16 %v2091, %v2087
  %v2836 = vpack.c.b16 %v2092, %v2088
  %v2837 = vpack.c.b16 %v2097, %v2093
  %v2838 = vpack.c.b16 %v2098, %v2094
  %v2839 = vpack.c.b16 %v2099, %v2095
  %v2840 = vpack.c.b16 %v2100, %v2096
  %v2841 = vpack.c.b16 %v2105, %v2101
  %v2842 = vpack.c.b16 %v2106, %v2102
  %v2843 = vpack.c.b16 %v2107, %v2103
  %v2844 = vpack.c.b16 %v2108, %v2104
  %v2845 = vpack.c.b16 %v2113, %v2109
  %v2846 = vpack.c.b16 %v2114, %v2110
  %v2847 = vpack.c.b16 %v2115, %v2111
  %v2848 = vpack.c.b16 %v2116, %v2112
  %v2849 = vpack.c.b16 %v2121, %v2117
  %v2850 = vpack.c.b16 %v2122, %v2118
  %v2851 = vpack.c.b16 %v2123, %v2119
  %v2852 = vpack.c.b16 %v2124, %v2120
  %v2853 = vpack.c.b16 %v2129, %v2125
  %v2854 = vpack.c.b16 %v2130, %v2126
  %v2855 = vpack.c.b16 %v2131, %v2127
  %v2856 = vpack.c.b16 %v2132, %v2128
  %v2857 = vpack.c.b16 %v2137, %v2133
  %v2858 = vpack.c.b16 %v2138, %v2134
  %v2859 = vpack.c.b16 %v2139, %v2135
  %v2860 = vpack.c.b16 %v2140, %v2136
  %v2861 = vpack.c.b16 %v2145, %v2141
  %v2862 = vpack.c.b16 %v2146, %v2142
  %v2863 = vpack.c.b16 %v2147, %v2143
  %v2864 = vpack.c.b16 %v2148, %v2144
  %v2865 = vpack.c.b16 %v2153, %v2149
  %v2866 = vpack.c.b16 %v2154, %v2150
  %v2867 = vpack.c.b16 %v2155, %v2151
  %v2868 = vpack.c.b16 %v2156, %v2152
  %v2869 = vpack.c.b16 %v2161, %v2157
  %v2870 = vpack.c.b16 %v2162, %v2158
  %v2871 = vpack.c.b16 %v2163, %v2159
  %v2872 = vpack.c.b16 %v2164, %v2160
  %v2873 = vpack.c.b16 %v2169, %v2165
  %v2874 = vpack.c.b16 %v2170, %v2166
  %v2875 = vpack.c.b16 %v2171, %v2167
  %v2876 = vpack.c.b16 %v2172, %v2168
  %v2877 = vpack.c.b16 %v2177, %v2173
  %v2878 = vpack.c.b16 %v2178, %v2174
  %v2879 = vpack.c.b16 %v2179, %v2175
  %v2880 = vpack.c.b16 %v2180, %v2176
  %v2881 = vpack.c.b16 %v2185, %v2181
  %v2882 = vpack.c.b16 %v2186, %v2182
  %v2883 = vpack.c.b16 %v2187, %v2183
  %v2884 = vpack.c.b16 %v2188, %v2184
  %v2885 = vpack.c.b16 %v2193, %v2189
  %v2886 = vpack.c.b16 %v2194, %v2190
  %v2887 = vpack.c.b16 %v2195, %v2191
  %v2888 = vpack.c.b16 %v2196, %v2192
  %v2889 = vpack.c.b16 %v2201, %v2197
  %v2890 = vpack.c.b16 %v2202, %v2198
  %v2891 = vpack.c.b16 %v2203, %v2199
  %v2892 = vpack.c.b16 %v2204, %v2200
  %v2893 = vpack.c.b16 %v2209, %v2205
  %v2894 = vpack.c.b16 %v2210, %v2206
  %v2895 = vpack.c.b16 %v2211, %v2207
  %v2896 = vpack.c.b16 %v2212, %v2208
  %v2897 = vpack.c.b16 %v2217, %v2213
  %v2898 = vpack.c.b16 %v2218, %v2214
  %v2899 = vpack.c.b16 %v2219, %v2215
  %v2900 = vpack.c.b16 %v2220, %v2216
  %v2901 = vpack.c.b16 %v2225, %v2221
  %v2902 = vpack.c.b16 %v2226, %v2222
  %v2903 = vpack.c.b16 %v2227, %v2223
  %v2904 = vpack.c.b16 %v2228, %v2224
  %v2905 = vpack.c.b16 %v2233, %v2229
  %v2906 = vpack.c.b16 %v2234, %v2230
  %v2907 = vpack.c.b16 %v2235, %v2231
  %v2908 = vpack.c.b16 %v2236, %v2232
  %v2909 = vpack.c.b16 %v2241, %v2237
  %v2910 = vpack.c.b16 %v2242, %v2238
  %v2911 = vpack.c.b16 %v2243, %v2239
  %v2912 = vpack.c.b16 %v2244, %v2240
  %v2913 = vpack.c.b16 %v2249, %v2245
  %v2914 = vpack.c.b16 %v2250, %v2246
  %v2915 = vpack.c.b16 %v2251, %v2247
  %v2916 = vpack.c.b16 %v2252, %v2248
  %v2917 = vpack.c.b16 %v2257, %v2253
  %v2918 = vpack.c.b16 %v2258, %v2254
  %v2919 = vpack.c.b16 %v2259, %v2255
  %v2920 = vpack.c.b16 %v2260, %v2256
  %v2921 = vpack.c.b16 %v2265, %v2261
  %v2922 = vpack.c.b16 %v2266, %v2262
  %v2923 = vpack.c.b16 %v2267, %v2263
  %v2924 = vpack.c.b16 %v2268, %v2264
  %v2925 = vpack.c.b16 %v2273, %v2269
  %v2926 = vpack.c.b16 %v2274, %v2270
  %v2927 = vpack.c.b16 %v2275, %v2271
  %v2928 = vpack.c.b16 %v2276, %v2272
  %v2929 = vpack.c.b16 %v2281, %v2277
  %v2930 = vpack.c.b16 %v2282, %v2278
  %v2931 = vpack.c.b16 %v2283, %v2279
  %v2932 = vpack.c.b16 %v2284, %v2280
  %v2933 = vpack.c.b16 %v2289, %v2285
  %v2934 = vpack.c.b16 %v2290, %v2286
  %v2935 = vpack.c.b16 %v2291, %v2287
  %v2936 = vpack.c.b16 %v2292, %v2288
  %v2937 = vpack.c.b16 %v2297, %v2293
  %v2938 = vpack.c.b16 %v2298, %v2294
  %v2939 = vpack.c.b16 %v2299, %v2295
  %v2940 = vpack.c.b16 %v2300, %v2296
  %v2941 = vpack.c.b16 %v2305, %v2301
  %v2942 = vpack.c.b16 %v2306, %v2302
  %v2943 = vpack.c.b16 %v2307, %v2303
  %v2944 = vpack.c.b16 %v2308, %v2304
  %v2945 = vpack.c.b16 %v2313, %v2309
  %v2946 = vpack.c.b16 %v2314, %v2310
  %v2947 = vpack.c.b16 %v2315, %v2311
  %v2948 = vpack.c.b16 %v2316, %v2312
  %v2949 = vpack.c.b16 %v2321, %v2317
  %v2950 = vpack.c.b16 %v2322, %v2318
  %v2951 = vpack.c.b16 %v2323, %v2319
  %v2952 = vpack.c.b16 %v2324, %v2320
  %v2953 = vpack.c.b16 %v2329, %v2325
  %v2954 = vpack.c.b16 %v2330, %v2326
  %v2955 = vpack.c.b16 %v2331, %v2327
  %v2956 = vpack.c.b16 %v2332, %v2328
  %v2957 = vpack.c.b16 %v2337, %v2333
  %v2958 = vpack.c.b16 %v2338, %v2334
  %v2959 = vpack.c.b16 %v2339, %v2335
  %v2960 = vpack.c.b16 %v2340, %v2336
  %v2961 = vpack.c.b16 %v2345, %v2341
  %v2962 = vpack.c.b16 %v2346, %v2342
  %v2963 = vpack.c.b16 %v2347, %v2343
  %v2964 = vpack.c.b16 %v2348, %v2344
  %v2965 = vpack.c.b16 %v2353, %v2349
  %v2966 = vpack.c.b16 %v2354, %v2350
  %v2967 = vpack.c.b16 %v2355, %v2351
  %v2968 = vpack.c.b16 %v2356, %v2352
  %v2969 = vpack.c.b16 %v2361, %v2357
  %v2970 = vpack.c.b16 %v2362, %v2358
  %v2971 = vpack.c.b16 %v2363, %v2359
  %v2972 = vpack.c.b16 %v2364, %v2360
  %v2973 = vpack.c.b16 %v2369, %v2365
  %v2974 = vpack.c.b16 %v2370, %v2366
  %v2975 = vpack.c.b16 %v2371, %v2367
  %v2976 = vpack.c.b16 %v2372, %v2368
  %v2977 = vpack.c.b16 %v2377, %v2373
  %v2978 = vpack.c.b16 %v2378, %v2374
  %v2979 = vpack.c.b16 %v2379, %v2375
  %v2980 = vpack.c.b16 %v2380, %v2376
  %v2981 = vpack.c.b16 %v2385, %v2381
  %v2982 = vpack.c.b16 %v2386, %v2382
  %v2983 = vpack.c.b16 %v2387, %v2383
  %v2984 = vpack.c.b16 %v2388, %v2384
  %v2985 = vpack.c.b16 %v2393, %v2389
  %v2986 = vpack.c.b16 %v2394, %v2390
  %v2987 = vpack.c.b16 %v2395, %v2391
  %v2988 = vpack.c.b16 %v2396, %v2392
  %v2989 = vpack.c.b16 %v2401, %v2397
  %v2990 = vpack.c.b16 %v2402, %v2398
  %v2991 = vpack.c.b16 %v2403, %v2399
  %v2992 = vpack.c.b16 %v2404, %v2400
  %v2993 = vpack.c.b16 %v2409, %v2405
  %v2994 = vpack.c.b16 %v2410, %v2406
  %v2995 = vpack.c.b16 %v2411, %v2407
  %v2996 = vpack.c.b16 %v2412, %v2408
  %v2997 = vpack.c.b16 %v2417, %v2413
  %v2998 = vpack.c.b16 %v2418, %v2414
  %v2999 = vpack.c.b16 %v2419, %v2415
  %v3000 = vpack.c.b16 %v2420, %v2416
  %v3001 = vpack.c.b16 %v2425, %v2421
  %v3002 = vpack.c.b16 %v2426, %v2422
  %v3003 = vpack.c.b16 %v2427, %v2423
  %v3004 = vpack.c.b16 %v2428, %v2424
  %3581 = vmatpush.bf16.msra.mxu0 %v2457
  %3582 = vmatpush.bf16.msra.mxu0 %v2453
  %3583 = vmatpush.bf16.msra.mxu0 %v2449
  %3584 = vmatpush.bf16.msra.mxu0 %v2445
  %3585 = vmatpush.bf16.msra.mxu0 %v2441
  %3586 = vmatpush.bf16.msra.mxu0 %v2437
  %3587 = vmatpush.bf16.msra.mxu0 %v2433
  %3588 = vmatpush.bf16.msra.mxu0 %v2429
  %3589 = vmatmul.bf16.gmra.mxu0 %v665
  %v3590 = vpop.f32.mrf.mxu0
  %v3591 = vadd.f32 0.0, %v3590
  %v3592 = vpop.f32.mrf.mxu0
  %v3593 = vadd.f32 0.0, %v3592
  %3594 = vdwg.mxu0
  %3595 = vmatpush.bf16.msra.mxu0 %v2489
  %3596 = vmatpush.bf16.msra.mxu0 %v2485
  %3597 = vmatpush.bf16.msra.mxu0 %v2481
  %3598 = vmatpush.bf16.msra.mxu0 %v2477
  %3599 = vmatpush.bf16.msra.mxu0 %v2473
  %3600 = vmatpush.bf16.msra.mxu0 %v2469
  %3601 = vmatpush.bf16.msra.mxu0 %v2465
  %3602 = vmatpush.bf16.msra.mxu0 %v2461
  %3603 = vmatmul.bf16.gmra.mxu0 %v666
  %v3604 = vpop.f32.mrf.mxu0
  %v3605 = vadd.f32 %v3591, %v3604
  %v3606 = vpop.f32.mrf.mxu0
  %v3607 = vadd.f32 %v3593, %v3606
  %3608 = vdwg.mxu0
  %3609 = vmatpush.bf16.msra.mxu0 %v2521
  %3610 = vmatpush.bf16.msra.mxu0 %v2517
  %3611 = vmatpush.bf16.msra.mxu0 %v2513
  %3612 = vmatpush.bf16.msra.mxu0 %v2509
  %3613 = vmatpush.bf16.msra.mxu0 %v2505
  %3614 = vmatpush.bf16.msra.mxu0 %v2501
  %3615 = vmatpush.bf16.msra.mxu0 %v2497
  %3616 = vmatpush.bf16.msra.mxu0 %v2493
  %3617 = vmatmul.bf16.gmra.mxu0 %v667
  %v3618 = vpop.f32.mrf.mxu0
  %v3619 = vadd.f32 %v3605, %v3618
  %v3620 = vpop.f32.mrf.mxu0
  %v3621 = vadd.f32 %v3607, %v3620
  %3622 = vdwg.mxu0
  %3623 = vmatpush.bf16.msra.mxu0 %v2553
  %3624 = vmatpush.bf16.msra.mxu0 %v2549
  %3625 = vmatpush.bf16.msra.mxu0 %v2545
  %3626 = vmatpush.bf16.msra.mxu0 %v2541
  %3627 = vmatpush.bf16.msra.mxu0 %v2537
  %3628 = vmatpush.bf16.msra.mxu0 %v2533
  %3629 = vmatpush.bf16.msra.mxu0 %v2529
  %3630 = vmatpush.bf16.msra.mxu0 %v2525
  %3631 = vmatmul.bf16.gmra.mxu0 %v668
  %v3632 = vpop.f32.mrf.mxu0
  %v3633 = vadd.f32 %v3619, %v3632
  %v3634 = vpop.f32.mrf.mxu0
  %v3635 = vadd.f32 %v3621, %v3634
  %3636 = vdwg.mxu0
  %3637 = vmatpush.bf16.msra.mxu0 %v2585
  %3638 = vmatpush.bf16.msra.mxu0 %v2581
  %3639 = vmatpush.bf16.msra.mxu0 %v2577
  %3640 = vmatpush.bf16.msra.mxu0 %v2573
  %3641 = vmatpush.bf16.msra.mxu0 %v2569
  %3642 = vmatpush.bf16.msra.mxu0 %v2565
  %3643 = vmatpush.bf16.msra.mxu0 %v2561
  %3644 = vmatpush.bf16.msra.mxu0 %v2557
  %3645 = vmatmul.bf16.gmra.mxu0 %v669
  %v3646 = vpop.f32.mrf.mxu0
  %v3647 = vadd.f32 %v3633, %v3646
  %v3648 = vpop.f32.mrf.mxu0
  %v3649 = vadd.f32 %v3635, %v3648
  %3650 = vdwg.mxu0
  %3651 = vmatpush.bf16.msra.mxu0 %v2617
  %3652 = vmatpush.bf16.msra.mxu0 %v2613
  %3653 = vmatpush.bf16.msra.mxu0 %v2609
  %3654 = vmatpush.bf16.msra.mxu0 %v2605
  %3655 = vmatpush.bf16.msra.mxu0 %v2601
  %3656 = vmatpush.bf16.msra.mxu0 %v2597
  %3657 = vmatpush.bf16.msra.mxu0 %v2593
  %3658 = vmatpush.bf16.msra.mxu0 %v2589
  %3659 = vmatmul.bf16.gmra.mxu0 %v670
  %v3660 = vpop.f32.mrf.mxu0
  %v3661 = vadd.f32 %v3647, %v3660
  %v3662 = vpop.f32.mrf.mxu0
  %v3663 = vadd.f32 %v3649, %v3662
  %3664 = vdwg.mxu0
  %3665 = vmatpush.bf16.msra.mxu0 %v2649
  %3666 = vmatpush.bf16.msra.mxu0 %v2645
  %3667 = vmatpush.bf16.msra.mxu0 %v2641
  %3668 = vmatpush.bf16.msra.mxu0 %v2637
  %3669 = vmatpush.bf16.msra.mxu0 %v2633
  %3670 = vmatpush.bf16.msra.mxu0 %v2629
  %3671 = vmatpush.bf16.msra.mxu0 %v2625
  %3672 = vmatpush.bf16.msra.mxu0 %v2621
  %3673 = vmatmul.bf16.gmra.mxu0 %v671
  %v3674 = vpop.f32.mrf.mxu0
  %v3675 = vadd.f32 %v3661, %v3674
  %v3676 = vpop.f32.mrf.mxu0
  %v3677 = vadd.f32 %v3663, %v3676
  %3678 = vdwg.mxu0
  %3679 = vmatpush.bf16.msra.mxu0 %v2681
  %3680 = vmatpush.bf16.msra.mxu0 %v2677
  %3681 = vmatpush.bf16.msra.mxu0 %v2673
  %3682 = vmatpush.bf16.msra.mxu0 %v2669
  %3683 = vmatpush.bf16.msra.mxu0 %v2665
  %3684 = vmatpush.bf16.msra.mxu0 %v2661
  %3685 = vmatpush.bf16.msra.mxu0 %v2657
  %3686 = vmatpush.bf16.msra.mxu0 %v2653
  %3687 = vmatmul.bf16.gmra.mxu0 %v672
  %v3688 = vpop.f32.mrf.mxu0
  %v3689 = vadd.f32 %v3675, %v3688
  %v3690 = vpop.f32.mrf.mxu0
  %v3691 = vadd.f32 %v3677, %v3690
  %3692 = vdwg.mxu0
  %3693 = vmatpush.bf16.msra.mxu0 %v2713
  %3694 = vmatpush.bf16.msra.mxu0 %v2709
  %3695 = vmatpush.bf16.msra.mxu0 %v2705
  %3696 = vmatpush.bf16.msra.mxu0 %v2701
  %3697 = vmatpush.bf16.msra.mxu0 %v2697
  %3698 = vmatpush.bf16.msra.mxu0 %v2693
  %3699 = vmatpush.bf16.msra.mxu0 %v2689
  %3700 = vmatpush.bf16.msra.mxu0 %v2685
  %3701 = vmatmul.bf16.gmra.mxu0 %v673
  %v3702 = vpop.f32.mrf.mxu0
  %v3703 = vadd.f32 %v3689, %v3702
  %v3704 = vpop.f32.mrf.mxu0
  %v3705 = vadd.f32 %v3691, %v3704
  %3706 = vdwg.mxu0
  %3707 = vmatpush.bf16.msra.mxu0 %v2745
  %3708 = vmatpush.bf16.msra.mxu0 %v2741
  %3709 = vmatpush.bf16.msra.mxu0 %v2737
  %3710 = vmatpush.bf16.msra.mxu0 %v2733
  %3711 = vmatpush.bf16.msra.mxu0 %v2729
  %3712 = vmatpush.bf16.msra.mxu0 %v2725
  %3713 = vmatpush.bf16.msra.mxu0 %v2721
  %3714 = vmatpush.bf16.msra.mxu0 %v2717
  %3715 = vmatmul.bf16.gmra.mxu0 %v674
  %v3716 = vpop.f32.mrf.mxu0
  %v3717 = vadd.f32 %v3703, %v3716
  %v3718 = vpop.f32.mrf.mxu0
  %v3719 = vadd.f32 %v3705, %v3718
  %3720 = vdwg.mxu0
  %3721 = vmatpush.bf16.msra.mxu0 %v2777
  %3722 = vmatpush.bf16.msra.mxu0 %v2773
  %3723 = vmatpush.bf16.msra.mxu0 %v2769
  %3724 = vmatpush.bf16.msra.mxu0 %v2765
  %3725 = vmatpush.bf16.msra.mxu0 %v2761
  %3726 = vmatpush.bf16.msra.mxu0 %v2757
  %3727 = vmatpush.bf16.msra.mxu0 %v2753
  %3728 = vmatpush.bf16.msra.mxu0 %v2749
  %3729 = vmatmul.bf16.gmra.mxu0 %v675
  %v3730 = vpop.f32.mrf.mxu0
  %v3731 = vadd.f32 %v3717, %v3730
  %v3732 = vpop.f32.mrf.mxu0
  %v3733 = vadd.f32 %v3719, %v3732
  %3734 = vdwg.mxu0
  %3735 = vmatpush.bf16.msra.mxu0 %v2809
  %3736 = vmatpush.bf16.msra.mxu0 %v2805
  %3737 = vmatpush.bf16.msra.mxu0 %v2801
  %3738 = vmatpush.bf16.msra.mxu0 %v2797
  %3739 = vmatpush.bf16.msra.mxu0 %v2793
  %3740 = vmatpush.bf16.msra.mxu0 %v2789
  %3741 = vmatpush.bf16.msra.mxu0 %v2785
  %3742 = vmatpush.bf16.msra.mxu0 %v2781
  %3743 = vmatmul.bf16.gmra.mxu0 %v676
  %v3744 = vpop.f32.mrf.mxu0
  %v3745 = vadd.f32 %v3731, %v3744
  %v3746 = vpop.f32.mrf.mxu0
  %v3747 = vadd.f32 %v3733, %v3746
  %3748 = vdwg.mxu0
  %3749 = vmatpush.bf16.msra.mxu0 %v2841
  %3750 = vmatpush.bf16.msra.mxu0 %v2837
  %3751 = vmatpush.bf16.msra.mxu0 %v2833
  %3752 = vmatpush.bf16.msra.mxu0 %v2829
  %3753 = vmatpush.bf16.msra.mxu0 %v2825
  %3754 = vmatpush.bf16.msra.mxu0 %v2821
  %3755 = vmatpush.bf16.msra.mxu0 %v2817
  %3756 = vmatpush.bf16.msra.mxu0 %v2813
  %3757 = vmatmul.bf16.gmra.mxu0 %v677
  %v3758 = vpop.f32.mrf.mxu0
  %v3759 = vadd.f32 %v3745, %v3758
  %v3760 = vpop.f32.mrf.mxu0
  %v3761 = vadd.f32 %v3747, %v3760
  %3762 = vdwg.mxu0
  %3763 = vmatpush.bf16.msra.mxu0 %v2873
  %3764 = vmatpush.bf16.msra.mxu0 %v2869
  %3765 = vmatpush.bf16.msra.mxu0 %v2865
  %3766 = vmatpush.bf16.msra.mxu0 %v2861
  %3767 = vmatpush.bf16.msra.mxu0 %v2857
  %3768 = vmatpush.bf16.msra.mxu0 %v2853
  %3769 = vmatpush.bf16.msra.mxu0 %v2849
  %3770 = vmatpush.bf16.msra.mxu0 %v2845
  %3771 = vmatmul.bf16.gmra.mxu0 %v678
  %v3772 = vpop.f32.mrf.mxu0
  %v3773 = vadd.f32 %v3759, %v3772
  %v3774 = vpop.f32.mrf.mxu0
  %v3775 = vadd.f32 %v3761, %v3774
  %3776 = vdwg.mxu0
  %3777 = vmatpush.bf16.msra.mxu0 %v2905
  %3778 = vmatpush.bf16.msra.mxu0 %v2901
  %3779 = vmatpush.bf16.msra.mxu0 %v2897
  %3780 = vmatpush.bf16.msra.mxu0 %v2893
  %3781 = vmatpush.bf16.msra.mxu0 %v2889
  %3782 = vmatpush.bf16.msra.mxu0 %v2885
  %3783 = vmatpush.bf16.msra.mxu0 %v2881
  %3784 = vmatpush.bf16.msra.mxu0 %v2877
  %3785 = vmatmul.bf16.gmra.mxu0 %v679
  %v3786 = vpop.f32.mrf.mxu0
  %v3787 = vadd.f32 %v3773, %v3786
  %v3788 = vpop.f32.mrf.mxu0
  %v3789 = vadd.f32 %v3775, %v3788
  %3790 = vdwg.mxu0
  %3791 = vmatpush.bf16.msra.mxu0 %v2937
  %3792 = vmatpush.bf16.msra.mxu0 %v2933
  %3793 = vmatpush.bf16.msra.mxu0 %v2929
  %3794 = vmatpush.bf16.msra.mxu0 %v2925
  %3795 = vmatpush.bf16.msra.mxu0 %v2921
  %3796 = vmatpush.bf16.msra.mxu0 %v2917
  %3797 = vmatpush.bf16.msra.mxu0 %v2913
  %3798 = vmatpush.bf16.msra.mxu0 %v2909
  %3799 = vmatmul.bf16.gmra.mxu0 %v680
  %v3800 = vpop.f32.mrf.mxu0
  %v3801 = vadd.f32 %v3787, %v3800
  %v3802 = vpop.f32.mrf.mxu0
  %v3803 = vadd.f32 %v3789, %v3802
  %3804 = vdwg.mxu0
  %3805 = vmatpush.bf16.msra.mxu0 %v2969
  %3806 = vmatpush.bf16.msra.mxu0 %v2965
  %3807 = vmatpush.bf16.msra.mxu0 %v2961
  %3808 = vmatpush.bf16.msra.mxu0 %v2957
  %3809 = vmatpush.bf16.msra.mxu0 %v2953
  %3810 = vmatpush.bf16.msra.mxu0 %v2949
  %3811 = vmatpush.bf16.msra.mxu0 %v2945
  %3812 = vmatpush.bf16.msra.mxu0 %v2941
  %3813 = vmatmul.bf16.gmra.mxu0 %v681
  %v3814 = vpop.f32.mrf.mxu0
  %v3815 = vadd.f32 %v3801, %v3814
  %v3816 = vpop.f32.mrf.mxu0
  %v3817 = vadd.f32 %v3803, %v3816
  %3818 = vdwg.mxu0
  %3819 = vmatpush.bf16.msra.mxu0 %v3001
  %3820 = vmatpush.bf16.msra.mxu0 %v2997
  %3821 = vmatpush.bf16.msra.mxu0 %v2993
  %3822 = vmatpush.bf16.msra.mxu0 %v2989
  %3823 = vmatpush.bf16.msra.mxu0 %v2985
  %3824 = vmatpush.bf16.msra.mxu0 %v2981
  %3825 = vmatpush.bf16.msra.mxu0 %v2977
  %3826 = vmatpush.bf16.msra.mxu0 %v2973
  %3827 = vmatmul.bf16.gmra.mxu0 %v682
  %v3828 = vpop.f32.mrf.mxu0
  %v3829 = vadd.f32 %v3815, %v3828
  %v3830 = vpop.f32.mrf.mxu0
  %v3831 = vadd.f32 %v3817, %v3830
  %3832 = vdwg.mxu0
  %3833 = vmatpush.bf16.msra.mxu0 %v2458
  %3834 = vmatpush.bf16.msra.mxu0 %v2454
  %3835 = vmatpush.bf16.msra.mxu0 %v2450
  %3836 = vmatpush.bf16.msra.mxu0 %v2446
  %3837 = vmatpush.bf16.msra.mxu0 %v2442
  %3838 = vmatpush.bf16.msra.mxu0 %v2438
  %3839 = vmatpush.bf16.msra.mxu0 %v2434
  %3840 = vmatpush.bf16.msra.mxu0 %v2430
  %3841 = vmatmul.bf16.gmra.mxu0 %v665
  %v3842 = vpop.f32.mrf.mxu0
  %v3843 = vadd.f32 0.0, %v3842
  %v3844 = vpop.f32.mrf.mxu0
  %v3845 = vadd.f32 0.0, %v3844
  %3846 = vdwg.mxu0
  %3847 = vmatpush.bf16.msra.mxu0 %v2490
  %3848 = vmatpush.bf16.msra.mxu0 %v2486
  %3849 = vmatpush.bf16.msra.mxu0 %v2482
  %3850 = vmatpush.bf16.msra.mxu0 %v2478
  %3851 = vmatpush.bf16.msra.mxu0 %v2474
  %3852 = vmatpush.bf16.msra.mxu0 %v2470
  %3853 = vmatpush.bf16.msra.mxu0 %v2466
  %3854 = vmatpush.bf16.msra.mxu0 %v2462
  %3855 = vmatmul.bf16.gmra.mxu0 %v666
  %v3856 = vpop.f32.mrf.mxu0
  %v3857 = vadd.f32 %v3843, %v3856
  %v3858 = vpop.f32.mrf.mxu0
  %v3859 = vadd.f32 %v3845, %v3858
  %3860 = vdwg.mxu0
  %3861 = vmatpush.bf16.msra.mxu0 %v2522
  %3862 = vmatpush.bf16.msra.mxu0 %v2518
  %3863 = vmatpush.bf16.msra.mxu0 %v2514
  %3864 = vmatpush.bf16.msra.mxu0 %v2510
  %3865 = vmatpush.bf16.msra.mxu0 %v2506
  %3866 = vmatpush.bf16.msra.mxu0 %v2502
  %3867 = vmatpush.bf16.msra.mxu0 %v2498
  %3868 = vmatpush.bf16.msra.mxu0 %v2494
  %3869 = vmatmul.bf16.gmra.mxu0 %v667
  %v3870 = vpop.f32.mrf.mxu0
  %v3871 = vadd.f32 %v3857, %v3870
  %v3872 = vpop.f32.mrf.mxu0
  %v3873 = vadd.f32 %v3859, %v3872
  %3874 = vdwg.mxu0
  %3875 = vmatpush.bf16.msra.mxu0 %v2554
  %3876 = vmatpush.bf16.msra.mxu0 %v2550
  %3877 = vmatpush.bf16.msra.mxu0 %v2546
  %3878 = vmatpush.bf16.msra.mxu0 %v2542
  %3879 = vmatpush.bf16.msra.mxu0 %v2538
  %3880 = vmatpush.bf16.msra.mxu0 %v2534
  %3881 = vmatpush.bf16.msra.mxu0 %v2530
  %3882 = vmatpush.bf16.msra.mxu0 %v2526
  %3883 = vmatmul.bf16.gmra.mxu0 %v668
  %v3884 = vpop.f32.mrf.mxu0
  %v3885 = vadd.f32 %v3871, %v3884
  %v3886 = vpop.f32.mrf.mxu0
  %v3887 = vadd.f32 %v3873, %v3886
  %3888 = vdwg.mxu0
  %3889 = vmatpush.bf16.msra.mxu0 %v2586
  %3890 = vmatpush.bf16.msra.mxu0 %v2582
  %3891 = vmatpush.bf16.msra.mxu0 %v2578
  %3892 = vmatpush.bf16.msra.mxu0 %v2574
  %3893 = vmatpush.bf16.msra.mxu0 %v2570
  %3894 = vmatpush.bf16.msra.mxu0 %v2566
  %3895 = vmatpush.bf16.msra.mxu0 %v2562
  %3896 = vmatpush.bf16.msra.mxu0 %v2558
  %3897 = vmatmul.bf16.gmra.mxu0 %v669
  %v3898 = vpop.f32.mrf.mxu0
  %v3899 = vadd.f32 %v3885, %v3898
  %v3900 = vpop.f32.mrf.mxu0
  %v3901 = vadd.f32 %v3887, %v3900
  %3902 = vdwg.mxu0
  %3903 = vmatpush.bf16.msra.mxu0 %v2618
  %3904 = vmatpush.bf16.msra.mxu0 %v2614
  %3905 = vmatpush.bf16.msra.mxu0 %v2610
  %3906 = vmatpush.bf16.msra.mxu0 %v2606
  %3907 = vmatpush.bf16.msra.mxu0 %v2602
  %3908 = vmatpush.bf16.msra.mxu0 %v2598
  %3909 = vmatpush.bf16.msra.mxu0 %v2594
  %3910 = vmatpush.bf16.msra.mxu0 %v2590
  %3911 = vmatmul.bf16.gmra.mxu0 %v670
  %v3912 = vpop.f32.mrf.mxu0
  %v3913 = vadd.f32 %v3899, %v3912
  %v3914 = vpop.f32.mrf.mxu0
  %v3915 = vadd.f32 %v3901, %v3914
  %3916 = vdwg.mxu0
  %3917 = vmatpush.bf16.msra.mxu0 %v2650
  %3918 = vmatpush.bf16.msra.mxu0 %v2646
  %3919 = vmatpush.bf16.msra.mxu0 %v2642
  %3920 = vmatpush.bf16.msra.mxu0 %v2638
  %3921 = vmatpush.bf16.msra.mxu0 %v2634
  %3922 = vmatpush.bf16.msra.mxu0 %v2630
  %3923 = vmatpush.bf16.msra.mxu0 %v2626
  %3924 = vmatpush.bf16.msra.mxu0 %v2622
  %3925 = vmatmul.bf16.gmra.mxu0 %v671
  %v3926 = vpop.f32.mrf.mxu0
  %v3927 = vadd.f32 %v3913, %v3926
  %v3928 = vpop.f32.mrf.mxu0
  %v3929 = vadd.f32 %v3915, %v3928
  %3930 = vdwg.mxu0
  %3931 = vmatpush.bf16.msra.mxu0 %v2682
  %3932 = vmatpush.bf16.msra.mxu0 %v2678
  %3933 = vmatpush.bf16.msra.mxu0 %v2674
  %3934 = vmatpush.bf16.msra.mxu0 %v2670
  %3935 = vmatpush.bf16.msra.mxu0 %v2666
  %3936 = vmatpush.bf16.msra.mxu0 %v2662
  %3937 = vmatpush.bf16.msra.mxu0 %v2658
  %3938 = vmatpush.bf16.msra.mxu0 %v2654
  %3939 = vmatmul.bf16.gmra.mxu0 %v672
  %v3940 = vpop.f32.mrf.mxu0
  %v3941 = vadd.f32 %v3927, %v3940
  %v3942 = vpop.f32.mrf.mxu0
  %v3943 = vadd.f32 %v3929, %v3942
  %3944 = vdwg.mxu0
  %3945 = vmatpush.bf16.msra.mxu0 %v2714
  %3946 = vmatpush.bf16.msra.mxu0 %v2710
  %3947 = vmatpush.bf16.msra.mxu0 %v2706
  %3948 = vmatpush.bf16.msra.mxu0 %v2702
  %3949 = vmatpush.bf16.msra.mxu0 %v2698
  %3950 = vmatpush.bf16.msra.mxu0 %v2694
  %3951 = vmatpush.bf16.msra.mxu0 %v2690
  %3952 = vmatpush.bf16.msra.mxu0 %v2686
  %3953 = vmatmul.bf16.gmra.mxu0 %v673
  %v3954 = vpop.f32.mrf.mxu0
  %v3955 = vadd.f32 %v3941, %v3954
  %v3956 = vpop.f32.mrf.mxu0
  %v3957 = vadd.f32 %v3943, %v3956
  %3958 = vdwg.mxu0
  %3959 = vmatpush.bf16.msra.mxu0 %v2746
  %3960 = vmatpush.bf16.msra.mxu0 %v2742
  %3961 = vmatpush.bf16.msra.mxu0 %v2738
  %3962 = vmatpush.bf16.msra.mxu0 %v2734
  %3963 = vmatpush.bf16.msra.mxu0 %v2730
  %3964 = vmatpush.bf16.msra.mxu0 %v2726
  %3965 = vmatpush.bf16.msra.mxu0 %v2722
  %3966 = vmatpush.bf16.msra.mxu0 %v2718
  %3967 = vmatmul.bf16.gmra.mxu0 %v674
  %v3968 = vpop.f32.mrf.mxu0
  %v3969 = vadd.f32 %v3955, %v3968
  %v3970 = vpop.f32.mrf.mxu0
  %v3971 = vadd.f32 %v3957, %v3970
  %3972 = vdwg.mxu0
  %3973 = vmatpush.bf16.msra.mxu0 %v2778
  %3974 = vmatpush.bf16.msra.mxu0 %v2774
  %3975 = vmatpush.bf16.msra.mxu0 %v2770
  %3976 = vmatpush.bf16.msra.mxu0 %v2766
  %3977 = vmatpush.bf16.msra.mxu0 %v2762
  %3978 = vmatpush.bf16.msra.mxu0 %v2758
  %3979 = vmatpush.bf16.msra.mxu0 %v2754
  %3980 = vmatpush.bf16.msra.mxu0 %v2750
  %3981 = vmatmul.bf16.gmra.mxu0 %v675
  %v3982 = vpop.f32.mrf.mxu0
  %v3983 = vadd.f32 %v3969, %v3982
  %v3984 = vpop.f32.mrf.mxu0
  %v3985 = vadd.f32 %v3971, %v3984
  %3986 = vdwg.mxu0
  %3987 = vmatpush.bf16.msra.mxu0 %v2810
  %3988 = vmatpush.bf16.msra.mxu0 %v2806
  %3989 = vmatpush.bf16.msra.mxu0 %v2802
  %3990 = vmatpush.bf16.msra.mxu0 %v2798
  %3991 = vmatpush.bf16.msra.mxu0 %v2794
  %3992 = vmatpush.bf16.msra.mxu0 %v2790
  %3993 = vmatpush.bf16.msra.mxu0 %v2786
  %3994 = vmatpush.bf16.msra.mxu0 %v2782
  %3995 = vmatmul.bf16.gmra.mxu0 %v676
  %v3996 = vpop.f32.mrf.mxu0
  %v3997 = vadd.f32 %v3983, %v3996
  %v3998 = vpop.f32.mrf.mxu0
  %v3999 = vadd.f32 %v3985, %v3998
  %4000 = vdwg.mxu0
  %4001 = vmatpush.bf16.msra.mxu0 %v2842
  %4002 = vmatpush.bf16.msra.mxu0 %v2838
  %4003 = vmatpush.bf16.msra.mxu0 %v2834
  %4004 = vmatpush.bf16.msra.mxu0 %v2830
  %4005 = vmatpush.bf16.msra.mxu0 %v2826
  %4006 = vmatpush.bf16.msra.mxu0 %v2822
  %4007 = vmatpush.bf16.msra.mxu0 %v2818
  %4008 = vmatpush.bf16.msra.mxu0 %v2814
  %4009 = vmatmul.bf16.gmra.mxu0 %v677
  %v4010 = vpop.f32.mrf.mxu0
  %v4011 = vadd.f32 %v3997, %v4010
  %v4012 = vpop.f32.mrf.mxu0
  %v4013 = vadd.f32 %v3999, %v4012
  %4014 = vdwg.mxu0
  %4015 = vmatpush.bf16.msra.mxu0 %v2874
  %4016 = vmatpush.bf16.msra.mxu0 %v2870
  %4017 = vmatpush.bf16.msra.mxu0 %v2866
  %4018 = vmatpush.bf16.msra.mxu0 %v2862
  %4019 = vmatpush.bf16.msra.mxu0 %v2858
  %4020 = vmatpush.bf16.msra.mxu0 %v2854
  %4021 = vmatpush.bf16.msra.mxu0 %v2850
  %4022 = vmatpush.bf16.msra.mxu0 %v2846
  %4023 = vmatmul.bf16.gmra.mxu0 %v678
  %v4024 = vpop.f32.mrf.mxu0
  %v4025 = vadd.f32 %v4011, %v4024
  %v4026 = vpop.f32.mrf.mxu0
  %v4027 = vadd.f32 %v4013, %v4026
  %4028 = vdwg.mxu0
  %4029 = vmatpush.bf16.msra.mxu0 %v2906
  %4030 = vmatpush.bf16.msra.mxu0 %v2902
  %4031 = vmatpush.bf16.msra.mxu0 %v2898
  %4032 = vmatpush.bf16.msra.mxu0 %v2894
  %4033 = vmatpush.bf16.msra.mxu0 %v2890
  %4034 = vmatpush.bf16.msra.mxu0 %v2886
  %4035 = vmatpush.bf16.msra.mxu0 %v2882
  %4036 = vmatpush.bf16.msra.mxu0 %v2878
  %4037 = vmatmul.bf16.gmra.mxu0 %v679
  %v4038 = vpop.f32.mrf.mxu0
  %v4039 = vadd.f32 %v4025, %v4038
  %v4040 = vpop.f32.mrf.mxu0
  %v4041 = vadd.f32 %v4027, %v4040
  %4042 = vdwg.mxu0
  %4043 = vmatpush.bf16.msra.mxu0 %v2938
  %4044 = vmatpush.bf16.msra.mxu0 %v2934
  %4045 = vmatpush.bf16.msra.mxu0 %v2930
  %4046 = vmatpush.bf16.msra.mxu0 %v2926
  %4047 = vmatpush.bf16.msra.mxu0 %v2922
  %4048 = vmatpush.bf16.msra.mxu0 %v2918
  %4049 = vmatpush.bf16.msra.mxu0 %v2914
  %4050 = vmatpush.bf16.msra.mxu0 %v2910
  %4051 = vmatmul.bf16.gmra.mxu0 %v680
  %v4052 = vpop.f32.mrf.mxu0
  %v4053 = vadd.f32 %v4039, %v4052
  %v4054 = vpop.f32.mrf.mxu0
  %v4055 = vadd.f32 %v4041, %v4054
  %4056 = vdwg.mxu0
  %4057 = vmatpush.bf16.msra.mxu0 %v2970
  %4058 = vmatpush.bf16.msra.mxu0 %v2966
  %4059 = vmatpush.bf16.msra.mxu0 %v2962
  %4060 = vmatpush.bf16.msra.mxu0 %v2958
  %4061 = vmatpush.bf16.msra.mxu0 %v2954
  %4062 = vmatpush.bf16.msra.mxu0 %v2950
  %4063 = vmatpush.bf16.msra.mxu0 %v2946
  %4064 = vmatpush.bf16.msra.mxu0 %v2942
  %4065 = vmatmul.bf16.gmra.mxu0 %v681
  %v4066 = vpop.f32.mrf.mxu0
  %v4067 = vadd.f32 %v4053, %v4066
  %v4068 = vpop.f32.mrf.mxu0
  %v4069 = vadd.f32 %v4055, %v4068
  %4070 = vdwg.mxu0
  %4071 = vmatpush.bf16.msra.mxu0 %v3002
  %4072 = vmatpush.bf16.msra.mxu0 %v2998
  %4073 = vmatpush.bf16.msra.mxu0 %v2994
  %4074 = vmatpush.bf16.msra.mxu0 %v2990
  %4075 = vmatpush.bf16.msra.mxu0 %v2986
  %4076 = vmatpush.bf16.msra.mxu0 %v2982
  %4077 = vmatpush.bf16.msra.mxu0 %v2978
  %4078 = vmatpush.bf16.msra.mxu0 %v2974
  %4079 = vmatmul.bf16.gmra.mxu0 %v682
  %v4080 = vpop.f32.mrf.mxu0
  %v4081 = vadd.f32 %v4067, %v4080
  %v4082 = vpop.f32.mrf.mxu0
  %v4083 = vadd.f32 %v4069, %v4082
  %4084 = vdwg.mxu0
  %4085 = vmatpush.bf16.msra.mxu0 %v2459
  %4086 = vmatpush.bf16.msra.mxu0 %v2455
  %4087 = vmatpush.bf16.msra.mxu0 %v2451
  %4088 = vmatpush.bf16.msra.mxu0 %v2447
  %4089 = vmatpush.bf16.msra.mxu0 %v2443
  %4090 = vmatpush.bf16.msra.mxu0 %v2439
  %4091 = vmatpush.bf16.msra.mxu0 %v2435
  %4092 = vmatpush.bf16.msra.mxu0 %v2431
  %4093 = vmatmul.bf16.gmra.mxu0 %v665
  %v4094 = vpop.f32.mrf.mxu0
  %v4095 = vadd.f32 0.0, %v4094
  %v4096 = vpop.f32.mrf.mxu0
  %v4097 = vadd.f32 0.0, %v4096
  %4098 = vdwg.mxu0
  %4099 = vmatpush.bf16.msra.mxu0 %v2491
  %4100 = vmatpush.bf16.msra.mxu0 %v2487
  %4101 = vmatpush.bf16.msra.mxu0 %v2483
  %4102 = vmatpush.bf16.msra.mxu0 %v2479
  %4103 = vmatpush.bf16.msra.mxu0 %v2475
  %4104 = vmatpush.bf16.msra.mxu0 %v2471
  %4105 = vmatpush.bf16.msra.mxu0 %v2467
  %4106 = vmatpush.bf16.msra.mxu0 %v2463
  %4107 = vmatmul.bf16.gmra.mxu0 %v666
  %v4108 = vpop.f32.mrf.mxu0
  %v4109 = vadd.f32 %v4095, %v4108
  %v4110 = vpop.f32.mrf.mxu0
  %v4111 = vadd.f32 %v4097, %v4110
  %4112 = vdwg.mxu0
  %4113 = vmatpush.bf16.msra.mxu0 %v2523
  %4114 = vmatpush.bf16.msra.mxu0 %v2519
  %4115 = vmatpush.bf16.msra.mxu0 %v2515
  %4116 = vmatpush.bf16.msra.mxu0 %v2511
  %4117 = vmatpush.bf16.msra.mxu0 %v2507
  %4118 = vmatpush.bf16.msra.mxu0 %v2503
  %4119 = vmatpush.bf16.msra.mxu0 %v2499
  %4120 = vmatpush.bf16.msra.mxu0 %v2495
  %4121 = vmatmul.bf16.gmra.mxu0 %v667
  %v4122 = vpop.f32.mrf.mxu0
  %v4123 = vadd.f32 %v4109, %v4122
  %v4124 = vpop.f32.mrf.mxu0
  %v4125 = vadd.f32 %v4111, %v4124
  %4126 = vdwg.mxu0
  %4127 = vmatpush.bf16.msra.mxu0 %v2555
  %4128 = vmatpush.bf16.msra.mxu0 %v2551
  %4129 = vmatpush.bf16.msra.mxu0 %v2547
  %4130 = vmatpush.bf16.msra.mxu0 %v2543
  %4131 = vmatpush.bf16.msra.mxu0 %v2539
  %4132 = vmatpush.bf16.msra.mxu0 %v2535
  %4133 = vmatpush.bf16.msra.mxu0 %v2531
  %4134 = vmatpush.bf16.msra.mxu0 %v2527
  %4135 = vmatmul.bf16.gmra.mxu0 %v668
  %v4136 = vpop.f32.mrf.mxu0
  %v4137 = vadd.f32 %v4123, %v4136
  %v4138 = vpop.f32.mrf.mxu0
  %v4139 = vadd.f32 %v4125, %v4138
  %4140 = vdwg.mxu0
  %4141 = vmatpush.bf16.msra.mxu0 %v2587
  %4142 = vmatpush.bf16.msra.mxu0 %v2583
  %4143 = vmatpush.bf16.msra.mxu0 %v2579
  %4144 = vmatpush.bf16.msra.mxu0 %v2575
  %4145 = vmatpush.bf16.msra.mxu0 %v2571
  %4146 = vmatpush.bf16.msra.mxu0 %v2567
  %4147 = vmatpush.bf16.msra.mxu0 %v2563
  %4148 = vmatpush.bf16.msra.mxu0 %v2559
  %4149 = vmatmul.bf16.gmra.mxu0 %v669
  %v4150 = vpop.f32.mrf.mxu0
  %v4151 = vadd.f32 %v4137, %v4150
  %v4152 = vpop.f32.mrf.mxu0
  %v4153 = vadd.f32 %v4139, %v4152
  %4154 = vdwg.mxu0
  %4155 = vmatpush.bf16.msra.mxu0 %v2619
  %4156 = vmatpush.bf16.msra.mxu0 %v2615
  %4157 = vmatpush.bf16.msra.mxu0 %v2611
  %4158 = vmatpush.bf16.msra.mxu0 %v2607
  %4159 = vmatpush.bf16.msra.mxu0 %v2603
  %4160 = vmatpush.bf16.msra.mxu0 %v2599
  %4161 = vmatpush.bf16.msra.mxu0 %v2595
  %4162 = vmatpush.bf16.msra.mxu0 %v2591
  %4163 = vmatmul.bf16.gmra.mxu0 %v670
  %v4164 = vpop.f32.mrf.mxu0
  %v4165 = vadd.f32 %v4151, %v4164
  %v4166 = vpop.f32.mrf.mxu0
  %v4167 = vadd.f32 %v4153, %v4166
  %4168 = vdwg.mxu0
  %4169 = vmatpush.bf16.msra.mxu0 %v2651
  %4170 = vmatpush.bf16.msra.mxu0 %v2647
  %4171 = vmatpush.bf16.msra.mxu0 %v2643
  %4172 = vmatpush.bf16.msra.mxu0 %v2639
  %4173 = vmatpush.bf16.msra.mxu0 %v2635
  %4174 = vmatpush.bf16.msra.mxu0 %v2631
  %4175 = vmatpush.bf16.msra.mxu0 %v2627
  %4176 = vmatpush.bf16.msra.mxu0 %v2623
  %4177 = vmatmul.bf16.gmra.mxu0 %v671
  %v4178 = vpop.f32.mrf.mxu0
  %v4179 = vadd.f32 %v4165, %v4178
  %v4180 = vpop.f32.mrf.mxu0
  %v4181 = vadd.f32 %v4167, %v4180
  %4182 = vdwg.mxu0
  %4183 = vmatpush.bf16.msra.mxu0 %v2683
  %4184 = vmatpush.bf16.msra.mxu0 %v2679
  %4185 = vmatpush.bf16.msra.mxu0 %v2675
  %4186 = vmatpush.bf16.msra.mxu0 %v2671
  %4187 = vmatpush.bf16.msra.mxu0 %v2667
  %4188 = vmatpush.bf16.msra.mxu0 %v2663
  %4189 = vmatpush.bf16.msra.mxu0 %v2659
  %4190 = vmatpush.bf16.msra.mxu0 %v2655
  %4191 = vmatmul.bf16.gmra.mxu0 %v672
  %v4192 = vpop.f32.mrf.mxu0
  %v4193 = vadd.f32 %v4179, %v4192
  %v4194 = vpop.f32.mrf.mxu0
  %v4195 = vadd.f32 %v4181, %v4194
  %4196 = vdwg.mxu0
  %4197 = vmatpush.bf16.msra.mxu0 %v2715
  %4198 = vmatpush.bf16.msra.mxu0 %v2711
  %4199 = vmatpush.bf16.msra.mxu0 %v2707
  %4200 = vmatpush.bf16.msra.mxu0 %v2703
  %4201 = vmatpush.bf16.msra.mxu0 %v2699
  %4202 = vmatpush.bf16.msra.mxu0 %v2695
  %4203 = vmatpush.bf16.msra.mxu0 %v2691
  %4204 = vmatpush.bf16.msra.mxu0 %v2687
  %4205 = vmatmul.bf16.gmra.mxu0 %v673
  %v4206 = vpop.f32.mrf.mxu0
  %v4207 = vadd.f32 %v4193, %v4206
  %v4208 = vpop.f32.mrf.mxu0
  %v4209 = vadd.f32 %v4195, %v4208
  %4210 = vdwg.mxu0
  %4211 = vmatpush.bf16.msra.mxu0 %v2747
  %4212 = vmatpush.bf16.msra.mxu0 %v2743
  %4213 = vmatpush.bf16.msra.mxu0 %v2739
  %4214 = vmatpush.bf16.msra.mxu0 %v2735
  %4215 = vmatpush.bf16.msra.mxu0 %v2731
  %4216 = vmatpush.bf16.msra.mxu0 %v2727
  %4217 = vmatpush.bf16.msra.mxu0 %v2723
  %4218 = vmatpush.bf16.msra.mxu0 %v2719
  %4219 = vmatmul.bf16.gmra.mxu0 %v674
  %v4220 = vpop.f32.mrf.mxu0
  %v4221 = vadd.f32 %v4207, %v4220
  %v4222 = vpop.f32.mrf.mxu0
  %v4223 = vadd.f32 %v4209, %v4222
  %4224 = vdwg.mxu0
  %4225 = vmatpush.bf16.msra.mxu0 %v2779
  %4226 = vmatpush.bf16.msra.mxu0 %v2775
  %4227 = vmatpush.bf16.msra.mxu0 %v2771
  %4228 = vmatpush.bf16.msra.mxu0 %v2767
  %4229 = vmatpush.bf16.msra.mxu0 %v2763
  %4230 = vmatpush.bf16.msra.mxu0 %v2759
  %4231 = vmatpush.bf16.msra.mxu0 %v2755
  %4232 = vmatpush.bf16.msra.mxu0 %v2751
  %4233 = vmatmul.bf16.gmra.mxu0 %v675
  %v4234 = vpop.f32.mrf.mxu0
  %v4235 = vadd.f32 %v4221, %v4234
  %v4236 = vpop.f32.mrf.mxu0
  %v4237 = vadd.f32 %v4223, %v4236
  %4238 = vdwg.mxu0
  %4239 = vmatpush.bf16.msra.mxu0 %v2811
  %4240 = vmatpush.bf16.msra.mxu0 %v2807
  %4241 = vmatpush.bf16.msra.mxu0 %v2803
  %4242 = vmatpush.bf16.msra.mxu0 %v2799
  %4243 = vmatpush.bf16.msra.mxu0 %v2795
  %4244 = vmatpush.bf16.msra.mxu0 %v2791
  %4245 = vmatpush.bf16.msra.mxu0 %v2787
  %4246 = vmatpush.bf16.msra.mxu0 %v2783
  %4247 = vmatmul.bf16.gmra.mxu0 %v676
  %v4248 = vpop.f32.mrf.mxu0
  %v4249 = vadd.f32 %v4235, %v4248
  %v4250 = vpop.f32.mrf.mxu0
  %v4251 = vadd.f32 %v4237, %v4250
  %4252 = vdwg.mxu0
  %4253 = vmatpush.bf16.msra.mxu0 %v2843
  %4254 = vmatpush.bf16.msra.mxu0 %v2839
  %4255 = vmatpush.bf16.msra.mxu0 %v2835
  %4256 = vmatpush.bf16.msra.mxu0 %v2831
  %4257 = vmatpush.bf16.msra.mxu0 %v2827
  %4258 = vmatpush.bf16.msra.mxu0 %v2823
  %4259 = vmatpush.bf16.msra.mxu0 %v2819
  %4260 = vmatpush.bf16.msra.mxu0 %v2815
  %4261 = vmatmul.bf16.gmra.mxu0 %v677
  %v4262 = vpop.f32.mrf.mxu0
  %v4263 = vadd.f32 %v4249, %v4262
  %v4264 = vpop.f32.mrf.mxu0
  %v4265 = vadd.f32 %v4251, %v4264
  %4266 = vdwg.mxu0
  %4267 = vmatpush.bf16.msra.mxu0 %v2875
  %4268 = vmatpush.bf16.msra.mxu0 %v2871
  %4269 = vmatpush.bf16.msra.mxu0 %v2867
  %4270 = vmatpush.bf16.msra.mxu0 %v2863
  %4271 = vmatpush.bf16.msra.mxu0 %v2859
  %4272 = vmatpush.bf16.msra.mxu0 %v2855
  %4273 = vmatpush.bf16.msra.mxu0 %v2851
  %4274 = vmatpush.bf16.msra.mxu0 %v2847
  %4275 = vmatmul.bf16.gmra.mxu0 %v678
  %v4276 = vpop.f32.mrf.mxu0
  %v4277 = vadd.f32 %v4263, %v4276
  %v4278 = vpop.f32.mrf.mxu0
  %v4279 = vadd.f32 %v4265, %v4278
  %4280 = vdwg.mxu0
  %4281 = vmatpush.bf16.msra.mxu0 %v2907
  %4282 = vmatpush.bf16.msra.mxu0 %v2903
  %4283 = vmatpush.bf16.msra.mxu0 %v2899
  %4284 = vmatpush.bf16.msra.mxu0 %v2895
  %4285 = vmatpush.bf16.msra.mxu0 %v2891
  %4286 = vmatpush.bf16.msra.mxu0 %v2887
  %4287 = vmatpush.bf16.msra.mxu0 %v2883
  %4288 = vmatpush.bf16.msra.mxu0 %v2879
  %4289 = vmatmul.bf16.gmra.mxu0 %v679
  %v4290 = vpop.f32.mrf.mxu0
  %v4291 = vadd.f32 %v4277, %v4290
  %v4292 = vpop.f32.mrf.mxu0
  %v4293 = vadd.f32 %v4279, %v4292
  %4294 = vdwg.mxu0
  %4295 = vmatpush.bf16.msra.mxu0 %v2939
  %4296 = vmatpush.bf16.msra.mxu0 %v2935
  %4297 = vmatpush.bf16.msra.mxu0 %v2931
  %4298 = vmatpush.bf16.msra.mxu0 %v2927
  %4299 = vmatpush.bf16.msra.mxu0 %v2923
  %4300 = vmatpush.bf16.msra.mxu0 %v2919
  %4301 = vmatpush.bf16.msra.mxu0 %v2915
  %4302 = vmatpush.bf16.msra.mxu0 %v2911
  %4303 = vmatmul.bf16.gmra.mxu0 %v680
  %v4304 = vpop.f32.mrf.mxu0
  %v4305 = vadd.f32 %v4291, %v4304
  %v4306 = vpop.f32.mrf.mxu0
  %v4307 = vadd.f32 %v4293, %v4306
  %4308 = vdwg.mxu0
  %4309 = vmatpush.bf16.msra.mxu0 %v2971
  %4310 = vmatpush.bf16.msra.mxu0 %v2967
  %4311 = vmatpush.bf16.msra.mxu0 %v2963
  %4312 = vmatpush.bf16.msra.mxu0 %v2959
  %4313 = vmatpush.bf16.msra.mxu0 %v2955
  %4314 = vmatpush.bf16.msra.mxu0 %v2951
  %4315 = vmatpush.bf16.msra.mxu0 %v2947
  %4316 = vmatpush.bf16.msra.mxu0 %v2943
  %4317 = vmatmul.bf16.gmra.mxu0 %v681
  %v4318 = vpop.f32.mrf.mxu0
  %v4319 = vadd.f32 %v4305, %v4318
  %v4320 = vpop.f32.mrf.mxu0
  %v4321 = vadd.f32 %v4307, %v4320
  %4322 = vdwg.mxu0
  %4323 = vmatpush.bf16.msra.mxu0 %v3003
  %4324 = vmatpush.bf16.msra.mxu0 %v2999
  %4325 = vmatpush.bf16.msra.mxu0 %v2995
  %4326 = vmatpush.bf16.msra.mxu0 %v2991
  %4327 = vmatpush.bf16.msra.mxu0 %v2987
  %4328 = vmatpush.bf16.msra.mxu0 %v2983
  %4329 = vmatpush.bf16.msra.mxu0 %v2979
  %4330 = vmatpush.bf16.msra.mxu0 %v2975
  %4331 = vmatmul.bf16.gmra.mxu0 %v682
  %v4332 = vpop.f32.mrf.mxu0
  %v4333 = vadd.f32 %v4319, %v4332
  %v4334 = vpop.f32.mrf.mxu0
  %v4335 = vadd.f32 %v4321, %v4334
  %4336 = vdwg.mxu0
  %4337 = vmatpush.bf16.msra.mxu0 %v2460
  %4338 = vmatpush.bf16.msra.mxu0 %v2456
  %4339 = vmatpush.bf16.msra.mxu0 %v2452
  %4340 = vmatpush.bf16.msra.mxu0 %v2448
  %4341 = vmatpush.bf16.msra.mxu0 %v2444
  %4342 = vmatpush.bf16.msra.mxu0 %v2440
  %4343 = vmatpush.bf16.msra.mxu0 %v2436
  %4344 = vmatpush.bf16.msra.mxu0 %v2432
  %4345 = vmatmul.bf16.gmra.mxu0 %v665
  %v4346 = vpop.f32.mrf.mxu0
  %v4347 = vadd.f32 0.0, %v4346
  %v4348 = vpop.f32.mrf.mxu0
  %v4349 = vadd.f32 0.0, %v4348
  %4350 = vdwg.mxu0
  %4351 = vmatpush.bf16.msra.mxu0 %v2492
  %4352 = vmatpush.bf16.msra.mxu0 %v2488
  %4353 = vmatpush.bf16.msra.mxu0 %v2484
  %4354 = vmatpush.bf16.msra.mxu0 %v2480
  %4355 = vmatpush.bf16.msra.mxu0 %v2476
  %4356 = vmatpush.bf16.msra.mxu0 %v2472
  %4357 = vmatpush.bf16.msra.mxu0 %v2468
  %4358 = vmatpush.bf16.msra.mxu0 %v2464
  %4359 = vmatmul.bf16.gmra.mxu0 %v666
  %v4360 = vpop.f32.mrf.mxu0
  %v4361 = vadd.f32 %v4347, %v4360
  %v4362 = vpop.f32.mrf.mxu0
  %v4363 = vadd.f32 %v4349, %v4362
  %4364 = vdwg.mxu0
  %4365 = vmatpush.bf16.msra.mxu0 %v2524
  %4366 = vmatpush.bf16.msra.mxu0 %v2520
  %4367 = vmatpush.bf16.msra.mxu0 %v2516
  %4368 = vmatpush.bf16.msra.mxu0 %v2512
  %4369 = vmatpush.bf16.msra.mxu0 %v2508
  %4370 = vmatpush.bf16.msra.mxu0 %v2504
  %4371 = vmatpush.bf16.msra.mxu0 %v2500
  %4372 = vmatpush.bf16.msra.mxu0 %v2496
  %4373 = vmatmul.bf16.gmra.mxu0 %v667
  %v4374 = vpop.f32.mrf.mxu0
  %v4375 = vadd.f32 %v4361, %v4374
  %v4376 = vpop.f32.mrf.mxu0
  %v4377 = vadd.f32 %v4363, %v4376
  %4378 = vdwg.mxu0
  %4379 = vmatpush.bf16.msra.mxu0 %v2556
  %4380 = vmatpush.bf16.msra.mxu0 %v2552
  %4381 = vmatpush.bf16.msra.mxu0 %v2548
  %4382 = vmatpush.bf16.msra.mxu0 %v2544
  %4383 = vmatpush.bf16.msra.mxu0 %v2540
  %4384 = vmatpush.bf16.msra.mxu0 %v2536
  %4385 = vmatpush.bf16.msra.mxu0 %v2532
  %4386 = vmatpush.bf16.msra.mxu0 %v2528
  %4387 = vmatmul.bf16.gmra.mxu0 %v668
  %v4388 = vpop.f32.mrf.mxu0
  %v4389 = vadd.f32 %v4375, %v4388
  %v4390 = vpop.f32.mrf.mxu0
  %v4391 = vadd.f32 %v4377, %v4390
  %4392 = vdwg.mxu0
  %4393 = vmatpush.bf16.msra.mxu0 %v2588
  %4394 = vmatpush.bf16.msra.mxu0 %v2584
  %4395 = vmatpush.bf16.msra.mxu0 %v2580
  %4396 = vmatpush.bf16.msra.mxu0 %v2576
  %4397 = vmatpush.bf16.msra.mxu0 %v2572
  %4398 = vmatpush.bf16.msra.mxu0 %v2568
  %4399 = vmatpush.bf16.msra.mxu0 %v2564
  %4400 = vmatpush.bf16.msra.mxu0 %v2560
  %4401 = vmatmul.bf16.gmra.mxu0 %v669
  %v4402 = vpop.f32.mrf.mxu0
  %v4403 = vadd.f32 %v4389, %v4402
  %v4404 = vpop.f32.mrf.mxu0
  %v4405 = vadd.f32 %v4391, %v4404
  %4406 = vdwg.mxu0
  %4407 = vmatpush.bf16.msra.mxu0 %v2620
  %4408 = vmatpush.bf16.msra.mxu0 %v2616
  %4409 = vmatpush.bf16.msra.mxu0 %v2612
  %4410 = vmatpush.bf16.msra.mxu0 %v2608
  %4411 = vmatpush.bf16.msra.mxu0 %v2604
  %4412 = vmatpush.bf16.msra.mxu0 %v2600
  %4413 = vmatpush.bf16.msra.mxu0 %v2596
  %4414 = vmatpush.bf16.msra.mxu0 %v2592
  %4415 = vmatmul.bf16.gmra.mxu0 %v670
  %v4416 = vpop.f32.mrf.mxu0
  %v4417 = vadd.f32 %v4403, %v4416
  %v4418 = vpop.f32.mrf.mxu0
  %v4419 = vadd.f32 %v4405, %v4418
  %4420 = vdwg.mxu0
  %4421 = vmatpush.bf16.msra.mxu0 %v2652
  %4422 = vmatpush.bf16.msra.mxu0 %v2648
  %4423 = vmatpush.bf16.msra.mxu0 %v2644
  %4424 = vmatpush.bf16.msra.mxu0 %v2640
  %4425 = vmatpush.bf16.msra.mxu0 %v2636
  %4426 = vmatpush.bf16.msra.mxu0 %v2632
  %4427 = vmatpush.bf16.msra.mxu0 %v2628
  %4428 = vmatpush.bf16.msra.mxu0 %v2624
  %4429 = vmatmul.bf16.gmra.mxu0 %v671
  %v4430 = vpop.f32.mrf.mxu0
  %v4431 = vadd.f32 %v4417, %v4430
  %v4432 = vpop.f32.mrf.mxu0
  %v4433 = vadd.f32 %v4419, %v4432
  %4434 = vdwg.mxu0
  %4435 = vmatpush.bf16.msra.mxu0 %v2684
  %4436 = vmatpush.bf16.msra.mxu0 %v2680
  %4437 = vmatpush.bf16.msra.mxu0 %v2676
  %4438 = vmatpush.bf16.msra.mxu0 %v2672
  %4439 = vmatpush.bf16.msra.mxu0 %v2668
  %4440 = vmatpush.bf16.msra.mxu0 %v2664
  %4441 = vmatpush.bf16.msra.mxu0 %v2660
  %4442 = vmatpush.bf16.msra.mxu0 %v2656
  %4443 = vmatmul.bf16.gmra.mxu0 %v672
  %v4444 = vpop.f32.mrf.mxu0
  %v4445 = vadd.f32 %v4431, %v4444
  %v4446 = vpop.f32.mrf.mxu0
  %v4447 = vadd.f32 %v4433, %v4446
  %4448 = vdwg.mxu0
  %4449 = vmatpush.bf16.msra.mxu0 %v2716
  %4450 = vmatpush.bf16.msra.mxu0 %v2712
  %4451 = vmatpush.bf16.msra.mxu0 %v2708
  %4452 = vmatpush.bf16.msra.mxu0 %v2704
  %4453 = vmatpush.bf16.msra.mxu0 %v2700
  %4454 = vmatpush.bf16.msra.mxu0 %v2696
  %4455 = vmatpush.bf16.msra.mxu0 %v2692
  %4456 = vmatpush.bf16.msra.mxu0 %v2688
  %4457 = vmatmul.bf16.gmra.mxu0 %v673
  %v4458 = vpop.f32.mrf.mxu0
  %v4459 = vadd.f32 %v4445, %v4458
  %v4460 = vpop.f32.mrf.mxu0
  %v4461 = vadd.f32 %v4447, %v4460
  %4462 = vdwg.mxu0
  %4463 = vmatpush.bf16.msra.mxu0 %v2748
  %4464 = vmatpush.bf16.msra.mxu0 %v2744
  %4465 = vmatpush.bf16.msra.mxu0 %v2740
  %4466 = vmatpush.bf16.msra.mxu0 %v2736
  %4467 = vmatpush.bf16.msra.mxu0 %v2732
  %4468 = vmatpush.bf16.msra.mxu0 %v2728
  %4469 = vmatpush.bf16.msra.mxu0 %v2724
  %4470 = vmatpush.bf16.msra.mxu0 %v2720
  %4471 = vmatmul.bf16.gmra.mxu0 %v674
  %v4472 = vpop.f32.mrf.mxu0
  %v4473 = vadd.f32 %v4459, %v4472
  %v4474 = vpop.f32.mrf.mxu0
  %v4475 = vadd.f32 %v4461, %v4474
  %4476 = vdwg.mxu0
  %4477 = vmatpush.bf16.msra.mxu0 %v2780
  %4478 = vmatpush.bf16.msra.mxu0 %v2776
  %4479 = vmatpush.bf16.msra.mxu0 %v2772
  %4480 = vmatpush.bf16.msra.mxu0 %v2768
  %4481 = vmatpush.bf16.msra.mxu0 %v2764
  %4482 = vmatpush.bf16.msra.mxu0 %v2760
  %4483 = vmatpush.bf16.msra.mxu0 %v2756
  %4484 = vmatpush.bf16.msra.mxu0 %v2752
  %4485 = vmatmul.bf16.gmra.mxu0 %v675
  %v4486 = vpop.f32.mrf.mxu0
  %v4487 = vadd.f32 %v4473, %v4486
  %v4488 = vpop.f32.mrf.mxu0
  %v4489 = vadd.f32 %v4475, %v4488
  %4490 = vdwg.mxu0
  %4491 = vmatpush.bf16.msra.mxu0 %v2812
  %4492 = vmatpush.bf16.msra.mxu0 %v2808
  %4493 = vmatpush.bf16.msra.mxu0 %v2804
  %4494 = vmatpush.bf16.msra.mxu0 %v2800
  %4495 = vmatpush.bf16.msra.mxu0 %v2796
  %4496 = vmatpush.bf16.msra.mxu0 %v2792
  %4497 = vmatpush.bf16.msra.mxu0 %v2788
  %4498 = vmatpush.bf16.msra.mxu0 %v2784
  %4499 = vmatmul.bf16.gmra.mxu0 %v676
  %v4500 = vpop.f32.mrf.mxu0
  %v4501 = vadd.f32 %v4487, %v4500
  %v4502 = vpop.f32.mrf.mxu0
  %v4503 = vadd.f32 %v4489, %v4502
  %4504 = vdwg.mxu0
  %4505 = vmatpush.bf16.msra.mxu0 %v2844
  %4506 = vmatpush.bf16.msra.mxu0 %v2840
  %4507 = vmatpush.bf16.msra.mxu0 %v2836
  %4508 = vmatpush.bf16.msra.mxu0 %v2832
  %4509 = vmatpush.bf16.msra.mxu0 %v2828
  %4510 = vmatpush.bf16.msra.mxu0 %v2824
  %4511 = vmatpush.bf16.msra.mxu0 %v2820
  %4512 = vmatpush.bf16.msra.mxu0 %v2816
  %4513 = vmatmul.bf16.gmra.mxu0 %v677
  %v4514 = vpop.f32.mrf.mxu0
  %v4515 = vadd.f32 %v4501, %v4514
  %v4516 = vpop.f32.mrf.mxu0
  %v4517 = vadd.f32 %v4503, %v4516
  %4518 = vdwg.mxu0
  %4519 = vmatpush.bf16.msra.mxu0 %v2876
  %4520 = vmatpush.bf16.msra.mxu0 %v2872
  %4521 = vmatpush.bf16.msra.mxu0 %v2868
  %4522 = vmatpush.bf16.msra.mxu0 %v2864
  %4523 = vmatpush.bf16.msra.mxu0 %v2860
  %4524 = vmatpush.bf16.msra.mxu0 %v2856
  %4525 = vmatpush.bf16.msra.mxu0 %v2852
  %4526 = vmatpush.bf16.msra.mxu0 %v2848
  %4527 = vmatmul.bf16.gmra.mxu0 %v678
  %v4528 = vpop.f32.mrf.mxu0
  %v4529 = vadd.f32 %v4515, %v4528
  %v4530 = vpop.f32.mrf.mxu0
  %v4531 = vadd.f32 %v4517, %v4530
  %4532 = vdwg.mxu0
  %4533 = vmatpush.bf16.msra.mxu0 %v2908
  %4534 = vmatpush.bf16.msra.mxu0 %v2904
  %4535 = vmatpush.bf16.msra.mxu0 %v2900
  %4536 = vmatpush.bf16.msra.mxu0 %v2896
  %4537 = vmatpush.bf16.msra.mxu0 %v2892
  %4538 = vmatpush.bf16.msra.mxu0 %v2888
  %4539 = vmatpush.bf16.msra.mxu0 %v2884
  %4540 = vmatpush.bf16.msra.mxu0 %v2880
  %4541 = vmatmul.bf16.gmra.mxu0 %v679
  %v4542 = vpop.f32.mrf.mxu0
  %v4543 = vadd.f32 %v4529, %v4542
  %v4544 = vpop.f32.mrf.mxu0
  %v4545 = vadd.f32 %v4531, %v4544
  %4546 = vdwg.mxu0
  %4547 = vmatpush.bf16.msra.mxu0 %v2940
  %4548 = vmatpush.bf16.msra.mxu0 %v2936
  %4549 = vmatpush.bf16.msra.mxu0 %v2932
  %4550 = vmatpush.bf16.msra.mxu0 %v2928
  %4551 = vmatpush.bf16.msra.mxu0 %v2924
  %4552 = vmatpush.bf16.msra.mxu0 %v2920
  %4553 = vmatpush.bf16.msra.mxu0 %v2916
  %4554 = vmatpush.bf16.msra.mxu0 %v2912
  %4555 = vmatmul.bf16.gmra.mxu0 %v680
  %v4556 = vpop.f32.mrf.mxu0
  %v4557 = vadd.f32 %v4543, %v4556
  %v4558 = vpop.f32.mrf.mxu0
  %v4559 = vadd.f32 %v4545, %v4558
  %4560 = vdwg.mxu0
  %4561 = vmatpush.bf16.msra.mxu0 %v2972
  %4562 = vmatpush.bf16.msra.mxu0 %v2968
  %4563 = vmatpush.bf16.msra.mxu0 %v2964
  %4564 = vmatpush.bf16.msra.mxu0 %v2960
  %4565 = vmatpush.bf16.msra.mxu0 %v2956
  %4566 = vmatpush.bf16.msra.mxu0 %v2952
  %4567 = vmatpush.bf16.msra.mxu0 %v2948
  %4568 = vmatpush.bf16.msra.mxu0 %v2944
  %4569 = vmatmul.bf16.gmra.mxu0 %v681
  %v4570 = vpop.f32.mrf.mxu0
  %v4571 = vadd.f32 %v4557, %v4570
  %v4572 = vpop.f32.mrf.mxu0
  %v4573 = vadd.f32 %v4559, %v4572
  %4574 = vdwg.mxu0
  %4575 = vmatpush.bf16.msra.mxu0 %v3004
  %4576 = vmatpush.bf16.msra.mxu0 %v3000
  %4577 = vmatpush.bf16.msra.mxu0 %v2996
  %4578 = vmatpush.bf16.msra.mxu0 %v2992
  %4579 = vmatpush.bf16.msra.mxu0 %v2988
  %4580 = vmatpush.bf16.msra.mxu0 %v2984
  %4581 = vmatpush.bf16.msra.mxu0 %v2980
  %4582 = vmatpush.bf16.msra.mxu0 %v2976
  %4583 = vmatmul.bf16.gmra.mxu0 %v682
  %v4584 = vpop.f32.mrf.mxu0
  %v4585 = vadd.f32 %v4571, %v4584
  %v4586 = vpop.f32.mrf.mxu0
  %v4587 = vadd.f32 %v4573, %v4586
  %4588 = vdwg.mxu0
  %v4589 = vadd.f32 %v3829, %v3831
  %v4590 = vrot.slane %v4589, 4
  %v4591 = vadd.f32 %v4589, %v4590
  %v4592 = vrot.slane %v4591, 2
  %v4593 = vadd.f32 %v4591, %v4592
  %v4594 = vrot.slane %v4593, 1
  %v4595 = vadd.f32 %v4593, %v4594
  %v4596 = vadd.f32 %v4081, %v4083
  %v4597 = vrot.slane %v4596, 4
  %v4598 = vadd.f32 %v4596, %v4597
  %v4599 = vrot.slane %v4598, 2
  %v4600 = vadd.f32 %v4598, %v4599
  %v4601 = vrot.slane %v4600, 1
  %v4602 = vadd.f32 %v4600, %v4601
  %v4603 = vadd.f32 %v4333, %v4335
  %v4604 = vrot.slane %v4603, 4
  %v4605 = vadd.f32 %v4603, %v4604
  %v4606 = vrot.slane %v4605, 2
  %v4607 = vadd.f32 %v4605, %v4606
  %v4608 = vrot.slane %v4607, 1
  %v4609 = vadd.f32 %v4607, %v4608
  %v4610 = vadd.f32 %v4585, %v4587
  %v4611 = vrot.slane %v4610, 4
  %v4612 = vadd.f32 %v4610, %v4611
  %v4613 = vrot.slane %v4612, 2
  %v4614 = vadd.f32 %v4612, %v4613
  %v4615 = vrot.slane %v4614, 1
  %v4616 = vadd.f32 %v4614, %v4615
  %v4617 = vmul.f32 %v3829, %v3829
  %v4618 = vmul.f32 %v4081, %v4081
  %v4619 = vmul.f32 %v4333, %v4333
  %v4620 = vmul.f32 %v4585, %v4585
  %v4621 = vmul.f32 %v3831, %v3831
  %v4622 = vmul.f32 %v4083, %v4083
  %v4623 = vmul.f32 %v4335, %v4335
  %v4624 = vmul.f32 %v4587, %v4587
  %v4625 = vadd.f32 %v4617, %v4621
  %v4626 = vrot.slane %v4625, 4
  %v4627 = vadd.f32 %v4625, %v4626
  %v4628 = vrot.slane %v4627, 2
  %v4629 = vadd.f32 %v4627, %v4628
  %v4630 = vrot.slane %v4629, 1
  %v4631 = vadd.f32 %v4629, %v4630
  %v4632 = vadd.f32 %v4618, %v4622
  %v4633 = vrot.slane %v4632, 4
  %v4634 = vadd.f32 %v4632, %v4633
  %v4635 = vrot.slane %v4634, 2
  %v4636 = vadd.f32 %v4634, %v4635
  %v4637 = vrot.slane %v4636, 1
  %v4638 = vadd.f32 %v4636, %v4637
  %v4639 = vadd.f32 %v4619, %v4623
  %v4640 = vrot.slane %v4639, 4
  %v4641 = vadd.f32 %v4639, %v4640
  %v4642 = vrot.slane %v4641, 2
  %v4643 = vadd.f32 %v4641, %v4642
  %v4644 = vrot.slane %v4643, 1
  %v4645 = vadd.f32 %v4643, %v4644
  %v4646 = vadd.f32 %v4620, %v4624
  %v4647 = vrot.slane %v4646, 4
  %v4648 = vadd.f32 %v4646, %v4647
  %v4649 = vrot.slane %v4648, 2
  %v4650 = vadd.f32 %v4648, %v4649
  %v4651 = vrot.slane %v4650, 1
  %v4652 = vadd.f32 %v4650, %v4651
  %vm4653 = vcmask 1040384
  %v4654 = vsel %vm4653, %v4595, %v4631
  %v4655 = vsel %vm4653, %v4602, %v4638
  %v4656 = vsel %vm4653, %v4609, %v4645
  %v4657 = vsel %vm4653, %v4616, %v4652
  %p4658 = scmp.eq.s32.totalorder 0, 0
  // Predicated region
  $region18: #{deep_cnn_forward.8} parent=0 // pred_check
    %p4659 = pneg %p4658
  $region19: #{deep_cnn_forward.8} parent=0 // pred_check_branch
    %4661 = sbr.rel (%p4659) target = $region21
  $region20: #{deep_cnn_forward.8} parent=0 // pred_region
    %v4666 = vrot.slane %v4655, 6
    %v4667 = vrot.slane %v4656, 4
    %v4668 = vrot.slane %v4657, 2
    %vm4669 = vcmask 1041408
    %v4670 = vsel %vm4669, %v4654, %v4666
    %vm4671 = vcmask 1045508
    %v4672 = vsel %vm4671, %v4667, %v4668
    %vm4673 = vcmask 1043456
    %v4674 = vsel %vm4673, %v4670, %v4672
    %4676 = vst [vmem:[#allocation2] sm:$0xff] %v4674
  $region21: #{deep_cnn_forward.8} parent=0 // pred_fallthru
    _
  %p4677 = scmp.gt.s32.totalorder 0, 0
  // Predicated region
  $region22: #{deep_cnn_forward.8} parent=0 // pred_check
    %p4678 = pneg %p4677
  $region23: #{deep_cnn_forward.8} parent=0 // pred_check_branch
    %4680 = sbr.rel (%p4678) target = $region25
  $region24: #{deep_cnn_forward.8} parent=0 // pred_region
    %v4681 = vld [vmem:[#allocation2] sm:$0xff]
    %v4686 = vrot.slane %v4655, 6
    %v4687 = vrot.slane %v4656, 4
    %v4688 = vrot.slane %v4657, 2
    %vm4689 = vcmask 1041408
    %v4690 = vsel %vm4689, %v4654, %v4686
    %vm4691 = vcmask 1045508
    %v4692 = vsel %vm4691, %v4687, %v4688
    %vm4693 = vcmask 1043456
    %v4694 = vsel %vm4693, %v4690, %v4692
    %v4696 = vadd.f32 %v4681, %v4694
    %4697 = vst [vmem:[#allocation2] sm:$0xff] %v4696
  $region25: #{deep_cnn_forward.8} parent=0 // pred_fallthru
    _
  %s4698 = smul.u32 0, 16
  %v4699 = vpack.c.bf16 %v4081, %v3829
  %v4700 = vpack.c.bf16 %v4585, %v4333
  %v4701 = vpack.c.bf16 %v4083, %v3831
  %v4702 = vpack.c.bf16 %v4587, %v4335
  %s4703 = sshra.s32 %s4698, 3
  %s4704 = sand.u32 %s4698, 7
  %s4705 = smul.u32 %s4703, 4
  %s4706 = smul.addr %s4705, 4
  %s4707 = scalar_lea.vmem %s4, %s4706
  %4708 = vst [vmem:[%s4707] sm:$0xff] %v4699
  %4709 = vst [vmem:[%s4707 + $0x8] sm:$0xff] %v4700
  %4710 = vst [vmem:[%s4707 + $0x10] sm:$0xff] %v4701
  %4711 = vst [vmem:[%s4707 + $0x18] sm:$0xff] %v4702
  // Predicated region
  $region26: #{deep_cnn_forward.8} parent=0 // pred_check
    %p4712 = pneg %p4658
  $region27: #{deep_cnn_forward.8} parent=0 // pred_check_branch
    %4714 = sbr.rel (%p4712) target = $region29
  $region28: #{deep_cnn_forward.8} parent=0 // pred_region
    %v4715 = vld [vmem:[#allocation2] ss:$2 sm:$0xf]
    %v4716 = vmul.f32 %v4715, 0.125
    %s4717 = scalar_lea.vmem [#allocation2], 1
    %v4718 = vld [vmem:[%s4717] ss:$2 sm:$0xf]
    %v4719 = vmul.f32 %v4718, 0.125
    %v4720 = vmul.f32 %v4716, %v4716
    %v4721 = vsub.f32 %v4719, %v4720
    %v4722 = vadd.f32 %v4721, 1e-05
    %v4723 = vrsqrt.pop %v4722
    %v4724 = vmul.f32 %v4723, %v4722
    %v4725 = vmul.f32 %v4724, %v4723
    %v4726 = vmul.f32 0.5, %v4725
    %v4727 = vsub.f32 1.5, %v4726
    %v4728 = vmul.f32 %v4723, %v4727
    %vm4729 = vweird.f32 %v4722
    %vm4730 = vweird.f32 %v4723
    %vm4731 = vmor %vm4729, %vm4730
    %v4732 = vsel %vm4731, %v4723, %v4728
    %v4733 = vld [vmem:[%s2] sm:$0xf]
    %v4734 = vmul.f32 %v4732, %v4733
    %v4735 = vld [vmem:[%s3] sm:$0xf]
    %v4736 = vmul.f32 %v4716, %v4734
    %v4737 = vsub.f32 %v4735, %v4736
    %v4738 = vld [vmem:[%s4] sm:$0xff]
    %v4739 = vld [vmem:[%s4 + $0x8] sm:$0xff]
    %v4740 = vld [vmem:[%s4 + $0x10] sm:$0xff]
    %v4741 = vld [vmem:[%s4 + $0x18] sm:$0xff]
    %v4742 = vunpack.c.l.bf16 %v4738
    %v4743 = vunpack.c.h.bf16 %v4738
    %v4744 = vunpack.c.l.bf16 %v4739
    %v4745 = vunpack.c.h.bf16 %v4739
    %v4746 = vunpack.c.l.bf16 %v4740
    %v4747 = vunpack.c.h.bf16 %v4740
    %v4748 = vunpack.c.l.bf16 %v4741
    %v4749 = vunpack.c.h.bf16 %v4741
    %v4751 = vperm.slane %v4734, 0
    %v4752 = vperm.slane %v4734, 1
    %v4753 = vperm.slane %v4734, 2
    %v4754 = vperm.slane %v4734, 3
    %v4759 = vmul.f32 %v4742, %v4751
    %v4760 = vmul.f32 %v4743, %v4752
    %v4761 = vmul.f32 %v4744, %v4753
    %v4762 = vmul.f32 %v4745, %v4754
    %v4763 = vmul.f32 %v4746, %v4751
    %v4764 = vmul.f32 %v4747, %v4752
    %v4765 = vmul.f32 %v4748, %v4753
    %v4766 = vmul.f32 %v4749, %v4754
    %v4768 = vperm.slane %v4737, 0
    %v4769 = vperm.slane %v4737, 1
    %v4770 = vperm.slane %v4737, 2
    %v4771 = vperm.slane %v4737, 3
    %v4776 = vadd.f32 %v4759, %v4768
    %v4777 = vadd.f32 %v4760, %v4769
    %v4778 = vadd.f32 %v4761, %v4770
    %v4779 = vadd.f32 %v4762, %v4771
    %v4780 = vadd.f32 %v4763, %v4768
    %v4781 = vadd.f32 %v4764, %v4769
    %v4782 = vadd.f32 %v4765, %v4770
    %v4783 = vadd.f32 %v4766, %v4771
    %v4784 = vmax.f32 %v4776, 0.0
    %v4785 = vmax.f32 %v4777, 0.0
    %v4786 = vmax.f32 %v4778, 0.0
    %v4787 = vmax.f32 %v4779, 0.0
    %v4788 = vmax.f32 %v4780, 0.0
    %v4789 = vmax.f32 %v4781, 0.0
    %v4790 = vmax.f32 %v4782, 0.0
    %v4791 = vmax.f32 %v4783, 0.0
    %v4792 = vpack.c.bf16 %v4785, %v4784
    %v4793 = vpack.c.bf16 %v4787, %v4786
    %v4794 = vpack.c.bf16 %v4789, %v4788
    %v4795 = vpack.c.bf16 %v4791, %v4790
    %4796 = vst [vmem:[%s4] sm:$0xff] %v4792
    %4797 = vst [vmem:[%s4 + $0x8] sm:$0xff] %v4793
    %4798 = vst [vmem:[%s4 + $0x10] sm:$0xff] %v4794
    %4799 = vst [vmem:[%s4 + $0x18] sm:$0xff] %v4795
  $region29: #{deep_cnn_forward.8} parent=0 // pred_fallthru
    _
  // Predicated region
  $region30: #{deep_cnn_forward.8} parent=0 // pred_check
    _
  $region31: #{deep_cnn_forward.8} parent=0 // pred_check_branch
    %4801 = sbr.rel (0) target = $region33
  $region32: #{deep_cnn_forward.8} parent=0 // pred_region
    _
  $region33: #{deep_cnn_forward.8} parent=0 // pred_fallthru
    _
  // Predicated region
  $region34: #{deep_cnn_forward.8} parent=0 // pred_check
    _
  $region35: #{deep_cnn_forward.8} parent=0 // pred_check_branch
    %4803 = sbr.rel (0) target = $region37
  $region36: #{deep_cnn_forward.8} parent=0 // pred_region
    _
  $region37: #{deep_cnn_forward.8} parent=0 // pred_fallthru
    _

</llo_original>
